<compile_context>
chip_gen: v7x
topology: tpu7x:2x2x1
jax: 0.10.0
libtpu: 0.0.40
codegen_flags: <defaults>
</compile_context>

<pallas_src>
import math
import jax
import jax.numpy as jnp
from jax import lax
from jax.experimental import pallas as pl
from jax.experimental.pallas import tpu as pltpu

NF = 32                       # nf
OUTC = 4 * NF                 # 128 output channels per module
DEPTH = 6                     # depth
KS = (39, 19, 9)              # InceptionModule kernel sizes (ks=40 -> 39/19/9, forced odd)
PADS = (19, 9, 4)             # "same" padding for stride 1
MAXPAD = PADS[0]              # 19
K_PAD = 40                    # taps zero-padded to a multiple of GROUP
GROUP = 8                     # taps per im2col group -> contraction dim GROUP*NF = 256
NGRP = K_PAD // GROUP         # 5 grouped matmuls per conv
LPAD = 24                     # sublane-aligned left halo (>= MAXPAD)
RPAD = 24                     # right halo (>= K_PAD - 1 - MAXPAD + 1, rounded up)
CONV_OFF = LPAD - MAXPAD      # 5: read offset of tap 0 inside the padded buffer
ACT_OFF = 8                   # sublane-aligned data offset inside the padded activation
NEG = float(jnp.finfo(jnp.float32).min)  # maxpool pad value (torch pads with -inf;
                                         # equivalent for max unless inputs contain -inf)


# ---------------------------------------------------------------------------
# Fused Pallas kernel: 6 inception modules + 2 shortcuts, one grid step per batch elem
# ---------------------------------------------------------------------------
def _inception_block_kernel(x_ref, wb0_ref, wp0_ref, wg0_ref,
                            wb_ref, wp_ref, wg_ref, scale_ref, shift_ref,
                            ws0_ref, s0sc_ref, s0sh_ref, s1sc_ref, s1sh_ref,
                            o_ref,
                            xb_pad, act_pad, res_buf, xp0_pad):
    T = o_ref.shape[0]
    c_in = x_ref.shape[-1]

    # --- initialize only the halo rows of the scratch buffers (the interiors are
    #     fully overwritten by every module; halos are never written afterwards) ---
    xb_pad[pl.ds(0, LPAD), :] = jnp.zeros((LPAD, NF), jnp.float32)
    xb_pad[pl.ds(LPAD + T, RPAD), :] = jnp.zeros((RPAD, NF), jnp.float32)
    act_pad[pl.ds(ACT_OFF - 1, 1), :] = jnp.full((1, OUTC), NEG, jnp.float32)
    act_pad[pl.ds(ACT_OFF + T, 1), :] = jnp.full((1, OUTC), NEG, jnp.float32)
    xp0_pad[pl.ds(0, 1), :] = jnp.full((1, c_in), NEG, jnp.float32)
    xp0_pad[pl.ds(T + 1, 1), :] = jnp.full((1, c_in), NEG, jnp.float32)

    x0 = x_ref[...]                              # (T, c_in) raw block input
    xp0_pad[pl.ds(1, T), :] = x0

    def run_module(x_in, wb, wp_ext, wg_get, pooled, scale, shift):
        # bottleneck 1x1 conv: (T, C) @ (C, NF)
        xb = jnp.dot(x_in, wb, preferred_element_type=jnp.float32)
        xb_pad[pl.ds(LPAD, T), :] = xb           # sublane-aligned store (LPAD = 24)
        # pool branch: pooled @ (C, 128) with weight only in lanes 96:128 -> no concat
        acc = jnp.dot(pooled, wp_ext, preferred_element_type=jnp.float32)
        # merged 39/19/9 conv: NGRP im2col matmuls with contraction GROUP*NF = 256
        for g in range(NGRP):
            base = CONV_OFF + g * GROUP
            slab = jnp.concatenate(
                [xb_pad[pl.ds(base + c, T), :] for c in range(GROUP)], axis=-1)
            acc = acc + jnp.dot(slab, wg_get(g), preferred_element_type=jnp.float32)
        # folded BatchNorm (eval mode) + ReLU
        return jnp.maximum(acc * scale + shift, 0.0)

    # ---- module 0 (input has c_in channels) ----
    pooled0 = jnp.maximum(jnp.maximum(xp0_pad[pl.ds(0, T), :],
                                      xp0_pad[pl.ds(1, T), :]),
                          xp0_pad[pl.ds(2, T), :])
    y = run_module(x0, wb0_ref[...], wp0_ref[...], lambda g: wg0_ref[g],
                   pooled0, scale_ref[0], shift_ref[0])
    act_pad[pl.ds(ACT_OFF, T), :] = y

    # ---- modules 1..5 (input has 128 channels), residuals at d=2 and d=5 ----
    for d in range(1, DEPTH):
        x_in = act_pad[pl.ds(ACT_OFF, T), :]
        pooled = jnp.maximum(jnp.maximum(act_pad[pl.ds(ACT_OFF - 1, T), :], x_in),
                             act_pad[pl.ds(ACT_OFF + 1, T), :])
        y = run_module(x_in, wb_ref[d - 1], wp_ref[d - 1],
                       lambda g, _d=d: wg_ref[(_d - 1) * NGRP + g],
                       pooled, scale_ref[d], shift_ref[d])
        if d == 2:
            # shortcut 0: 1x1 conv (c_in -> 128) + BN applied to the block input
            sc = jnp.dot(x0, ws0_ref[...], preferred_element_type=jnp.float32)
            y = jnp.maximum(y + sc * s0sc_ref[...] + s0sh_ref[...], 0.0)
            res_buf[...] = y
        if d == DEPTH - 1:
            # shortcut 1: BN-only path (identity 1x1 matmul skipped entirely)
            y = jnp.maximum(y + res_buf[...] * s1sc_ref[...] + s1sh_ref[...], 0.0)
            o_ref[...] = y
        else:
            act_pad[pl.ds(ACT_OFF, T), :] = y


# ---------------------------------------------------------------------------
# pallas_call wrapper
# ---------------------------------------------------------------------------
def _full_spec(shape):
    n = len(shape)
    return pl.BlockSpec(shape, lambda b, _n=n: (0,) * _n)


def _prepare_fused_params(params):
    """Merge/stack the per-branch weights into the layout the fused kernel expects."""
    mods = params["modules"]

    def merged_conv(p):
        # (K_PAD, NF, 128): cols 0:32 <- w39, 32:64 <- w19, 64:96 <- w9, 96:128 <- 0
        wm = jnp.zeros((K_PAD, NF, OUTC), jnp.float32)
        wm = wm.at[0:KS[0], :, 0:NF].set(p["w39"])
        o1 = MAXPAD - PADS[1]
        wm = wm.at[o1:o1 + KS[1], :, NF:2 * NF].set(p["w19"])
        o2 = MAXPAD - PADS[2]
        wm = wm.at[o2:o2 + KS[2], :, 2 * NF:3 * NF].set(p["w9"])
        return wm.reshape(NGRP, GROUP * NF, OUTC)        # tap-grouped (5, 256, 128)

    def pool_ext(p):
        w = jnp.zeros((p["wp"].shape[0], OUTC), jnp.float32)
        return w.at[:, 3 * NF:].set(p["wp"])             # pool branch -> lanes 96:128

    return {
        "wb0": mods[0]["wb"],
        "wp0": pool_ext(mods[0]),
        "wg0": merged_conv(mods[0]),
        "wb_r": jnp.stack([mods[d]["wb"] for d in range(1, DEPTH)]),
        "wp_r": jnp.stack([pool_ext(mods[d]) for d in range(1, DEPTH)]),
        "wg_r": jnp.concatenate([merged_conv(mods[d]) for d in range(1, DEPTH)], axis=0),
        "scale": jnp.stack([mods[d]["scale"] for d in range(DEPTH)]),
        "shift": jnp.stack([mods[d]["shift"] for d in range(DEPTH)]),
        "ws0": params["shortcuts"][0]["w"],
        "s0_scale": params["shortcuts"][0]["scale"],
        "s0_shift": params["shortcuts"][0]["shift"],
        "s1_scale": params["shortcuts"][1]["scale"],
        "s1_shift": params["shortcuts"][1]["shift"],
    }


def inception_block_forward(x_ncw, params):
    x = jnp.transpose(x_ncw, (0, 2, 1)).astype(jnp.float32)   # NCW -> NWC (glue)
    B, T, c_in = x.shape
    fp = _prepare_fused_params(params)
    in_arrays = [x, fp["wb0"], fp["wp0"], fp["wg0"], fp["wb_r"], fp["wp_r"], fp["wg_r"],
                 fp["scale"], fp["shift"], fp["ws0"], fp["s0_scale"], fp["s0_shift"],
                 fp["s1_scale"], fp["s1_shift"]]
    in_specs = ([pl.BlockSpec((None, T, c_in), lambda b: (b, 0, 0))]
                + [_full_spec(a.shape) for a in in_arrays[1:]])
    out = pl.pallas_call(
        _inception_block_kernel,
        out_shape=jax.ShapeDtypeStruct((B, T, OUTC), jnp.float32),
        grid=(B,),
        in_specs=in_specs,
        out_specs=pl.BlockSpec((None, T, OUTC), lambda b: (b, 0, 0)),
        scratch_shapes=[
            pltpu.VMEM((LPAD + T + RPAD, NF), jnp.float32),   # zero-padded bottleneck
            pltpu.VMEM((T + 2 * ACT_OFF, OUTC), jnp.float32), # padded inter-module act
            pltpu.VMEM((T, OUTC), jnp.float32),               # residual
            pltpu.VMEM((T + 2, c_in), jnp.float32),           # padded raw input (pool 0)
        ],
        compiler_params=pltpu.CompilerParams(
            dimension_semantics=("parallel",),
            vmem_limit_bytes=48 * 1024 * 1024),
    )(*in_arrays)
    return jnp.transpose(out, (0, 2, 1))                      # NWC -> NCW


# ---------------------------------------------------------------------------
# deterministic parameter init (shapes follow the PyTorch module __init__)
# ---------------------------------------------------------------------------
def _conv_w(key, shape, fan_in):
    bound = 1.0 / math.sqrt(fan_in)
    return jax.random.uniform(key, shape, jnp.float32, -bound, bound)


def _folded_bn(key, c, eps=1e-5):
    k1, k2 = jax.random.split(key)
    gamma = 1.0 + 0.1 * jax.random.normal(k1, (c,), jnp.float32)
    beta = 0.1 * jax.random.normal(k2, (c,), jnp.float32)
    mean = jnp.zeros((c,), jnp.float32)
    var = jnp.ones((c,), jnp.float32)
    scale = gamma / jnp.sqrt(var + eps)
    shift = beta - mean * scale
    return scale.reshape(1, c), shift.reshape(1, c)


def init_params(key, c_in):
    params = {"modules": [], "shortcuts": []}
    for d in range(DEPTH):
        ni = c_in if d == 0 else OUTC
        key, *ks = jax.random.split(key, 7)
        p = {
            "wb": _conv_w(ks[0], (ni, NF), ni),                      # bottleneck 1x1
            "w39": _conv_w(ks[1], (KS[0], NF, NF), NF * KS[0]),      # (K, C_in, C_out)
            "w19": _conv_w(ks[2], (KS[1], NF, NF), NF * KS[1]),
            "w9": _conv_w(ks[3], (KS[2], NF, NF), NF * KS[2]),
            "wp": _conv_w(ks[4], (ni, NF), ni),                      # pool-branch 1x1
        }
        p["scale"], p["shift"] = _folded_bn(ks[5], OUTC)
        params["modules"].append(p)
    # shortcut 0 (d=2): 1x1 conv c_in -> 4*nf + BN ; shortcut 1 (d=5): BN only
    key, k0, k1, k2 = jax.random.split(key, 4)
    s0_scale, s0_shift = _folded_bn(k1, OUTC)
    params["shortcuts"].append({"w": _conv_w(k0, (c_in, OUTC), c_in),
                                "scale": s0_scale, "shift": s0_shift})
    s1_scale, s1_shift = _folded_bn(k2, OUTC)
    params["shortcuts"].append({"scale": s1_scale, "shift": s1_shift})
    return params


# ---------------------------------------------------------------------------
# pure-JAX reference (mirrors PyTorch forward semantics) for a sanity check
# ---------------------------------------------------------------------------
def _conv1d_ref(x, w, pad):
    return lax.conv_general_dilated(
        x, w, window_strides=(1,), padding=[(pad, pad)],
        dimension_numbers=("NWC", "WIO", "NWC"), precision=lax.Precision.HIGHEST)


def _module_ref(x, p):
    xb = _conv1d_ref(x, p["wb"][None], 0)
    y0 = _conv1d_ref(xb, p["w39"], PADS[0])
    y1 = _conv1d_ref(xb, p["w19"], PADS[1])
    y2 = _conv1d_ref(xb, p["w9"], PADS[2])
    pooled = lax.reduce_window(x, -jnp.inf, lax.max, (1, 3, 1), (1, 1, 1),
                               ((0, 0), (1, 1), (0, 0)))
    y3 = _conv1d_ref(pooled, p["wp"][None], 0)
    y = jnp.concatenate([y0, y1, y2, y3], axis=-1)
    return jnp.maximum(y * p["scale"] + p["shift"], 0.0)


def _block_ref(x_ncw, params):
    x = jnp.transpose(x_ncw, (0, 2, 1))
    res = x
    for d in range(DEPTH):
        x = _module_ref(x, params["modules"][d])
        if d % 3 == 2:
            sp = params["shortcuts"][d // 3]
            sc = res if "w" not in sp else jnp.einsum(
                "btc,cd->btd", res, sp["w"], precision=lax.Precision.HIGHEST)
            x = jnp.maximum(x + sc * sp["scale"] + sp["shift"], 0.0)
            res = x
    return jnp.transpose(x, (0, 2, 1))


# ---------------------------------------------------------------------------
if __name__ == "__main__":
    B, C_IN, L = 2, 4, 16
    key = jax.random.PRNGKey(0)
    kx, kp = jax.random.split(key)
    x = jax.random.normal(kx, (B, C_IN, L), jnp.float32)      # PyTorch NCW input
    params = init_params(kp, C_IN)

    out = jax.block_until_ready(inception_block_forward(x, params))
    assert out.shape == (B, 4 * NF, L), out.shape

    ref = jax.block_until_ready(_block_ref(x, params))
    err = float(jnp.max(jnp.abs(out - ref)))
    if not (err < 5e-2):
        raise SystemExit(f"mismatch vs reference: max abs err = {err}")
    print("KERNEL_OK")
</pallas_src>

<mosaic_0001>
module attributes {stable_mosaic.version = 11 : i64} {
  func.func @_inception_block_kernel(%arg0: i32, %arg1: memref<1x16x4xf32, #tpu.memory_space<vmem>>, %arg2: memref<4x32xf32, #tpu.memory_space<vmem>>, %arg3: memref<4x128xf32, #tpu.memory_space<vmem>>, %arg4: memref<5x256x128xf32, #tpu.memory_space<vmem>>, %arg5: memref<5x128x32xf32, #tpu.memory_space<vmem>>, %arg6: memref<5x128x128xf32, #tpu.memory_space<vmem>>, %arg7: memref<25x256x128xf32, #tpu.memory_space<vmem>>, %arg8: memref<6x1x128xf32, #tpu.memory_space<vmem>>, %arg9: memref<6x1x128xf32, #tpu.memory_space<vmem>>, %arg10: memref<4x128xf32, #tpu.memory_space<vmem>>, %arg11: memref<1x128xf32, #tpu.memory_space<vmem>>, %arg12: memref<1x128xf32, #tpu.memory_space<vmem>>, %arg13: memref<1x128xf32, #tpu.memory_space<vmem>>, %arg14: memref<1x128xf32, #tpu.memory_space<vmem>>, %arg15: memref<1x16x128xf32, #tpu.memory_space<vmem>>, %arg16: memref<64x32xf32, #tpu.memory_space<vmem>>, %arg17: memref<32x128xf32, #tpu.memory_space<vmem>>, %arg18: memref<16x128xf32, #tpu.memory_space<vmem>>, %arg19: memref<18x4xf32, #tpu.memory_space<vmem>>) attributes {dimension_semantics = [#tpu.dimension_semantics<parallel>], iteration_bounds = array<i64: 2>, scalar_prefetch = 0 : i64, scratch_operands = 4 : i64, tpu.core_type = #tpu.core_type<tc>, window_params = [{transform_indices = @transform_0, window_bounds = array<i64: 1, 16, 4>}, {pipeline_mode = #tpu.pipeline_mode<synchronous>, transform_indices = @transform_1, window_bounds = array<i64: 4, 32>}, {pipeline_mode = #tpu.pipeline_mode<synchronous>, transform_indices = @transform_2, window_bounds = array<i64: 4, 128>}, {pipeline_mode = #tpu.pipeline_mode<synchronous>, transform_indices = @transform_3, window_bounds = array<i64: 5, 256, 128>}, {pipeline_mode = #tpu.pipeline_mode<synchronous>, transform_indices = @transform_4, window_bounds = array<i64: 5, 128, 32>}, {pipeline_mode = #tpu.pipeline_mode<synchronous>, transform_indices = @transform_5, window_bounds = array<i64: 5, 128, 128>}, {pipeline_mode = #tpu.pipeline_mode<synchronous>, transform_indices = @transform_6, window_bounds = array<i64: 25, 256, 128>}, {pipeline_mode = #tpu.pipeline_mode<synchronous>, transform_indices = @transform_7, window_bounds = array<i64: 6, 1, 128>}, {pipeline_mode = #tpu.pipeline_mode<synchronous>, transform_indices = @transform_8, window_bounds = array<i64: 6, 1, 128>}, {pipeline_mode = #tpu.pipeline_mode<synchronous>, transform_indices = @transform_9, window_bounds = array<i64: 4, 128>}, {pipeline_mode = #tpu.pipeline_mode<synchronous>, transform_indices = @transform_10, window_bounds = array<i64: 1, 128>}, {pipeline_mode = #tpu.pipeline_mode<synchronous>, transform_indices = @transform_11, window_bounds = array<i64: 1, 128>}, {pipeline_mode = #tpu.pipeline_mode<synchronous>, transform_indices = @transform_12, window_bounds = array<i64: 1, 128>}, {pipeline_mode = #tpu.pipeline_mode<synchronous>, transform_indices = @transform_13, window_bounds = array<i64: 1, 128>}, {transform_indices = @transform_14, window_bounds = array<i64: 1, 16, 128>}]} {
    %cst = arith.constant 0.000000e+00 : f32
    %0 = vector.broadcast %cst : f32 to vector<24x32xf32>
    %c0 = arith.constant 0 : index
    %c0_0 = arith.constant 0 : index
    %1 = vector.load %arg16[%c0, %c0_0] : memref<64x32xf32, #tpu.memory_space<vmem>>, vector<24x32xf32>
    tpu.vector_store %arg16[%c0, %c0_0], %0 {strides = array<i32>} : memref<64x32xf32, #tpu.memory_space<vmem>>, vector<24x32xf32>,
    %cst_1 = arith.constant 0.000000e+00 : f32
    %2 = vector.broadcast %cst_1 : f32 to vector<24x32xf32>
    %c40 = arith.constant 40 : index
    %c0_2 = arith.constant 0 : index
    %3 = vector.load %arg16[%c40, %c0_2] : memref<64x32xf32, #tpu.memory_space<vmem>>, vector<24x32xf32>
    tpu.vector_store %arg16[%c40, %c0_2], %2 {strides = array<i32>} : memref<64x32xf32, #tpu.memory_space<vmem>>, vector<24x32xf32>,
    %cst_3 = arith.constant -3.40282347E+38 : f32
    %4 = vector.broadcast %cst_3 : f32 to vector<1x128xf32>
    %c7 = arith.constant 7 : index
    %c0_4 = arith.constant 0 : index
    %5 = vector.load %arg17[%c7, %c0_4] : memref<32x128xf32, #tpu.memory_space<vmem>>, vector<1x128xf32>
    tpu.vector_store %arg17[%c7, %c0_4], %4 {strides = array<i32>} : memref<32x128xf32, #tpu.memory_space<vmem>>, vector<1x128xf32>,
    %cst_5 = arith.constant -3.40282347E+38 : f32
    %6 = vector.broadcast %cst_5 : f32 to vector<1x128xf32>
    %c24 = arith.constant 24 : index
    %c0_6 = arith.constant 0 : index
    %7 = vector.load %arg17[%c24, %c0_6] : memref<32x128xf32, #tpu.memory_space<vmem>>, vector<1x128xf32>
    tpu.vector_store %arg17[%c24, %c0_6], %6 {strides = array<i32>} : memref<32x128xf32, #tpu.memory_space<vmem>>, vector<1x128xf32>,
    %cst_7 = arith.constant -3.40282347E+38 : f32
    %8 = vector.broadcast %cst_7 : f32 to vector<1x4xf32>
    %c0_8 = arith.constant 0 : index
    %c0_9 = arith.constant 0 : index
    %9 = vector.load %arg19[%c0_8, %c0_9] : memref<18x4xf32, #tpu.memory_space<vmem>>, vector<1x4xf32>
    tpu.vector_store %arg19[%c0_8, %c0_9], %8 {strides = array<i32>} : memref<18x4xf32, #tpu.memory_space<vmem>>, vector<1x4xf32>,
    %cst_10 = arith.constant -3.40282347E+38 : f32
    %10 = vector.broadcast %cst_10 : f32 to vector<1x4xf32>
    %c17 = arith.constant 17 : index
    %c0_11 = arith.constant 0 : index
    %11 = vector.load %arg19[%c17, %c0_11] : memref<18x4xf32, #tpu.memory_space<vmem>>, vector<1x4xf32>
    tpu.vector_store %arg19[%c17, %c0_11], %10 {strides = array<i32>} : memref<18x4xf32, #tpu.memory_space<vmem>>, vector<1x4xf32>,
    %c0_12 = arith.constant 0 : index
    %c0_13 = arith.constant 0 : index
    %c0_14 = arith.constant 0 : index
    %12 = vector.load %arg1[%c0_12, %c0_13, %c0_14] : memref<1x16x4xf32, #tpu.memory_space<vmem>>, vector<1x16x4xf32>
    %13 = vector.shape_cast %12 : vector<1x16x4xf32> to vector<16x4xf32>
    %c1 = arith.constant 1 : index
    %c0_15 = arith.constant 0 : index
    %14 = vector.load %arg19[%c1, %c0_15] : memref<18x4xf32, #tpu.memory_space<vmem>>, vector<16x4xf32>
    tpu.vector_store %arg19[%c1, %c0_15], %13 {strides = array<i32>} : memref<18x4xf32, #tpu.memory_space<vmem>>, vector<16x4xf32>,
    %c0_16 = arith.constant 0 : index
    %c0_17 = arith.constant 0 : index
    %15 = vector.load %arg19[%c0_16, %c0_17] : memref<18x4xf32, #tpu.memory_space<vmem>>, vector<16x4xf32>
    %c1_18 = arith.constant 1 : index
    %c0_19 = arith.constant 0 : index
    %16 = vector.load %arg19[%c1_18, %c0_19] : memref<18x4xf32, #tpu.memory_space<vmem>>, vector<16x4xf32>
    %17 = arith.maximumf %15, %16 : vector<16x4xf32>
    %c2 = arith.constant 2 : index
    %c0_20 = arith.constant 0 : index
    %18 = vector.load %arg19[%c2, %c0_20] : memref<18x4xf32, #tpu.memory_space<vmem>>, vector<16x4xf32>
    %19 = arith.maximumf %17, %18 : vector<16x4xf32>
    %c0_21 = arith.constant 0 : index
    %c0_22 = arith.constant 0 : index
    %20 = vector.load %arg2[%c0_21, %c0_22] : memref<4x32xf32, #tpu.memory_space<vmem>>, vector<4x32xf32>
    %c0_23 = arith.constant 0 : index
    %c0_24 = arith.constant 0 : index
    %21 = vector.load %arg3[%c0_23, %c0_24] : memref<4x128xf32, #tpu.memory_space<vmem>>, vector<4x128xf32>
    %c0_25 = arith.constant 0 : index
    %c0_26 = arith.constant 0 : index
    %c0_27 = arith.constant 0 : index
    %22 = vector.load %arg8[%c0_25, %c0_26, %c0_27] : memref<6x1x128xf32, #tpu.memory_space<vmem>>, vector<1x1x128xf32>
    %23 = vector.shape_cast %22 : vector<1x1x128xf32> to vector<1x128xf32>
    %c0_28 = arith.constant 0 : index
    %c0_29 = arith.constant 0 : index
    %c0_30 = arith.constant 0 : index
    %24 = vector.load %arg9[%c0_28, %c0_29, %c0_30] : memref<6x1x128xf32, #tpu.memory_space<vmem>>, vector<1x1x128xf32>
    %25 = vector.shape_cast %24 : vector<1x1x128xf32> to vector<1x128xf32>
    %cst_31 = arith.constant dense<0.000000e+00> : vector<16x32xf32>
    %26 = tpu.matmul %13, %20, %cst_31 {dimension_numbers = #tpu.dot_dimension_numbers<[1], [0], [0], [1], [0, 0, 1, 1], [], []>} : vector<16x4xf32>, vector<4x32xf32>, vector<16x32xf32> -> vector<16x32xf32>
    %c24_32 = arith.constant 24 : index
    %c0_33 = arith.constant 0 : index
    %27 = vector.load %arg16[%c24_32, %c0_33] : memref<64x32xf32, #tpu.memory_space<vmem>>, vector<16x32xf32>
    tpu.vector_store %arg16[%c24_32, %c0_33], %26 {strides = array<i32>} : memref<64x32xf32, #tpu.memory_space<vmem>>, vector<16x32xf32>,
    %cst_34 = arith.constant dense<0.000000e+00> : vector<16x128xf32>
    %28 = tpu.matmul %19, %21, %cst_34 {dimension_numbers = #tpu.dot_dimension_numbers<[1], [0], [0], [1], [0, 0, 1, 1], [], []>} : vector<16x4xf32>, vector<4x128xf32>, vector<16x128xf32> -> vector<16x128xf32>
    %c5 = arith.constant 5 : index
    %c0_35 = arith.constant 0 : index
    %29 = vector.load %arg16[%c5, %c0_35] : memref<64x32xf32, #tpu.memory_space<vmem>>, vector<16x32xf32>
    %c6 = arith.constant 6 : index
    %c0_36 = arith.constant 0 : index
    %30 = vector.load %arg16[%c6, %c0_36] : memref<64x32xf32, #tpu.memory_space<vmem>>, vector<16x32xf32>
    %c7_37 = arith.constant 7 : index
    %c0_38 = arith.constant 0 : index
    %31 = vector.load %arg16[%c7_37, %c0_38] : memref<64x32xf32, #tpu.memory_space<vmem>>, vector<16x32xf32>
    %c8 = arith.constant 8 : index
    %c0_39 = arith.constant 0 : index
    %32 = vector.load %arg16[%c8, %c0_39] : memref<64x32xf32, #tpu.memory_space<vmem>>, vector<16x32xf32>
    %c9 = arith.constant 9 : index
    %c0_40 = arith.constant 0 : index
    %33 = vector.load %arg16[%c9, %c0_40] : memref<64x32xf32, #tpu.memory_space<vmem>>, vector<16x32xf32>
    %c10 = arith.constant 10 : index
    %c0_41 = arith.constant 0 : index
    %34 = vector.load %arg16[%c10, %c0_41] : memref<64x32xf32, #tpu.memory_space<vmem>>, vector<16x32xf32>
    %c11 = arith.constant 11 : index
    %c0_42 = arith.constant 0 : index
    %35 = vector.load %arg16[%c11, %c0_42] : memref<64x32xf32, #tpu.memory_space<vmem>>, vector<16x32xf32>
    %c12 = arith.constant 12 : index
    %c0_43 = arith.constant 0 : index
    %36 = vector.load %arg16[%c12, %c0_43] : memref<64x32xf32, #tpu.memory_space<vmem>>, vector<16x32xf32>
    %37 = tpu.concatenate %29, %30, %31, %32, %33, %34, %35, %36 in 1 : vector<16x32xf32>, vector<16x32xf32>, vector<16x32xf32>, vector<16x32xf32>, vector<16x32xf32>, vector<16x32xf32>, vector<16x32xf32>, vector<16x32xf32> -> vector<16x256xf32>
    %c0_44 = arith.constant 0 : index
    %c0_45 = arith.constant 0 : index
    %c0_46 = arith.constant 0 : index
    %38 = vector.load %arg4[%c0_44, %c0_45, %c0_46] : memref<5x256x128xf32, #tpu.memory_space<vmem>>, vector<1x256x128xf32>
    %39 = vector.shape_cast %38 : vector<1x256x128xf32> to vector<256x128xf32>
    %cst_47 = arith.constant dense<0.000000e+00> : vector<16x128xf32>
    %40 = tpu.matmul %37, %39, %cst_47 {dimension_numbers = #tpu.dot_dimension_numbers<[1], [0], [0], [1], [0, 0, 1, 1], [], []>} : vector<16x256xf32>, vector<256x128xf32>, vector<16x128xf32> -> vector<16x128xf32>
    %41 = arith.addf %28, %40 : vector<16x128xf32>
    %c13 = arith.constant 13 : index
    %c0_48 = arith.constant 0 : index
    %42 = vector.load %arg16[%c13, %c0_48] : memref<64x32xf32, #tpu.memory_space<vmem>>, vector<16x32xf32>
    %c14 = arith.constant 14 : index
    %c0_49 = arith.constant 0 : index
    %43 = vector.load %arg16[%c14, %c0_49] : memref<64x32xf32, #tpu.memory_space<vmem>>, vector<16x32xf32>
    %c15 = arith.constant 15 : index
    %c0_50 = arith.constant 0 : index
    %44 = vector.load %arg16[%c15, %c0_50] : memref<64x32xf32, #tpu.memory_space<vmem>>, vector<16x32xf32>
    %c16 = arith.constant 16 : index
    %c0_51 = arith.constant 0 : index
    %45 = vector.load %arg16[%c16, %c0_51] : memref<64x32xf32, #tpu.memory_space<vmem>>, vector<16x32xf32>
    %c17_52 = arith.constant 17 : index
    %c0_53 = arith.constant 0 : index
    %46 = vector.load %arg16[%c17_52, %c0_53] : memref<64x32xf32, #tpu.memory_space<vmem>>, vector<16x32xf32>
    %c18 = arith.constant 18 : index
    %c0_54 = arith.constant 0 : index
    %47 = vector.load %arg16[%c18, %c0_54] : memref<64x32xf32, #tpu.memory_space<vmem>>, vector<16x32xf32>
    %c19 = arith.constant 19 : index
    %c0_55 = arith.constant 0 : index
    %48 = vector.load %arg16[%c19, %c0_55] : memref<64x32xf32, #tpu.memory_space<vmem>>, vector<16x32xf32>
    %c20 = arith.constant 20 : index
    %c0_56 = arith.constant 0 : index
    %49 = vector.load %arg16[%c20, %c0_56] : memref<64x32xf32, #tpu.memory_space<vmem>>, vector<16x32xf32>
    %50 = tpu.concatenate %42, %43, %44, %45, %46, %47, %48, %49 in 1 : vector<16x32xf32>, vector<16x32xf32>, vector<16x32xf32>, vector<16x32xf32>, vector<16x32xf32>, vector<16x32xf32>, vector<16x32xf32>, vector<16x32xf32> -> vector<16x256xf32>
    %c1_57 = arith.constant 1 : index
    %c0_58 = arith.constant 0 : index
    %c0_59 = arith.constant 0 : index
    %51 = vector.load %arg4[%c1_57, %c0_58, %c0_59] : memref<5x256x128xf32, #tpu.memory_space<vmem>>, vector<1x256x128xf32>
    %52 = vector.shape_cast %51 : vector<1x256x128xf32> to vector<256x128xf32>
    %cst_60 = arith.constant dense<0.000000e+00> : vector<16x128xf32>
    %53 = tpu.matmul %50, %52, %cst_60 {dimension_numbers = #tpu.dot_dimension_numbers<[1], [0], [0], [1], [0, 0, 1, 1], [], []>} : vector<16x256xf32>, vector<256x128xf32>, vector<16x128xf32> -> vector<16x128xf32>
    %54 = arith.addf %41, %53 : vector<16x128xf32>
    %c21 = arith.constant 21 : index
    %c0_61 = arith.constant 0 : index
    %55 = vector.load %arg16[%c21, %c0_61] : memref<64x32xf32, #tpu.memory_space<vmem>>, vector<16x32xf32>
    %c22 = arith.constant 22 : index
    %c0_62 = arith.constant 0 : index
    %56 = vector.load %arg16[%c22, %c0_62] : memref<64x32xf32, #tpu.memory_space<vmem>>, vector<16x32xf32>
    %c23 = arith.constant 23 : index
    %c0_63 = arith.constant 0 : index
    %57 = vector.load %arg16[%c23, %c0_63] : memref<64x32xf32, #tpu.memory_space<vmem>>, vector<16x32xf32>
    %c24_64 = arith.constant 24 : index
    %c0_65 = arith.constant 0 : index
    %58 = vector.load %arg16[%c24_64, %c0_65] : memref<64x32xf32, #tpu.memory_space<vmem>>, vector<16x32xf32>
    %c25 = arith.constant 25 : index
    %c0_66 = arith.constant 0 : index
    %59 = vector.load %arg16[%c25, %c0_66] : memref<64x32xf32, #tpu.memory_space<vmem>>, vector<16x32xf32>
    %c26 = arith.constant 26 : index
    %c0_67 = arith.constant 0 : index
    %60 = vector.load %arg16[%c26, %c0_67] : memref<64x32xf32, #tpu.memory_space<vmem>>, vector<16x32xf32>
    %c27 = arith.constant 27 : index
    %c0_68 = arith.constant 0 : index
    %61 = vector.load %arg16[%c27, %c0_68] : memref<64x32xf32, #tpu.memory_space<vmem>>, vector<16x32xf32>
    %c28 = arith.constant 28 : index
    %c0_69 = arith.constant 0 : index
    %62 = vector.load %arg16[%c28, %c0_69] : memref<64x32xf32, #tpu.memory_space<vmem>>, vector<16x32xf32>
    %63 = tpu.concatenate %55, %56, %57, %58, %59, %60, %61, %62 in 1 : vector<16x32xf32>, vector<16x32xf32>, vector<16x32xf32>, vector<16x32xf32>, vector<16x32xf32>, vector<16x32xf32>, vector<16x32xf32>, vector<16x32xf32> -> vector<16x256xf32>
    %c2_70 = arith.constant 2 : index
    %c0_71 = arith.constant 0 : index
    %c0_72 = arith.constant 0 : index
    %64 = vector.load %arg4[%c2_70, %c0_71, %c0_72] : memref<5x256x128xf32, #tpu.memory_space<vmem>>, vector<1x256x128xf32>
    %65 = vector.shape_cast %64 : vector<1x256x128xf32> to vector<256x128xf32>
    %cst_73 = arith.constant dense<0.000000e+00> : vector<16x128xf32>
    %66 = tpu.matmul %63, %65, %cst_73 {dimension_numbers = #tpu.dot_dimension_numbers<[1], [0], [0], [1], [0, 0, 1, 1], [], []>} : vector<16x256xf32>, vector<256x128xf32>, vector<16x128xf32> -> vector<16x128xf32>
    %67 = arith.addf %54, %66 : vector<16x128xf32>
    %c29 = arith.constant 29 : index
    %c0_74 = arith.constant 0 : index
    %68 = vector.load %arg16[%c29, %c0_74] : memref<64x32xf32, #tpu.memory_space<vmem>>, vector<16x32xf32>
    %c30 = arith.constant 30 : index
    %c0_75 = arith.constant 0 : index
    %69 = vector.load %arg16[%c30, %c0_75] : memref<64x32xf32, #tpu.memory_space<vmem>>, vector<16x32xf32>
    %c31 = arith.constant 31 : index
    %c0_76 = arith.constant 0 : index
    %70 = vector.load %arg16[%c31, %c0_76] : memref<64x32xf32, #tpu.memory_space<vmem>>, vector<16x32xf32>
    %c32 = arith.constant 32 : index
    %c0_77 = arith.constant 0 : index
    %71 = vector.load %arg16[%c32, %c0_77] : memref<64x32xf32, #tpu.memory_space<vmem>>, vector<16x32xf32>
    %c33 = arith.constant 33 : index
    %c0_78 = arith.constant 0 : index
    %72 = vector.load %arg16[%c33, %c0_78] : memref<64x32xf32, #tpu.memory_space<vmem>>, vector<16x32xf32>
    %c34 = arith.constant 34 : index
    %c0_79 = arith.constant 0 : index
    %73 = vector.load %arg16[%c34, %c0_79] : memref<64x32xf32, #tpu.memory_space<vmem>>, vector<16x32xf32>
    %c35 = arith.constant 35 : index
    %c0_80 = arith.constant 0 : index
    %74 = vector.load %arg16[%c35, %c0_80] : memref<64x32xf32, #tpu.memory_space<vmem>>, vector<16x32xf32>
    %c36 = arith.constant 36 : index
    %c0_81 = arith.constant 0 : index
    %75 = vector.load %arg16[%c36, %c0_81] : memref<64x32xf32, #tpu.memory_space<vmem>>, vector<16x32xf32>
    %76 = tpu.concatenate %68, %69, %70, %71, %72, %73, %74, %75 in 1 : vector<16x32xf32>, vector<16x32xf32>, vector<16x32xf32>, vector<16x32xf32>, vector<16x32xf32>, vector<16x32xf32>, vector<16x32xf32>, vector<16x32xf32> -> vector<16x256xf32>
    %c3 = arith.constant 3 : index
    %c0_82 = arith.constant 0 : index
    %c0_83 = arith.constant 0 : index
    %77 = vector.load %arg4[%c3, %c0_82, %c0_83] : memref<5x256x128xf32, #tpu.memory_space<vmem>>, vector<1x256x128xf32>
    %78 = vector.shape_cast %77 : vector<1x256x128xf32> to vector<256x128xf32>
    %cst_84 = arith.constant dense<0.000000e+00> : vector<16x128xf32>
    %79 = tpu.matmul %76, %78, %cst_84 {dimension_numbers = #tpu.dot_dimension_numbers<[1], [0], [0], [1], [0, 0, 1, 1], [], []>} : vector<16x256xf32>, vector<256x128xf32>, vector<16x128xf32> -> vector<16x128xf32>
    %80 = arith.addf %67, %79 : vector<16x128xf32>
    %c37 = arith.constant 37 : index
    %c0_85 = arith.constant 0 : index
    %81 = vector.load %arg16[%c37, %c0_85] : memref<64x32xf32, #tpu.memory_space<vmem>>, vector<16x32xf32>
    %c38 = arith.constant 38 : index
    %c0_86 = arith.constant 0 : index
    %82 = vector.load %arg16[%c38, %c0_86] : memref<64x32xf32, #tpu.memory_space<vmem>>, vector<16x32xf32>
    %c39 = arith.constant 39 : index
    %c0_87 = arith.constant 0 : index
    %83 = vector.load %arg16[%c39, %c0_87] : memref<64x32xf32, #tpu.memory_space<vmem>>, vector<16x32xf32>
    %c40_88 = arith.constant 40 : index
    %c0_89 = arith.constant 0 : index
    %84 = vector.load %arg16[%c40_88, %c0_89] : memref<64x32xf32, #tpu.memory_space<vmem>>, vector<16x32xf32>
    %c41 = arith.constant 41 : index
    %c0_90 = arith.constant 0 : index
    %85 = vector.load %arg16[%c41, %c0_90] : memref<64x32xf32, #tpu.memory_space<vmem>>, vector<16x32xf32>
    %c42 = arith.constant 42 : index
    %c0_91 = arith.constant 0 : index
    %86 = vector.load %arg16[%c42, %c0_91] : memref<64x32xf32, #tpu.memory_space<vmem>>, vector<16x32xf32>
    %c43 = arith.constant 43 : index
    %c0_92 = arith.constant 0 : index
    %87 = vector.load %arg16[%c43, %c0_92] : memref<64x32xf32, #tpu.memory_space<vmem>>, vector<16x32xf32>
    %c44 = arith.constant 44 : index
    %c0_93 = arith.constant 0 : index
    %88 = vector.load %arg16[%c44, %c0_93] : memref<64x32xf32, #tpu.memory_space<vmem>>, vector<16x32xf32>
    %89 = tpu.concatenate %81, %82, %83, %84, %85, %86, %87, %88 in 1 : vector<16x32xf32>, vector<16x32xf32>, vector<16x32xf32>, vector<16x32xf32>, vector<16x32xf32>, vector<16x32xf32>, vector<16x32xf32>, vector<16x32xf32> -> vector<16x256xf32>
    %c4 = arith.constant 4 : index
    %c0_94 = arith.constant 0 : index
    %c0_95 = arith.constant 0 : index
    %90 = vector.load %arg4[%c4, %c0_94, %c0_95] : memref<5x256x128xf32, #tpu.memory_space<vmem>>, vector<1x256x128xf32>
    %91 = vector.shape_cast %90 : vector<1x256x128xf32> to vector<256x128xf32>
    %cst_96 = arith.constant dense<0.000000e+00> : vector<16x128xf32>
    %92 = tpu.matmul %89, %91, %cst_96 {dimension_numbers = #tpu.dot_dimension_numbers<[1], [0], [0], [1], [0, 0, 1, 1], [], []>} : vector<16x256xf32>, vector<256x128xf32>, vector<16x128xf32> -> vector<16x128xf32>
    %93 = arith.addf %80, %92 : vector<16x128xf32>
    %94 = vector.broadcast %23 : vector<1x128xf32> to vector<16x128xf32>
    %95 = arith.mulf %93, %94 : vector<16x128xf32>
    %96 = vector.broadcast %25 : vector<1x128xf32> to vector<16x128xf32>
    %97 = arith.addf %95, %96 : vector<16x128xf32>
    %cst_97 = arith.constant 0.000000e+00 : f32
    %98 = vector.broadcast %cst_97 : f32 to vector<16x128xf32>
    %99 = arith.maximumf %97, %98 : vector<16x128xf32>
    %c8_98 = arith.constant 8 : index
    %c0_99 = arith.constant 0 : index
    %100 = vector.load %arg17[%c8_98, %c0_99] : memref<32x128xf32, #tpu.memory_space<vmem>>, vector<16x128xf32>
    tpu.vector_store %arg17[%c8_98, %c0_99], %99 {strides = array<i32>} : memref<32x128xf32, #tpu.memory_space<vmem>>, vector<16x128xf32>,
    %c8_100 = arith.constant 8 : index
    %c0_101 = arith.constant 0 : index
    %101 = vector.load %arg17[%c8_100, %c0_101] : memref<32x128xf32, #tpu.memory_space<vmem>>, vector<16x128xf32>
    %c7_102 = arith.constant 7 : index
    %c0_103 = arith.constant 0 : index
    %102 = vector.load %arg17[%c7_102, %c0_103] : memref<32x128xf32, #tpu.memory_space<vmem>>, vector<16x128xf32>
    %103 = arith.maximumf %102, %101 : vector<16x128xf32>
    %c9_104 = arith.constant 9 : index
    %c0_105 = arith.constant 0 : index
    %104 = vector.load %arg17[%c9_104, %c0_105] : memref<32x128xf32, #tpu.memory_space<vmem>>, vector<16x128xf32>
    %105 = arith.maximumf %103, %104 : vector<16x128xf32>
    %c0_106 = arith.constant 0 : index
    %c0_107 = arith.constant 0 : index
    %c0_108 = arith.constant 0 : index
    %106 = vector.load %arg5[%c0_106, %c0_107, %c0_108] : memref<5x128x32xf32, #tpu.memory_space<vmem>>, vector<1x128x32xf32>
    %107 = vector.shape_cast %106 : vector<1x128x32xf32> to vector<128x32xf32>
    %c0_109 = arith.constant 0 : index
    %c0_110 = arith.constant 0 : index
    %c0_111 = arith.constant 0 : index
    %108 = vector.load %arg6[%c0_109, %c0_110, %c0_111] : memref<5x128x128xf32, #tpu.memory_space<vmem>>, vector<1x128x128xf32>
    %109 = vector.shape_cast %108 : vector<1x128x128xf32> to vector<128x128xf32>
    %c1_112 = arith.constant 1 : index
    %c0_113 = arith.constant 0 : index
    %c0_114 = arith.constant 0 : index
    %110 = vector.load %arg8[%c1_112, %c0_113, %c0_114] : memref<6x1x128xf32, #tpu.memory_space<vmem>>, vector<1x1x128xf32>
    %111 = vector.shape_cast %110 : vector<1x1x128xf32> to vector<1x128xf32>
    %c1_115 = arith.constant 1 : index
    %c0_116 = arith.constant 0 : index
    %c0_117 = arith.constant 0 : index
    %112 = vector.load %arg9[%c1_115, %c0_116, %c0_117] : memref<6x1x128xf32, #tpu.memory_space<vmem>>, vector<1x1x128xf32>
    %113 = vector.shape_cast %112 : vector<1x1x128xf32> to vector<1x128xf32>
    %cst_118 = arith.constant dense<0.000000e+00> : vector<16x32xf32>
    %114 = tpu.matmul %101, %107, %cst_118 {dimension_numbers = #tpu.dot_dimension_numbers<[1], [0], [0], [1], [0, 0, 1, 1], [], []>} : vector<16x128xf32>, vector<128x32xf32>, vector<16x32xf32> -> vector<16x32xf32>
    %c24_119 = arith.constant 24 : index
    %c0_120 = arith.constant 0 : index
    %115 = vector.load %arg16[%c24_119, %c0_120] : memref<64x32xf32, #tpu.memory_space<vmem>>, vector<16x32xf32>
    tpu.vector_store %arg16[%c24_119, %c0_120], %114 {strides = array<i32>} : memref<64x32xf32, #tpu.memory_space<vmem>>, vector<16x32xf32>,
    %cst_121 = arith.constant dense<0.000000e+00> : vector<16x128xf32>
    %116 = tpu.matmul %105, %109, %cst_121 {dimension_numbers = #tpu.dot_dimension_numbers<[1], [0], [0], [1], [0, 0, 1, 1], [], []>} : vector<16x128xf32>, vector<128x128xf32>, vector<16x128xf32> -> vector<16x128xf32>
    %c5_122 = arith.constant 5 : index
    %c0_123 = arith.constant 0 : index
    %117 = vector.load %arg16[%c5_122, %c0_123] : memref<64x32xf32, #tpu.memory_space<vmem>>, vector<16x32xf32>
    %c6_124 = arith.constant 6 : index
    %c0_125 = arith.constant 0 : index
    %118 = vector.load %arg16[%c6_124, %c0_125] : memref<64x32xf32, #tpu.memory_space<vmem>>, vector<16x32xf32>
    %c7_126 = arith.constant 7 : index
    %c0_127 = arith.constant 0 : index
    %119 = vector.load %arg16[%c7_126, %c0_127] : memref<64x32xf32, #tpu.memory_space<vmem>>, vector<16x32xf32>
    %c8_128 = arith.constant 8 : index
    %c0_129 = arith.constant 0 : index
    %120 = vector.load %arg16[%c8_128, %c0_129] : memref<64x32xf32, #tpu.memory_space<vmem>>, vector<16x32xf32>
    %c9_130 = arith.constant 9 : index
    %c0_131 = arith.constant 0 : index
    %121 = vector.load %arg16[%c9_130, %c0_131] : memref<64x32xf32, #tpu.memory_space<vmem>>, vector<16x32xf32>
    %c10_132 = arith.constant 10 : index
    %c0_133 = arith.constant 0 : index
    %122 = vector.load %arg16[%c10_132, %c0_133] : memref<64x32xf32, #tpu.memory_space<vmem>>, vector<16x32xf32>
    %c11_134 = arith.constant 11 : index
    %c0_135 = arith.constant 0 : index
    %123 = vector.load %arg16[%c11_134, %c0_135] : memref<64x32xf32, #tpu.memory_space<vmem>>, vector<16x32xf32>
    %c12_136 = arith.constant 12 : index
    %c0_137 = arith.constant 0 : index
    %124 = vector.load %arg16[%c12_136, %c0_137] : memref<64x32xf32, #tpu.memory_space<vmem>>, vector<16x32xf32>
    %125 = tpu.concatenate %117, %118, %119, %120, %121, %122, %123, %124 in 1 : vector<16x32xf32>, vector<16x32xf32>, vector<16x32xf32>, vector<16x32xf32>, vector<16x32xf32>, vector<16x32xf32>, vector<16x32xf32>, vector<16x32xf32> -> vector<16x256xf32>
    %c0_138 = arith.constant 0 : index
    %c0_139 = arith.constant 0 : index
    %c0_140 = arith.constant 0 : index
    %126 = vector.load %arg7[%c0_138, %c0_139, %c0_140] : memref<25x256x128xf32, #tpu.memory_space<vmem>>, vector<1x256x128xf32>
    %127 = vector.shape_cast %126 : vector<1x256x128xf32> to vector<256x128xf32>
    %cst_141 = arith.constant dense<0.000000e+00> : vector<16x128xf32>
    %128 = tpu.matmul %125, %127, %cst_141 {dimension_numbers = #tpu.dot_dimension_numbers<[1], [0], [0], [1], [0, 0, 1, 1], [], []>} : vector<16x256xf32>, vector<256x128xf32>, vector<16x128xf32> -> vector<16x128xf32>
    %129 = arith.addf %116, %128 : vector<16x128xf32>
    %c13_142 = arith.constant 13 : index
    %c0_143 = arith.constant 0 : index
    %130 = vector.load %arg16[%c13_142, %c0_143] : memref<64x32xf32, #tpu.memory_space<vmem>>, vector<16x32xf32>
    %c14_144 = arith.constant 14 : index
    %c0_145 = arith.constant 0 : index
    %131 = vector.load %arg16[%c14_144, %c0_145] : memref<64x32xf32, #tpu.memory_space<vmem>>, vector<16x32xf32>
    %c15_146 = arith.constant 15 : index
    %c0_147 = arith.constant 0 : index
    %132 = vector.load %arg16[%c15_146, %c0_147] : memref<64x32xf32, #tpu.memory_space<vmem>>, vector<16x32xf32>
    %c16_148 = arith.constant 16 : index
    %c0_149 = arith.constant 0 : index
    %133 = vector.load %arg16[%c16_148, %c0_149] : memref<64x32xf32, #tpu.memory_space<vmem>>, vector<16x32xf32>
    %c17_150 = arith.constant 17 : index
    %c0_151 = arith.constant 0 : index
    %134 = vector.load %arg16[%c17_150, %c0_151] : memref<64x32xf32, #tpu.memory_space<vmem>>, vector<16x32xf32>
    %c18_152 = arith.constant 18 : index
    %c0_153 = arith.constant 0 : index
    %135 = vector.load %arg16[%c18_152, %c0_153] : memref<64x32xf32, #tpu.memory_space<vmem>>, vector<16x32xf32>
    %c19_154 = arith.constant 19 : index
    %c0_155 = arith.constant 0 : index
    %136 = vector.load %arg16[%c19_154, %c0_155] : memref<64x32xf32, #tpu.memory_space<vmem>>, vector<16x32xf32>
    %c20_156 = arith.constant 20 : index
    %c0_157 = arith.constant 0 : index
    %137 = vector.load %arg16[%c20_156, %c0_157] : memref<64x32xf32, #tpu.memory_space<vmem>>, vector<16x32xf32>
    %138 = tpu.concatenate %130, %131, %132, %133, %134, %135, %136, %137 in 1 : vector<16x32xf32>, vector<16x32xf32>, vector<16x32xf32>, vector<16x32xf32>, vector<16x32xf32>, vector<16x32xf32>, vector<16x32xf32>, vector<16x32xf32> -> vector<16x256xf32>
    %c1_158 = arith.constant 1 : index
    %c0_159 = arith.constant 0 : index
    %c0_160 = arith.constant 0 : index
    %139 = vector.load %arg7[%c1_158, %c0_159, %c0_160] : memref<25x256x128xf32, #tpu.memory_space<vmem>>, vector<1x256x128xf32>
    %140 = vector.shape_cast %139 : vector<1x256x128xf32> to vector<256x128xf32>
    %cst_161 = arith.constant dense<0.000000e+00> : vector<16x128xf32>
    %141 = tpu.matmul %138, %140, %cst_161 {dimension_numbers = #tpu.dot_dimension_numbers<[1], [0], [0], [1], [0, 0, 1, 1], [], []>} : vector<16x256xf32>, vector<256x128xf32>, vector<16x128xf32> -> vector<16x128xf32>
    %142 = arith.addf %129, %141 : vector<16x128xf32>
    %c21_162 = arith.constant 21 : index
    %c0_163 = arith.constant 0 : index
    %143 = vector.load %arg16[%c21_162, %c0_163] : memref<64x32xf32, #tpu.memory_space<vmem>>, vector<16x32xf32>
    %c22_164 = arith.constant 22 : index
    %c0_165 = arith.constant 0 : index
    %144 = vector.load %arg16[%c22_164, %c0_165] : memref<64x32xf32, #tpu.memory_space<vmem>>, vector<16x32xf32>
    %c23_166 = arith.constant 23 : index
    %c0_167 = arith.constant 0 : index
    %145 = vector.load %arg16[%c23_166, %c0_167] : memref<64x32xf32, #tpu.memory_space<vmem>>, vector<16x32xf32>
    %c24_168 = arith.constant 24 : index
    %c0_169 = arith.constant 0 : index
    %146 = vector.load %arg16[%c24_168, %c0_169] : memref<64x32xf32, #tpu.memory_space<vmem>>, vector<16x32xf32>
    %c25_170 = arith.constant 25 : index
    %c0_171 = arith.constant 0 : index
    %147 = vector.load %arg16[%c25_170, %c0_171] : memref<64x32xf32, #tpu.memory_space<vmem>>, vector<16x32xf32>
    %c26_172 = arith.constant 26 : index
    %c0_173 = arith.constant 0 : index
    %148 = vector.load %arg16[%c26_172, %c0_173] : memref<64x32xf32, #tpu.memory_space<vmem>>, vector<16x32xf32>
    %c27_174 = arith.constant 27 : index
    %c0_175 = arith.constant 0 : index
    %149 = vector.load %arg16[%c27_174, %c0_175] : memref<64x32xf32, #tpu.memory_space<vmem>>, vector<16x32xf32>
    %c28_176 = arith.constant 28 : index
    %c0_177 = arith.constant 0 : index
    %150 = vector.load %arg16[%c28_176, %c0_177] : memref<64x32xf32, #tpu.memory_space<vmem>>, vector<16x32xf32>
    %151 = tpu.concatenate %143, %144, %145, %146, %147, %148, %149, %150 in 1 : vector<16x32xf32>, vector<16x32xf32>, vector<16x32xf32>, vector<16x32xf32>, vector<16x32xf32>, vector<16x32xf32>, vector<16x32xf32>, vector<16x32xf32> -> vector<16x256xf32>
    %c2_178 = arith.constant 2 : index
    %c0_179 = arith.constant 0 : index
    %c0_180 = arith.constant 0 : index
    %152 = vector.load %arg7[%c2_178, %c0_179, %c0_180] : memref<25x256x128xf32, #tpu.memory_space<vmem>>, vector<1x256x128xf32>
    %153 = vector.shape_cast %152 : vector<1x256x128xf32> to vector<256x128xf32>
    %cst_181 = arith.constant dense<0.000000e+00> : vector<16x128xf32>
    %154 = tpu.matmul %151, %153, %cst_181 {dimension_numbers = #tpu.dot_dimension_numbers<[1], [0], [0], [1], [0, 0, 1, 1], [], []>} : vector<16x256xf32>, vector<256x128xf32>, vector<16x128xf32> -> vector<16x128xf32>
    %155 = arith.addf %142, %154 : vector<16x128xf32>
    %c29_182 = arith.constant 29 : index
    %c0_183 = arith.constant 0 : index
    %156 = vector.load %arg16[%c29_182, %c0_183] : memref<64x32xf32, #tpu.memory_space<vmem>>, vector<16x32xf32>
    %c30_184 = arith.constant 30 : index
    %c0_185 = arith.constant 0 : index
    %157 = vector.load %arg16[%c30_184, %c0_185] : memref<64x32xf32, #tpu.memory_space<vmem>>, vector<16x32xf32>
    %c31_186 = arith.constant 31 : index
    %c0_187 = arith.constant 0 : index
    %158 = vector.load %arg16[%c31_186, %c0_187] : memref<64x32xf32, #tpu.memory_space<vmem>>, vector<16x32xf32>
    %c32_188 = arith.constant 32 : index
    %c0_189 = arith.constant 0 : index
    %159 = vector.load %arg16[%c32_188, %c0_189] : memref<64x32xf32, #tpu.memory_space<vmem>>, vector<16x32xf32>
    %c33_190 = arith.constant 33 : index
    %c0_191 = arith.constant 0 : index
    %160 = vector.load %arg16[%c33_190, %c0_191] : memref<64x32xf32, #tpu.memory_space<vmem>>, vector<16x32xf32>
    %c34_192 = arith.constant 34 : index
    %c0_193 = arith.constant 0 : index
    %161 = vector.load %arg16[%c34_192, %c0_193] : memref<64x32xf32, #tpu.memory_space<vmem>>, vector<16x32xf32>
    %c35_194 = arith.constant 35 : index
    %c0_195 = arith.constant 0 : index
    %162 = vector.load %arg16[%c35_194, %c0_195] : memref<64x32xf32, #tpu.memory_space<vmem>>, vector<16x32xf32>
    %c36_196 = arith.constant 36 : index
    %c0_197 = arith.constant 0 : index
    %163 = vector.load %arg16[%c36_196, %c0_197] : memref<64x32xf32, #tpu.memory_space<vmem>>, vector<16x32xf32>
    %164 = tpu.concatenate %156, %157, %158, %159, %160, %161, %162, %163 in 1 : vector<16x32xf32>, vector<16x32xf32>, vector<16x32xf32>, vector<16x32xf32>, vector<16x32xf32>, vector<16x32xf32>, vector<16x32xf32>, vector<16x32xf32> -> vector<16x256xf32>
    %c3_198 = arith.constant 3 : index
    %c0_199 = arith.constant 0 : index
    %c0_200 = arith.constant 0 : index
    %165 = vector.load %arg7[%c3_198, %c0_199, %c0_200] : memref<25x256x128xf32, #tpu.memory_space<vmem>>, vector<1x256x128xf32>
    %166 = vector.shape_cast %165 : vector<1x256x128xf32> to vector<256x128xf32>
    %cst_201 = arith.constant dense<0.000000e+00> : vector<16x128xf32>
    %167 = tpu.matmul %164, %166, %cst_201 {dimension_numbers = #tpu.dot_dimension_numbers<[1], [0], [0], [1], [0, 0, 1, 1], [], []>} : vector<16x256xf32>, vector<256x128xf32>, vector<16x128xf32> -> vector<16x128xf32>
    %168 = arith.addf %155, %167 : vector<16x128xf32>
    %c37_202 = arith.constant 37 : index
    %c0_203 = arith.constant 0 : index
    %169 = vector.load %arg16[%c37_202, %c0_203] : memref<64x32xf32, #tpu.memory_space<vmem>>, vector<16x32xf32>
    %c38_204 = arith.constant 38 : index
    %c0_205 = arith.constant 0 : index
    %170 = vector.load %arg16[%c38_204, %c0_205] : memref<64x32xf32, #tpu.memory_space<vmem>>, vector<16x32xf32>
    %c39_206 = arith.constant 39 : index
    %c0_207 = arith.constant 0 : index
    %171 = vector.load %arg16[%c39_206, %c0_207] : memref<64x32xf32, #tpu.memory_space<vmem>>, vector<16x32xf32>
    %c40_208 = arith.constant 40 : index
    %c0_209 = arith.constant 0 : index
    %172 = vector.load %arg16[%c40_208, %c0_209] : memref<64x32xf32, #tpu.memory_space<vmem>>, vector<16x32xf32>
    %c41_210 = arith.constant 41 : index
    %c0_211 = arith.constant 0 : index
    %173 = vector.load %arg16[%c41_210, %c0_211] : memref<64x32xf32, #tpu.memory_space<vmem>>, vector<16x32xf32>
    %c42_212 = arith.constant 42 : index
    %c0_213 = arith.constant 0 : index
    %174 = vector.load %arg16[%c42_212, %c0_213] : memref<64x32xf32, #tpu.memory_space<vmem>>, vector<16x32xf32>
    %c43_214 = arith.constant 43 : index
    %c0_215 = arith.constant 0 : index
    %175 = vector.load %arg16[%c43_214, %c0_215] : memref<64x32xf32, #tpu.memory_space<vmem>>, vector<16x32xf32>
    %c44_216 = arith.constant 44 : index
    %c0_217 = arith.constant 0 : index
    %176 = vector.load %arg16[%c44_216, %c0_217] : memref<64x32xf32, #tpu.memory_space<vmem>>, vector<16x32xf32>
    %177 = tpu.concatenate %169, %170, %171, %172, %173, %174, %175, %176 in 1 : vector<16x32xf32>, vector<16x32xf32>, vector<16x32xf32>, vector<16x32xf32>, vector<16x32xf32>, vector<16x32xf32>, vector<16x32xf32>, vector<16x32xf32> -> vector<16x256xf32>
    %c4_218 = arith.constant 4 : index
    %c0_219 = arith.constant 0 : index
    %c0_220 = arith.constant 0 : index
    %178 = vector.load %arg7[%c4_218, %c0_219, %c0_220] : memref<25x256x128xf32, #tpu.memory_space<vmem>>, vector<1x256x128xf32>
    %179 = vector.shape_cast %178 : vector<1x256x128xf32> to vector<256x128xf32>
    %cst_221 = arith.constant dense<0.000000e+00> : vector<16x128xf32>
    %180 = tpu.matmul %177, %179, %cst_221 {dimension_numbers = #tpu.dot_dimension_numbers<[1], [0], [0], [1], [0, 0, 1, 1], [], []>} : vector<16x256xf32>, vector<256x128xf32>, vector<16x128xf32> -> vector<16x128xf32>
    %181 = arith.addf %168, %180 : vector<16x128xf32>
    %182 = vector.broadcast %111 : vector<1x128xf32> to vector<16x128xf32>
    %183 = arith.mulf %181, %182 : vector<16x128xf32>
    %184 = vector.broadcast %113 : vector<1x128xf32> to vector<16x128xf32>
    %185 = arith.addf %183, %184 : vector<16x128xf32>
    %cst_222 = arith.constant 0.000000e+00 : f32
    %186 = vector.broadcast %cst_222 : f32 to vector<16x128xf32>
    %187 = arith.maximumf %185, %186 : vector<16x128xf32>
    %c8_223 = arith.constant 8 : index
    %c0_224 = arith.constant 0 : index
    %188 = vector.load %arg17[%c8_223, %c0_224] : memref<32x128xf32, #tpu.memory_space<vmem>>, vector<16x128xf32>
    tpu.vector_store %arg17[%c8_223, %c0_224], %187 {strides = array<i32>} : memref<32x128xf32, #tpu.memory_space<vmem>>, vector<16x128xf32>,
    %c8_225 = arith.constant 8 : index
    %c0_226 = arith.constant 0 : index
    %189 = vector.load %arg17[%c8_225, %c0_226] : memref<32x128xf32, #tpu.memory_space<vmem>>, vector<16x128xf32>
    %c7_227 = arith.constant 7 : index
    %c0_228 = arith.constant 0 : index
    %190 = vector.load %arg17[%c7_227, %c0_228] : memref<32x128xf32, #tpu.memory_space<vmem>>, vector<16x128xf32>
    %191 = arith.maximumf %190, %189 : vector<16x128xf32>
    %c9_229 = arith.constant 9 : index
    %c0_230 = arith.constant 0 : index
    %192 = vector.load %arg17[%c9_229, %c0_230] : memref<32x128xf32, #tpu.memory_space<vmem>>, vector<16x128xf32>
    %193 = arith.maximumf %191, %192 : vector<16x128xf32>
    %c1_231 = arith.constant 1 : index
    %c0_232 = arith.constant 0 : index
    %c0_233 = arith.constant 0 : index
    %194 = vector.load %arg5[%c1_231, %c0_232, %c0_233] : memref<5x128x32xf32, #tpu.memory_space<vmem>>, vector<1x128x32xf32>
    %195 = vector.shape_cast %194 : vector<1x128x32xf32> to vector<128x32xf32>
    %c1_234 = arith.constant 1 : index
    %c0_235 = arith.constant 0 : index
    %c0_236 = arith.constant 0 : index
    %196 = vector.load %arg6[%c1_234, %c0_235, %c0_236] : memref<5x128x128xf32, #tpu.memory_space<vmem>>, vector<1x128x128xf32>
    %197 = vector.shape_cast %196 : vector<1x128x128xf32> to vector<128x128xf32>
    %c2_237 = arith.constant 2 : index
    %c0_238 = arith.constant 0 : index
    %c0_239 = arith.constant 0 : index
    %198 = vector.load %arg8[%c2_237, %c0_238, %c0_239] : memref<6x1x128xf32, #tpu.memory_space<vmem>>, vector<1x1x128xf32>
    %199 = vector.shape_cast %198 : vector<1x1x128xf32> to vector<1x128xf32>
    %c2_240 = arith.constant 2 : index
    %c0_241 = arith.constant 0 : index
    %c0_242 = arith.constant 0 : index
    %200 = vector.load %arg9[%c2_240, %c0_241, %c0_242] : memref<6x1x128xf32, #tpu.memory_space<vmem>>, vector<1x1x128xf32>
    %201 = vector.shape_cast %200 : vector<1x1x128xf32> to vector<1x128xf32>
    %cst_243 = arith.constant dense<0.000000e+00> : vector<16x32xf32>
    %202 = tpu.matmul %189, %195, %cst_243 {dimension_numbers = #tpu.dot_dimension_numbers<[1], [0], [0], [1], [0, 0, 1, 1], [], []>} : vector<16x128xf32>, vector<128x32xf32>, vector<16x32xf32> -> vector<16x32xf32>
    %c24_244 = arith.constant 24 : index
    %c0_245 = arith.constant 0 : index
    %203 = vector.load %arg16[%c24_244, %c0_245] : memref<64x32xf32, #tpu.memory_space<vmem>>, vector<16x32xf32>
    tpu.vector_store %arg16[%c24_244, %c0_245], %202 {strides = array<i32>} : memref<64x32xf32, #tpu.memory_space<vmem>>, vector<16x32xf32>,
    %cst_246 = arith.constant dense<0.000000e+00> : vector<16x128xf32>
    %204 = tpu.matmul %193, %197, %cst_246 {dimension_numbers = #tpu.dot_dimension_numbers<[1], [0], [0], [1], [0, 0, 1, 1], [], []>} : vector<16x128xf32>, vector<128x128xf32>, vector<16x128xf32> -> vector<16x128xf32>
    %c5_247 = arith.constant 5 : index
    %c0_248 = arith.constant 0 : index
    %205 = vector.load %arg16[%c5_247, %c0_248] : memref<64x32xf32, #tpu.memory_space<vmem>>, vector<16x32xf32>
    %c6_249 = arith.constant 6 : index
    %c0_250 = arith.constant 0 : index
    %206 = vector.load %arg16[%c6_249, %c0_250] : memref<64x32xf32, #tpu.memory_space<vmem>>, vector<16x32xf32>
    %c7_251 = arith.constant 7 : index
    %c0_252 = arith.constant 0 : index
    %207 = vector.load %arg16[%c7_251, %c0_252] : memref<64x32xf32, #tpu.memory_space<vmem>>, vector<16x32xf32>
    %c8_253 = arith.constant 8 : index
    %c0_254 = arith.constant 0 : index
    %208 = vector.load %arg16[%c8_253, %c0_254] : memref<64x32xf32, #tpu.memory_space<vmem>>, vector<16x32xf32>
    %c9_255 = arith.constant 9 : index
    %c0_256 = arith.constant 0 : index
    %209 = vector.load %arg16[%c9_255, %c0_256] : memref<64x32xf32, #tpu.memory_space<vmem>>, vector<16x32xf32>
    %c10_257 = arith.constant 10 : index
    %c0_258 = arith.constant 0 : index
    %210 = vector.load %arg16[%c10_257, %c0_258] : memref<64x32xf32, #tpu.memory_space<vmem>>, vector<16x32xf32>
    %c11_259 = arith.constant 11 : index
    %c0_260 = arith.constant 0 : index
    %211 = vector.load %arg16[%c11_259, %c0_260] : memref<64x32xf32, #tpu.memory_space<vmem>>, vector<16x32xf32>
    %c12_261 = arith.constant 12 : index
    %c0_262 = arith.constant 0 : index
    %212 = vector.load %arg16[%c12_261, %c0_262] : memref<64x32xf32, #tpu.memory_space<vmem>>, vector<16x32xf32>
    %213 = tpu.concatenate %205, %206, %207, %208, %209, %210, %211, %212 in 1 : vector<16x32xf32>, vector<16x32xf32>, vector<16x32xf32>, vector<16x32xf32>, vector<16x32xf32>, vector<16x32xf32>, vector<16x32xf32>, vector<16x32xf32> -> vector<16x256xf32>
    %c5_263 = arith.constant 5 : index
    %c0_264 = arith.constant 0 : index
    %c0_265 = arith.constant 0 : index
    %214 = vector.load %arg7[%c5_263, %c0_264, %c0_265] : memref<25x256x128xf32, #tpu.memory_space<vmem>>, vector<1x256x128xf32>
    %215 = vector.shape_cast %214 : vector<1x256x128xf32> to vector<256x128xf32>
    %cst_266 = arith.constant dense<0.000000e+00> : vector<16x128xf32>
    %216 = tpu.matmul %213, %215, %cst_266 {dimension_numbers = #tpu.dot_dimension_numbers<[1], [0], [0], [1], [0, 0, 1, 1], [], []>} : vector<16x256xf32>, vector<256x128xf32>, vector<16x128xf32> -> vector<16x128xf32>
    %217 = arith.addf %204, %216 : vector<16x128xf32>
    %c13_267 = arith.constant 13 : index
    %c0_268 = arith.constant 0 : index
    %218 = vector.load %arg16[%c13_267, %c0_268] : memref<64x32xf32, #tpu.memory_space<vmem>>, vector<16x32xf32>
    %c14_269 = arith.constant 14 : index
    %c0_270 = arith.constant 0 : index
    %219 = vector.load %arg16[%c14_269, %c0_270] : memref<64x32xf32, #tpu.memory_space<vmem>>, vector<16x32xf32>
    %c15_271 = arith.constant 15 : index
    %c0_272 = arith.constant 0 : index
    %220 = vector.load %arg16[%c15_271, %c0_272] : memref<64x32xf32, #tpu.memory_space<vmem>>, vector<16x32xf32>
    %c16_273 = arith.constant 16 : index
    %c0_274 = arith.constant 0 : index
    %221 = vector.load %arg16[%c16_273, %c0_274] : memref<64x32xf32, #tpu.memory_space<vmem>>, vector<16x32xf32>
    %c17_275 = arith.constant 17 : index
    %c0_276 = arith.constant 0 : index
    %222 = vector.load %arg16[%c17_275, %c0_276] : memref<64x32xf32, #tpu.memory_space<vmem>>, vector<16x32xf32>
    %c18_277 = arith.constant 18 : index
    %c0_278 = arith.constant 0 : index
    %223 = vector.load %arg16[%c18_277, %c0_278] : memref<64x32xf32, #tpu.memory_space<vmem>>, vector<16x32xf32>
    %c19_279 = arith.constant 19 : index
    %c0_280 = arith.constant 0 : index
    %224 = vector.load %arg16[%c19_279, %c0_280] : memref<64x32xf32, #tpu.memory_space<vmem>>, vector<16x32xf32>
    %c20_281 = arith.constant 20 : index
    %c0_282 = arith.constant 0 : index
    %225 = vector.load %arg16[%c20_281, %c0_282] : memref<64x32xf32, #tpu.memory_space<vmem>>, vector<16x32xf32>
    %226 = tpu.concatenate %218, %219, %220, %221, %222, %223, %224, %225 in 1 : vector<16x32xf32>, vector<16x32xf32>, vector<16x32xf32>, vector<16x32xf32>, vector<16x32xf32>, vector<16x32xf32>, vector<16x32xf32>, vector<16x32xf32> -> vector<16x256xf32>
    %c6_283 = arith.constant 6 : index
    %c0_284 = arith.constant 0 : index
    %c0_285 = arith.constant 0 : index
    %227 = vector.load %arg7[%c6_283, %c0_284, %c0_285] : memref<25x256x128xf32, #tpu.memory_space<vmem>>, vector<1x256x128xf32>
    %228 = vector.shape_cast %227 : vector<1x256x128xf32> to vector<256x128xf32>
    %cst_286 = arith.constant dense<0.000000e+00> : vector<16x128xf32>
    %229 = tpu.matmul %226, %228, %cst_286 {dimension_numbers = #tpu.dot_dimension_numbers<[1], [0], [0], [1], [0, 0, 1, 1], [], []>} : vector<16x256xf32>, vector<256x128xf32>, vector<16x128xf32> -> vector<16x128xf32>
    %230 = arith.addf %217, %229 : vector<16x128xf32>
    %c21_287 = arith.constant 21 : index
    %c0_288 = arith.constant 0 : index
    %231 = vector.load %arg16[%c21_287, %c0_288] : memref<64x32xf32, #tpu.memory_space<vmem>>, vector<16x32xf32>
    %c22_289 = arith.constant 22 : index
    %c0_290 = arith.constant 0 : index
    %232 = vector.load %arg16[%c22_289, %c0_290] : memref<64x32xf32, #tpu.memory_space<vmem>>, vector<16x32xf32>
    %c23_291 = arith.constant 23 : index
    %c0_292 = arith.constant 0 : index
    %233 = vector.load %arg16[%c23_291, %c0_292] : memref<64x32xf32, #tpu.memory_space<vmem>>, vector<16x32xf32>
    %c24_293 = arith.constant 24 : index
    %c0_294 = arith.constant 0 : index
    %234 = vector.load %arg16[%c24_293, %c0_294] : memref<64x32xf32, #tpu.memory_space<vmem>>, vector<16x32xf32>
    %c25_295 = arith.constant 25 : index
    %c0_296 = arith.constant 0 : index
    %235 = vector.load %arg16[%c25_295, %c0_296] : memref<64x32xf32, #tpu.memory_space<vmem>>, vector<16x32xf32>
    %c26_297 = arith.constant 26 : index
    %c0_298 = arith.constant 0 : index
    %236 = vector.load %arg16[%c26_297, %c0_298] : memref<64x32xf32, #tpu.memory_space<vmem>>, vector<16x32xf32>
    %c27_299 = arith.constant 27 : index
    %c0_300 = arith.constant 0 : index
    %237 = vector.load %arg16[%c27_299, %c0_300] : memref<64x32xf32, #tpu.memory_space<vmem>>, vector<16x32xf32>
    %c28_301 = arith.constant 28 : index
    %c0_302 = arith.constant 0 : index
    %238 = vector.load %arg16[%c28_301, %c0_302] : memref<64x32xf32, #tpu.memory_space<vmem>>, vector<16x32xf32>
    %239 = tpu.concatenate %231, %232, %233, %234, %235, %236, %237, %238 in 1 : vector<16x32xf32>, vector<16x32xf32>, vector<16x32xf32>, vector<16x32xf32>, vector<16x32xf32>, vector<16x32xf32>, vector<16x32xf32>, vector<16x32xf32> -> vector<16x256xf32>
    %c7_303 = arith.constant 7 : index
    %c0_304 = arith.constant 0 : index
    %c0_305 = arith.constant 0 : index
    %240 = vector.load %arg7[%c7_303, %c0_304, %c0_305] : memref<25x256x128xf32, #tpu.memory_space<vmem>>, vector<1x256x128xf32>
    %241 = vector.shape_cast %240 : vector<1x256x128xf32> to vector<256x128xf32>
    %cst_306 = arith.constant dense<0.000000e+00> : vector<16x128xf32>
    %242 = tpu.matmul %239, %241, %cst_306 {dimension_numbers = #tpu.dot_dimension_numbers<[1], [0], [0], [1], [0, 0, 1, 1], [], []>} : vector<16x256xf32>, vector<256x128xf32>, vector<16x128xf32> -> vector<16x128xf32>
    %243 = arith.addf %230, %242 : vector<16x128xf32>
    %c29_307 = arith.constant 29 : index
    %c0_308 = arith.constant 0 : index
    %244 = vector.load %arg16[%c29_307, %c0_308] : memref<64x32xf32, #tpu.memory_space<vmem>>, vector<16x32xf32>
    %c30_309 = arith.constant 30 : index
    %c0_310 = arith.constant 0 : index
    %245 = vector.load %arg16[%c30_309, %c0_310] : memref<64x32xf32, #tpu.memory_space<vmem>>, vector<16x32xf32>
    %c31_311 = arith.constant 31 : index
    %c0_312 = arith.constant 0 : index
    %246 = vector.load %arg16[%c31_311, %c0_312] : memref<64x32xf32, #tpu.memory_space<vmem>>, vector<16x32xf32>
    %c32_313 = arith.constant 32 : index
    %c0_314 = arith.constant 0 : index
    %247 = vector.load %arg16[%c32_313, %c0_314] : memref<64x32xf32, #tpu.memory_space<vmem>>, vector<16x32xf32>
    %c33_315 = arith.constant 33 : index
    %c0_316 = arith.constant 0 : index
    %248 = vector.load %arg16[%c33_315, %c0_316] : memref<64x32xf32, #tpu.memory_space<vmem>>, vector<16x32xf32>
    %c34_317 = arith.constant 34 : index
    %c0_318 = arith.constant 0 : index
    %249 = vector.load %arg16[%c34_317, %c0_318] : memref<64x32xf32, #tpu.memory_space<vmem>>, vector<16x32xf32>
    %c35_319 = arith.constant 35 : index
    %c0_320 = arith.constant 0 : index
    %250 = vector.load %arg16[%c35_319, %c0_320] : memref<64x32xf32, #tpu.memory_space<vmem>>, vector<16x32xf32>
    %c36_321 = arith.constant 36 : index
    %c0_322 = arith.constant 0 : index
    %251 = vector.load %arg16[%c36_321, %c0_322] : memref<64x32xf32, #tpu.memory_space<vmem>>, vector<16x32xf32>
    %252 = tpu.concatenate %244, %245, %246, %247, %248, %249, %250, %251 in 1 : vector<16x32xf32>, vector<16x32xf32>, vector<16x32xf32>, vector<16x32xf32>, vector<16x32xf32>, vector<16x32xf32>, vector<16x32xf32>, vector<16x32xf32> -> vector<16x256xf32>
    %c8_323 = arith.constant 8 : index
    %c0_324 = arith.constant 0 : index
    %c0_325 = arith.constant 0 : index
    %253 = vector.load %arg7[%c8_323, %c0_324, %c0_325] : memref<25x256x128xf32, #tpu.memory_space<vmem>>, vector<1x256x128xf32>
    %254 = vector.shape_cast %253 : vector<1x256x128xf32> to vector<256x128xf32>
    %cst_326 = arith.constant dense<0.000000e+00> : vector<16x128xf32>
    %255 = tpu.matmul %252, %254, %cst_326 {dimension_numbers = #tpu.dot_dimension_numbers<[1], [0], [0], [1], [0, 0, 1, 1], [], []>} : vector<16x256xf32>, vector<256x128xf32>, vector<16x128xf32> -> vector<16x128xf32>
    %256 = arith.addf %243, %255 : vector<16x128xf32>
    %c37_327 = arith.constant 37 : index
    %c0_328 = arith.constant 0 : index
    %257 = vector.load %arg16[%c37_327, %c0_328] : memref<64x32xf32, #tpu.memory_space<vmem>>, vector<16x32xf32>
    %c38_329 = arith.constant 38 : index
    %c0_330 = arith.constant 0 : index
    %258 = vector.load %arg16[%c38_329, %c0_330] : memref<64x32xf32, #tpu.memory_space<vmem>>, vector<16x32xf32>
    %c39_331 = arith.constant 39 : index
    %c0_332 = arith.constant 0 : index
    %259 = vector.load %arg16[%c39_331, %c0_332] : memref<64x32xf32, #tpu.memory_space<vmem>>, vector<16x32xf32>
    %c40_333 = arith.constant 40 : index
    %c0_334 = arith.constant 0 : index
    %260 = vector.load %arg16[%c40_333, %c0_334] : memref<64x32xf32, #tpu.memory_space<vmem>>, vector<16x32xf32>
    %c41_335 = arith.constant 41 : index
    %c0_336 = arith.constant 0 : index
    %261 = vector.load %arg16[%c41_335, %c0_336] : memref<64x32xf32, #tpu.memory_space<vmem>>, vector<16x32xf32>
    %c42_337 = arith.constant 42 : index
    %c0_338 = arith.constant 0 : index
    %262 = vector.load %arg16[%c42_337, %c0_338] : memref<64x32xf32, #tpu.memory_space<vmem>>, vector<16x32xf32>
    %c43_339 = arith.constant 43 : index
    %c0_340 = arith.constant 0 : index
    %263 = vector.load %arg16[%c43_339, %c0_340] : memref<64x32xf32, #tpu.memory_space<vmem>>, vector<16x32xf32>
    %c44_341 = arith.constant 44 : index
    %c0_342 = arith.constant 0 : index
    %264 = vector.load %arg16[%c44_341, %c0_342] : memref<64x32xf32, #tpu.memory_space<vmem>>, vector<16x32xf32>
    %265 = tpu.concatenate %257, %258, %259, %260, %261, %262, %263, %264 in 1 : vector<16x32xf32>, vector<16x32xf32>, vector<16x32xf32>, vector<16x32xf32>, vector<16x32xf32>, vector<16x32xf32>, vector<16x32xf32>, vector<16x32xf32> -> vector<16x256xf32>
    %c9_343 = arith.constant 9 : index
    %c0_344 = arith.constant 0 : index
    %c0_345 = arith.constant 0 : index
    %266 = vector.load %arg7[%c9_343, %c0_344, %c0_345] : memref<25x256x128xf32, #tpu.memory_space<vmem>>, vector<1x256x128xf32>
    %267 = vector.shape_cast %266 : vector<1x256x128xf32> to vector<256x128xf32>
    %cst_346 = arith.constant dense<0.000000e+00> : vector<16x128xf32>
    %268 = tpu.matmul %265, %267, %cst_346 {dimension_numbers = #tpu.dot_dimension_numbers<[1], [0], [0], [1], [0, 0, 1, 1], [], []>} : vector<16x256xf32>, vector<256x128xf32>, vector<16x128xf32> -> vector<16x128xf32>
    %269 = arith.addf %256, %268 : vector<16x128xf32>
    %270 = vector.broadcast %199 : vector<1x128xf32> to vector<16x128xf32>
    %271 = arith.mulf %269, %270 : vector<16x128xf32>
    %272 = vector.broadcast %201 : vector<1x128xf32> to vector<16x128xf32>
    %273 = arith.addf %271, %272 : vector<16x128xf32>
    %cst_347 = arith.constant 0.000000e+00 : f32
    %274 = vector.broadcast %cst_347 : f32 to vector<16x128xf32>
    %275 = arith.maximumf %273, %274 : vector<16x128xf32>
    %c0_348 = arith.constant 0 : index
    %c0_349 = arith.constant 0 : index
    %276 = vector.load %arg10[%c0_348, %c0_349] : memref<4x128xf32, #tpu.memory_space<vmem>>, vector<4x128xf32>
    %cst_350 = arith.constant dense<0.000000e+00> : vector<16x128xf32>
    %277 = tpu.matmul %13, %276, %cst_350 {dimension_numbers = #tpu.dot_dimension_numbers<[1], [0], [0], [1], [0, 0, 1, 1], [], []>} : vector<16x4xf32>, vector<4x128xf32>, vector<16x128xf32> -> vector<16x128xf32>
    %c0_351 = arith.constant 0 : index
    %c0_352 = arith.constant 0 : index
    %278 = vector.load %arg11[%c0_351, %c0_352] : memref<1x128xf32, #tpu.memory_space<vmem>>, vector<1x128xf32>
    %279 = vector.broadcast %278 : vector<1x128xf32> to vector<16x128xf32>
    %280 = arith.mulf %277, %279 : vector<16x128xf32>
    %281 = arith.addf %275, %280 : vector<16x128xf32>
    %c0_353 = arith.constant 0 : index
    %c0_354 = arith.constant 0 : index
    %282 = vector.load %arg12[%c0_353, %c0_354] : memref<1x128xf32, #tpu.memory_space<vmem>>, vector<1x128xf32>
    %283 = vector.broadcast %282 : vector<1x128xf32> to vector<16x128xf32>
    %284 = arith.addf %281, %283 : vector<16x128xf32>
    %cst_355 = arith.constant 0.000000e+00 : f32
    %285 = vector.broadcast %cst_355 : f32 to vector<16x128xf32>
    %286 = arith.maximumf %284, %285 : vector<16x128xf32>
    %c0_356 = arith.constant 0 : index
    %c0_357 = arith.constant 0 : index
    %287 = vector.load %arg18[%c0_356, %c0_357] : memref<16x128xf32, #tpu.memory_space<vmem>>, vector<16x128xf32>
    tpu.vector_store %arg18[%c0_356, %c0_357], %286 {strides = array<i32>} : memref<16x128xf32, #tpu.memory_space<vmem>>, vector<16x128xf32>,
    %c8_358 = arith.constant 8 : index
    %c0_359 = arith.constant 0 : index
    %288 = vector.load %arg17[%c8_358, %c0_359] : memref<32x128xf32, #tpu.memory_space<vmem>>, vector<16x128xf32>
    tpu.vector_store %arg17[%c8_358, %c0_359], %286 {strides = array<i32>} : memref<32x128xf32, #tpu.memory_space<vmem>>, vector<16x128xf32>,
    %c8_360 = arith.constant 8 : index
    %c0_361 = arith.constant 0 : index
    %289 = vector.load %arg17[%c8_360, %c0_361] : memref<32x128xf32, #tpu.memory_space<vmem>>, vector<16x128xf32>
    %c7_362 = arith.constant 7 : index
    %c0_363 = arith.constant 0 : index
    %290 = vector.load %arg17[%c7_362, %c0_363] : memref<32x128xf32, #tpu.memory_space<vmem>>, vector<16x128xf32>
    %291 = arith.maximumf %290, %289 : vector<16x128xf32>
    %c9_364 = arith.constant 9 : index
    %c0_365 = arith.constant 0 : index
    %292 = vector.load %arg17[%c9_364, %c0_365] : memref<32x128xf32, #tpu.memory_space<vmem>>, vector<16x128xf32>
    %293 = arith.maximumf %291, %292 : vector<16x128xf32>
    %c2_366 = arith.constant 2 : index
    %c0_367 = arith.constant 0 : index
    %c0_368 = arith.constant 0 : index
    %294 = vector.load %arg5[%c2_366, %c0_367, %c0_368] : memref<5x128x32xf32, #tpu.memory_space<vmem>>, vector<1x128x32xf32>
    %295 = vector.shape_cast %294 : vector<1x128x32xf32> to vector<128x32xf32>
    %c2_369 = arith.constant 2 : index
    %c0_370 = arith.constant 0 : index
    %c0_371 = arith.constant 0 : index
    %296 = vector.load %arg6[%c2_369, %c0_370, %c0_371] : memref<5x128x128xf32, #tpu.memory_space<vmem>>, vector<1x128x128xf32>
    %297 = vector.shape_cast %296 : vector<1x128x128xf32> to vector<128x128xf32>
    %c3_372 = arith.constant 3 : index
    %c0_373 = arith.constant 0 : index
    %c0_374 = arith.constant 0 : index
    %298 = vector.load %arg8[%c3_372, %c0_373, %c0_374] : memref<6x1x128xf32, #tpu.memory_space<vmem>>, vector<1x1x128xf32>
    %299 = vector.shape_cast %298 : vector<1x1x128xf32> to vector<1x128xf32>
    %c3_375 = arith.constant 3 : index
    %c0_376 = arith.constant 0 : index
    %c0_377 = arith.constant 0 : index
    %300 = vector.load %arg9[%c3_375, %c0_376, %c0_377] : memref<6x1x128xf32, #tpu.memory_space<vmem>>, vector<1x1x128xf32>
    %301 = vector.shape_cast %300 : vector<1x1x128xf32> to vector<1x128xf32>
    %cst_378 = arith.constant dense<0.000000e+00> : vector<16x32xf32>
    %302 = tpu.matmul %289, %295, %cst_378 {dimension_numbers = #tpu.dot_dimension_numbers<[1], [0], [0], [1], [0, 0, 1, 1], [], []>} : vector<16x128xf32>, vector<128x32xf32>, vector<16x32xf32> -> vector<16x32xf32>
    %c24_379 = arith.constant 24 : index
    %c0_380 = arith.constant 0 : index
    %303 = vector.load %arg16[%c24_379, %c0_380] : memref<64x32xf32, #tpu.memory_space<vmem>>, vector<16x32xf32>
    tpu.vector_store %arg16[%c24_379, %c0_380], %302 {strides = array<i32>} : memref<64x32xf32, #tpu.memory_space<vmem>>, vector<16x32xf32>,
    %cst_381 = arith.constant dense<0.000000e+00> : vector<16x128xf32>
    %304 = tpu.matmul %293, %297, %cst_381 {dimension_numbers = #tpu.dot_dimension_numbers<[1], [0], [0], [1], [0, 0, 1, 1], [], []>} : vector<16x128xf32>, vector<128x128xf32>, vector<16x128xf32> -> vector<16x128xf32>
    %c5_382 = arith.constant 5 : index
    %c0_383 = arith.constant 0 : index
    %305 = vector.load %arg16[%c5_382, %c0_383] : memref<64x32xf32, #tpu.memory_space<vmem>>, vector<16x32xf32>
    %c6_384 = arith.constant 6 : index
    %c0_385 = arith.constant 0 : index
    %306 = vector.load %arg16[%c6_384, %c0_385] : memref<64x32xf32, #tpu.memory_space<vmem>>, vector<16x32xf32>
    %c7_386 = arith.constant 7 : index
    %c0_387 = arith.constant 0 : index
    %307 = vector.load %arg16[%c7_386, %c0_387] : memref<64x32xf32, #tpu.memory_space<vmem>>, vector<16x32xf32>
    %c8_388 = arith.constant 8 : index
    %c0_389 = arith.constant 0 : index
    %308 = vector.load %arg16[%c8_388, %c0_389] : memref<64x32xf32, #tpu.memory_space<vmem>>, vector<16x32xf32>
    %c9_390 = arith.constant 9 : index
    %c0_391 = arith.constant 0 : index
    %309 = vector.load %arg16[%c9_390, %c0_391] : memref<64x32xf32, #tpu.memory_space<vmem>>, vector<16x32xf32>
    %c10_392 = arith.constant 10 : index
    %c0_393 = arith.constant 0 : index
    %310 = vector.load %arg16[%c10_392, %c0_393] : memref<64x32xf32, #tpu.memory_space<vmem>>, vector<16x32xf32>
    %c11_394 = arith.constant 11 : index
    %c0_395 = arith.constant 0 : index
    %311 = vector.load %arg16[%c11_394, %c0_395] : memref<64x32xf32, #tpu.memory_space<vmem>>, vector<16x32xf32>
    %c12_396 = arith.constant 12 : index
    %c0_397 = arith.constant 0 : index
    %312 = vector.load %arg16[%c12_396, %c0_397] : memref<64x32xf32, #tpu.memory_space<vmem>>, vector<16x32xf32>
    %313 = tpu.concatenate %305, %306, %307, %308, %309, %310, %311, %312 in 1 : vector<16x32xf32>, vector<16x32xf32>, vector<16x32xf32>, vector<16x32xf32>, vector<16x32xf32>, vector<16x32xf32>, vector<16x32xf32>, vector<16x32xf32> -> vector<16x256xf32>
    %c10_398 = arith.constant 10 : index
    %c0_399 = arith.constant 0 : index
    %c0_400 = arith.constant 0 : index
    %314 = vector.load %arg7[%c10_398, %c0_399, %c0_400] : memref<25x256x128xf32, #tpu.memory_space<vmem>>, vector<1x256x128xf32>
    %315 = vector.shape_cast %314 : vector<1x256x128xf32> to vector<256x128xf32>
    %cst_401 = arith.constant dense<0.000000e+00> : vector<16x128xf32>
    %316 = tpu.matmul %313, %315, %cst_401 {dimension_numbers = #tpu.dot_dimension_numbers<[1], [0], [0], [1], [0, 0, 1, 1], [], []>} : vector<16x256xf32>, vector<256x128xf32>, vector<16x128xf32> -> vector<16x128xf32>
    %317 = arith.addf %304, %316 : vector<16x128xf32>
    %c13_402 = arith.constant 13 : index
    %c0_403 = arith.constant 0 : index
    %318 = vector.load %arg16[%c13_402, %c0_403] : memref<64x32xf32, #tpu.memory_space<vmem>>, vector<16x32xf32>
    %c14_404 = arith.constant 14 : index
    %c0_405 = arith.constant 0 : index
    %319 = vector.load %arg16[%c14_404, %c0_405] : memref<64x32xf32, #tpu.memory_space<vmem>>, vector<16x32xf32>
    %c15_406 = arith.constant 15 : index
    %c0_407 = arith.constant 0 : index
    %320 = vector.load %arg16[%c15_406, %c0_407] : memref<64x32xf32, #tpu.memory_space<vmem>>, vector<16x32xf32>
    %c16_408 = arith.constant 16 : index
    %c0_409 = arith.constant 0 : index
    %321 = vector.load %arg16[%c16_408, %c0_409] : memref<64x32xf32, #tpu.memory_space<vmem>>, vector<16x32xf32>
    %c17_410 = arith.constant 17 : index
    %c0_411 = arith.constant 0 : index
    %322 = vector.load %arg16[%c17_410, %c0_411] : memref<64x32xf32, #tpu.memory_space<vmem>>, vector<16x32xf32>
    %c18_412 = arith.constant 18 : index
    %c0_413 = arith.constant 0 : index
    %323 = vector.load %arg16[%c18_412, %c0_413] : memref<64x32xf32, #tpu.memory_space<vmem>>, vector<16x32xf32>
    %c19_414 = arith.constant 19 : index
    %c0_415 = arith.constant 0 : index
    %324 = vector.load %arg16[%c19_414, %c0_415] : memref<64x32xf32, #tpu.memory_space<vmem>>, vector<16x32xf32>
    %c20_416 = arith.constant 20 : index
    %c0_417 = arith.constant 0 : index
    %325 = vector.load %arg16[%c20_416, %c0_417] : memref<64x32xf32, #tpu.memory_space<vmem>>, vector<16x32xf32>
    %326 = tpu.concatenate %318, %319, %320, %321, %322, %323, %324, %325 in 1 : vector<16x32xf32>, vector<16x32xf32>, vector<16x32xf32>, vector<16x32xf32>, vector<16x32xf32>, vector<16x32xf32>, vector<16x32xf32>, vector<16x32xf32> -> vector<16x256xf32>
    %c11_418 = arith.constant 11 : index
    %c0_419 = arith.constant 0 : index
    %c0_420 = arith.constant 0 : index
    %327 = vector.load %arg7[%c11_418, %c0_419, %c0_420] : memref<25x256x128xf32, #tpu.memory_space<vmem>>, vector<1x256x128xf32>
    %328 = vector.shape_cast %327 : vector<1x256x128xf32> to vector<256x128xf32>
    %cst_421 = arith.constant dense<0.000000e+00> : vector<16x128xf32>
    %329 = tpu.matmul %326, %328, %cst_421 {dimension_numbers = #tpu.dot_dimension_numbers<[1], [0], [0], [1], [0, 0, 1, 1], [], []>} : vector<16x256xf32>, vector<256x128xf32>, vector<16x128xf32> -> vector<16x128xf32>
    %330 = arith.addf %317, %329 : vector<16x128xf32>
    %c21_422 = arith.constant 21 : index
    %c0_423 = arith.constant 0 : index
    %331 = vector.load %arg16[%c21_422, %c0_423] : memref<64x32xf32, #tpu.memory_space<vmem>>, vector<16x32xf32>
    %c22_424 = arith.constant 22 : index
    %c0_425 = arith.constant 0 : index
    %332 = vector.load %arg16[%c22_424, %c0_425] : memref<64x32xf32, #tpu.memory_space<vmem>>, vector<16x32xf32>
    %c23_426 = arith.constant 23 : index
    %c0_427 = arith.constant 0 : index
    %333 = vector.load %arg16[%c23_426, %c0_427] : memref<64x32xf32, #tpu.memory_space<vmem>>, vector<16x32xf32>
    %c24_428 = arith.constant 24 : index
    %c0_429 = arith.constant 0 : index
    %334 = vector.load %arg16[%c24_428, %c0_429] : memref<64x32xf32, #tpu.memory_space<vmem>>, vector<16x32xf32>
    %c25_430 = arith.constant 25 : index
    %c0_431 = arith.constant 0 : index
    %335 = vector.load %arg16[%c25_430, %c0_431] : memref<64x32xf32, #tpu.memory_space<vmem>>, vector<16x32xf32>
    %c26_432 = arith.constant 26 : index
    %c0_433 = arith.constant 0 : index
    %336 = vector.load %arg16[%c26_432, %c0_433] : memref<64x32xf32, #tpu.memory_space<vmem>>, vector<16x32xf32>
    %c27_434 = arith.constant 27 : index
    %c0_435 = arith.constant 0 : index
    %337 = vector.load %arg16[%c27_434, %c0_435] : memref<64x32xf32, #tpu.memory_space<vmem>>, vector<16x32xf32>
    %c28_436 = arith.constant 28 : index
    %c0_437 = arith.constant 0 : index
    %338 = vector.load %arg16[%c28_436, %c0_437] : memref<64x32xf32, #tpu.memory_space<vmem>>, vector<16x32xf32>
    %339 = tpu.concatenate %331, %332, %333, %334, %335, %336, %337, %338 in 1 : vector<16x32xf32>, vector<16x32xf32>, vector<16x32xf32>, vector<16x32xf32>, vector<16x32xf32>, vector<16x32xf32>, vector<16x32xf32>, vector<16x32xf32> -> vector<16x256xf32>
    %c12_438 = arith.constant 12 : index
    %c0_439 = arith.constant 0 : index
    %c0_440 = arith.constant 0 : index
    %340 = vector.load %arg7[%c12_438, %c0_439, %c0_440] : memref<25x256x128xf32, #tpu.memory_space<vmem>>, vector<1x256x128xf32>
    %341 = vector.shape_cast %340 : vector<1x256x128xf32> to vector<256x128xf32>
    %cst_441 = arith.constant dense<0.000000e+00> : vector<16x128xf32>
    %342 = tpu.matmul %339, %341, %cst_441 {dimension_numbers = #tpu.dot_dimension_numbers<[1], [0], [0], [1], [0, 0, 1, 1], [], []>} : vector<16x256xf32>, vector<256x128xf32>, vector<16x128xf32> -> vector<16x128xf32>
    %343 = arith.addf %330, %342 : vector<16x128xf32>
    %c29_442 = arith.constant 29 : index
    %c0_443 = arith.constant 0 : index
    %344 = vector.load %arg16[%c29_442, %c0_443] : memref<64x32xf32, #tpu.memory_space<vmem>>, vector<16x32xf32>
    %c30_444 = arith.constant 30 : index
    %c0_445 = arith.constant 0 : index
    %345 = vector.load %arg16[%c30_444, %c0_445] : memref<64x32xf32, #tpu.memory_space<vmem>>, vector<16x32xf32>
    %c31_446 = arith.constant 31 : index
    %c0_447 = arith.constant 0 : index
    %346 = vector.load %arg16[%c31_446, %c0_447] : memref<64x32xf32, #tpu.memory_space<vmem>>, vector<16x32xf32>
    %c32_448 = arith.constant 32 : index
    %c0_449 = arith.constant 0 : index
    %347 = vector.load %arg16[%c32_448, %c0_449] : memref<64x32xf32, #tpu.memory_space<vmem>>, vector<16x32xf32>
    %c33_450 = arith.constant 33 : index
    %c0_451 = arith.constant 0 : index
    %348 = vector.load %arg16[%c33_450, %c0_451] : memref<64x32xf32, #tpu.memory_space<vmem>>, vector<16x32xf32>
    %c34_452 = arith.constant 34 : index
    %c0_453 = arith.constant 0 : index
    %349 = vector.load %arg16[%c34_452, %c0_453] : memref<64x32xf32, #tpu.memory_space<vmem>>, vector<16x32xf32>
    %c35_454 = arith.constant 35 : index
    %c0_455 = arith.constant 0 : index
    %350 = vector.load %arg16[%c35_454, %c0_455] : memref<64x32xf32, #tpu.memory_space<vmem>>, vector<16x32xf32>
    %c36_456 = arith.constant 36 : index
    %c0_457 = arith.constant 0 : index
    %351 = vector.load %arg16[%c36_456, %c0_457] : memref<64x32xf32, #tpu.memory_space<vmem>>, vector<16x32xf32>
    %352 = tpu.concatenate %344, %345, %346, %347, %348, %349, %350, %351 in 1 : vector<16x32xf32>, vector<16x32xf32>, vector<16x32xf32>, vector<16x32xf32>, vector<16x32xf32>, vector<16x32xf32>, vector<16x32xf32>, vector<16x32xf32> -> vector<16x256xf32>
    %c13_458 = arith.constant 13 : index
    %c0_459 = arith.constant 0 : index
    %c0_460 = arith.constant 0 : index
    %353 = vector.load %arg7[%c13_458, %c0_459, %c0_460] : memref<25x256x128xf32, #tpu.memory_space<vmem>>, vector<1x256x128xf32>
    %354 = vector.shape_cast %353 : vector<1x256x128xf32> to vector<256x128xf32>
    %cst_461 = arith.constant dense<0.000000e+00> : vector<16x128xf32>
    %355 = tpu.matmul %352, %354, %cst_461 {dimension_numbers = #tpu.dot_dimension_numbers<[1], [0], [0], [1], [0, 0, 1, 1], [], []>} : vector<16x256xf32>, vector<256x128xf32>, vector<16x128xf32> -> vector<16x128xf32>
    %356 = arith.addf %343, %355 : vector<16x128xf32>
    %c37_462 = arith.constant 37 : index
    %c0_463 = arith.constant 0 : index
    %357 = vector.load %arg16[%c37_462, %c0_463] : memref<64x32xf32, #tpu.memory_space<vmem>>, vector<16x32xf32>
    %c38_464 = arith.constant 38 : index
    %c0_465 = arith.constant 0 : index
    %358 = vector.load %arg16[%c38_464, %c0_465] : memref<64x32xf32, #tpu.memory_space<vmem>>, vector<16x32xf32>
    %c39_466 = arith.constant 39 : index
    %c0_467 = arith.constant 0 : index
    %359 = vector.load %arg16[%c39_466, %c0_467] : memref<64x32xf32, #tpu.memory_space<vmem>>, vector<16x32xf32>
    %c40_468 = arith.constant 40 : index
    %c0_469 = arith.constant 0 : index
    %360 = vector.load %arg16[%c40_468, %c0_469] : memref<64x32xf32, #tpu.memory_space<vmem>>, vector<16x32xf32>
    %c41_470 = arith.constant 41 : index
    %c0_471 = arith.constant 0 : index
    %361 = vector.load %arg16[%c41_470, %c0_471] : memref<64x32xf32, #tpu.memory_space<vmem>>, vector<16x32xf32>
    %c42_472 = arith.constant 42 : index
    %c0_473 = arith.constant 0 : index
    %362 = vector.load %arg16[%c42_472, %c0_473] : memref<64x32xf32, #tpu.memory_space<vmem>>, vector<16x32xf32>
    %c43_474 = arith.constant 43 : index
    %c0_475 = arith.constant 0 : index
    %363 = vector.load %arg16[%c43_474, %c0_475] : memref<64x32xf32, #tpu.memory_space<vmem>>, vector<16x32xf32>
    %c44_476 = arith.constant 44 : index
    %c0_477 = arith.constant 0 : index
    %364 = vector.load %arg16[%c44_476, %c0_477] : memref<64x32xf32, #tpu.memory_space<vmem>>, vector<16x32xf32>
    %365 = tpu.concatenate %357, %358, %359, %360, %361, %362, %363, %364 in 1 : vector<16x32xf32>, vector<16x32xf32>, vector<16x32xf32>, vector<16x32xf32>, vector<16x32xf32>, vector<16x32xf32>, vector<16x32xf32>, vector<16x32xf32> -> vector<16x256xf32>
    %c14_478 = arith.constant 14 : index
    %c0_479 = arith.constant 0 : index
    %c0_480 = arith.constant 0 : index
    %366 = vector.load %arg7[%c14_478, %c0_479, %c0_480] : memref<25x256x128xf32, #tpu.memory_space<vmem>>, vector<1x256x128xf32>
    %367 = vector.shape_cast %366 : vector<1x256x128xf32> to vector<256x128xf32>
    %cst_481 = arith.constant dense<0.000000e+00> : vector<16x128xf32>
    %368 = tpu.matmul %365, %367, %cst_481 {dimension_numbers = #tpu.dot_dimension_numbers<[1], [0], [0], [1], [0, 0, 1, 1], [], []>} : vector<16x256xf32>, vector<256x128xf32>, vector<16x128xf32> -> vector<16x128xf32>
    %369 = arith.addf %356, %368 : vector<16x128xf32>
    %370 = vector.broadcast %299 : vector<1x128xf32> to vector<16x128xf32>
    %371 = arith.mulf %369, %370 : vector<16x128xf32>
    %372 = vector.broadcast %301 : vector<1x128xf32> to vector<16x128xf32>
    %373 = arith.addf %371, %372 : vector<16x128xf32>
    %cst_482 = arith.constant 0.000000e+00 : f32
    %374 = vector.broadcast %cst_482 : f32 to vector<16x128xf32>
    %375 = arith.maximumf %373, %374 : vector<16x128xf32>
    %c8_483 = arith.constant 8 : index
    %c0_484 = arith.constant 0 : index
    %376 = vector.load %arg17[%c8_483, %c0_484] : memref<32x128xf32, #tpu.memory_space<vmem>>, vector<16x128xf32>
    tpu.vector_store %arg17[%c8_483, %c0_484], %375 {strides = array<i32>} : memref<32x128xf32, #tpu.memory_space<vmem>>, vector<16x128xf32>,
    %c8_485 = arith.constant 8 : index
    %c0_486 = arith.constant 0 : index
    %377 = vector.load %arg17[%c8_485, %c0_486] : memref<32x128xf32, #tpu.memory_space<vmem>>, vector<16x128xf32>
    %c7_487 = arith.constant 7 : index
    %c0_488 = arith.constant 0 : index
    %378 = vector.load %arg17[%c7_487, %c0_488] : memref<32x128xf32, #tpu.memory_space<vmem>>, vector<16x128xf32>
    %379 = arith.maximumf %378, %377 : vector<16x128xf32>
    %c9_489 = arith.constant 9 : index
    %c0_490 = arith.constant 0 : index
    %380 = vector.load %arg17[%c9_489, %c0_490] : memref<32x128xf32, #tpu.memory_space<vmem>>, vector<16x128xf32>
    %381 = arith.maximumf %379, %380 : vector<16x128xf32>
    %c3_491 = arith.constant 3 : index
    %c0_492 = arith.constant 0 : index
    %c0_493 = arith.constant 0 : index
    %382 = vector.load %arg5[%c3_491, %c0_492, %c0_493] : memref<5x128x32xf32, #tpu.memory_space<vmem>>, vector<1x128x32xf32>
    %383 = vector.shape_cast %382 : vector<1x128x32xf32> to vector<128x32xf32>
    %c3_494 = arith.constant 3 : index
    %c0_495 = arith.constant 0 : index
    %c0_496 = arith.constant 0 : index
    %384 = vector.load %arg6[%c3_494, %c0_495, %c0_496] : memref<5x128x128xf32, #tpu.memory_space<vmem>>, vector<1x128x128xf32>
    %385 = vector.shape_cast %384 : vector<1x128x128xf32> to vector<128x128xf32>
    %c4_497 = arith.constant 4 : index
    %c0_498 = arith.constant 0 : index
    %c0_499 = arith.constant 0 : index
    %386 = vector.load %arg8[%c4_497, %c0_498, %c0_499] : memref<6x1x128xf32, #tpu.memory_space<vmem>>, vector<1x1x128xf32>
    %387 = vector.shape_cast %386 : vector<1x1x128xf32> to vector<1x128xf32>
    %c4_500 = arith.constant 4 : index
    %c0_501 = arith.constant 0 : index
    %c0_502 = arith.constant 0 : index
    %388 = vector.load %arg9[%c4_500, %c0_501, %c0_502] : memref<6x1x128xf32, #tpu.memory_space<vmem>>, vector<1x1x128xf32>
    %389 = vector.shape_cast %388 : vector<1x1x128xf32> to vector<1x128xf32>
    %cst_503 = arith.constant dense<0.000000e+00> : vector<16x32xf32>
    %390 = tpu.matmul %377, %383, %cst_503 {dimension_numbers = #tpu.dot_dimension_numbers<[1], [0], [0], [1], [0, 0, 1, 1], [], []>} : vector<16x128xf32>, vector<128x32xf32>, vector<16x32xf32> -> vector<16x32xf32>
    %c24_504 = arith.constant 24 : index
    %c0_505 = arith.constant 0 : index
    %391 = vector.load %arg16[%c24_504, %c0_505] : memref<64x32xf32, #tpu.memory_space<vmem>>, vector<16x32xf32>
    tpu.vector_store %arg16[%c24_504, %c0_505], %390 {strides = array<i32>} : memref<64x32xf32, #tpu.memory_space<vmem>>, vector<16x32xf32>,
    %cst_506 = arith.constant dense<0.000000e+00> : vector<16x128xf32>
    %392 = tpu.matmul %381, %385, %cst_506 {dimension_numbers = #tpu.dot_dimension_numbers<[1], [0], [0], [1], [0, 0, 1, 1], [], []>} : vector<16x128xf32>, vector<128x128xf32>, vector<16x128xf32> -> vector<16x128xf32>
    %c5_507 = arith.constant 5 : index
    %c0_508 = arith.constant 0 : index
    %393 = vector.load %arg16[%c5_507, %c0_508] : memref<64x32xf32, #tpu.memory_space<vmem>>, vector<16x32xf32>
    %c6_509 = arith.constant 6 : index
    %c0_510 = arith.constant 0 : index
    %394 = vector.load %arg16[%c6_509, %c0_510] : memref<64x32xf32, #tpu.memory_space<vmem>>, vector<16x32xf32>
    %c7_511 = arith.constant 7 : index
    %c0_512 = arith.constant 0 : index
    %395 = vector.load %arg16[%c7_511, %c0_512] : memref<64x32xf32, #tpu.memory_space<vmem>>, vector<16x32xf32>
    %c8_513 = arith.constant 8 : index
    %c0_514 = arith.constant 0 : index
    %396 = vector.load %arg16[%c8_513, %c0_514] : memref<64x32xf32, #tpu.memory_space<vmem>>, vector<16x32xf32>
    %c9_515 = arith.constant 9 : index
    %c0_516 = arith.constant 0 : index
    %397 = vector.load %arg16[%c9_515, %c0_516] : memref<64x32xf32, #tpu.memory_space<vmem>>, vector<16x32xf32>
    %c10_517 = arith.constant 10 : index
    %c0_518 = arith.constant 0 : index
    %398 = vector.load %arg16[%c10_517, %c0_518] : memref<64x32xf32, #tpu.memory_space<vmem>>, vector<16x32xf32>
    %c11_519 = arith.constant 11 : index
    %c0_520 = arith.constant 0 : index
    %399 = vector.load %arg16[%c11_519, %c0_520] : memref<64x32xf32, #tpu.memory_space<vmem>>, vector<16x32xf32>
    %c12_521 = arith.constant 12 : index
    %c0_522 = arith.constant 0 : index
    %400 = vector.load %arg16[%c12_521, %c0_522] : memref<64x32xf32, #tpu.memory_space<vmem>>, vector<16x32xf32>
    %401 = tpu.concatenate %393, %394, %395, %396, %397, %398, %399, %400 in 1 : vector<16x32xf32>, vector<16x32xf32>, vector<16x32xf32>, vector<16x32xf32>, vector<16x32xf32>, vector<16x32xf32>, vector<16x32xf32>, vector<16x32xf32> -> vector<16x256xf32>
    %c15_523 = arith.constant 15 : index
    %c0_524 = arith.constant 0 : index
    %c0_525 = arith.constant 0 : index
    %402 = vector.load %arg7[%c15_523, %c0_524, %c0_525] : memref<25x256x128xf32, #tpu.memory_space<vmem>>, vector<1x256x128xf32>
    %403 = vector.shape_cast %402 : vector<1x256x128xf32> to vector<256x128xf32>
    %cst_526 = arith.constant dense<0.000000e+00> : vector<16x128xf32>
    %404 = tpu.matmul %401, %403, %cst_526 {dimension_numbers = #tpu.dot_dimension_numbers<[1], [0], [0], [1], [0, 0, 1, 1], [], []>} : vector<16x256xf32>, vector<256x128xf32>, vector<16x128xf32> -> vector<16x128xf32>
    %405 = arith.addf %392, %404 : vector<16x128xf32>
    %c13_527 = arith.constant 13 : index
    %c0_528 = arith.constant 0 : index
    %406 = vector.load %arg16[%c13_527, %c0_528] : memref<64x32xf32, #tpu.memory_space<vmem>>, vector<16x32xf32>
    %c14_529 = arith.constant 14 : index
    %c0_530 = arith.constant 0 : index
    %407 = vector.load %arg16[%c14_529, %c0_530] : memref<64x32xf32, #tpu.memory_space<vmem>>, vector<16x32xf32>
    %c15_531 = arith.constant 15 : index
    %c0_532 = arith.constant 0 : index
    %408 = vector.load %arg16[%c15_531, %c0_532] : memref<64x32xf32, #tpu.memory_space<vmem>>, vector<16x32xf32>
    %c16_533 = arith.constant 16 : index
    %c0_534 = arith.constant 0 : index
    %409 = vector.load %arg16[%c16_533, %c0_534] : memref<64x32xf32, #tpu.memory_space<vmem>>, vector<16x32xf32>
    %c17_535 = arith.constant 17 : index
    %c0_536 = arith.constant 0 : index
    %410 = vector.load %arg16[%c17_535, %c0_536] : memref<64x32xf32, #tpu.memory_space<vmem>>, vector<16x32xf32>
    %c18_537 = arith.constant 18 : index
    %c0_538 = arith.constant 0 : index
    %411 = vector.load %arg16[%c18_537, %c0_538] : memref<64x32xf32, #tpu.memory_space<vmem>>, vector<16x32xf32>
    %c19_539 = arith.constant 19 : index
    %c0_540 = arith.constant 0 : index
    %412 = vector.load %arg16[%c19_539, %c0_540] : memref<64x32xf32, #tpu.memory_space<vmem>>, vector<16x32xf32>
    %c20_541 = arith.constant 20 : index
    %c0_542 = arith.constant 0 : index
    %413 = vector.load %arg16[%c20_541, %c0_542] : memref<64x32xf32, #tpu.memory_space<vmem>>, vector<16x32xf32>
    %414 = tpu.concatenate %406, %407, %408, %409, %410, %411, %412, %413 in 1 : vector<16x32xf32>, vector<16x32xf32>, vector<16x32xf32>, vector<16x32xf32>, vector<16x32xf32>, vector<16x32xf32>, vector<16x32xf32>, vector<16x32xf32> -> vector<16x256xf32>
    %c16_543 = arith.constant 16 : index
    %c0_544 = arith.constant 0 : index
    %c0_545 = arith.constant 0 : index
    %415 = vector.load %arg7[%c16_543, %c0_544, %c0_545] : memref<25x256x128xf32, #tpu.memory_space<vmem>>, vector<1x256x128xf32>
    %416 = vector.shape_cast %415 : vector<1x256x128xf32> to vector<256x128xf32>
    %cst_546 = arith.constant dense<0.000000e+00> : vector<16x128xf32>
    %417 = tpu.matmul %414, %416, %cst_546 {dimension_numbers = #tpu.dot_dimension_numbers<[1], [0], [0], [1], [0, 0, 1, 1], [], []>} : vector<16x256xf32>, vector<256x128xf32>, vector<16x128xf32> -> vector<16x128xf32>
    %418 = arith.addf %405, %417 : vector<16x128xf32>
    %c21_547 = arith.constant 21 : index
    %c0_548 = arith.constant 0 : index
    %419 = vector.load %arg16[%c21_547, %c0_548] : memref<64x32xf32, #tpu.memory_space<vmem>>, vector<16x32xf32>
    %c22_549 = arith.constant 22 : index
    %c0_550 = arith.constant 0 : index
    %420 = vector.load %arg16[%c22_549, %c0_550] : memref<64x32xf32, #tpu.memory_space<vmem>>, vector<16x32xf32>
    %c23_551 = arith.constant 23 : index
    %c0_552 = arith.constant 0 : index
    %421 = vector.load %arg16[%c23_551, %c0_552] : memref<64x32xf32, #tpu.memory_space<vmem>>, vector<16x32xf32>
    %c24_553 = arith.constant 24 : index
    %c0_554 = arith.constant 0 : index
    %422 = vector.load %arg16[%c24_553, %c0_554] : memref<64x32xf32, #tpu.memory_space<vmem>>, vector<16x32xf32>
    %c25_555 = arith.constant 25 : index
    %c0_556 = arith.constant 0 : index
    %423 = vector.load %arg16[%c25_555, %c0_556] : memref<64x32xf32, #tpu.memory_space<vmem>>, vector<16x32xf32>
    %c26_557 = arith.constant 26 : index
    %c0_558 = arith.constant 0 : index
    %424 = vector.load %arg16[%c26_557, %c0_558] : memref<64x32xf32, #tpu.memory_space<vmem>>, vector<16x32xf32>
    %c27_559 = arith.constant 27 : index
    %c0_560 = arith.constant 0 : index
    %425 = vector.load %arg16[%c27_559, %c0_560] : memref<64x32xf32, #tpu.memory_space<vmem>>, vector<16x32xf32>
    %c28_561 = arith.constant 28 : index
    %c0_562 = arith.constant 0 : index
    %426 = vector.load %arg16[%c28_561, %c0_562] : memref<64x32xf32, #tpu.memory_space<vmem>>, vector<16x32xf32>
    %427 = tpu.concatenate %419, %420, %421, %422, %423, %424, %425, %426 in 1 : vector<16x32xf32>, vector<16x32xf32>, vector<16x32xf32>, vector<16x32xf32>, vector<16x32xf32>, vector<16x32xf32>, vector<16x32xf32>, vector<16x32xf32> -> vector<16x256xf32>
    %c17_563 = arith.constant 17 : index
    %c0_564 = arith.constant 0 : index
    %c0_565 = arith.constant 0 : index
    %428 = vector.load %arg7[%c17_563, %c0_564, %c0_565] : memref<25x256x128xf32, #tpu.memory_space<vmem>>, vector<1x256x128xf32>
    %429 = vector.shape_cast %428 : vector<1x256x128xf32> to vector<256x128xf32>
    %cst_566 = arith.constant dense<0.000000e+00> : vector<16x128xf32>
    %430 = tpu.matmul %427, %429, %cst_566 {dimension_numbers = #tpu.dot_dimension_numbers<[1], [0], [0], [1], [0, 0, 1, 1], [], []>} : vector<16x256xf32>, vector<256x128xf32>, vector<16x128xf32> -> vector<16x128xf32>
    %431 = arith.addf %418, %430 : vector<16x128xf32>
    %c29_567 = arith.constant 29 : index
    %c0_568 = arith.constant 0 : index
    %432 = vector.load %arg16[%c29_567, %c0_568] : memref<64x32xf32, #tpu.memory_space<vmem>>, vector<16x32xf32>
    %c30_569 = arith.constant 30 : index
    %c0_570 = arith.constant 0 : index
    %433 = vector.load %arg16[%c30_569, %c0_570] : memref<64x32xf32, #tpu.memory_space<vmem>>, vector<16x32xf32>
    %c31_571 = arith.constant 31 : index
    %c0_572 = arith.constant 0 : index
    %434 = vector.load %arg16[%c31_571, %c0_572] : memref<64x32xf32, #tpu.memory_space<vmem>>, vector<16x32xf32>
    %c32_573 = arith.constant 32 : index
    %c0_574 = arith.constant 0 : index
    %435 = vector.load %arg16[%c32_573, %c0_574] : memref<64x32xf32, #tpu.memory_space<vmem>>, vector<16x32xf32>
    %c33_575 = arith.constant 33 : index
    %c0_576 = arith.constant 0 : index
    %436 = vector.load %arg16[%c33_575, %c0_576] : memref<64x32xf32, #tpu.memory_space<vmem>>, vector<16x32xf32>
    %c34_577 = arith.constant 34 : index
    %c0_578 = arith.constant 0 : index
    %437 = vector.load %arg16[%c34_577, %c0_578] : memref<64x32xf32, #tpu.memory_space<vmem>>, vector<16x32xf32>
    %c35_579 = arith.constant 35 : index
    %c0_580 = arith.constant 0 : index
    %438 = vector.load %arg16[%c35_579, %c0_580] : memref<64x32xf32, #tpu.memory_space<vmem>>, vector<16x32xf32>
    %c36_581 = arith.constant 36 : index
    %c0_582 = arith.constant 0 : index
    %439 = vector.load %arg16[%c36_581, %c0_582] : memref<64x32xf32, #tpu.memory_space<vmem>>, vector<16x32xf32>
    %440 = tpu.concatenate %432, %433, %434, %435, %436, %437, %438, %439 in 1 : vector<16x32xf32>, vector<16x32xf32>, vector<16x32xf32>, vector<16x32xf32>, vector<16x32xf32>, vector<16x32xf32>, vector<16x32xf32>, vector<16x32xf32> -> vector<16x256xf32>
    %c18_583 = arith.constant 18 : index
    %c0_584 = arith.constant 0 : index
    %c0_585 = arith.constant 0 : index
    %441 = vector.load %arg7[%c18_583, %c0_584, %c0_585] : memref<25x256x128xf32, #tpu.memory_space<vmem>>, vector<1x256x128xf32>
    %442 = vector.shape_cast %441 : vector<1x256x128xf32> to vector<256x128xf32>
    %cst_586 = arith.constant dense<0.000000e+00> : vector<16x128xf32>
    %443 = tpu.matmul %440, %442, %cst_586 {dimension_numbers = #tpu.dot_dimension_numbers<[1], [0], [0], [1], [0, 0, 1, 1], [], []>} : vector<16x256xf32>, vector<256x128xf32>, vector<16x128xf32> -> vector<16x128xf32>
    %444 = arith.addf %431, %443 : vector<16x128xf32>
    %c37_587 = arith.constant 37 : index
    %c0_588 = arith.constant 0 : index
    %445 = vector.load %arg16[%c37_587, %c0_588] : memref<64x32xf32, #tpu.memory_space<vmem>>, vector<16x32xf32>
    %c38_589 = arith.constant 38 : index
    %c0_590 = arith.constant 0 : index
    %446 = vector.load %arg16[%c38_589, %c0_590] : memref<64x32xf32, #tpu.memory_space<vmem>>, vector<16x32xf32>
    %c39_591 = arith.constant 39 : index
    %c0_592 = arith.constant 0 : index
    %447 = vector.load %arg16[%c39_591, %c0_592] : memref<64x32xf32, #tpu.memory_space<vmem>>, vector<16x32xf32>
    %c40_593 = arith.constant 40 : index
    %c0_594 = arith.constant 0 : index
    %448 = vector.load %arg16[%c40_593, %c0_594] : memref<64x32xf32, #tpu.memory_space<vmem>>, vector<16x32xf32>
    %c41_595 = arith.constant 41 : index
    %c0_596 = arith.constant 0 : index
    %449 = vector.load %arg16[%c41_595, %c0_596] : memref<64x32xf32, #tpu.memory_space<vmem>>, vector<16x32xf32>
    %c42_597 = arith.constant 42 : index
    %c0_598 = arith.constant 0 : index
    %450 = vector.load %arg16[%c42_597, %c0_598] : memref<64x32xf32, #tpu.memory_space<vmem>>, vector<16x32xf32>
    %c43_599 = arith.constant 43 : index
    %c0_600 = arith.constant 0 : index
    %451 = vector.load %arg16[%c43_599, %c0_600] : memref<64x32xf32, #tpu.memory_space<vmem>>, vector<16x32xf32>
    %c44_601 = arith.constant 44 : index
    %c0_602 = arith.constant 0 : index
    %452 = vector.load %arg16[%c44_601, %c0_602] : memref<64x32xf32, #tpu.memory_space<vmem>>, vector<16x32xf32>
    %453 = tpu.concatenate %445, %446, %447, %448, %449, %450, %451, %452 in 1 : vector<16x32xf32>, vector<16x32xf32>, vector<16x32xf32>, vector<16x32xf32>, vector<16x32xf32>, vector<16x32xf32>, vector<16x32xf32>, vector<16x32xf32> -> vector<16x256xf32>
    %c19_603 = arith.constant 19 : index
    %c0_604 = arith.constant 0 : index
    %c0_605 = arith.constant 0 : index
    %454 = vector.load %arg7[%c19_603, %c0_604, %c0_605] : memref<25x256x128xf32, #tpu.memory_space<vmem>>, vector<1x256x128xf32>
    %455 = vector.shape_cast %454 : vector<1x256x128xf32> to vector<256x128xf32>
    %cst_606 = arith.constant dense<0.000000e+00> : vector<16x128xf32>
    %456 = tpu.matmul %453, %455, %cst_606 {dimension_numbers = #tpu.dot_dimension_numbers<[1], [0], [0], [1], [0, 0, 1, 1], [], []>} : vector<16x256xf32>, vector<256x128xf32>, vector<16x128xf32> -> vector<16x128xf32>
    %457 = arith.addf %444, %456 : vector<16x128xf32>
    %458 = vector.broadcast %387 : vector<1x128xf32> to vector<16x128xf32>
    %459 = arith.mulf %457, %458 : vector<16x128xf32>
    %460 = vector.broadcast %389 : vector<1x128xf32> to vector<16x128xf32>
    %461 = arith.addf %459, %460 : vector<16x128xf32>
    %cst_607 = arith.constant 0.000000e+00 : f32
    %462 = vector.broadcast %cst_607 : f32 to vector<16x128xf32>
    %463 = arith.maximumf %461, %462 : vector<16x128xf32>
    %c8_608 = arith.constant 8 : index
    %c0_609 = arith.constant 0 : index
    %464 = vector.load %arg17[%c8_608, %c0_609] : memref<32x128xf32, #tpu.memory_space<vmem>>, vector<16x128xf32>
    tpu.vector_store %arg17[%c8_608, %c0_609], %463 {strides = array<i32>} : memref<32x128xf32, #tpu.memory_space<vmem>>, vector<16x128xf32>,
    %c8_610 = arith.constant 8 : index
    %c0_611 = arith.constant 0 : index
    %465 = vector.load %arg17[%c8_610, %c0_611] : memref<32x128xf32, #tpu.memory_space<vmem>>, vector<16x128xf32>
    %c7_612 = arith.constant 7 : index
    %c0_613 = arith.constant 0 : index
    %466 = vector.load %arg17[%c7_612, %c0_613] : memref<32x128xf32, #tpu.memory_space<vmem>>, vector<16x128xf32>
    %467 = arith.maximumf %466, %465 : vector<16x128xf32>
    %c9_614 = arith.constant 9 : index
    %c0_615 = arith.constant 0 : index
    %468 = vector.load %arg17[%c9_614, %c0_615] : memref<32x128xf32, #tpu.memory_space<vmem>>, vector<16x128xf32>
    %469 = arith.maximumf %467, %468 : vector<16x128xf32>
    %c4_616 = arith.constant 4 : index
    %c0_617 = arith.constant 0 : index
    %c0_618 = arith.constant 0 : index
    %470 = vector.load %arg5[%c4_616, %c0_617, %c0_618] : memref<5x128x32xf32, #tpu.memory_space<vmem>>, vector<1x128x32xf32>
    %471 = vector.shape_cast %470 : vector<1x128x32xf32> to vector<128x32xf32>
    %c4_619 = arith.constant 4 : index
    %c0_620 = arith.constant 0 : index
    %c0_621 = arith.constant 0 : index
    %472 = vector.load %arg6[%c4_619, %c0_620, %c0_621] : memref<5x128x128xf32, #tpu.memory_space<vmem>>, vector<1x128x128xf32>
    %473 = vector.shape_cast %472 : vector<1x128x128xf32> to vector<128x128xf32>
    %c5_622 = arith.constant 5 : index
    %c0_623 = arith.constant 0 : index
    %c0_624 = arith.constant 0 : index
    %474 = vector.load %arg8[%c5_622, %c0_623, %c0_624] : memref<6x1x128xf32, #tpu.memory_space<vmem>>, vector<1x1x128xf32>
    %475 = vector.shape_cast %474 : vector<1x1x128xf32> to vector<1x128xf32>
    %c5_625 = arith.constant 5 : index
    %c0_626 = arith.constant 0 : index
    %c0_627 = arith.constant 0 : index
    %476 = vector.load %arg9[%c5_625, %c0_626, %c0_627] : memref<6x1x128xf32, #tpu.memory_space<vmem>>, vector<1x1x128xf32>
    %477 = vector.shape_cast %476 : vector<1x1x128xf32> to vector<1x128xf32>
    %cst_628 = arith.constant dense<0.000000e+00> : vector<16x32xf32>
    %478 = tpu.matmul %465, %471, %cst_628 {dimension_numbers = #tpu.dot_dimension_numbers<[1], [0], [0], [1], [0, 0, 1, 1], [], []>} : vector<16x128xf32>, vector<128x32xf32>, vector<16x32xf32> -> vector<16x32xf32>
    %c24_629 = arith.constant 24 : index
    %c0_630 = arith.constant 0 : index
    %479 = vector.load %arg16[%c24_629, %c0_630] : memref<64x32xf32, #tpu.memory_space<vmem>>, vector<16x32xf32>
    tpu.vector_store %arg16[%c24_629, %c0_630], %478 {strides = array<i32>} : memref<64x32xf32, #tpu.memory_space<vmem>>, vector<16x32xf32>,
    %cst_631 = arith.constant dense<0.000000e+00> : vector<16x128xf32>
    %480 = tpu.matmul %469, %473, %cst_631 {dimension_numbers = #tpu.dot_dimension_numbers<[1], [0], [0], [1], [0, 0, 1, 1], [], []>} : vector<16x128xf32>, vector<128x128xf32>, vector<16x128xf32> -> vector<16x128xf32>
    %c5_632 = arith.constant 5 : index
    %c0_633 = arith.constant 0 : index
    %481 = vector.load %arg16[%c5_632, %c0_633] : memref<64x32xf32, #tpu.memory_space<vmem>>, vector<16x32xf32>
    %c6_634 = arith.constant 6 : index
    %c0_635 = arith.constant 0 : index
    %482 = vector.load %arg16[%c6_634, %c0_635] : memref<64x32xf32, #tpu.memory_space<vmem>>, vector<16x32xf32>
    %c7_636 = arith.constant 7 : index
    %c0_637 = arith.constant 0 : index
    %483 = vector.load %arg16[%c7_636, %c0_637] : memref<64x32xf32, #tpu.memory_space<vmem>>, vector<16x32xf32>
    %c8_638 = arith.constant 8 : index
    %c0_639 = arith.constant 0 : index
    %484 = vector.load %arg16[%c8_638, %c0_639] : memref<64x32xf32, #tpu.memory_space<vmem>>, vector<16x32xf32>
    %c9_640 = arith.constant 9 : index
    %c0_641 = arith.constant 0 : index
    %485 = vector.load %arg16[%c9_640, %c0_641] : memref<64x32xf32, #tpu.memory_space<vmem>>, vector<16x32xf32>
    %c10_642 = arith.constant 10 : index
    %c0_643 = arith.constant 0 : index
    %486 = vector.load %arg16[%c10_642, %c0_643] : memref<64x32xf32, #tpu.memory_space<vmem>>, vector<16x32xf32>
    %c11_644 = arith.constant 11 : index
    %c0_645 = arith.constant 0 : index
    %487 = vector.load %arg16[%c11_644, %c0_645] : memref<64x32xf32, #tpu.memory_space<vmem>>, vector<16x32xf32>
    %c12_646 = arith.constant 12 : index
    %c0_647 = arith.constant 0 : index
    %488 = vector.load %arg16[%c12_646, %c0_647] : memref<64x32xf32, #tpu.memory_space<vmem>>, vector<16x32xf32>
    %489 = tpu.concatenate %481, %482, %483, %484, %485, %486, %487, %488 in 1 : vector<16x32xf32>, vector<16x32xf32>, vector<16x32xf32>, vector<16x32xf32>, vector<16x32xf32>, vector<16x32xf32>, vector<16x32xf32>, vector<16x32xf32> -> vector<16x256xf32>
    %c20_648 = arith.constant 20 : index
    %c0_649 = arith.constant 0 : index
    %c0_650 = arith.constant 0 : index
    %490 = vector.load %arg7[%c20_648, %c0_649, %c0_650] : memref<25x256x128xf32, #tpu.memory_space<vmem>>, vector<1x256x128xf32>
    %491 = vector.shape_cast %490 : vector<1x256x128xf32> to vector<256x128xf32>
    %cst_651 = arith.constant dense<0.000000e+00> : vector<16x128xf32>
    %492 = tpu.matmul %489, %491, %cst_651 {dimension_numbers = #tpu.dot_dimension_numbers<[1], [0], [0], [1], [0, 0, 1, 1], [], []>} : vector<16x256xf32>, vector<256x128xf32>, vector<16x128xf32> -> vector<16x128xf32>
    %493 = arith.addf %480, %492 : vector<16x128xf32>
    %c13_652 = arith.constant 13 : index
    %c0_653 = arith.constant 0 : index
    %494 = vector.load %arg16[%c13_652, %c0_653] : memref<64x32xf32, #tpu.memory_space<vmem>>, vector<16x32xf32>
    %c14_654 = arith.constant 14 : index
    %c0_655 = arith.constant 0 : index
    %495 = vector.load %arg16[%c14_654, %c0_655] : memref<64x32xf32, #tpu.memory_space<vmem>>, vector<16x32xf32>
    %c15_656 = arith.constant 15 : index
    %c0_657 = arith.constant 0 : index
    %496 = vector.load %arg16[%c15_656, %c0_657] : memref<64x32xf32, #tpu.memory_space<vmem>>, vector<16x32xf32>
    %c16_658 = arith.constant 16 : index
    %c0_659 = arith.constant 0 : index
    %497 = vector.load %arg16[%c16_658, %c0_659] : memref<64x32xf32, #tpu.memory_space<vmem>>, vector<16x32xf32>
    %c17_660 = arith.constant 17 : index
    %c0_661 = arith.constant 0 : index
    %498 = vector.load %arg16[%c17_660, %c0_661] : memref<64x32xf32, #tpu.memory_space<vmem>>, vector<16x32xf32>
    %c18_662 = arith.constant 18 : index
    %c0_663 = arith.constant 0 : index
    %499 = vector.load %arg16[%c18_662, %c0_663] : memref<64x32xf32, #tpu.memory_space<vmem>>, vector<16x32xf32>
    %c19_664 = arith.constant 19 : index
    %c0_665 = arith.constant 0 : index
    %500 = vector.load %arg16[%c19_664, %c0_665] : memref<64x32xf32, #tpu.memory_space<vmem>>, vector<16x32xf32>
    %c20_666 = arith.constant 20 : index
    %c0_667 = arith.constant 0 : index
    %501 = vector.load %arg16[%c20_666, %c0_667] : memref<64x32xf32, #tpu.memory_space<vmem>>, vector<16x32xf32>
    %502 = tpu.concatenate %494, %495, %496, %497, %498, %499, %500, %501 in 1 : vector<16x32xf32>, vector<16x32xf32>, vector<16x32xf32>, vector<16x32xf32>, vector<16x32xf32>, vector<16x32xf32>, vector<16x32xf32>, vector<16x32xf32> -> vector<16x256xf32>
    %c21_668 = arith.constant 21 : index
    %c0_669 = arith.constant 0 : index
    %c0_670 = arith.constant 0 : index
    %503 = vector.load %arg7[%c21_668, %c0_669, %c0_670] : memref<25x256x128xf32, #tpu.memory_space<vmem>>, vector<1x256x128xf32>
    %504 = vector.shape_cast %503 : vector<1x256x128xf32> to vector<256x128xf32>
    %cst_671 = arith.constant dense<0.000000e+00> : vector<16x128xf32>
    %505 = tpu.matmul %502, %504, %cst_671 {dimension_numbers = #tpu.dot_dimension_numbers<[1], [0], [0], [1], [0, 0, 1, 1], [], []>} : vector<16x256xf32>, vector<256x128xf32>, vector<16x128xf32> -> vector<16x128xf32>
    %506 = arith.addf %493, %505 : vector<16x128xf32>
    %c21_672 = arith.constant 21 : index
    %c0_673 = arith.constant 0 : index
    %507 = vector.load %arg16[%c21_672, %c0_673] : memref<64x32xf32, #tpu.memory_space<vmem>>, vector<16x32xf32>
    %c22_674 = arith.constant 22 : index
    %c0_675 = arith.constant 0 : index
    %508 = vector.load %arg16[%c22_674, %c0_675] : memref<64x32xf32, #tpu.memory_space<vmem>>, vector<16x32xf32>
    %c23_676 = arith.constant 23 : index
    %c0_677 = arith.constant 0 : index
    %509 = vector.load %arg16[%c23_676, %c0_677] : memref<64x32xf32, #tpu.memory_space<vmem>>, vector<16x32xf32>
    %c24_678 = arith.constant 24 : index
    %c0_679 = arith.constant 0 : index
    %510 = vector.load %arg16[%c24_678, %c0_679] : memref<64x32xf32, #tpu.memory_space<vmem>>, vector<16x32xf32>
    %c25_680 = arith.constant 25 : index
    %c0_681 = arith.constant 0 : index
    %511 = vector.load %arg16[%c25_680, %c0_681] : memref<64x32xf32, #tpu.memory_space<vmem>>, vector<16x32xf32>
    %c26_682 = arith.constant 26 : index
    %c0_683 = arith.constant 0 : index
    %512 = vector.load %arg16[%c26_682, %c0_683] : memref<64x32xf32, #tpu.memory_space<vmem>>, vector<16x32xf32>
    %c27_684 = arith.constant 27 : index
    %c0_685 = arith.constant 0 : index
    %513 = vector.load %arg16[%c27_684, %c0_685] : memref<64x32xf32, #tpu.memory_space<vmem>>, vector<16x32xf32>
    %c28_686 = arith.constant 28 : index
    %c0_687 = arith.constant 0 : index
    %514 = vector.load %arg16[%c28_686, %c0_687] : memref<64x32xf32, #tpu.memory_space<vmem>>, vector<16x32xf32>
    %515 = tpu.concatenate %507, %508, %509, %510, %511, %512, %513, %514 in 1 : vector<16x32xf32>, vector<16x32xf32>, vector<16x32xf32>, vector<16x32xf32>, vector<16x32xf32>, vector<16x32xf32>, vector<16x32xf32>, vector<16x32xf32> -> vector<16x256xf32>
    %c22_688 = arith.constant 22 : index
    %c0_689 = arith.constant 0 : index
    %c0_690 = arith.constant 0 : index
    %516 = vector.load %arg7[%c22_688, %c0_689, %c0_690] : memref<25x256x128xf32, #tpu.memory_space<vmem>>, vector<1x256x128xf32>
    %517 = vector.shape_cast %516 : vector<1x256x128xf32> to vector<256x128xf32>
    %cst_691 = arith.constant dense<0.000000e+00> : vector<16x128xf32>
    %518 = tpu.matmul %515, %517, %cst_691 {dimension_numbers = #tpu.dot_dimension_numbers<[1], [0], [0], [1], [0, 0, 1, 1], [], []>} : vector<16x256xf32>, vector<256x128xf32>, vector<16x128xf32> -> vector<16x128xf32>
    %519 = arith.addf %506, %518 : vector<16x128xf32>
    %c29_692 = arith.constant 29 : index
    %c0_693 = arith.constant 0 : index
    %520 = vector.load %arg16[%c29_692, %c0_693] : memref<64x32xf32, #tpu.memory_space<vmem>>, vector<16x32xf32>
    %c30_694 = arith.constant 30 : index
    %c0_695 = arith.constant 0 : index
    %521 = vector.load %arg16[%c30_694, %c0_695] : memref<64x32xf32, #tpu.memory_space<vmem>>, vector<16x32xf32>
    %c31_696 = arith.constant 31 : index
    %c0_697 = arith.constant 0 : index
    %522 = vector.load %arg16[%c31_696, %c0_697] : memref<64x32xf32, #tpu.memory_space<vmem>>, vector<16x32xf32>
    %c32_698 = arith.constant 32 : index
    %c0_699 = arith.constant 0 : index
    %523 = vector.load %arg16[%c32_698, %c0_699] : memref<64x32xf32, #tpu.memory_space<vmem>>, vector<16x32xf32>
    %c33_700 = arith.constant 33 : index
    %c0_701 = arith.constant 0 : index
    %524 = vector.load %arg16[%c33_700, %c0_701] : memref<64x32xf32, #tpu.memory_space<vmem>>, vector<16x32xf32>
    %c34_702 = arith.constant 34 : index
    %c0_703 = arith.constant 0 : index
    %525 = vector.load %arg16[%c34_702, %c0_703] : memref<64x32xf32, #tpu.memory_space<vmem>>, vector<16x32xf32>
    %c35_704 = arith.constant 35 : index
    %c0_705 = arith.constant 0 : index
    %526 = vector.load %arg16[%c35_704, %c0_705] : memref<64x32xf32, #tpu.memory_space<vmem>>, vector<16x32xf32>
    %c36_706 = arith.constant 36 : index
    %c0_707 = arith.constant 0 : index
    %527 = vector.load %arg16[%c36_706, %c0_707] : memref<64x32xf32, #tpu.memory_space<vmem>>, vector<16x32xf32>
    %528 = tpu.concatenate %520, %521, %522, %523, %524, %525, %526, %527 in 1 : vector<16x32xf32>, vector<16x32xf32>, vector<16x32xf32>, vector<16x32xf32>, vector<16x32xf32>, vector<16x32xf32>, vector<16x32xf32>, vector<16x32xf32> -> vector<16x256xf32>
    %c23_708 = arith.constant 23 : index
    %c0_709 = arith.constant 0 : index
    %c0_710 = arith.constant 0 : index
    %529 = vector.load %arg7[%c23_708, %c0_709, %c0_710] : memref<25x256x128xf32, #tpu.memory_space<vmem>>, vector<1x256x128xf32>
    %530 = vector.shape_cast %529 : vector<1x256x128xf32> to vector<256x128xf32>
    %cst_711 = arith.constant dense<0.000000e+00> : vector<16x128xf32>
    %531 = tpu.matmul %528, %530, %cst_711 {dimension_numbers = #tpu.dot_dimension_numbers<[1], [0], [0], [1], [0, 0, 1, 1], [], []>} : vector<16x256xf32>, vector<256x128xf32>, vector<16x128xf32> -> vector<16x128xf32>
    %532 = arith.addf %519, %531 : vector<16x128xf32>
    %c37_712 = arith.constant 37 : index
    %c0_713 = arith.constant 0 : index
    %533 = vector.load %arg16[%c37_712, %c0_713] : memref<64x32xf32, #tpu.memory_space<vmem>>, vector<16x32xf32>
    %c38_714 = arith.constant 38 : index
    %c0_715 = arith.constant 0 : index
    %534 = vector.load %arg16[%c38_714, %c0_715] : memref<64x32xf32, #tpu.memory_space<vmem>>, vector<16x32xf32>
    %c39_716 = arith.constant 39 : index
    %c0_717 = arith.constant 0 : index
    %535 = vector.load %arg16[%c39_716, %c0_717] : memref<64x32xf32, #tpu.memory_space<vmem>>, vector<16x32xf32>
    %c40_718 = arith.constant 40 : index
    %c0_719 = arith.constant 0 : index
    %536 = vector.load %arg16[%c40_718, %c0_719] : memref<64x32xf32, #tpu.memory_space<vmem>>, vector<16x32xf32>
    %c41_720 = arith.constant 41 : index
    %c0_721 = arith.constant 0 : index
    %537 = vector.load %arg16[%c41_720, %c0_721] : memref<64x32xf32, #tpu.memory_space<vmem>>, vector<16x32xf32>
    %c42_722 = arith.constant 42 : index
    %c0_723 = arith.constant 0 : index
    %538 = vector.load %arg16[%c42_722, %c0_723] : memref<64x32xf32, #tpu.memory_space<vmem>>, vector<16x32xf32>
    %c43_724 = arith.constant 43 : index
    %c0_725 = arith.constant 0 : index
    %539 = vector.load %arg16[%c43_724, %c0_725] : memref<64x32xf32, #tpu.memory_space<vmem>>, vector<16x32xf32>
    %c44_726 = arith.constant 44 : index
    %c0_727 = arith.constant 0 : index
    %540 = vector.load %arg16[%c44_726, %c0_727] : memref<64x32xf32, #tpu.memory_space<vmem>>, vector<16x32xf32>
    %541 = tpu.concatenate %533, %534, %535, %536, %537, %538, %539, %540 in 1 : vector<16x32xf32>, vector<16x32xf32>, vector<16x32xf32>, vector<16x32xf32>, vector<16x32xf32>, vector<16x32xf32>, vector<16x32xf32>, vector<16x32xf32> -> vector<16x256xf32>
    %c24_728 = arith.constant 24 : index
    %c0_729 = arith.constant 0 : index
    %c0_730 = arith.constant 0 : index
    %542 = vector.load %arg7[%c24_728, %c0_729, %c0_730] : memref<25x256x128xf32, #tpu.memory_space<vmem>>, vector<1x256x128xf32>
    %543 = vector.shape_cast %542 : vector<1x256x128xf32> to vector<256x128xf32>
    %cst_731 = arith.constant dense<0.000000e+00> : vector<16x128xf32>
    %544 = tpu.matmul %541, %543, %cst_731 {dimension_numbers = #tpu.dot_dimension_numbers<[1], [0], [0], [1], [0, 0, 1, 1], [], []>} : vector<16x256xf32>, vector<256x128xf32>, vector<16x128xf32> -> vector<16x128xf32>
    %545 = arith.addf %532, %544 : vector<16x128xf32>
    %546 = vector.broadcast %475 : vector<1x128xf32> to vector<16x128xf32>
    %547 = arith.mulf %545, %546 : vector<16x128xf32>
    %548 = vector.broadcast %477 : vector<1x128xf32> to vector<16x128xf32>
    %549 = arith.addf %547, %548 : vector<16x128xf32>
    %cst_732 = arith.constant 0.000000e+00 : f32
    %550 = vector.broadcast %cst_732 : f32 to vector<16x128xf32>
    %551 = arith.maximumf %549, %550 : vector<16x128xf32>
    %c0_733 = arith.constant 0 : index
    %c0_734 = arith.constant 0 : index
    %552 = vector.load %arg18[%c0_733, %c0_734] : memref<16x128xf32, #tpu.memory_space<vmem>>, vector<16x128xf32>
    %c0_735 = arith.constant 0 : index
    %c0_736 = arith.constant 0 : index
    %553 = vector.load %arg13[%c0_735, %c0_736] : memref<1x128xf32, #tpu.memory_space<vmem>>, vector<1x128xf32>
    %554 = vector.broadcast %553 : vector<1x128xf32> to vector<16x128xf32>
    %555 = arith.mulf %552, %554 : vector<16x128xf32>
    %556 = arith.addf %551, %555 : vector<16x128xf32>
    %c0_737 = arith.constant 0 : index
    %c0_738 = arith.constant 0 : index
    %557 = vector.load %arg14[%c0_737, %c0_738] : memref<1x128xf32, #tpu.memory_space<vmem>>, vector<1x128xf32>
    %558 = vector.broadcast %557 : vector<1x128xf32> to vector<16x128xf32>
    %559 = arith.addf %556, %558 : vector<16x128xf32>
    %cst_739 = arith.constant 0.000000e+00 : f32
    %560 = vector.broadcast %cst_739 : f32 to vector<16x128xf32>
    %561 = arith.maximumf %559, %560 : vector<16x128xf32>
    %c0_740 = arith.constant 0 : index
    %c0_741 = arith.constant 0 : index
    %c0_742 = arith.constant 0 : index
    %562 = vector.load %arg15[%c0_740, %c0_741, %c0_742] : memref<1x16x128xf32, #tpu.memory_space<vmem>>, vector<1x16x128xf32>
    %563 = vector.shape_cast %562 : vector<1x16x128xf32> to vector<16x128xf32>
    %564 = vector.shape_cast %561 : vector<16x128xf32> to vector<1x16x128xf32>
    tpu.vector_store %arg15[%c0_740, %c0_741, %c0_742], %564 {strides = array<i32>} : memref<1x16x128xf32, #tpu.memory_space<vmem>>, vector<1x16x128xf32>,
    return
  }
  func.func @transform_0(%arg0: i32) -> (i32, i32, i32) {
    %c0_i32 = arith.constant 0 : i32
    %c0_i32_0 = arith.constant 0 : i32
    %c0_i32_1 = arith.constant 0 : i32
    return %arg0, %c0_i32, %c0_i32_0 : i32, i32, i32
  }
  func.func @transform_1(%arg0: i32) -> (i32, i32) {
    %c0_i32 = arith.constant 0 : i32
    %c0_i32_0 = arith.constant 0 : i32
    %c0_i32_1 = arith.constant 0 : i32
    return %c0_i32, %c0_i32_0 : i32, i32
  }
  func.func @transform_2(%arg0: i32) -> (i32, i32) {
    %c0_i32 = arith.constant 0 : i32
    %c0_i32_0 = arith.constant 0 : i32
    %c0_i32_1 = arith.constant 0 : i32
    return %c0_i32, %c0_i32_0 : i32, i32
  }
  func.func @transform_3(%arg0: i32) -> (i32, i32, i32) {
    %c0_i32 = arith.constant 0 : i32
    %c0_i32_0 = arith.constant 0 : i32
    %c0_i32_1 = arith.constant 0 : i32
    %c0_i32_2 = arith.constant 0 : i32
    return %c0_i32, %c0_i32_0, %c0_i32_1 : i32, i32, i32
  }
  func.func @transform_4(%arg0: i32) -> (i32, i32, i32) {
    %c0_i32 = arith.constant 0 : i32
    %c0_i32_0 = arith.constant 0 : i32
    %c0_i32_1 = arith.constant 0 : i32
    %c0_i32_2 = arith.constant 0 : i32
    return %c0_i32, %c0_i32_0, %c0_i32_1 : i32, i32, i32
  }
  func.func @transform_5(%arg0: i32) -> (i32, i32, i32) {
    %c0_i32 = arith.constant 0 : i32
    %c0_i32_0 = arith.constant 0 : i32
    %c0_i32_1 = arith.constant 0 : i32
    %c0_i32_2 = arith.constant 0 : i32
    return %c0_i32, %c0_i32_0, %c0_i32_1 : i32, i32, i32
  }
  func.func @transform_6(%arg0: i32) -> (i32, i32, i32) {
    %c0_i32 = arith.constant 0 : i32
    %c0_i32_0 = arith.constant 0 : i32
    %c0_i32_1 = arith.constant 0 : i32
    %c0_i32_2 = arith.constant 0 : i32
    return %c0_i32, %c0_i32_0, %c0_i32_1 : i32, i32, i32
  }
  func.func @transform_7(%arg0: i32) -> (i32, i32, i32) {
    %c0_i32 = arith.constant 0 : i32
    %c0_i32_0 = arith.constant 0 : i32
    %c0_i32_1 = arith.constant 0 : i32
    %c0_i32_2 = arith.constant 0 : i32
    return %c0_i32, %c0_i32_0, %c0_i32_1 : i32, i32, i32
  }
  func.func @transform_8(%arg0: i32) -> (i32, i32, i32) {
    %c0_i32 = arith.constant 0 : i32
    %c0_i32_0 = arith.constant 0 : i32
    %c0_i32_1 = arith.constant 0 : i32
    %c0_i32_2 = arith.constant 0 : i32
    return %c0_i32, %c0_i32_0, %c0_i32_1 : i32, i32, i32
  }
  func.func @transform_9(%arg0: i32) -> (i32, i32) {
    %c0_i32 = arith.constant 0 : i32
    %c0_i32_0 = arith.constant 0 : i32
    %c0_i32_1 = arith.constant 0 : i32
    return %c0_i32, %c0_i32_0 : i32, i32
  }
  func.func @transform_10(%arg0: i32) -> (i32, i32) {
    %c0_i32 = arith.constant 0 : i32
    %c0_i32_0 = arith.constant 0 : i32
    %c0_i32_1 = arith.constant 0 : i32
    return %c0_i32, %c0_i32_0 : i32, i32
  }
  func.func @transform_11(%arg0: i32) -> (i32, i32) {
    %c0_i32 = arith.constant 0 : i32
    %c0_i32_0 = arith.constant 0 : i32
    %c0_i32_1 = arith.constant 0 : i32
    return %c0_i32, %c0_i32_0 : i32, i32
  }
  func.func @transform_12(%arg0: i32) -> (i32, i32) {
    %c0_i32 = arith.constant 0 : i32
    %c0_i32_0 = arith.constant 0 : i32
    %c0_i32_1 = arith.constant 0 : i32
    return %c0_i32, %c0_i32_0 : i32, i32
  }
  func.func @transform_13(%arg0: i32) -> (i32, i32) {
    %c0_i32 = arith.constant 0 : i32
    %c0_i32_0 = arith.constant 0 : i32
    %c0_i32_1 = arith.constant 0 : i32
    return %c0_i32, %c0_i32_0 : i32, i32
  }
  func.func @transform_14(%arg0: i32) -> (i32, i32, i32) {
    %c0_i32 = arith.constant 0 : i32
    %c0_i32_0 = arith.constant 0 : i32
    %c0_i32_1 = arith.constant 0 : i32
    return %arg0, %c0_i32, %c0_i32_0 : i32, i32, i32
  }
}

</mosaic_0001>

<llo_original>
// kernel: tpu_custom_call.1
$region0: #{tpu_custom_call.1}
  #allocation0 [shape = 'u32[]', space=smem, size = 0x4, offset = 0x4, fixed_abs, tag = 'smem constant byte address 0x4 - core index']
  #allocation1 [shape = 'u32[144,128]{1,0:T(1,128)}', space=vmem, size = 0x12000, scoped, tag = 'internal scratch']
  #allocation2 [shape = 'f32[64,32]{1,0:T(8,128)}', space=vmem, size = 0x8000, scoped, tag = 'scratch operand']
  #allocation3 [shape = 'f32[32,128]{1,0:T(8,128)}', space=vmem, size = 0x4000, scoped, tag = 'scratch operand']
  #allocation4 [shape = 'f32[16,128]{1,0:T(8,128)}', space=vmem, size = 0x2000, scoped, tag = 'scratch operand']
  #allocation5 [shape = 'f32[18,4]{1,0:T(8,128)}', space=vmem, size = 0x3000, scoped, tag = 'scratch operand']
  %s0 = inlined_call_operand.vmem [shape: f32[2,16,4], index: 0, kind: input, shape index: {}]
  %s1 = inlined_call_operand.hbm [shape: f32[4,32], index: 1, kind: input, shape index: {}]
  %s2 = inlined_call_operand.hbm [shape: f32[4,128], index: 2, kind: input, shape index: {}]
  %s3 = inlined_call_operand.hbm [shape: f32[5,256,128], index: 3, kind: input, shape index: {}]
  %s4 = inlined_call_operand.vmem [shape: f32[5,128,32], index: 4, kind: input, shape index: {}]
  %s5 = inlined_call_operand.hbm [shape: f32[5,128,128], index: 5, kind: input, shape index: {}]
  %s6 = inlined_call_operand.hbm [shape: f32[25,256,128], index: 6, kind: input, shape index: {}]
  %s7 = inlined_call_operand.hbm [shape: f32[6,1,128], index: 7, kind: input, shape index: {}]
  %s8 = inlined_call_operand.hbm [shape: f32[6,1,128], index: 8, kind: input, shape index: {}]
  %s9 = inlined_call_operand.hbm [shape: f32[4,128], index: 9, kind: input, shape index: {}]
  %s10 = inlined_call_operand.hbm [shape: f32[1,128], index: 10, kind: input, shape index: {}]
  %s11 = inlined_call_operand.hbm [shape: f32[1,128], index: 11, kind: input, shape index: {}]
  %s12 = inlined_call_operand.hbm [shape: f32[1,128], index: 12, kind: input, shape index: {}]
  %s13 = inlined_call_operand.hbm [shape: f32[1,128], index: 13, kind: input, shape index: {}]
  %s14 = inlined_call_operand.hbm [shape: f32[2,16,128], index: 14, kind: output, shape index: {}]
  %s15 = sld [smem:[#allocation0]]
  $region137: #{tpu_custom_call.1} parent=0
    _
  %s17 = ssub.s32 1, %s15
  %s18 = scalar_select 0, %s17, %s15
  $region1: #{tpu_custom_call.1} parent=0
    #allocation6 [shape = 'u8[2048]{0}', space=vmem, size = 0x800, scoped, tag = 'input window, operand 1, single buffered']
    #allocation7 [shape = 's32[2]{0}', space=sflag, size = 0x8, scoped, tag = 'scoped memory for tpu_custom_call.1']
    #allocation8 [shape = 's32[2]{0}', space=sflag, size = 0x8, scoped, tag = 'scoped memory for tpu_custom_call.1']
    #allocation9 [shape = 'u8[2048]{0}', space=vmem, size = 0x800, scoped, tag = 'input window, operand 2, single buffered']
    #allocation10 [shape = 's32[1]{0}', space=sflag, size = 0x4, scoped, tag = 'scoped memory for tpu_custom_call.1']
    #allocation11 [shape = 'u8[655360]{0}', space=vmem, size = 0xa0000, scoped, tag = 'input window, operand 3, single buffered']
    #allocation12 [shape = 'u8[327680]{0}', space=vmem, size = 0x50000, scoped, tag = 'input window, operand 5, single buffered']
    #allocation13 [shape = 's32[1]{0}', space=sflag, size = 0x4, scoped, tag = 'scoped memory for tpu_custom_call.1']
    #allocation14 [shape = 'u8[3276800]{0}', space=vmem, size = 0x320000, scoped, tag = 'input window, operand 6, single buffered']
    #allocation15 [shape = 'u8[3072]{0}', space=vmem, size = 0xc00, scoped, tag = 'input window, operand 7, single buffered']
    #allocation16 [shape = 's32[1]{0}', space=sflag, size = 0x4, scoped, tag = 'scoped memory for tpu_custom_call.1']
    #allocation17 [shape = 'u8[3072]{0}', space=vmem, size = 0xc00, scoped, tag = 'input window, operand 8, single buffered']
    #allocation18 [shape = 'u8[2048]{0}', space=vmem, size = 0x800, scoped, tag = 'input window, operand 9, single buffered']
    #allocation19 [shape = 's32[1]{0}', space=sflag, size = 0x4, scoped, tag = 'scoped memory for tpu_custom_call.1']
    #allocation20 [shape = 'u8[512]{0}', space=vmem, size = 0x400, scoped, tag = 'input window, operand 10, single buffered']
    #allocation21 [shape = 'u8[512]{0}', space=vmem, size = 0x400, scoped, tag = 'input window, operand 11, single buffered']
    #allocation22 [shape = 's32[1]{0}', space=sflag, size = 0x4, scoped, tag = 'scoped memory for tpu_custom_call.1']
    #allocation23 [shape = 'u8[512]{0}', space=vmem, size = 0x400, scoped, tag = 'input window, operand 12, single buffered']
    #allocation24 [shape = 'u8[512]{0}', space=vmem, size = 0x400, scoped, tag = 'input window, operand 13, single buffered']
    #allocation25 [shape = 's32[1]{0}', space=sflag, size = 0x4, scoped, tag = 'scoped memory for tpu_custom_call.1']
    #allocation26 [shape = 'u8[16384]{0}', space=vmem, size = 0x4000, scoped, tag = 'output window, operand 0']
    %19 = vsyncpa [#allocation7], 0
    %20 = vsyncpa [#allocation10], 0
    %21 = vsyncpa [#allocation13], 0
    %22 = vsyncpa [#allocation16], 0
    %23 = vsyncpa [#allocation19], 0
    %24 = vsyncpa [#allocation22], 0
    %25 = vsyncpa [#allocation25], 0
    %26 = vsyncpa [#allocation8], 0
    %s27 = scalar_lea.sflag [#allocation8], 1
    %28 = vsyncpa %s27, 0
    loop: start=0, step=1, limit=4
    $region2: #{tpu_custom_call.1} parent=1 // loop_pre_header
      _
    $region3: #{tpu_custom_call.1} parent=1 // loop_header
      %s30 = sphi 0, %s34
      %p31 = scmp.ge.s32.totalorder %s30, 4
      %s40 = sphi 0, %s42
      %s43 = sphi 0, %s40
      %s44 = sphi 0, %s43
      %s60 = sphi 0, %s44
      %s64 = sphi 0, %s64
      %s66 = sphi 0, %s64
      %s67 = sphi 0, %s66
      %s81 = sphi 0, %s67
      %s85 = sphi 0, %s85
      %s87 = sphi 0, %s85
      %s88 = sphi 0, %s87
      %s102 = sphi 0, %s88
      %s106 = sphi 0, %s106
      %s108 = sphi 0, %s106
      %s109 = sphi 0, %s108
      %s123 = sphi 0, %s109
      %s127 = sphi 0, %s127
      %s129 = sphi 0, %s127
      %s130 = sphi 0, %s129
      %s144 = sphi 0, %s130
      %s148 = sphi 0, %s148
      %s150 = sphi 0, %s148
      %s151 = sphi 0, %s150
      %s165 = sphi 0, %s151
      %s169 = sphi 0, %s169
      %s171 = sphi 0, %s169
      %s172 = sphi 0, %s171
      %s186 = sphi 0, %s172
      %s190 = sphi 0, %s190
      %s192 = sphi 0, %s190
      %s193 = sphi 0, %s192
      %s207 = sphi 0, %s193
      %s211 = sphi 0, %s211
      %s213 = sphi 0, %s211
      %s214 = sphi 0, %s213
      %s228 = sphi 0, %s214
      %s232 = sphi 0, %s232
      %s234 = sphi 0, %s232
      %s235 = sphi 0, %s234
      %s249 = sphi 0, %s235
      %s253 = sphi 0, %s253
      %s255 = sphi 0, %s253
      %s256 = sphi 0, %s255
      %s270 = sphi 0, %s256
      %s274 = sphi 0, %s274
      %s276 = sphi 0, %s274
      %s277 = sphi 0, %s276
      %s291 = sphi 0, %s277
      %s295 = sphi 0, %s295
      %s297 = sphi 0, %s295
      %s298 = sphi 0, %s297
      %s312 = sphi 0, %s298
      %s316 = sphi 0, %s316
      %s318 = sphi 0, %s316
      %s319 = sphi 0, %s318
      %s333 = sphi 0, %s319
      %s339 = sphi 0, %s341
      %s342 = sphi 0, %s339
      %s343 = sphi 0, %s342
      %s359 = sphi 0, %s343
    $region4: #{tpu_custom_call.1} parent=1 // loop_header_branch
      %33 = sbr.rel (%p31) target = $region8
    $region5: #{tpu_custom_call.1} parent=1 // loop_body
      %s35 = ssub.s32 %s30, 1
      %s36 = ssub.s32 %s30, 2
      %s37 = sadd.s32 %s30, 1
      %s38 = ssub.s32 %s30, %s37
      %p39 = scmp.eq.s32.totalorder %s38, 0
      %s41 = sadd.s32 %s40, 1
      %s42 = scalar_select %p39, %s40, %s41
      %p45 = pneg %p39
      %p46 = scmp.eq.s32.totalorder %s30, 1
      %p47 = por %p45, %p46
      %p48 = scmp.ne.s32.totalorder %s40, %s43
      %p49 = scmp.eq.s32.totalorder %s30, 0
      %p50 = por %p48, %p49
      %p51 = scmp.ne.s32.totalorder %s40, %s43
      %p52 = scmp.eq.s32.totalorder %s35, 1
      %p53 = por %p51, %p52
      %p54 = scmp.ne.s32.totalorder %s43, %s44
      %p55 = scmp.eq.s32.totalorder %s35, 0
      %p56 = por %p54, %p55
      %p57 = scmp.ne.s32.totalorder %s43, %s44
      %p58 = scmp.eq.s32.totalorder %s36, 1
      %p59 = por %p57, %p58
      %p61 = scmp.ne.s32.totalorder %s44, %s60
      %p62 = scmp.eq.s32.totalorder %s36, 0
      %p63 = por %p61, %p62
      %s65 = sadd.s32 %s64, 1
      %p68 = scmp.eq.s32.totalorder %s30, 1
      %p69 = scmp.ne.s32.totalorder %s64, %s66
      %p70 = scmp.eq.s32.totalorder %s30, 0
      %p71 = por %p69, %p70
      %p72 = scmp.ne.s32.totalorder %s64, %s66
      %p73 = scmp.eq.s32.totalorder %s35, 1
      %p74 = por %p72, %p73
      %p75 = scmp.ne.s32.totalorder %s66, %s67
      %p76 = scmp.eq.s32.totalorder %s35, 0
      %p77 = por %p75, %p76
      %p78 = scmp.ne.s32.totalorder %s66, %s67
      %p79 = scmp.eq.s32.totalorder %s36, 1
      %p80 = por %p78, %p79
      %p82 = scmp.ne.s32.totalorder %s67, %s81
      %p83 = scmp.eq.s32.totalorder %s36, 0
      %p84 = por %p82, %p83
      %s86 = sadd.s32 %s85, 1
      %p89 = scmp.eq.s32.totalorder %s30, 1
      %p90 = scmp.ne.s32.totalorder %s85, %s87
      %p91 = scmp.eq.s32.totalorder %s30, 0
      %p92 = por %p90, %p91
      %p93 = scmp.ne.s32.totalorder %s85, %s87
      %p94 = scmp.eq.s32.totalorder %s35, 1
      %p95 = por %p93, %p94
      %p96 = scmp.ne.s32.totalorder %s87, %s88
      %p97 = scmp.eq.s32.totalorder %s35, 0
      %p98 = por %p96, %p97
      %p99 = scmp.ne.s32.totalorder %s87, %s88
      %p100 = scmp.eq.s32.totalorder %s36, 1
      %p101 = por %p99, %p100
      %p103 = scmp.ne.s32.totalorder %s88, %s102
      %p104 = scmp.eq.s32.totalorder %s36, 0
      %p105 = por %p103, %p104
      %s107 = sadd.s32 %s106, 1
      %p110 = scmp.eq.s32.totalorder %s30, 1
      %p111 = scmp.ne.s32.totalorder %s106, %s108
      %p112 = scmp.eq.s32.totalorder %s30, 0
      %p113 = por %p111, %p112
      %p114 = scmp.ne.s32.totalorder %s106, %s108
      %p115 = scmp.eq.s32.totalorder %s35, 1
      %p116 = por %p114, %p115
      %p117 = scmp.ne.s32.totalorder %s108, %s109
      %p118 = scmp.eq.s32.totalorder %s35, 0
      %p119 = por %p117, %p118
      %p120 = scmp.ne.s32.totalorder %s108, %s109
      %p121 = scmp.eq.s32.totalorder %s36, 1
      %p122 = por %p120, %p121
      %p124 = scmp.ne.s32.totalorder %s109, %s123
      %p125 = scmp.eq.s32.totalorder %s36, 0
      %p126 = por %p124, %p125
      %s128 = sadd.s32 %s127, 1
      %p131 = scmp.eq.s32.totalorder %s30, 1
      %p132 = scmp.ne.s32.totalorder %s127, %s129
      %p133 = scmp.eq.s32.totalorder %s30, 0
      %p134 = por %p132, %p133
      %p135 = scmp.ne.s32.totalorder %s127, %s129
      %p136 = scmp.eq.s32.totalorder %s35, 1
      %p137 = por %p135, %p136
      %p138 = scmp.ne.s32.totalorder %s129, %s130
      %p139 = scmp.eq.s32.totalorder %s35, 0
      %p140 = por %p138, %p139
      %p141 = scmp.ne.s32.totalorder %s129, %s130
      %p142 = scmp.eq.s32.totalorder %s36, 1
      %p143 = por %p141, %p142
      %p145 = scmp.ne.s32.totalorder %s130, %s144
      %p146 = scmp.eq.s32.totalorder %s36, 0
      %p147 = por %p145, %p146
      %s149 = sadd.s32 %s148, 1
      %p152 = scmp.eq.s32.totalorder %s30, 1
      %p153 = scmp.ne.s32.totalorder %s148, %s150
      %p154 = scmp.eq.s32.totalorder %s30, 0
      %p155 = por %p153, %p154
      %p156 = scmp.ne.s32.totalorder %s148, %s150
      %p157 = scmp.eq.s32.totalorder %s35, 1
      %p158 = por %p156, %p157
      %p159 = scmp.ne.s32.totalorder %s150, %s151
      %p160 = scmp.eq.s32.totalorder %s35, 0
      %p161 = por %p159, %p160
      %p162 = scmp.ne.s32.totalorder %s150, %s151
      %p163 = scmp.eq.s32.totalorder %s36, 1
      %p164 = por %p162, %p163
      %p166 = scmp.ne.s32.totalorder %s151, %s165
      %p167 = scmp.eq.s32.totalorder %s36, 0
      %p168 = por %p166, %p167
      %s170 = sadd.s32 %s169, 1
      %p173 = scmp.eq.s32.totalorder %s30, 1
      %p174 = scmp.ne.s32.totalorder %s169, %s171
      %p175 = scmp.eq.s32.totalorder %s30, 0
      %p176 = por %p174, %p175
      %p177 = scmp.ne.s32.totalorder %s169, %s171
      %p178 = scmp.eq.s32.totalorder %s35, 1
      %p179 = por %p177, %p178
      %p180 = scmp.ne.s32.totalorder %s171, %s172
      %p181 = scmp.eq.s32.totalorder %s35, 0
      %p182 = por %p180, %p181
      %p183 = scmp.ne.s32.totalorder %s171, %s172
      %p184 = scmp.eq.s32.totalorder %s36, 1
      %p185 = por %p183, %p184
      %p187 = scmp.ne.s32.totalorder %s172, %s186
      %p188 = scmp.eq.s32.totalorder %s36, 0
      %p189 = por %p187, %p188
      %s191 = sadd.s32 %s190, 1
      %p194 = scmp.eq.s32.totalorder %s30, 1
      %p195 = scmp.ne.s32.totalorder %s190, %s192
      %p196 = scmp.eq.s32.totalorder %s30, 0
      %p197 = por %p195, %p196
      %p198 = scmp.ne.s32.totalorder %s190, %s192
      %p199 = scmp.eq.s32.totalorder %s35, 1
      %p200 = por %p198, %p199
      %p201 = scmp.ne.s32.totalorder %s192, %s193
      %p202 = scmp.eq.s32.totalorder %s35, 0
      %p203 = por %p201, %p202
      %p204 = scmp.ne.s32.totalorder %s192, %s193
      %p205 = scmp.eq.s32.totalorder %s36, 1
      %p206 = por %p204, %p205
      %p208 = scmp.ne.s32.totalorder %s193, %s207
      %p209 = scmp.eq.s32.totalorder %s36, 0
      %p210 = por %p208, %p209
      %s212 = sadd.s32 %s211, 1
      %p215 = scmp.eq.s32.totalorder %s30, 1
      %p216 = scmp.ne.s32.totalorder %s211, %s213
      %p217 = scmp.eq.s32.totalorder %s30, 0
      %p218 = por %p216, %p217
      %p219 = scmp.ne.s32.totalorder %s211, %s213
      %p220 = scmp.eq.s32.totalorder %s35, 1
      %p221 = por %p219, %p220
      %p222 = scmp.ne.s32.totalorder %s213, %s214
      %p223 = scmp.eq.s32.totalorder %s35, 0
      %p224 = por %p222, %p223
      %p225 = scmp.ne.s32.totalorder %s213, %s214
      %p226 = scmp.eq.s32.totalorder %s36, 1
      %p227 = por %p225, %p226
      %p229 = scmp.ne.s32.totalorder %s214, %s228
      %p230 = scmp.eq.s32.totalorder %s36, 0
      %p231 = por %p229, %p230
      %s233 = sadd.s32 %s232, 1
      %p236 = scmp.eq.s32.totalorder %s30, 1
      %p237 = scmp.ne.s32.totalorder %s232, %s234
      %p238 = scmp.eq.s32.totalorder %s30, 0
      %p239 = por %p237, %p238
      %p240 = scmp.ne.s32.totalorder %s232, %s234
      %p241 = scmp.eq.s32.totalorder %s35, 1
      %p242 = por %p240, %p241
      %p243 = scmp.ne.s32.totalorder %s234, %s235
      %p244 = scmp.eq.s32.totalorder %s35, 0
      %p245 = por %p243, %p244
      %p246 = scmp.ne.s32.totalorder %s234, %s235
      %p247 = scmp.eq.s32.totalorder %s36, 1
      %p248 = por %p246, %p247
      %p250 = scmp.ne.s32.totalorder %s235, %s249
      %p251 = scmp.eq.s32.totalorder %s36, 0
      %p252 = por %p250, %p251
      %s254 = sadd.s32 %s253, 1
      %p257 = scmp.eq.s32.totalorder %s30, 1
      %p258 = scmp.ne.s32.totalorder %s253, %s255
      %p259 = scmp.eq.s32.totalorder %s30, 0
      %p260 = por %p258, %p259
      %p261 = scmp.ne.s32.totalorder %s253, %s255
      %p262 = scmp.eq.s32.totalorder %s35, 1
      %p263 = por %p261, %p262
      %p264 = scmp.ne.s32.totalorder %s255, %s256
      %p265 = scmp.eq.s32.totalorder %s35, 0
      %p266 = por %p264, %p265
      %p267 = scmp.ne.s32.totalorder %s255, %s256
      %p268 = scmp.eq.s32.totalorder %s36, 1
      %p269 = por %p267, %p268
      %p271 = scmp.ne.s32.totalorder %s256, %s270
      %p272 = scmp.eq.s32.totalorder %s36, 0
      %p273 = por %p271, %p272
      %s275 = sadd.s32 %s274, 1
      %p278 = scmp.eq.s32.totalorder %s30, 1
      %p279 = scmp.ne.s32.totalorder %s274, %s276
      %p280 = scmp.eq.s32.totalorder %s30, 0
      %p281 = por %p279, %p280
      %p282 = scmp.ne.s32.totalorder %s274, %s276
      %p283 = scmp.eq.s32.totalorder %s35, 1
      %p284 = por %p282, %p283
      %p285 = scmp.ne.s32.totalorder %s276, %s277
      %p286 = scmp.eq.s32.totalorder %s35, 0
      %p287 = por %p285, %p286
      %p288 = scmp.ne.s32.totalorder %s276, %s277
      %p289 = scmp.eq.s32.totalorder %s36, 1
      %p290 = por %p288, %p289
      %p292 = scmp.ne.s32.totalorder %s277, %s291
      %p293 = scmp.eq.s32.totalorder %s36, 0
      %p294 = por %p292, %p293
      %s296 = sadd.s32 %s295, 1
      %p299 = scmp.eq.s32.totalorder %s30, 1
      %p300 = scmp.ne.s32.totalorder %s295, %s297
      %p301 = scmp.eq.s32.totalorder %s30, 0
      %p302 = por %p300, %p301
      %p303 = scmp.ne.s32.totalorder %s295, %s297
      %p304 = scmp.eq.s32.totalorder %s35, 1
      %p305 = por %p303, %p304
      %p306 = scmp.ne.s32.totalorder %s297, %s298
      %p307 = scmp.eq.s32.totalorder %s35, 0
      %p308 = por %p306, %p307
      %p309 = scmp.ne.s32.totalorder %s297, %s298
      %p310 = scmp.eq.s32.totalorder %s36, 1
      %p311 = por %p309, %p310
      %p313 = scmp.ne.s32.totalorder %s298, %s312
      %p314 = scmp.eq.s32.totalorder %s36, 0
      %p315 = por %p313, %p314
      %s317 = sadd.s32 %s316, 1
      %p320 = scmp.eq.s32.totalorder %s30, 1
      %p321 = scmp.ne.s32.totalorder %s316, %s318
      %p322 = scmp.eq.s32.totalorder %s30, 0
      %p323 = por %p321, %p322
      %p324 = scmp.ne.s32.totalorder %s316, %s318
      %p325 = scmp.eq.s32.totalorder %s35, 1
      %p326 = por %p324, %p325
      %p327 = scmp.ne.s32.totalorder %s318, %s319
      %p328 = scmp.eq.s32.totalorder %s35, 0
      %p329 = por %p327, %p328
      %p330 = scmp.ne.s32.totalorder %s318, %s319
      %p331 = scmp.eq.s32.totalorder %s36, 1
      %p332 = por %p330, %p331
      %p334 = scmp.ne.s32.totalorder %s319, %s333
      %p335 = scmp.eq.s32.totalorder %s36, 0
      %p336 = por %p334, %p335
      %s337 = ssub.s32 %s30, %s37
      %p338 = scmp.eq.s32.totalorder %s337, 0
      %s340 = sadd.s32 %s339, 1
      %s341 = scalar_select %p338, %s339, %s340
      %p344 = pneg %p338
      %p345 = scmp.eq.s32.totalorder %s30, 1
      %p346 = por %p344, %p345
      %p347 = scmp.ne.s32.totalorder %s339, %s342
      %p348 = scmp.eq.s32.totalorder %s30, 0
      %p349 = por %p347, %p348
      %p350 = scmp.ne.s32.totalorder %s339, %s342
      %p351 = scmp.eq.s32.totalorder %s35, 1
      %p352 = por %p350, %p351
      %p353 = scmp.ne.s32.totalorder %s342, %s343
      %p354 = scmp.eq.s32.totalorder %s35, 0
      %p355 = por %p353, %p354
      %p356 = scmp.ne.s32.totalorder %s342, %s343
      %p357 = scmp.eq.s32.totalorder %s36, 1
      %p358 = por %p356, %p357
      %p360 = scmp.ne.s32.totalorder %s343, %s359
      %p361 = scmp.eq.s32.totalorder %s36, 0
      %p362 = por %p360, %p361
      %p363 = scmp.le.s32.totalorder 1, %s30
      %p364 = scmp.lt.s32.totalorder %s30, 3
      %p365 = pnand %p363, %p364
      %p366 = pneg %p365
      // Predicated region
      $region9: #{tpu_custom_call.1} parent=5 // pred_check
        _
      $region10: #{tpu_custom_call.1} parent=5 // pred_check_branch
        %368 = sbr.rel (%p365) target = $region12
      $region11: #{tpu_custom_call.1} parent=5 // pred_region
        %s369 = ssub.s32 %s30, 1
        // Predicated region
        $region13: #{tpu_custom_call.1} parent=11 // pred_check
          %p370 = pneg %p77
        $region14: #{tpu_custom_call.1} parent=11 // pred_check_branch
          %372 = sbr.rel (%p370) target = $region16
        $region15: #{tpu_custom_call.1} parent=11 // pred_region
          %s374 = ssub.s32 64, 64
          %375 = vsyncadd [#allocation7], %s374
          %s377 = sshll.u32 [#allocation6], 4
          %s378 = int_to_ptr.vmem [resolvable:$true] %s377
          %380 = dma.hbm_to_vmem [thread:$0]  %s1, 64, %s378, [#allocation7]
        $region16: #{tpu_custom_call.1} parent=11 // pred_fallthru
          _
        // Predicated region
        $region17: #{tpu_custom_call.1} parent=11 // pred_check
          %p381 = pneg %p98
        $region18: #{tpu_custom_call.1} parent=11 // pred_check_branch
          %383 = sbr.rel (%p381) target = $region20
        $region19: #{tpu_custom_call.1} parent=11 // pred_region
          %s385 = ssub.s32 64, 64
          %386 = vsyncadd [#allocation10], %s385
          %s388 = sshll.u32 [#allocation9], 4
          %s389 = int_to_ptr.vmem [resolvable:$true] %s388
          %391 = dma.hbm_to_vmem [thread:$0]  %s2, 64, %s389, [#allocation10]
        $region20: #{tpu_custom_call.1} parent=11 // pred_fallthru
          _
        // Predicated region
        $region21: #{tpu_custom_call.1} parent=11 // pred_check
          %p392 = pneg %p119
        $region22: #{tpu_custom_call.1} parent=11 // pred_check_branch
          %394 = sbr.rel (%p392) target = $region24
        $region23: #{tpu_custom_call.1} parent=11 // pred_region
          %s396 = ssub.s32 20480, 20480
          %397 = vsyncadd [#allocation10], %s396
          %s398 = sshll.u32 [#allocation11], 4
          %s399 = int_to_ptr.vmem [resolvable:$true] %s398
          %404 = dma.hbm_to_vmem [thread:$0]  %s3, 20480, %s399, [#allocation10], 128, 128, 8
        $region24: #{tpu_custom_call.1} parent=11 // pred_fallthru
          _
        // Predicated region
        $region25: #{tpu_custom_call.1} parent=11 // pred_check
          %p405 = pneg %p140
        $region26: #{tpu_custom_call.1} parent=11 // pred_check_branch
          %407 = sbr.rel (%p405) target = $region28
        $region27: #{tpu_custom_call.1} parent=11 // pred_region
          _
        $region28: #{tpu_custom_call.1} parent=11 // pred_fallthru
          _
        // Predicated region
        $region29: #{tpu_custom_call.1} parent=11 // pred_check
          %p408 = pneg %p161
        $region30: #{tpu_custom_call.1} parent=11 // pred_check_branch
          %410 = sbr.rel (%p408) target = $region32
        $region31: #{tpu_custom_call.1} parent=11 // pred_region
          %s412 = ssub.s32 10240, 10240
          %413 = vsyncadd [#allocation13], %s412
          %s414 = sshll.u32 [#allocation12], 4
          %s415 = int_to_ptr.vmem [resolvable:$true] %s414
          %420 = dma.hbm_to_vmem [thread:$0]  %s5, 10240, %s415, [#allocation13], 128, 128, 8
        $region32: #{tpu_custom_call.1} parent=11 // pred_fallthru
          _
        // Predicated region
        $region33: #{tpu_custom_call.1} parent=11 // pred_check
          %p421 = pneg %p182
        $region34: #{tpu_custom_call.1} parent=11 // pred_check_branch
          %423 = sbr.rel (%p421) target = $region36
        $region35: #{tpu_custom_call.1} parent=11 // pred_region
          %s425 = ssub.s32 102400, 102400
          %426 = vsyncadd [#allocation13], %s425
          %s427 = sshll.u32 [#allocation14], 4
          %s428 = int_to_ptr.vmem [resolvable:$true] %s427
          %433 = dma.hbm_to_vmem [thread:$0]  %s6, 102400, %s428, [#allocation13], 128, 128, 8
        $region36: #{tpu_custom_call.1} parent=11 // pred_fallthru
          _
        // Predicated region
        $region37: #{tpu_custom_call.1} parent=11 // pred_check
          %p434 = pneg %p203
        $region38: #{tpu_custom_call.1} parent=11 // pred_check_branch
          %436 = sbr.rel (%p434) target = $region40
        $region39: #{tpu_custom_call.1} parent=11 // pred_region
          %s438 = ssub.s32 96, 96
          %439 = vsyncadd [#allocation16], %s438
          %s440 = sshll.u32 [#allocation15], 4
          %s441 = int_to_ptr.vmem [resolvable:$true] %s440
          %446 = dma.hbm_to_vmem [thread:$0]  %s7, 96, %s441, [#allocation16], 16, 16, 1
        $region40: #{tpu_custom_call.1} parent=11 // pred_fallthru
          _
        // Predicated region
        $region41: #{tpu_custom_call.1} parent=11 // pred_check
          %p447 = pneg %p224
        $region42: #{tpu_custom_call.1} parent=11 // pred_check_branch
          %449 = sbr.rel (%p447) target = $region44
        $region43: #{tpu_custom_call.1} parent=11 // pred_region
          %s451 = ssub.s32 96, 96
          %452 = vsyncadd [#allocation16], %s451
          %s453 = sshll.u32 [#allocation17], 4
          %s454 = int_to_ptr.vmem [resolvable:$true] %s453
          %459 = dma.hbm_to_vmem [thread:$0]  %s8, 96, %s454, [#allocation16], 16, 16, 1
        $region44: #{tpu_custom_call.1} parent=11 // pred_fallthru
          _
        // Predicated region
        $region45: #{tpu_custom_call.1} parent=11 // pred_check
          %p460 = pneg %p245
        $region46: #{tpu_custom_call.1} parent=11 // pred_check_branch
          %462 = sbr.rel (%p460) target = $region48
        $region47: #{tpu_custom_call.1} parent=11 // pred_region
          %s464 = ssub.s32 64, 64
          %465 = vsyncadd [#allocation19], %s464
          %s467 = sshll.u32 [#allocation18], 4
          %s468 = int_to_ptr.vmem [resolvable:$true] %s467
          %470 = dma.hbm_to_vmem [thread:$0]  %s9, 64, %s468, [#allocation19]
        $region48: #{tpu_custom_call.1} parent=11 // pred_fallthru
          _
        // Predicated region
        $region49: #{tpu_custom_call.1} parent=11 // pred_check
          %p471 = pneg %p266
        $region50: #{tpu_custom_call.1} parent=11 // pred_check_branch
          %473 = sbr.rel (%p471) target = $region52
        $region51: #{tpu_custom_call.1} parent=11 // pred_region
          %s475 = ssub.s32 16, 16
          %476 = vsyncadd [#allocation19], %s475
          %s478 = sshll.u32 [#allocation20], 4
          %s479 = int_to_ptr.vmem [resolvable:$true] %s478
          %481 = dma.hbm_to_vmem [thread:$0]  %s10, 16, %s479, [#allocation19]
        $region52: #{tpu_custom_call.1} parent=11 // pred_fallthru
          _
        // Predicated region
        $region53: #{tpu_custom_call.1} parent=11 // pred_check
          %p482 = pneg %p287
        $region54: #{tpu_custom_call.1} parent=11 // pred_check_branch
          %484 = sbr.rel (%p482) target = $region56
        $region55: #{tpu_custom_call.1} parent=11 // pred_region
          %s486 = ssub.s32 16, 16
          %487 = vsyncadd [#allocation22], %s486
          %s489 = sshll.u32 [#allocation21], 4
          %s490 = int_to_ptr.vmem [resolvable:$true] %s489
          %492 = dma.hbm_to_vmem [thread:$0]  %s11, 16, %s490, [#allocation22]
        $region56: #{tpu_custom_call.1} parent=11 // pred_fallthru
          _
        // Predicated region
        $region57: #{tpu_custom_call.1} parent=11 // pred_check
          %p493 = pneg %p308
        $region58: #{tpu_custom_call.1} parent=11 // pred_check_branch
          %495 = sbr.rel (%p493) target = $region60
        $region59: #{tpu_custom_call.1} parent=11 // pred_region
          %s497 = ssub.s32 16, 16
          %498 = vsyncadd [#allocation22], %s497
          %s500 = sshll.u32 [#allocation23], 4
          %s501 = int_to_ptr.vmem [resolvable:$true] %s500
          %503 = dma.hbm_to_vmem [thread:$0]  %s12, 16, %s501, [#allocation22]
        $region60: #{tpu_custom_call.1} parent=11 // pred_fallthru
          _
        // Predicated region
        $region61: #{tpu_custom_call.1} parent=11 // pred_check
          %p504 = pneg %p329
        $region62: #{tpu_custom_call.1} parent=11 // pred_check_branch
          %506 = sbr.rel (%p504) target = $region64
        $region63: #{tpu_custom_call.1} parent=11 // pred_region
          %s508 = ssub.s32 16, 16
          %509 = vsyncadd [#allocation25], %s508
          %s511 = sshll.u32 [#allocation24], 4
          %s512 = int_to_ptr.vmem [resolvable:$true] %s511
          %514 = dma.hbm_to_vmem [thread:$0]  %s13, 16, %s512, [#allocation25]
        $region64: #{tpu_custom_call.1} parent=11 // pred_fallthru
          _
      $region12: #{tpu_custom_call.1} parent=5 // pred_fallthru
        _
      %p515 = scmp.lt.s32.totalorder %s30, 2
      // Predicated region
      $region65: #{tpu_custom_call.1} parent=5 // pred_check
        %p516 = pneg %p515
      $region66: #{tpu_custom_call.1} parent=5 // pred_check_branch
        %518 = sbr.rel (%p516) target = $region68
      $region67: #{tpu_custom_call.1} parent=5 // pred_region
        // Predicated region
        $region69: #{tpu_custom_call.1} parent=67 // pred_check
          %p519 = pneg %p50
        $region70: #{tpu_custom_call.1} parent=67 // pred_check_branch
          %521 = sbr.rel (%p519) target = $region72
        $region71: #{tpu_custom_call.1} parent=67 // pred_region
          %p522 = scmp.lt.s32.totalorder %s30, 1
          %s523 = scalar_select %p522, %s30, 1
          %s524 = smul.addr %s523, 2
          %s525 = smul.addr %s524, 8
          %s526 = scalar_lea.vmem %s0, %s525
        $region72: #{tpu_custom_call.1} parent=67 // pred_fallthru
          _
      $region68: #{tpu_custom_call.1} parent=5 // pred_fallthru
        _
      %p527 = scmp.le.s32.totalorder 1, %s30
      %p528 = scmp.lt.s32.totalorder %s30, 3
      %p529 = pnand %p527, %p528
      %p530 = pneg %p529
      // Predicated region
      $region73: #{tpu_custom_call.1} parent=5 // pred_check
        _
      $region74: #{tpu_custom_call.1} parent=5 // pred_check_branch
        %532 = sbr.rel (%p529) target = $region76
      $region75: #{tpu_custom_call.1} parent=5 // pred_region
        %s533 = ssub.s32 %s30, 1
        // Predicated region
        $region77: #{tpu_custom_call.1} parent=75 // pred_check
          %p534 = pneg %p77
        $region78: #{tpu_custom_call.1} parent=75 // pred_check_branch
          %536 = sbr.rel (%p534) target = $region80
        $region79: #{tpu_custom_call.1} parent=75 // pred_region
          %537 = dma.done [#allocation7], 64
        $region80: #{tpu_custom_call.1} parent=75 // pred_fallthru
          _
        // Predicated region
        $region81: #{tpu_custom_call.1} parent=75 // pred_check
          %p538 = pneg %p98
        $region82: #{tpu_custom_call.1} parent=75 // pred_check_branch
          %540 = sbr.rel (%p538) target = $region84
        $region83: #{tpu_custom_call.1} parent=75 // pred_region
          %541 = dma.done [#allocation10], 64
        $region84: #{tpu_custom_call.1} parent=75 // pred_fallthru
          _
        // Predicated region
        $region85: #{tpu_custom_call.1} parent=75 // pred_check
          %p542 = pneg %p119
        $region86: #{tpu_custom_call.1} parent=75 // pred_check_branch
          %544 = sbr.rel (%p542) target = $region88
        $region87: #{tpu_custom_call.1} parent=75 // pred_region
          %545 = dma.done [#allocation10], 20480
        $region88: #{tpu_custom_call.1} parent=75 // pred_fallthru
          _
        // Predicated region
        $region89: #{tpu_custom_call.1} parent=75 // pred_check
          %p546 = pneg %p161
        $region90: #{tpu_custom_call.1} parent=75 // pred_check_branch
          %548 = sbr.rel (%p546) target = $region92
        $region91: #{tpu_custom_call.1} parent=75 // pred_region
          %549 = dma.done [#allocation13], 10240
        $region92: #{tpu_custom_call.1} parent=75 // pred_fallthru
          _
        // Predicated region
        $region93: #{tpu_custom_call.1} parent=75 // pred_check
          %p550 = pneg %p182
        $region94: #{tpu_custom_call.1} parent=75 // pred_check_branch
          %552 = sbr.rel (%p550) target = $region96
        $region95: #{tpu_custom_call.1} parent=75 // pred_region
          %553 = dma.done [#allocation13], 102400
        $region96: #{tpu_custom_call.1} parent=75 // pred_fallthru
          _
        // Predicated region
        $region97: #{tpu_custom_call.1} parent=75 // pred_check
          %p554 = pneg %p203
        $region98: #{tpu_custom_call.1} parent=75 // pred_check_branch
          %556 = sbr.rel (%p554) target = $region100
        $region99: #{tpu_custom_call.1} parent=75 // pred_region
          %557 = dma.done [#allocation16], 96
        $region100: #{tpu_custom_call.1} parent=75 // pred_fallthru
          _
        // Predicated region
        $region101: #{tpu_custom_call.1} parent=75 // pred_check
          %p558 = pneg %p224
        $region102: #{tpu_custom_call.1} parent=75 // pred_check_branch
          %560 = sbr.rel (%p558) target = $region104
        $region103: #{tpu_custom_call.1} parent=75 // pred_region
          %561 = dma.done [#allocation16], 96
        $region104: #{tpu_custom_call.1} parent=75 // pred_fallthru
          _
        // Predicated region
        $region105: #{tpu_custom_call.1} parent=75 // pred_check
          %p562 = pneg %p245
        $region106: #{tpu_custom_call.1} parent=75 // pred_check_branch
          %564 = sbr.rel (%p562) target = $region108
        $region107: #{tpu_custom_call.1} parent=75 // pred_region
          %565 = dma.done [#allocation19], 64
        $region108: #{tpu_custom_call.1} parent=75 // pred_fallthru
          _
        // Predicated region
        $region109: #{tpu_custom_call.1} parent=75 // pred_check
          %p566 = pneg %p266
        $region110: #{tpu_custom_call.1} parent=75 // pred_check_branch
          %568 = sbr.rel (%p566) target = $region112
        $region111: #{tpu_custom_call.1} parent=75 // pred_region
          %569 = dma.done [#allocation19], 16
        $region112: #{tpu_custom_call.1} parent=75 // pred_fallthru
          _
        // Predicated region
        $region113: #{tpu_custom_call.1} parent=75 // pred_check
          %p570 = pneg %p287
        $region114: #{tpu_custom_call.1} parent=75 // pred_check_branch
          %572 = sbr.rel (%p570) target = $region116
        $region115: #{tpu_custom_call.1} parent=75 // pred_region
          %573 = dma.done [#allocation22], 16
        $region116: #{tpu_custom_call.1} parent=75 // pred_fallthru
          _
        // Predicated region
        $region117: #{tpu_custom_call.1} parent=75 // pred_check
          %p574 = pneg %p308
        $region118: #{tpu_custom_call.1} parent=75 // pred_check_branch
          %576 = sbr.rel (%p574) target = $region120
        $region119: #{tpu_custom_call.1} parent=75 // pred_region
          %577 = dma.done [#allocation22], 16
        $region120: #{tpu_custom_call.1} parent=75 // pred_fallthru
          _
        // Predicated region
        $region121: #{tpu_custom_call.1} parent=75 // pred_check
          %p578 = pneg %p329
        $region122: #{tpu_custom_call.1} parent=75 // pred_check_branch
          %580 = sbr.rel (%p578) target = $region124
        $region123: #{tpu_custom_call.1} parent=75 // pred_region
          %581 = dma.done [#allocation25], 16
        $region124: #{tpu_custom_call.1} parent=75 // pred_fallthru
          _
        %p582 = scmp.lt.s32.totalorder %s35, 1
        %s583 = scalar_select %p582, %s35, 1
        %s584 = smul.addr %s583, 2
        %s585 = smul.addr %s584, 8
        %s586 = scalar_lea.vmem %s0, %s585
        %p587 = pneg %p56
        %p588 = pneg %p53
        %p589 = pneg %p77
        %p590 = pneg %p74
        %p591 = pneg %p98
        %p592 = pneg %p95
        %p593 = pneg %p119
        %p594 = pneg %p116
        %p595 = pneg %p140
        %p596 = pneg %p137
        %p597 = pneg %p161
        %p598 = pneg %p158
        %p599 = pneg %p182
        %p600 = pneg %p179
        %p601 = pneg %p203
        %p602 = pneg %p200
        %p603 = pneg %p224
        %p604 = pneg %p221
        %p605 = pneg %p245
        %p606 = pneg %p242
        %p607 = pneg %p266
        %p608 = pneg %p263
        %p609 = pneg %p287
        %p610 = pneg %p284
        %p611 = pneg %p308
        %p612 = pneg %p305
        %p613 = pneg %p329
        %p614 = pneg %p326
        %p615 = pneg %p355
        %p616 = pneg %p352
        %s617 = sand.u32 %s342, 1
        %s618 = scalar_lea.sflag [#allocation8], %s617
        %s619 = sand.u32 %s342, 1
        %s620 = smul.addr %s619, 16
        %s621 = scalar_lea.vmem [#allocation26], %s620
        %p622 = scmp.lt.s32.totalorder %s35, 1
        %s623 = scalar_select %p622, %s35, 1
        %s624 = smul.addr %s623, 2
        %s625 = smul.addr %s624, 8
        %s626 = scalar_lea.vmem %s0, %s625
        %vm627 = vcmask 261120
        %628 = vst.msk [vmem:[#allocation2] sm:$0xff] %vm627, 0.0
        %629 = vst.msk [vmem:[#allocation2 + $0x8] sm:$0xff] %vm627, 0.0
        %630 = vst.msk [vmem:[#allocation2 + $0x10] sm:$0xff] %vm627, 0.0
        %631 = vst.msk [vmem:[#allocation2 + $0x28] sm:$0xff] %vm627, 0.0
        %632 = vst.msk [vmem:[#allocation2 + $0x30] sm:$0xff] %vm627, 0.0
        %633 = vst.msk [vmem:[#allocation2 + $0x38] sm:$0xff] %vm627, 0.0
        %634 = vst [vmem:[#allocation3 + $0x7] sm:$0x1] -3.4028235e+38
        %635 = vst [vmem:[#allocation3 + $0x18] sm:$0x1] -3.4028235e+38
        %vm636 = vcmask 24576
        %637 = vst.msk [vmem:[#allocation5] sm:$0x1] %vm636, -3.4028235e+38
        %638 = vst.msk [vmem:[#allocation5 + $0x11] sm:$0x1] %vm636, -3.4028235e+38
        %v639 = vld [vmem:[%s626] sm:$0xff]
        %v640 = vld [vmem:[%s626 + $0x8] sm:$0xff]
        %vm641 = vcmask 31744
        %642 = vst.msk [vmem:[#allocation5 + $0x1] sm:$0xff] %vm641, %v639
        %643 = vst.msk [vmem:[#allocation5 + $0x9] sm:$0xff] %vm641, %v640
        %v644 = vld [vmem:[#allocation5] sm:$0xff]
        %v645 = vld [vmem:[#allocation5 + $0x8] sm:$0xff]
        %v646 = vld [vmem:[#allocation5 + $0x1] sm:$0xff]
        %v647 = vld [vmem:[#allocation5 + $0x9] sm:$0xff]
        %v648 = vmax.f32 %v644, %v646
        %v649 = vmax.f32 %v645, %v647
        %v650 = vld [vmem:[#allocation5 + $0x2] sm:$0xff]
        %v651 = vld [vmem:[#allocation5 + $0xa] sm:$0xff]
        %v652 = vmax.f32 %v648, %v650
        %v653 = vmax.f32 %v649, %v651
        %v654 = vld [vmem:[#allocation6] sm:$0xf]
        %v655 = vld [vmem:[#allocation9] sm:$0xf]
        %v656 = vld [vmem:[#allocation15] sm:$0x1]
        %v657 = vld [vmem:[#allocation17] sm:$0x1]
        %v659 = vsel %vm641, %v639, 0
        %v662 = vsel %vm641, %v640, 0
        %vm664 = vcmask 1043456
        %v666 = vsel %vm664, %v654, 0
        %668 = vmatprep.subr.mxu0 0.0
        %669 = vmatpush1.msra.mxu0 %v666
        %670 = vmatprep.subr.mxu0 0.0
        %671 = vmatpush1.msra.mxu0 0.0
        %672 = vmatprep.subr.mxu0 0.0
        %673 = vmatpush1.msra.mxu0 0.0
        %674 = vmatprep.subr.mxu0 0.0
        %675 = vmatpush1.msra.mxu0 0.0
        %676 = vmatprep.subr.mxu0 0.0
        %677 = vmatpush1.msra.mxu0 0.0
        %678 = vmatprep.subr.mxu0 0.0
        %679 = vmatpush1.msra.mxu0 0.0
        %680 = vmatprep.subr.mxu0 0.0
        %681 = vmatpush1.msra.mxu0 0.0
        %682 = vmatprep.subr.mxu0 0.0
        %683 = vmatpush1.msra.mxu0 0.0
        %684 = vmatprep.subr.mxu0 0.0
        %685 = vmatpush1.msra.mxu0 0.0
        %686 = vmatprep.subr.mxu0 0.0
        %687 = vmatpush1.msra.mxu0 0.0
        %688 = vmatprep.subr.mxu0 0.0
        %689 = vmatpush1.msra.mxu0 0.0
        %690 = vmatprep.subr.mxu0 0.0
        %691 = vmatpush1.msra.mxu0 0.0
        %692 = vmatprep.subr.mxu0 0.0
        %693 = vmatpush1.msra.mxu0 0.0
        %694 = vmatprep.subr.mxu0 0.0
        %695 = vmatpush1.msra.mxu0 0.0
        %696 = vmatprep.subr.mxu0 0.0
        %697 = vmatpush1.msra.mxu0 0.0
        %698 = vmatprep.subr.mxu0 0.0
        %699 = vmatpush1.msra.mxu0 0.0
        %700 = vmatprep.subr.mxu0 0.0
        %701 = vmatpush1.msra.mxu0 0.0
        %702 = vmatprep.subr.mxu0 0.0
        %703 = vmatpush1.msra.mxu0 0.0
        %704 = vmatprep.subr.mxu0 0.0
        %705 = vmatpush1.msra.mxu0 0.0
        %706 = vmatprep.subr.mxu0 0.0
        %707 = vmatpush1.msra.mxu0 0.0
        %708 = vmatprep.subr.mxu0 0.0
        %709 = vmatpush1.msra.mxu0 0.0
        %710 = vmatprep.subr.mxu0 0.0
        %711 = vmatpush1.msra.mxu0 0.0
        %712 = vmatprep.subr.mxu0 0.0
        %713 = vmatpush1.msra.mxu0 0.0
        %714 = vmatprep.subr.mxu0 0.0
        %715 = vmatpush1.msra.mxu0 0.0
        %716 = vmatprep.subr.mxu0 0.0
        %717 = vmatpush1.msra.mxu0 0.0
        %718 = vmatprep.subr.mxu0 0.0
        %719 = vmatpush1.msra.mxu0 0.0
        %720 = vmatprep.subr.mxu0 0.0
        %721 = vmatpush1.msra.mxu0 0.0
        %722 = vmatprep.subr.mxu0 0.0
        %723 = vmatpush1.msra.mxu0 0.0
        %724 = vmatprep.subr.mxu0 0.0
        %725 = vmatpush1.msra.mxu0 0.0
        %726 = vmatprep.subr.mxu0 0.0
        %727 = vmatpush1.msra.mxu0 0.0
        %728 = vmatprep.subr.mxu0 0.0
        %729 = vmatpush1.msra.mxu0 0.0
        %730 = vmatprep.subr.mxu0 0.0
        %731 = vmatpush1.msra.mxu0 0.0
        %732 = vmatprep.mubr.f32.mxu0 0.0
        %733 = vmatmul.mubr.f32.gmra.mrb[0].mxu0 %v659
        %v734 = vpop.f32.mrb[0].mxu0
        %v735 = vadd.f32 0.0, %v734
        %v736 = vpop.f32.mrb[0].mxu0
        %737 = vmatprep.mubr.f32.mxu0 0.0
        %738 = vmatmul.mubr.f32.gmra.mrb[0].mxu0 %v662
        %v739 = vpop.f32.mrb[0].mxu0
        %v740 = vadd.f32 0.0, %v739
        %v741 = vpop.f32.mrb[0].mxu0
        %742 = vdwg.mxu0
        %743 = vst.msk [vmem:[#allocation2 + $0x18] sm:$0xff] %vm627, %v735
        %744 = vst.msk [vmem:[#allocation2 + $0x20] sm:$0xff] %vm627, %v740
        %v745 = vld [vmem:[#allocation2 + $0x5] sm:$0xff]
        %v746 = vld [vmem:[#allocation2 + $0xd] sm:$0xff]
        %v747 = vld [vmem:[#allocation2 + $0x6] sm:$0xff]
        %v748 = vld [vmem:[#allocation2 + $0xe] sm:$0xff]
        %v749 = vld [vmem:[#allocation2 + $0x7] sm:$0xff]
        %v750 = vld [vmem:[#allocation2 + $0xf] sm:$0xff]
        %v751 = vld [vmem:[#allocation2 + $0x8] sm:$0xff]
        %v752 = vld [vmem:[#allocation2 + $0x10] sm:$0xff]
        %v753 = vld [vmem:[#allocation2 + $0x9] sm:$0xff]
        %v754 = vld [vmem:[#allocation2 + $0x11] sm:$0xff]
        %v755 = vld [vmem:[#allocation2 + $0xa] sm:$0xff]
        %v756 = vld [vmem:[#allocation2 + $0x12] sm:$0xff]
        %v757 = vld [vmem:[#allocation2 + $0xb] sm:$0xff]
        %v758 = vld [vmem:[#allocation2 + $0x13] sm:$0xff]
        %v759 = vld [vmem:[#allocation2 + $0xc] sm:$0xff]
        %v760 = vld [vmem:[#allocation2 + $0x14] sm:$0xff]
        %763 = vrot.lane.b32.xlu0 %v747, 32
        %v764 = vpop.permute.xlu0 %763
        %765 = vrot.lane.b32.xlu0 %v748, 32
        %v766 = vpop.permute.xlu0 %765
        %771 = vrot.lane.b32.xlu0 %v749, 64
        %v772 = vpop.permute.xlu0 %771
        %773 = vrot.lane.b32.xlu0 %v750, 64
        %v774 = vpop.permute.xlu0 %773
        %779 = vrot.lane.b32.xlu0 %v751, 96
        %v780 = vpop.permute.xlu0 %779
        %781 = vrot.lane.b32.xlu0 %v752, 96
        %v782 = vpop.permute.xlu0 %781
        %787 = vrot.lane.b32.xlu0 %v755, 32
        %v788 = vpop.permute.xlu0 %787
        %789 = vrot.lane.b32.xlu0 %v756, 32
        %v790 = vpop.permute.xlu0 %789
        %795 = vrot.lane.b32.xlu0 %v757, 64
        %v796 = vpop.permute.xlu0 %795
        %797 = vrot.lane.b32.xlu0 %v758, 64
        %v798 = vpop.permute.xlu0 %797
        %803 = vrot.lane.b32.xlu0 %v759, 96
        %v804 = vpop.permute.xlu0 %803
        %805 = vrot.lane.b32.xlu0 %v760, 96
        %v806 = vpop.permute.xlu0 %805
        %v809 = vsel %vm627, %v745, %v764
        %v810 = vsel %vm627, %v746, %v766
        %vm811 = vcmask 523264
        %v812 = vsel %vm811, %v809, %v772
        %v813 = vsel %vm811, %v810, %v774
        %vm814 = vcmask 785408
        %v815 = vsel %vm814, %v812, %v780
        %v816 = vsel %vm814, %v813, %v782
        %v817 = vsel %vm627, %v753, %v788
        %v818 = vsel %vm627, %v754, %v790
        %v819 = vsel %vm811, %v817, %v796
        %v820 = vsel %vm811, %v818, %v798
        %v821 = vsel %vm814, %v819, %v804
        %v822 = vsel %vm814, %v820, %v806
        %v823 = vld [vmem:[#allocation11] sm:$0xff]
        %v824 = vld [vmem:[#allocation11 + $0x8] sm:$0xff]
        %v825 = vld [vmem:[#allocation11 + $0x10] sm:$0xff]
        %v826 = vld [vmem:[#allocation11 + $0x18] sm:$0xff]
        %v827 = vld [vmem:[#allocation11 + $0x20] sm:$0xff]
        %v828 = vld [vmem:[#allocation11 + $0x28] sm:$0xff]
        %v829 = vld [vmem:[#allocation11 + $0x30] sm:$0xff]
        %v830 = vld [vmem:[#allocation11 + $0x38] sm:$0xff]
        %v831 = vld [vmem:[#allocation11 + $0x40] sm:$0xff]
        %v832 = vld [vmem:[#allocation11 + $0x48] sm:$0xff]
        %v833 = vld [vmem:[#allocation11 + $0x50] sm:$0xff]
        %v834 = vld [vmem:[#allocation11 + $0x58] sm:$0xff]
        %v835 = vld [vmem:[#allocation11 + $0x60] sm:$0xff]
        %v836 = vld [vmem:[#allocation11 + $0x68] sm:$0xff]
        %v837 = vld [vmem:[#allocation11 + $0x70] sm:$0xff]
        %v838 = vld [vmem:[#allocation11 + $0x78] sm:$0xff]
        %v839 = vld [vmem:[#allocation11 + $0x80] sm:$0xff]
        %v840 = vld [vmem:[#allocation11 + $0x88] sm:$0xff]
        %v841 = vld [vmem:[#allocation11 + $0x90] sm:$0xff]
        %v842 = vld [vmem:[#allocation11 + $0x98] sm:$0xff]
        %v843 = vld [vmem:[#allocation11 + $0xa0] sm:$0xff]
        %v844 = vld [vmem:[#allocation11 + $0xa8] sm:$0xff]
        %v845 = vld [vmem:[#allocation11 + $0xb0] sm:$0xff]
        %v846 = vld [vmem:[#allocation11 + $0xb8] sm:$0xff]
        %v847 = vld [vmem:[#allocation11 + $0xc0] sm:$0xff]
        %v848 = vld [vmem:[#allocation11 + $0xc8] sm:$0xff]
        %v849 = vld [vmem:[#allocation11 + $0xd0] sm:$0xff]
        %v850 = vld [vmem:[#allocation11 + $0xd8] sm:$0xff]
        %v851 = vld [vmem:[#allocation11 + $0xe0] sm:$0xff]
        %v852 = vld [vmem:[#allocation11 + $0xe8] sm:$0xff]
        %v853 = vld [vmem:[#allocation11 + $0xf0] sm:$0xff]
        %v854 = vld [vmem:[#allocation11 + $0xf8] sm:$0xff]
        %855 = vmatprep.subr.mxu0 0.0
        %856 = vmatpush1.msra.mxu0 %v823
        %857 = vmatprep.subr.mxu0 0.0
        %858 = vmatpush1.msra.mxu0 %v824
        %859 = vmatprep.subr.mxu0 0.0
        %860 = vmatpush1.msra.mxu0 %v825
        %861 = vmatprep.subr.mxu0 0.0
        %862 = vmatpush1.msra.mxu0 %v826
        %863 = vmatprep.subr.mxu0 0.0
        %864 = vmatpush1.msra.mxu0 %v827
        %865 = vmatprep.subr.mxu0 0.0
        %866 = vmatpush1.msra.mxu0 %v828
        %867 = vmatprep.subr.mxu0 0.0
        %868 = vmatpush1.msra.mxu0 %v829
        %869 = vmatprep.subr.mxu0 0.0
        %870 = vmatpush1.msra.mxu0 %v830
        %871 = vmatprep.subr.mxu0 0.0
        %872 = vmatpush1.msra.mxu0 %v831
        %873 = vmatprep.subr.mxu0 0.0
        %874 = vmatpush1.msra.mxu0 %v832
        %875 = vmatprep.subr.mxu0 0.0
        %876 = vmatpush1.msra.mxu0 %v833
        %877 = vmatprep.subr.mxu0 0.0
        %878 = vmatpush1.msra.mxu0 %v834
        %879 = vmatprep.subr.mxu0 0.0
        %880 = vmatpush1.msra.mxu0 %v835
        %881 = vmatprep.subr.mxu0 0.0
        %882 = vmatpush1.msra.mxu0 %v836
        %883 = vmatprep.subr.mxu0 0.0
        %884 = vmatpush1.msra.mxu0 %v837
        %885 = vmatprep.subr.mxu0 0.0
        %886 = vmatpush1.msra.mxu0 %v838
        %887 = vmatprep.subr.mxu0 0.0
        %888 = vmatpush1.msra.mxu0 %v839
        %889 = vmatprep.subr.mxu0 0.0
        %890 = vmatpush1.msra.mxu0 %v840
        %891 = vmatprep.subr.mxu0 0.0
        %892 = vmatpush1.msra.mxu0 %v841
        %893 = vmatprep.subr.mxu0 0.0
        %894 = vmatpush1.msra.mxu0 %v842
        %895 = vmatprep.subr.mxu0 0.0
        %896 = vmatpush1.msra.mxu0 %v843
        %897 = vmatprep.subr.mxu0 0.0
        %898 = vmatpush1.msra.mxu0 %v844
        %899 = vmatprep.subr.mxu0 0.0
        %900 = vmatpush1.msra.mxu0 %v845
        %901 = vmatprep.subr.mxu0 0.0
        %902 = vmatpush1.msra.mxu0 %v846
        %903 = vmatprep.subr.mxu0 0.0
        %904 = vmatpush1.msra.mxu0 %v847
        %905 = vmatprep.subr.mxu0 0.0
        %906 = vmatpush1.msra.mxu0 %v848
        %907 = vmatprep.subr.mxu0 0.0
        %908 = vmatpush1.msra.mxu0 %v849
        %909 = vmatprep.subr.mxu0 0.0
        %910 = vmatpush1.msra.mxu0 %v850
        %911 = vmatprep.subr.mxu0 0.0
        %912 = vmatpush1.msra.mxu0 %v851
        %913 = vmatprep.subr.mxu0 0.0
        %914 = vmatpush1.msra.mxu0 %v852
        %915 = vmatprep.subr.mxu0 0.0
        %916 = vmatpush1.msra.mxu0 %v853
        %917 = vmatprep.subr.mxu0 0.0
        %918 = vmatpush1.msra.mxu0 %v854
        %919 = vmatprep.mubr.f32.mxu0 %v821
        %920 = vmatmul.mubr.f32.gmra.mrb[0].mxu0 %v815
        %v921 = vpop.f32.mrb[0].mxu0
        %v922 = vadd.f32 0.0, %v921
        %v923 = vpop.f32.mrb[0].mxu0
        %924 = vmatprep.mubr.f32.mxu0 %v822
        %925 = vmatmul.mubr.f32.gmra.mrb[0].mxu0 %v816
        %v926 = vpop.f32.mrb[0].mxu0
        %v927 = vadd.f32 0.0, %v926
        %v928 = vpop.f32.mrb[0].mxu0
        %929 = vdwg.mxu0
        %v931 = vsel %vm641, %v652, 0
        %v934 = vsel %vm641, %v653, 0
        %v937 = vsel %vm664, %v655, 0
        %939 = vmatprep.subr.mxu0 0.0
        %940 = vmatpush1.msra.mxu0 %v937
        %941 = vmatprep.subr.mxu0 0.0
        %942 = vmatpush1.msra.mxu0 0.0
        %943 = vmatprep.subr.mxu0 0.0
        %944 = vmatpush1.msra.mxu0 0.0
        %945 = vmatprep.subr.mxu0 0.0
        %946 = vmatpush1.msra.mxu0 0.0
        %947 = vmatprep.subr.mxu0 0.0
        %948 = vmatpush1.msra.mxu0 0.0
        %949 = vmatprep.subr.mxu0 0.0
        %950 = vmatpush1.msra.mxu0 0.0
        %951 = vmatprep.subr.mxu0 0.0
        %952 = vmatpush1.msra.mxu0 0.0
        %953 = vmatprep.subr.mxu0 0.0
        %954 = vmatpush1.msra.mxu0 0.0
        %955 = vmatprep.subr.mxu0 0.0
        %956 = vmatpush1.msra.mxu0 0.0
        %957 = vmatprep.subr.mxu0 0.0
        %958 = vmatpush1.msra.mxu0 0.0
        %959 = vmatprep.subr.mxu0 0.0
        %960 = vmatpush1.msra.mxu0 0.0
        %961 = vmatprep.subr.mxu0 0.0
        %962 = vmatpush1.msra.mxu0 0.0
        %963 = vmatprep.subr.mxu0 0.0
        %964 = vmatpush1.msra.mxu0 0.0
        %965 = vmatprep.subr.mxu0 0.0
        %966 = vmatpush1.msra.mxu0 0.0
        %967 = vmatprep.subr.mxu0 0.0
        %968 = vmatpush1.msra.mxu0 0.0
        %969 = vmatprep.subr.mxu0 0.0
        %970 = vmatpush1.msra.mxu0 0.0
        %971 = vmatprep.subr.mxu0 0.0
        %972 = vmatpush1.msra.mxu0 0.0
        %973 = vmatprep.subr.mxu0 0.0
        %974 = vmatpush1.msra.mxu0 0.0
        %975 = vmatprep.subr.mxu0 0.0
        %976 = vmatpush1.msra.mxu0 0.0
        %977 = vmatprep.subr.mxu0 0.0
        %978 = vmatpush1.msra.mxu0 0.0
        %979 = vmatprep.subr.mxu0 0.0
        %980 = vmatpush1.msra.mxu0 0.0
        %981 = vmatprep.subr.mxu0 0.0
        %982 = vmatpush1.msra.mxu0 0.0
        %983 = vmatprep.subr.mxu0 0.0
        %984 = vmatpush1.msra.mxu0 0.0
        %985 = vmatprep.subr.mxu0 0.0
        %986 = vmatpush1.msra.mxu0 0.0
        %987 = vmatprep.subr.mxu0 0.0
        %988 = vmatpush1.msra.mxu0 0.0
        %989 = vmatprep.subr.mxu0 0.0
        %990 = vmatpush1.msra.mxu0 0.0
        %991 = vmatprep.subr.mxu0 0.0
        %992 = vmatpush1.msra.mxu0 0.0
        %993 = vmatprep.subr.mxu0 0.0
        %994 = vmatpush1.msra.mxu0 0.0
        %995 = vmatprep.subr.mxu0 0.0
        %996 = vmatpush1.msra.mxu0 0.0
        %997 = vmatprep.subr.mxu0 0.0
        %998 = vmatpush1.msra.mxu0 0.0
        %999 = vmatprep.subr.mxu0 0.0
        %1000 = vmatpush1.msra.mxu0 0.0
        %1001 = vmatprep.subr.mxu0 0.0
        %1002 = vmatpush1.msra.mxu0 0.0
        %1003 = vmatprep.mubr.f32.mxu0 0.0
        %1004 = vmatmul.mubr.f32.gmra.mrb[0].mxu0 %v931
        %v1005 = vpop.f32.mrb[0].mxu0
        %v1006 = vadd.f32 %v922, %v1005
        %v1007 = vpop.f32.mrb[0].mxu0
        %1008 = vmatprep.mubr.f32.mxu0 0.0
        %1009 = vmatmul.mubr.f32.gmra.mrb[0].mxu0 %v934
        %v1010 = vpop.f32.mrb[0].mxu0
        %v1011 = vadd.f32 %v927, %v1010
        %v1012 = vpop.f32.mrb[0].mxu0
        %1013 = vdwg.mxu0
        %v1014 = vld [vmem:[#allocation2 + $0xd] sm:$0xff]
        %v1015 = vld [vmem:[#allocation2 + $0x15] sm:$0xff]
        %v1016 = vld [vmem:[#allocation2 + $0xe] sm:$0xff]
        %v1017 = vld [vmem:[#allocation2 + $0x16] sm:$0xff]
        %v1018 = vld [vmem:[#allocation2 + $0xf] sm:$0xff]
        %v1019 = vld [vmem:[#allocation2 + $0x17] sm:$0xff]
        %v1020 = vld [vmem:[#allocation2 + $0x10] sm:$0xff]
        %v1021 = vld [vmem:[#allocation2 + $0x18] sm:$0xff]
        %v1022 = vld [vmem:[#allocation2 + $0x11] sm:$0xff]
        %v1023 = vld [vmem:[#allocation2 + $0x19] sm:$0xff]
        %v1024 = vld [vmem:[#allocation2 + $0x12] sm:$0xff]
        %v1025 = vld [vmem:[#allocation2 + $0x1a] sm:$0xff]
        %v1026 = vld [vmem:[#allocation2 + $0x13] sm:$0xff]
        %v1027 = vld [vmem:[#allocation2 + $0x1b] sm:$0xff]
        %v1028 = vld [vmem:[#allocation2 + $0x14] sm:$0xff]
        %v1029 = vld [vmem:[#allocation2 + $0x1c] sm:$0xff]
        %1032 = vrot.lane.b32.xlu0 %v1016, 32
        %v1033 = vpop.permute.xlu0 %1032
        %1034 = vrot.lane.b32.xlu0 %v1017, 32
        %v1035 = vpop.permute.xlu0 %1034
        %1040 = vrot.lane.b32.xlu0 %v1018, 64
        %v1041 = vpop.permute.xlu0 %1040
        %1042 = vrot.lane.b32.xlu0 %v1019, 64
        %v1043 = vpop.permute.xlu0 %1042
        %1048 = vrot.lane.b32.xlu0 %v1020, 96
        %v1049 = vpop.permute.xlu0 %1048
        %1050 = vrot.lane.b32.xlu0 %v1021, 96
        %v1051 = vpop.permute.xlu0 %1050
        %1056 = vrot.lane.b32.xlu0 %v1024, 32
        %v1057 = vpop.permute.xlu0 %1056
        %1058 = vrot.lane.b32.xlu0 %v1025, 32
        %v1059 = vpop.permute.xlu0 %1058
        %1064 = vrot.lane.b32.xlu0 %v1026, 64
        %v1065 = vpop.permute.xlu0 %1064
        %1066 = vrot.lane.b32.xlu0 %v1027, 64
        %v1067 = vpop.permute.xlu0 %1066
        %1072 = vrot.lane.b32.xlu0 %v1028, 96
        %v1073 = vpop.permute.xlu0 %1072
        %1074 = vrot.lane.b32.xlu0 %v1029, 96
        %v1075 = vpop.permute.xlu0 %1074
        %v1078 = vsel %vm627, %v1014, %v1033
        %v1079 = vsel %vm627, %v1015, %v1035
        %v1080 = vsel %vm811, %v1078, %v1041
        %v1081 = vsel %vm811, %v1079, %v1043
        %v1082 = vsel %vm814, %v1080, %v1049
        %v1083 = vsel %vm814, %v1081, %v1051
        %v1084 = vsel %vm627, %v1022, %v1057
        %v1085 = vsel %vm627, %v1023, %v1059
        %v1086 = vsel %vm811, %v1084, %v1065
        %v1087 = vsel %vm811, %v1085, %v1067
        %v1088 = vsel %vm814, %v1086, %v1073
        %v1089 = vsel %vm814, %v1087, %v1075
        %s1090 = scalar_lea.vmem [#allocation11], 256
        %v1091 = vld [vmem:[%s1090] sm:$0xff]
        %v1092 = vld [vmem:[%s1090 + $0x8] sm:$0xff]
        %v1093 = vld [vmem:[%s1090 + $0x10] sm:$0xff]
        %v1094 = vld [vmem:[%s1090 + $0x18] sm:$0xff]
        %v1095 = vld [vmem:[%s1090 + $0x20] sm:$0xff]
        %v1096 = vld [vmem:[%s1090 + $0x28] sm:$0xff]
        %v1097 = vld [vmem:[%s1090 + $0x30] sm:$0xff]
        %v1098 = vld [vmem:[%s1090 + $0x38] sm:$0xff]
        %v1099 = vld [vmem:[%s1090 + $0x40] sm:$0xff]
        %v1100 = vld [vmem:[%s1090 + $0x48] sm:$0xff]
        %v1101 = vld [vmem:[%s1090 + $0x50] sm:$0xff]
        %v1102 = vld [vmem:[%s1090 + $0x58] sm:$0xff]
        %v1103 = vld [vmem:[%s1090 + $0x60] sm:$0xff]
        %v1104 = vld [vmem:[%s1090 + $0x68] sm:$0xff]
        %v1105 = vld [vmem:[%s1090 + $0x70] sm:$0xff]
        %v1106 = vld [vmem:[%s1090 + $0x78] sm:$0xff]
        %v1107 = vld [vmem:[%s1090 + $0x80] sm:$0xff]
        %v1108 = vld [vmem:[%s1090 + $0x88] sm:$0xff]
        %v1109 = vld [vmem:[%s1090 + $0x90] sm:$0xff]
        %v1110 = vld [vmem:[%s1090 + $0x98] sm:$0xff]
        %v1111 = vld [vmem:[%s1090 + $0xa0] sm:$0xff]
        %v1112 = vld [vmem:[%s1090 + $0xa8] sm:$0xff]
        %v1113 = vld [vmem:[%s1090 + $0xb0] sm:$0xff]
        %v1114 = vld [vmem:[%s1090 + $0xb8] sm:$0xff]
        %v1115 = vld [vmem:[%s1090 + $0xc0] sm:$0xff]
        %v1116 = vld [vmem:[%s1090 + $0xc8] sm:$0xff]
        %v1117 = vld [vmem:[%s1090 + $0xd0] sm:$0xff]
        %v1118 = vld [vmem:[%s1090 + $0xd8] sm:$0xff]
        %v1119 = vld [vmem:[%s1090 + $0xe0] sm:$0xff]
        %v1120 = vld [vmem:[%s1090 + $0xe8] sm:$0xff]
        %v1121 = vld [vmem:[%s1090 + $0xf0] sm:$0xff]
        %v1122 = vld [vmem:[%s1090 + $0xf8] sm:$0xff]
        %1123 = vmatprep.subr.mxu0 0.0
        %1124 = vmatpush1.msra.mxu0 %v1091
        %1125 = vmatprep.subr.mxu0 0.0
        %1126 = vmatpush1.msra.mxu0 %v1092
        %1127 = vmatprep.subr.mxu0 0.0
        %1128 = vmatpush1.msra.mxu0 %v1093
        %1129 = vmatprep.subr.mxu0 0.0
        %1130 = vmatpush1.msra.mxu0 %v1094
        %1131 = vmatprep.subr.mxu0 0.0
        %1132 = vmatpush1.msra.mxu0 %v1095
        %1133 = vmatprep.subr.mxu0 0.0
        %1134 = vmatpush1.msra.mxu0 %v1096
        %1135 = vmatprep.subr.mxu0 0.0
        %1136 = vmatpush1.msra.mxu0 %v1097
        %1137 = vmatprep.subr.mxu0 0.0
        %1138 = vmatpush1.msra.mxu0 %v1098
        %1139 = vmatprep.subr.mxu0 0.0
        %1140 = vmatpush1.msra.mxu0 %v1099
        %1141 = vmatprep.subr.mxu0 0.0
        %1142 = vmatpush1.msra.mxu0 %v1100
        %1143 = vmatprep.subr.mxu0 0.0
        %1144 = vmatpush1.msra.mxu0 %v1101
        %1145 = vmatprep.subr.mxu0 0.0
        %1146 = vmatpush1.msra.mxu0 %v1102
        %1147 = vmatprep.subr.mxu0 0.0
        %1148 = vmatpush1.msra.mxu0 %v1103
        %1149 = vmatprep.subr.mxu0 0.0
        %1150 = vmatpush1.msra.mxu0 %v1104
        %1151 = vmatprep.subr.mxu0 0.0
        %1152 = vmatpush1.msra.mxu0 %v1105
        %1153 = vmatprep.subr.mxu0 0.0
        %1154 = vmatpush1.msra.mxu0 %v1106
        %1155 = vmatprep.subr.mxu0 0.0
        %1156 = vmatpush1.msra.mxu0 %v1107
        %1157 = vmatprep.subr.mxu0 0.0
        %1158 = vmatpush1.msra.mxu0 %v1108
        %1159 = vmatprep.subr.mxu0 0.0
        %1160 = vmatpush1.msra.mxu0 %v1109
        %1161 = vmatprep.subr.mxu0 0.0
        %1162 = vmatpush1.msra.mxu0 %v1110
        %1163 = vmatprep.subr.mxu0 0.0
        %1164 = vmatpush1.msra.mxu0 %v1111
        %1165 = vmatprep.subr.mxu0 0.0
        %1166 = vmatpush1.msra.mxu0 %v1112
        %1167 = vmatprep.subr.mxu0 0.0
        %1168 = vmatpush1.msra.mxu0 %v1113
        %1169 = vmatprep.subr.mxu0 0.0
        %1170 = vmatpush1.msra.mxu0 %v1114
        %1171 = vmatprep.subr.mxu0 0.0
        %1172 = vmatpush1.msra.mxu0 %v1115
        %1173 = vmatprep.subr.mxu0 0.0
        %1174 = vmatpush1.msra.mxu0 %v1116
        %1175 = vmatprep.subr.mxu0 0.0
        %1176 = vmatpush1.msra.mxu0 %v1117
        %1177 = vmatprep.subr.mxu0 0.0
        %1178 = vmatpush1.msra.mxu0 %v1118
        %1179 = vmatprep.subr.mxu0 0.0
        %1180 = vmatpush1.msra.mxu0 %v1119
        %1181 = vmatprep.subr.mxu0 0.0
        %1182 = vmatpush1.msra.mxu0 %v1120
        %1183 = vmatprep.subr.mxu0 0.0
        %1184 = vmatpush1.msra.mxu0 %v1121
        %1185 = vmatprep.subr.mxu0 0.0
        %1186 = vmatpush1.msra.mxu0 %v1122
        %1187 = vmatprep.mubr.f32.mxu0 %v1088
        %1188 = vmatmul.mubr.f32.gmra.mrb[0].mxu0 %v1082
        %v1189 = vpop.f32.mrb[0].mxu0
        %v1190 = vadd.f32 0.0, %v1189
        %v1191 = vpop.f32.mrb[0].mxu0
        %1192 = vmatprep.mubr.f32.mxu0 %v1089
        %1193 = vmatmul.mubr.f32.gmra.mrb[0].mxu0 %v1083
        %v1194 = vpop.f32.mrb[0].mxu0
        %v1195 = vadd.f32 0.0, %v1194
        %v1196 = vpop.f32.mrb[0].mxu0
        %1197 = vdwg.mxu0
        %v1198 = vadd.f32 %v1006, %v1190
        %v1199 = vadd.f32 %v1011, %v1195
        %v1200 = vld [vmem:[#allocation2 + $0x15] sm:$0xff]
        %v1201 = vld [vmem:[#allocation2 + $0x1d] sm:$0xff]
        %v1202 = vld [vmem:[#allocation2 + $0x16] sm:$0xff]
        %v1203 = vld [vmem:[#allocation2 + $0x1e] sm:$0xff]
        %v1204 = vld [vmem:[#allocation2 + $0x17] sm:$0xff]
        %v1205 = vld [vmem:[#allocation2 + $0x1f] sm:$0xff]
        %v1206 = vld [vmem:[#allocation2 + $0x18] sm:$0xff]
        %v1207 = vld [vmem:[#allocation2 + $0x20] sm:$0xff]
        %v1208 = vld [vmem:[#allocation2 + $0x19] sm:$0xff]
        %v1209 = vld [vmem:[#allocation2 + $0x21] sm:$0xff]
        %v1210 = vld [vmem:[#allocation2 + $0x1a] sm:$0xff]
        %v1211 = vld [vmem:[#allocation2 + $0x22] sm:$0xff]
        %v1212 = vld [vmem:[#allocation2 + $0x1b] sm:$0xff]
        %v1213 = vld [vmem:[#allocation2 + $0x23] sm:$0xff]
        %v1214 = vld [vmem:[#allocation2 + $0x1c] sm:$0xff]
        %v1215 = vld [vmem:[#allocation2 + $0x24] sm:$0xff]
        %1218 = vrot.lane.b32.xlu0 %v1202, 32
        %v1219 = vpop.permute.xlu0 %1218
        %1220 = vrot.lane.b32.xlu0 %v1203, 32
        %v1221 = vpop.permute.xlu0 %1220
        %1226 = vrot.lane.b32.xlu0 %v1204, 64
        %v1227 = vpop.permute.xlu0 %1226
        %1228 = vrot.lane.b32.xlu0 %v1205, 64
        %v1229 = vpop.permute.xlu0 %1228
        %1234 = vrot.lane.b32.xlu0 %v1206, 96
        %v1235 = vpop.permute.xlu0 %1234
        %1236 = vrot.lane.b32.xlu0 %v1207, 96
        %v1237 = vpop.permute.xlu0 %1236
        %1242 = vrot.lane.b32.xlu0 %v1210, 32
        %v1243 = vpop.permute.xlu0 %1242
        %1244 = vrot.lane.b32.xlu0 %v1211, 32
        %v1245 = vpop.permute.xlu0 %1244
        %1250 = vrot.lane.b32.xlu0 %v1212, 64
        %v1251 = vpop.permute.xlu0 %1250
        %1252 = vrot.lane.b32.xlu0 %v1213, 64
        %v1253 = vpop.permute.xlu0 %1252
        %1258 = vrot.lane.b32.xlu0 %v1214, 96
        %v1259 = vpop.permute.xlu0 %1258
        %1260 = vrot.lane.b32.xlu0 %v1215, 96
        %v1261 = vpop.permute.xlu0 %1260
        %v1264 = vsel %vm627, %v1200, %v1219
        %v1265 = vsel %vm627, %v1201, %v1221
        %v1266 = vsel %vm811, %v1264, %v1227
        %v1267 = vsel %vm811, %v1265, %v1229
        %v1268 = vsel %vm814, %v1266, %v1235
        %v1269 = vsel %vm814, %v1267, %v1237
        %v1270 = vsel %vm627, %v1208, %v1243
        %v1271 = vsel %vm627, %v1209, %v1245
        %v1272 = vsel %vm811, %v1270, %v1251
        %v1273 = vsel %vm811, %v1271, %v1253
        %v1274 = vsel %vm814, %v1272, %v1259
        %v1275 = vsel %vm814, %v1273, %v1261
        %s1276 = scalar_lea.vmem [#allocation11], 512
        %v1277 = vld [vmem:[%s1276] sm:$0xff]
        %v1278 = vld [vmem:[%s1276 + $0x8] sm:$0xff]
        %v1279 = vld [vmem:[%s1276 + $0x10] sm:$0xff]
        %v1280 = vld [vmem:[%s1276 + $0x18] sm:$0xff]
        %v1281 = vld [vmem:[%s1276 + $0x20] sm:$0xff]
        %v1282 = vld [vmem:[%s1276 + $0x28] sm:$0xff]
        %v1283 = vld [vmem:[%s1276 + $0x30] sm:$0xff]
        %v1284 = vld [vmem:[%s1276 + $0x38] sm:$0xff]
        %v1285 = vld [vmem:[%s1276 + $0x40] sm:$0xff]
        %v1286 = vld [vmem:[%s1276 + $0x48] sm:$0xff]
        %v1287 = vld [vmem:[%s1276 + $0x50] sm:$0xff]
        %v1288 = vld [vmem:[%s1276 + $0x58] sm:$0xff]
        %v1289 = vld [vmem:[%s1276 + $0x60] sm:$0xff]
        %v1290 = vld [vmem:[%s1276 + $0x68] sm:$0xff]
        %v1291 = vld [vmem:[%s1276 + $0x70] sm:$0xff]
        %v1292 = vld [vmem:[%s1276 + $0x78] sm:$0xff]
        %v1293 = vld [vmem:[%s1276 + $0x80] sm:$0xff]
        %v1294 = vld [vmem:[%s1276 + $0x88] sm:$0xff]
        %v1295 = vld [vmem:[%s1276 + $0x90] sm:$0xff]
        %v1296 = vld [vmem:[%s1276 + $0x98] sm:$0xff]
        %v1297 = vld [vmem:[%s1276 + $0xa0] sm:$0xff]
        %v1298 = vld [vmem:[%s1276 + $0xa8] sm:$0xff]
        %v1299 = vld [vmem:[%s1276 + $0xb0] sm:$0xff]
        %v1300 = vld [vmem:[%s1276 + $0xb8] sm:$0xff]
        %v1301 = vld [vmem:[%s1276 + $0xc0] sm:$0xff]
        %v1302 = vld [vmem:[%s1276 + $0xc8] sm:$0xff]
        %v1303 = vld [vmem:[%s1276 + $0xd0] sm:$0xff]
        %v1304 = vld [vmem:[%s1276 + $0xd8] sm:$0xff]
        %v1305 = vld [vmem:[%s1276 + $0xe0] sm:$0xff]
        %v1306 = vld [vmem:[%s1276 + $0xe8] sm:$0xff]
        %v1307 = vld [vmem:[%s1276 + $0xf0] sm:$0xff]
        %v1308 = vld [vmem:[%s1276 + $0xf8] sm:$0xff]
        %1309 = vmatprep.subr.mxu0 0.0
        %1310 = vmatpush1.msra.mxu0 %v1277
        %1311 = vmatprep.subr.mxu0 0.0
        %1312 = vmatpush1.msra.mxu0 %v1278
        %1313 = vmatprep.subr.mxu0 0.0
        %1314 = vmatpush1.msra.mxu0 %v1279
        %1315 = vmatprep.subr.mxu0 0.0
        %1316 = vmatpush1.msra.mxu0 %v1280
        %1317 = vmatprep.subr.mxu0 0.0
        %1318 = vmatpush1.msra.mxu0 %v1281
        %1319 = vmatprep.subr.mxu0 0.0
        %1320 = vmatpush1.msra.mxu0 %v1282
        %1321 = vmatprep.subr.mxu0 0.0
        %1322 = vmatpush1.msra.mxu0 %v1283
        %1323 = vmatprep.subr.mxu0 0.0
        %1324 = vmatpush1.msra.mxu0 %v1284
        %1325 = vmatprep.subr.mxu0 0.0
        %1326 = vmatpush1.msra.mxu0 %v1285
        %1327 = vmatprep.subr.mxu0 0.0
        %1328 = vmatpush1.msra.mxu0 %v1286
        %1329 = vmatprep.subr.mxu0 0.0
        %1330 = vmatpush1.msra.mxu0 %v1287
        %1331 = vmatprep.subr.mxu0 0.0
        %1332 = vmatpush1.msra.mxu0 %v1288
        %1333 = vmatprep.subr.mxu0 0.0
        %1334 = vmatpush1.msra.mxu0 %v1289
        %1335 = vmatprep.subr.mxu0 0.0
        %1336 = vmatpush1.msra.mxu0 %v1290
        %1337 = vmatprep.subr.mxu0 0.0
        %1338 = vmatpush1.msra.mxu0 %v1291
        %1339 = vmatprep.subr.mxu0 0.0
        %1340 = vmatpush1.msra.mxu0 %v1292
        %1341 = vmatprep.subr.mxu0 0.0
        %1342 = vmatpush1.msra.mxu0 %v1293
        %1343 = vmatprep.subr.mxu0 0.0
        %1344 = vmatpush1.msra.mxu0 %v1294
        %1345 = vmatprep.subr.mxu0 0.0
        %1346 = vmatpush1.msra.mxu0 %v1295
        %1347 = vmatprep.subr.mxu0 0.0
        %1348 = vmatpush1.msra.mxu0 %v1296
        %1349 = vmatprep.subr.mxu0 0.0
        %1350 = vmatpush1.msra.mxu0 %v1297
        %1351 = vmatprep.subr.mxu0 0.0
        %1352 = vmatpush1.msra.mxu0 %v1298
        %1353 = vmatprep.subr.mxu0 0.0
        %1354 = vmatpush1.msra.mxu0 %v1299
        %1355 = vmatprep.subr.mxu0 0.0
        %1356 = vmatpush1.msra.mxu0 %v1300
        %1357 = vmatprep.subr.mxu0 0.0
        %1358 = vmatpush1.msra.mxu0 %v1301
        %1359 = vmatprep.subr.mxu0 0.0
        %1360 = vmatpush1.msra.mxu0 %v1302
        %1361 = vmatprep.subr.mxu0 0.0
        %1362 = vmatpush1.msra.mxu0 %v1303
        %1363 = vmatprep.subr.mxu0 0.0
        %1364 = vmatpush1.msra.mxu0 %v1304
        %1365 = vmatprep.subr.mxu0 0.0
        %1366 = vmatpush1.msra.mxu0 %v1305
        %1367 = vmatprep.subr.mxu0 0.0
        %1368 = vmatpush1.msra.mxu0 %v1306
        %1369 = vmatprep.subr.mxu0 0.0
        %1370 = vmatpush1.msra.mxu0 %v1307
        %1371 = vmatprep.subr.mxu0 0.0
        %1372 = vmatpush1.msra.mxu0 %v1308
        %1373 = vmatprep.mubr.f32.mxu0 %v1274
        %1374 = vmatmul.mubr.f32.gmra.mrb[0].mxu0 %v1268
        %v1375 = vpop.f32.mrb[0].mxu0
        %v1376 = vadd.f32 0.0, %v1375
        %v1377 = vpop.f32.mrb[0].mxu0
        %1378 = vmatprep.mubr.f32.mxu0 %v1275
        %1379 = vmatmul.mubr.f32.gmra.mrb[0].mxu0 %v1269
        %v1380 = vpop.f32.mrb[0].mxu0
        %v1381 = vadd.f32 0.0, %v1380
        %v1382 = vpop.f32.mrb[0].mxu0
        %1383 = vdwg.mxu0
        %v1384 = vadd.f32 %v1198, %v1376
        %v1385 = vadd.f32 %v1199, %v1381
        %v1386 = vld [vmem:[#allocation2 + $0x1d] sm:$0xff]
        %v1387 = vld [vmem:[#allocation2 + $0x25] sm:$0xff]
        %v1388 = vld [vmem:[#allocation2 + $0x1e] sm:$0xff]
        %v1389 = vld [vmem:[#allocation2 + $0x26] sm:$0xff]
        %v1390 = vld [vmem:[#allocation2 + $0x1f] sm:$0xff]
        %v1391 = vld [vmem:[#allocation2 + $0x27] sm:$0xff]
        %v1392 = vld [vmem:[#allocation2 + $0x20] sm:$0xff]
        %v1393 = vld [vmem:[#allocation2 + $0x28] sm:$0xff]
        %v1394 = vld [vmem:[#allocation2 + $0x21] sm:$0xff]
        %v1395 = vld [vmem:[#allocation2 + $0x29] sm:$0xff]
        %v1396 = vld [vmem:[#allocation2 + $0x22] sm:$0xff]
        %v1397 = vld [vmem:[#allocation2 + $0x2a] sm:$0xff]
        %v1398 = vld [vmem:[#allocation2 + $0x23] sm:$0xff]
        %v1399 = vld [vmem:[#allocation2 + $0x2b] sm:$0xff]
        %v1400 = vld [vmem:[#allocation2 + $0x24] sm:$0xff]
        %v1401 = vld [vmem:[#allocation2 + $0x2c] sm:$0xff]
        %1404 = vrot.lane.b32.xlu0 %v1388, 32
        %v1405 = vpop.permute.xlu0 %1404
        %1406 = vrot.lane.b32.xlu0 %v1389, 32
        %v1407 = vpop.permute.xlu0 %1406
        %1412 = vrot.lane.b32.xlu0 %v1390, 64
        %v1413 = vpop.permute.xlu0 %1412
        %1414 = vrot.lane.b32.xlu0 %v1391, 64
        %v1415 = vpop.permute.xlu0 %1414
        %1420 = vrot.lane.b32.xlu0 %v1392, 96
        %v1421 = vpop.permute.xlu0 %1420
        %1422 = vrot.lane.b32.xlu0 %v1393, 96
        %v1423 = vpop.permute.xlu0 %1422
        %1428 = vrot.lane.b32.xlu0 %v1396, 32
        %v1429 = vpop.permute.xlu0 %1428
        %1430 = vrot.lane.b32.xlu0 %v1397, 32
        %v1431 = vpop.permute.xlu0 %1430
        %1436 = vrot.lane.b32.xlu0 %v1398, 64
        %v1437 = vpop.permute.xlu0 %1436
        %1438 = vrot.lane.b32.xlu0 %v1399, 64
        %v1439 = vpop.permute.xlu0 %1438
        %1444 = vrot.lane.b32.xlu0 %v1400, 96
        %v1445 = vpop.permute.xlu0 %1444
        %1446 = vrot.lane.b32.xlu0 %v1401, 96
        %v1447 = vpop.permute.xlu0 %1446
        %v1450 = vsel %vm627, %v1386, %v1405
        %v1451 = vsel %vm627, %v1387, %v1407
        %v1452 = vsel %vm811, %v1450, %v1413
        %v1453 = vsel %vm811, %v1451, %v1415
        %v1454 = vsel %vm814, %v1452, %v1421
        %v1455 = vsel %vm814, %v1453, %v1423
        %v1456 = vsel %vm627, %v1394, %v1429
        %v1457 = vsel %vm627, %v1395, %v1431
        %v1458 = vsel %vm811, %v1456, %v1437
        %v1459 = vsel %vm811, %v1457, %v1439
        %v1460 = vsel %vm814, %v1458, %v1445
        %v1461 = vsel %vm814, %v1459, %v1447
        %s1462 = scalar_lea.vmem [#allocation11], 768
        %v1463 = vld [vmem:[%s1462] sm:$0xff]
        %v1464 = vld [vmem:[%s1462 + $0x8] sm:$0xff]
        %v1465 = vld [vmem:[%s1462 + $0x10] sm:$0xff]
        %v1466 = vld [vmem:[%s1462 + $0x18] sm:$0xff]
        %v1467 = vld [vmem:[%s1462 + $0x20] sm:$0xff]
        %v1468 = vld [vmem:[%s1462 + $0x28] sm:$0xff]
        %v1469 = vld [vmem:[%s1462 + $0x30] sm:$0xff]
        %v1470 = vld [vmem:[%s1462 + $0x38] sm:$0xff]
        %v1471 = vld [vmem:[%s1462 + $0x40] sm:$0xff]
        %v1472 = vld [vmem:[%s1462 + $0x48] sm:$0xff]
        %v1473 = vld [vmem:[%s1462 + $0x50] sm:$0xff]
        %v1474 = vld [vmem:[%s1462 + $0x58] sm:$0xff]
        %v1475 = vld [vmem:[%s1462 + $0x60] sm:$0xff]
        %v1476 = vld [vmem:[%s1462 + $0x68] sm:$0xff]
        %v1477 = vld [vmem:[%s1462 + $0x70] sm:$0xff]
        %v1478 = vld [vmem:[%s1462 + $0x78] sm:$0xff]
        %v1479 = vld [vmem:[%s1462 + $0x80] sm:$0xff]
        %v1480 = vld [vmem:[%s1462 + $0x88] sm:$0xff]
        %v1481 = vld [vmem:[%s1462 + $0x90] sm:$0xff]
        %v1482 = vld [vmem:[%s1462 + $0x98] sm:$0xff]
        %v1483 = vld [vmem:[%s1462 + $0xa0] sm:$0xff]
        %v1484 = vld [vmem:[%s1462 + $0xa8] sm:$0xff]
        %v1485 = vld [vmem:[%s1462 + $0xb0] sm:$0xff]
        %v1486 = vld [vmem:[%s1462 + $0xb8] sm:$0xff]
        %v1487 = vld [vmem:[%s1462 + $0xc0] sm:$0xff]
        %v1488 = vld [vmem:[%s1462 + $0xc8] sm:$0xff]
        %v1489 = vld [vmem:[%s1462 + $0xd0] sm:$0xff]
        %v1490 = vld [vmem:[%s1462 + $0xd8] sm:$0xff]
        %v1491 = vld [vmem:[%s1462 + $0xe0] sm:$0xff]
        %v1492 = vld [vmem:[%s1462 + $0xe8] sm:$0xff]
        %v1493 = vld [vmem:[%s1462 + $0xf0] sm:$0xff]
        %v1494 = vld [vmem:[%s1462 + $0xf8] sm:$0xff]
        %1495 = vmatprep.subr.mxu0 0.0
        %1496 = vmatpush1.msra.mxu0 %v1463
        %1497 = vmatprep.subr.mxu0 0.0
        %1498 = vmatpush1.msra.mxu0 %v1464
        %1499 = vmatprep.subr.mxu0 0.0
        %1500 = vmatpush1.msra.mxu0 %v1465
        %1501 = vmatprep.subr.mxu0 0.0
        %1502 = vmatpush1.msra.mxu0 %v1466
        %1503 = vmatprep.subr.mxu0 0.0
        %1504 = vmatpush1.msra.mxu0 %v1467
        %1505 = vmatprep.subr.mxu0 0.0
        %1506 = vmatpush1.msra.mxu0 %v1468
        %1507 = vmatprep.subr.mxu0 0.0
        %1508 = vmatpush1.msra.mxu0 %v1469
        %1509 = vmatprep.subr.mxu0 0.0
        %1510 = vmatpush1.msra.mxu0 %v1470
        %1511 = vmatprep.subr.mxu0 0.0
        %1512 = vmatpush1.msra.mxu0 %v1471
        %1513 = vmatprep.subr.mxu0 0.0
        %1514 = vmatpush1.msra.mxu0 %v1472
        %1515 = vmatprep.subr.mxu0 0.0
        %1516 = vmatpush1.msra.mxu0 %v1473
        %1517 = vmatprep.subr.mxu0 0.0
        %1518 = vmatpush1.msra.mxu0 %v1474
        %1519 = vmatprep.subr.mxu0 0.0
        %1520 = vmatpush1.msra.mxu0 %v1475
        %1521 = vmatprep.subr.mxu0 0.0
        %1522 = vmatpush1.msra.mxu0 %v1476
        %1523 = vmatprep.subr.mxu0 0.0
        %1524 = vmatpush1.msra.mxu0 %v1477
        %1525 = vmatprep.subr.mxu0 0.0
        %1526 = vmatpush1.msra.mxu0 %v1478
        %1527 = vmatprep.subr.mxu0 0.0
        %1528 = vmatpush1.msra.mxu0 %v1479
        %1529 = vmatprep.subr.mxu0 0.0
        %1530 = vmatpush1.msra.mxu0 %v1480
        %1531 = vmatprep.subr.mxu0 0.0
        %1532 = vmatpush1.msra.mxu0 %v1481
        %1533 = vmatprep.subr.mxu0 0.0
        %1534 = vmatpush1.msra.mxu0 %v1482
        %1535 = vmatprep.subr.mxu0 0.0
        %1536 = vmatpush1.msra.mxu0 %v1483
        %1537 = vmatprep.subr.mxu0 0.0
        %1538 = vmatpush1.msra.mxu0 %v1484
        %1539 = vmatprep.subr.mxu0 0.0
        %1540 = vmatpush1.msra.mxu0 %v1485
        %1541 = vmatprep.subr.mxu0 0.0
        %1542 = vmatpush1.msra.mxu0 %v1486
        %1543 = vmatprep.subr.mxu0 0.0
        %1544 = vmatpush1.msra.mxu0 %v1487
        %1545 = vmatprep.subr.mxu0 0.0
        %1546 = vmatpush1.msra.mxu0 %v1488
        %1547 = vmatprep.subr.mxu0 0.0
        %1548 = vmatpush1.msra.mxu0 %v1489
        %1549 = vmatprep.subr.mxu0 0.0
        %1550 = vmatpush1.msra.mxu0 %v1490
        %1551 = vmatprep.subr.mxu0 0.0
        %1552 = vmatpush1.msra.mxu0 %v1491
        %1553 = vmatprep.subr.mxu0 0.0
        %1554 = vmatpush1.msra.mxu0 %v1492
        %1555 = vmatprep.subr.mxu0 0.0
        %1556 = vmatpush1.msra.mxu0 %v1493
        %1557 = vmatprep.subr.mxu0 0.0
        %1558 = vmatpush1.msra.mxu0 %v1494
        %1559 = vmatprep.mubr.f32.mxu0 %v1460
        %1560 = vmatmul.mubr.f32.gmra.mrb[0].mxu0 %v1454
        %v1561 = vpop.f32.mrb[0].mxu0
        %v1562 = vadd.f32 0.0, %v1561
        %v1563 = vpop.f32.mrb[0].mxu0
        %1564 = vmatprep.mubr.f32.mxu0 %v1461
        %1565 = vmatmul.mubr.f32.gmra.mrb[0].mxu0 %v1455
        %v1566 = vpop.f32.mrb[0].mxu0
        %v1567 = vadd.f32 0.0, %v1566
        %v1568 = vpop.f32.mrb[0].mxu0
        %1569 = vdwg.mxu0
        %v1570 = vadd.f32 %v1384, %v1562
        %v1571 = vadd.f32 %v1385, %v1567
        %v1572 = vld [vmem:[#allocation2 + $0x25] sm:$0xff]
        %v1573 = vld [vmem:[#allocation2 + $0x2d] sm:$0xff]
        %v1574 = vld [vmem:[#allocation2 + $0x26] sm:$0xff]
        %v1575 = vld [vmem:[#allocation2 + $0x2e] sm:$0xff]
        %v1576 = vld [vmem:[#allocation2 + $0x27] sm:$0xff]
        %v1577 = vld [vmem:[#allocation2 + $0x2f] sm:$0xff]
        %v1578 = vld [vmem:[#allocation2 + $0x28] sm:$0xff]
        %v1579 = vld [vmem:[#allocation2 + $0x30] sm:$0xff]
        %v1580 = vld [vmem:[#allocation2 + $0x29] sm:$0xff]
        %v1581 = vld [vmem:[#allocation2 + $0x31] sm:$0xff]
        %v1582 = vld [vmem:[#allocation2 + $0x2a] sm:$0xff]
        %v1583 = vld [vmem:[#allocation2 + $0x32] sm:$0xff]
        %v1584 = vld [vmem:[#allocation2 + $0x2b] sm:$0xff]
        %v1585 = vld [vmem:[#allocation2 + $0x33] sm:$0xff]
        %v1586 = vld [vmem:[#allocation2 + $0x2c] sm:$0xff]
        %v1587 = vld [vmem:[#allocation2 + $0x34] sm:$0xff]
        %1590 = vrot.lane.b32.xlu0 %v1574, 32
        %v1591 = vpop.permute.xlu0 %1590
        %1592 = vrot.lane.b32.xlu0 %v1575, 32
        %v1593 = vpop.permute.xlu0 %1592
        %1598 = vrot.lane.b32.xlu0 %v1576, 64
        %v1599 = vpop.permute.xlu0 %1598
        %1600 = vrot.lane.b32.xlu0 %v1577, 64
        %v1601 = vpop.permute.xlu0 %1600
        %1606 = vrot.lane.b32.xlu0 %v1578, 96
        %v1607 = vpop.permute.xlu0 %1606
        %1608 = vrot.lane.b32.xlu0 %v1579, 96
        %v1609 = vpop.permute.xlu0 %1608
        %1614 = vrot.lane.b32.xlu0 %v1582, 32
        %v1615 = vpop.permute.xlu0 %1614
        %1616 = vrot.lane.b32.xlu0 %v1583, 32
        %v1617 = vpop.permute.xlu0 %1616
        %1622 = vrot.lane.b32.xlu0 %v1584, 64
        %v1623 = vpop.permute.xlu0 %1622
        %1624 = vrot.lane.b32.xlu0 %v1585, 64
        %v1625 = vpop.permute.xlu0 %1624
        %1630 = vrot.lane.b32.xlu0 %v1586, 96
        %v1631 = vpop.permute.xlu0 %1630
        %1632 = vrot.lane.b32.xlu0 %v1587, 96
        %v1633 = vpop.permute.xlu0 %1632
        %v1636 = vsel %vm627, %v1572, %v1591
        %v1637 = vsel %vm627, %v1573, %v1593
        %v1638 = vsel %vm811, %v1636, %v1599
        %v1639 = vsel %vm811, %v1637, %v1601
        %v1640 = vsel %vm814, %v1638, %v1607
        %v1641 = vsel %vm814, %v1639, %v1609
        %v1642 = vsel %vm627, %v1580, %v1615
        %v1643 = vsel %vm627, %v1581, %v1617
        %v1644 = vsel %vm811, %v1642, %v1623
        %v1645 = vsel %vm811, %v1643, %v1625
        %v1646 = vsel %vm814, %v1644, %v1631
        %v1647 = vsel %vm814, %v1645, %v1633
        %s1648 = scalar_lea.vmem [#allocation11], 1024
        %v1649 = vld [vmem:[%s1648] sm:$0xff]
        %v1650 = vld [vmem:[%s1648 + $0x8] sm:$0xff]
        %v1651 = vld [vmem:[%s1648 + $0x10] sm:$0xff]
        %v1652 = vld [vmem:[%s1648 + $0x18] sm:$0xff]
        %v1653 = vld [vmem:[%s1648 + $0x20] sm:$0xff]
        %v1654 = vld [vmem:[%s1648 + $0x28] sm:$0xff]
        %v1655 = vld [vmem:[%s1648 + $0x30] sm:$0xff]
        %v1656 = vld [vmem:[%s1648 + $0x38] sm:$0xff]
        %v1657 = vld [vmem:[%s1648 + $0x40] sm:$0xff]
        %v1658 = vld [vmem:[%s1648 + $0x48] sm:$0xff]
        %v1659 = vld [vmem:[%s1648 + $0x50] sm:$0xff]
        %v1660 = vld [vmem:[%s1648 + $0x58] sm:$0xff]
        %v1661 = vld [vmem:[%s1648 + $0x60] sm:$0xff]
        %v1662 = vld [vmem:[%s1648 + $0x68] sm:$0xff]
        %v1663 = vld [vmem:[%s1648 + $0x70] sm:$0xff]
        %v1664 = vld [vmem:[%s1648 + $0x78] sm:$0xff]
        %v1665 = vld [vmem:[%s1648 + $0x80] sm:$0xff]
        %v1666 = vld [vmem:[%s1648 + $0x88] sm:$0xff]
        %v1667 = vld [vmem:[%s1648 + $0x90] sm:$0xff]
        %v1668 = vld [vmem:[%s1648 + $0x98] sm:$0xff]
        %v1669 = vld [vmem:[%s1648 + $0xa0] sm:$0xff]
        %v1670 = vld [vmem:[%s1648 + $0xa8] sm:$0xff]
        %v1671 = vld [vmem:[%s1648 + $0xb0] sm:$0xff]
        %v1672 = vld [vmem:[%s1648 + $0xb8] sm:$0xff]
        %v1673 = vld [vmem:[%s1648 + $0xc0] sm:$0xff]
        %v1674 = vld [vmem:[%s1648 + $0xc8] sm:$0xff]
        %v1675 = vld [vmem:[%s1648 + $0xd0] sm:$0xff]
        %v1676 = vld [vmem:[%s1648 + $0xd8] sm:$0xff]
        %v1677 = vld [vmem:[%s1648 + $0xe0] sm:$0xff]
        %v1678 = vld [vmem:[%s1648 + $0xe8] sm:$0xff]
        %v1679 = vld [vmem:[%s1648 + $0xf0] sm:$0xff]
        %v1680 = vld [vmem:[%s1648 + $0xf8] sm:$0xff]
        %1681 = vmatprep.subr.mxu0 0.0
        %1682 = vmatpush1.msra.mxu0 %v1649
        %1683 = vmatprep.subr.mxu0 0.0
        %1684 = vmatpush1.msra.mxu0 %v1650
        %1685 = vmatprep.subr.mxu0 0.0
        %1686 = vmatpush1.msra.mxu0 %v1651
        %1687 = vmatprep.subr.mxu0 0.0
        %1688 = vmatpush1.msra.mxu0 %v1652
        %1689 = vmatprep.subr.mxu0 0.0
        %1690 = vmatpush1.msra.mxu0 %v1653
        %1691 = vmatprep.subr.mxu0 0.0
        %1692 = vmatpush1.msra.mxu0 %v1654
        %1693 = vmatprep.subr.mxu0 0.0
        %1694 = vmatpush1.msra.mxu0 %v1655
        %1695 = vmatprep.subr.mxu0 0.0
        %1696 = vmatpush1.msra.mxu0 %v1656
        %1697 = vmatprep.subr.mxu0 0.0
        %1698 = vmatpush1.msra.mxu0 %v1657
        %1699 = vmatprep.subr.mxu0 0.0
        %1700 = vmatpush1.msra.mxu0 %v1658
        %1701 = vmatprep.subr.mxu0 0.0
        %1702 = vmatpush1.msra.mxu0 %v1659
        %1703 = vmatprep.subr.mxu0 0.0
        %1704 = vmatpush1.msra.mxu0 %v1660
        %1705 = vmatprep.subr.mxu0 0.0
        %1706 = vmatpush1.msra.mxu0 %v1661
        %1707 = vmatprep.subr.mxu0 0.0
        %1708 = vmatpush1.msra.mxu0 %v1662
        %1709 = vmatprep.subr.mxu0 0.0
        %1710 = vmatpush1.msra.mxu0 %v1663
        %1711 = vmatprep.subr.mxu0 0.0
        %1712 = vmatpush1.msra.mxu0 %v1664
        %1713 = vmatprep.subr.mxu0 0.0
        %1714 = vmatpush1.msra.mxu0 %v1665
        %1715 = vmatprep.subr.mxu0 0.0
        %1716 = vmatpush1.msra.mxu0 %v1666
        %1717 = vmatprep.subr.mxu0 0.0
        %1718 = vmatpush1.msra.mxu0 %v1667
        %1719 = vmatprep.subr.mxu0 0.0
        %1720 = vmatpush1.msra.mxu0 %v1668
        %1721 = vmatprep.subr.mxu0 0.0
        %1722 = vmatpush1.msra.mxu0 %v1669
        %1723 = vmatprep.subr.mxu0 0.0
        %1724 = vmatpush1.msra.mxu0 %v1670
        %1725 = vmatprep.subr.mxu0 0.0
        %1726 = vmatpush1.msra.mxu0 %v1671
        %1727 = vmatprep.subr.mxu0 0.0
        %1728 = vmatpush1.msra.mxu0 %v1672
        %1729 = vmatprep.subr.mxu0 0.0
        %1730 = vmatpush1.msra.mxu0 %v1673
        %1731 = vmatprep.subr.mxu0 0.0
        %1732 = vmatpush1.msra.mxu0 %v1674
        %1733 = vmatprep.subr.mxu0 0.0
        %1734 = vmatpush1.msra.mxu0 %v1675
        %1735 = vmatprep.subr.mxu0 0.0
        %1736 = vmatpush1.msra.mxu0 %v1676
        %1737 = vmatprep.subr.mxu0 0.0
        %1738 = vmatpush1.msra.mxu0 %v1677
        %1739 = vmatprep.subr.mxu0 0.0
        %1740 = vmatpush1.msra.mxu0 %v1678
        %1741 = vmatprep.subr.mxu0 0.0
        %1742 = vmatpush1.msra.mxu0 %v1679
        %1743 = vmatprep.subr.mxu0 0.0
        %1744 = vmatpush1.msra.mxu0 %v1680
        %1745 = vmatprep.mubr.f32.mxu0 %v1646
        %1746 = vmatmul.mubr.f32.gmra.mrb[0].mxu0 %v1640
        %v1747 = vpop.f32.mrb[0].mxu0
        %v1748 = vadd.f32 0.0, %v1747
        %v1749 = vpop.f32.mrb[0].mxu0
        %1750 = vmatprep.mubr.f32.mxu0 %v1647
        %1751 = vmatmul.mubr.f32.gmra.mrb[0].mxu0 %v1641
        %v1752 = vpop.f32.mrb[0].mxu0
        %v1753 = vadd.f32 0.0, %v1752
        %v1754 = vpop.f32.mrb[0].mxu0
        %1755 = vdwg.mxu0
        %v1756 = vadd.f32 %v1570, %v1748
        %v1757 = vadd.f32 %v1571, %v1753
        %v1759 = vlaneseq
        %v1760 = vshrl.u32 %v1759, 7
        %v1761 = vsub.s32 0, %v1760
        %v1762 = vrot.slane %v656, %v1761
        %v1764 = vmul.f32 %v1756, %v1762
        %v1765 = vmul.f32 %v1757, %v1762
        %v1767 = vlaneseq
        %v1768 = vshrl.u32 %v1767, 7
        %v1769 = vsub.s32 0, %v1768
        %v1770 = vrot.slane %v657, %v1769
        %v1772 = vadd.f32 %v1764, %v1770
        %v1773 = vadd.f32 %v1765, %v1770
        %v1774 = vmax.f32 %v1772, 0.0
        %v1775 = vmax.f32 %v1773, 0.0
        %1776 = vst [vmem:[#allocation3 + $0x8] sm:$0xff] %v1774
        %1777 = vst [vmem:[#allocation3 + $0x10] sm:$0xff] %v1775
        %v1778 = vld [vmem:[#allocation3 + $0x8] sm:$0xff]
        %v1779 = vld [vmem:[#allocation3 + $0x10] sm:$0xff]
        %v1780 = vld [vmem:[#allocation3 + $0x7] sm:$0xff]
        %v1781 = vld [vmem:[#allocation3 + $0xf] sm:$0xff]
        %v1782 = vmax.f32 %v1780, %v1778
        %v1783 = vmax.f32 %v1781, %v1779
        %v1784 = vld [vmem:[#allocation3 + $0x9] sm:$0xff]
        %v1785 = vld [vmem:[#allocation3 + $0x11] sm:$0xff]
        %v1786 = vmax.f32 %v1782, %v1784
        %v1787 = vmax.f32 %v1783, %v1785
        %v1788 = vld [vmem:[%s4] sm:$0xff]
        %v1789 = vld [vmem:[%s4 + $0x8] sm:$0xff]
        %v1790 = vld [vmem:[%s4 + $0x10] sm:$0xff]
        %v1791 = vld [vmem:[%s4 + $0x18] sm:$0xff]
        %v1792 = vld [vmem:[%s4 + $0x20] sm:$0xff]
        %v1793 = vld [vmem:[%s4 + $0x28] sm:$0xff]
        %v1794 = vld [vmem:[%s4 + $0x30] sm:$0xff]
        %v1795 = vld [vmem:[%s4 + $0x38] sm:$0xff]
        %v1796 = vld [vmem:[%s4 + $0x40] sm:$0xff]
        %v1797 = vld [vmem:[%s4 + $0x48] sm:$0xff]
        %v1798 = vld [vmem:[%s4 + $0x50] sm:$0xff]
        %v1799 = vld [vmem:[%s4 + $0x58] sm:$0xff]
        %v1800 = vld [vmem:[%s4 + $0x60] sm:$0xff]
        %v1801 = vld [vmem:[%s4 + $0x68] sm:$0xff]
        %v1802 = vld [vmem:[%s4 + $0x70] sm:$0xff]
        %v1803 = vld [vmem:[%s4 + $0x78] sm:$0xff]
        %v1804 = vld [vmem:[#allocation12] sm:$0xff]
        %v1805 = vld [vmem:[#allocation12 + $0x8] sm:$0xff]
        %v1806 = vld [vmem:[#allocation12 + $0x10] sm:$0xff]
        %v1807 = vld [vmem:[#allocation12 + $0x18] sm:$0xff]
        %v1808 = vld [vmem:[#allocation12 + $0x20] sm:$0xff]
        %v1809 = vld [vmem:[#allocation12 + $0x28] sm:$0xff]
        %v1810 = vld [vmem:[#allocation12 + $0x30] sm:$0xff]
        %v1811 = vld [vmem:[#allocation12 + $0x38] sm:$0xff]
        %v1812 = vld [vmem:[#allocation12 + $0x40] sm:$0xff]
        %v1813 = vld [vmem:[#allocation12 + $0x48] sm:$0xff]
        %v1814 = vld [vmem:[#allocation12 + $0x50] sm:$0xff]
        %v1815 = vld [vmem:[#allocation12 + $0x58] sm:$0xff]
        %v1816 = vld [vmem:[#allocation12 + $0x60] sm:$0xff]
        %v1817 = vld [vmem:[#allocation12 + $0x68] sm:$0xff]
        %v1818 = vld [vmem:[#allocation12 + $0x70] sm:$0xff]
        %v1819 = vld [vmem:[#allocation12 + $0x78] sm:$0xff]
        %s1820 = scalar_lea.vmem [#allocation15], 1
        %v1821 = vld [vmem:[%s1820] sm:$0x1]
        %s1822 = scalar_lea.vmem [#allocation17], 1
        %v1823 = vld [vmem:[%s1822] sm:$0x1]
        %1824 = vmatprep.subr.mxu0 0.0
        %1825 = vmatpush1.msra.mxu0 %v1788
        %1826 = vmatprep.subr.mxu0 0.0
        %1827 = vmatpush1.msra.mxu0 %v1789
        %1828 = vmatprep.subr.mxu0 0.0
        %1829 = vmatpush1.msra.mxu0 %v1790
        %1830 = vmatprep.subr.mxu0 0.0
        %1831 = vmatpush1.msra.mxu0 %v1791
        %1832 = vmatprep.subr.mxu0 0.0
        %1833 = vmatpush1.msra.mxu0 %v1792
        %1834 = vmatprep.subr.mxu0 0.0
        %1835 = vmatpush1.msra.mxu0 %v1793
        %1836 = vmatprep.subr.mxu0 0.0
        %1837 = vmatpush1.msra.mxu0 %v1794
        %1838 = vmatprep.subr.mxu0 0.0
        %1839 = vmatpush1.msra.mxu0 %v1795
        %1840 = vmatprep.subr.mxu0 0.0
        %1841 = vmatpush1.msra.mxu0 %v1796
        %1842 = vmatprep.subr.mxu0 0.0
        %1843 = vmatpush1.msra.mxu0 %v1797
        %1844 = vmatprep.subr.mxu0 0.0
        %1845 = vmatpush1.msra.mxu0 %v1798
        %1846 = vmatprep.subr.mxu0 0.0
        %1847 = vmatpush1.msra.mxu0 %v1799
        %1848 = vmatprep.subr.mxu0 0.0
        %1849 = vmatpush1.msra.mxu0 %v1800
        %1850 = vmatprep.subr.mxu0 0.0
        %1851 = vmatpush1.msra.mxu0 %v1801
        %1852 = vmatprep.subr.mxu0 0.0
        %1853 = vmatpush1.msra.mxu0 %v1802
        %1854 = vmatprep.subr.mxu0 0.0
        %1855 = vmatpush1.msra.mxu0 %v1803
        %1856 = vmatprep.subr.mxu0 0.0
        %1857 = vmatpush1.msra.mxu0 0.0
        %1858 = vmatprep.subr.mxu0 0.0
        %1859 = vmatpush1.msra.mxu0 0.0
        %1860 = vmatprep.subr.mxu0 0.0
        %1861 = vmatpush1.msra.mxu0 0.0
        %1862 = vmatprep.subr.mxu0 0.0
        %1863 = vmatpush1.msra.mxu0 0.0
        %1864 = vmatprep.subr.mxu0 0.0
        %1865 = vmatpush1.msra.mxu0 0.0
        %1866 = vmatprep.subr.mxu0 0.0
        %1867 = vmatpush1.msra.mxu0 0.0
        %1868 = vmatprep.subr.mxu0 0.0
        %1869 = vmatpush1.msra.mxu0 0.0
        %1870 = vmatprep.subr.mxu0 0.0
        %1871 = vmatpush1.msra.mxu0 0.0
        %1872 = vmatprep.subr.mxu0 0.0
        %1873 = vmatpush1.msra.mxu0 0.0
        %1874 = vmatprep.subr.mxu0 0.0
        %1875 = vmatpush1.msra.mxu0 0.0
        %1876 = vmatprep.subr.mxu0 0.0
        %1877 = vmatpush1.msra.mxu0 0.0
        %1878 = vmatprep.subr.mxu0 0.0
        %1879 = vmatpush1.msra.mxu0 0.0
        %1880 = vmatprep.subr.mxu0 0.0
        %1881 = vmatpush1.msra.mxu0 0.0
        %1882 = vmatprep.subr.mxu0 0.0
        %1883 = vmatpush1.msra.mxu0 0.0
        %1884 = vmatprep.subr.mxu0 0.0
        %1885 = vmatpush1.msra.mxu0 0.0
        %1886 = vmatprep.subr.mxu0 0.0
        %1887 = vmatpush1.msra.mxu0 0.0
        %1888 = vmatprep.mubr.f32.mxu0 0.0
        %1889 = vmatmul.mubr.f32.gmra.mrb[0].mxu0 %v1778
        %v1890 = vpop.f32.mrb[0].mxu0
        %v1891 = vadd.f32 0.0, %v1890
        %v1892 = vpop.f32.mrb[0].mxu0
        %1893 = vmatprep.mubr.f32.mxu0 0.0
        %1894 = vmatmul.mubr.f32.gmra.mrb[0].mxu0 %v1779
        %v1895 = vpop.f32.mrb[0].mxu0
        %v1896 = vadd.f32 0.0, %v1895
        %v1897 = vpop.f32.mrb[0].mxu0
        %1898 = vdwg.mxu0
        %1899 = vst.msk [vmem:[#allocation2 + $0x18] sm:$0xff] %vm627, %v1891
        %1900 = vst.msk [vmem:[#allocation2 + $0x20] sm:$0xff] %vm627, %v1896
        %v1901 = vld [vmem:[#allocation2 + $0x5] sm:$0xff]
        %v1902 = vld [vmem:[#allocation2 + $0xd] sm:$0xff]
        %v1903 = vld [vmem:[#allocation2 + $0x6] sm:$0xff]
        %v1904 = vld [vmem:[#allocation2 + $0xe] sm:$0xff]
        %v1905 = vld [vmem:[#allocation2 + $0x7] sm:$0xff]
        %v1906 = vld [vmem:[#allocation2 + $0xf] sm:$0xff]
        %v1907 = vld [vmem:[#allocation2 + $0x8] sm:$0xff]
        %v1908 = vld [vmem:[#allocation2 + $0x10] sm:$0xff]
        %v1909 = vld [vmem:[#allocation2 + $0x9] sm:$0xff]
        %v1910 = vld [vmem:[#allocation2 + $0x11] sm:$0xff]
        %v1911 = vld [vmem:[#allocation2 + $0xa] sm:$0xff]
        %v1912 = vld [vmem:[#allocation2 + $0x12] sm:$0xff]
        %v1913 = vld [vmem:[#allocation2 + $0xb] sm:$0xff]
        %v1914 = vld [vmem:[#allocation2 + $0x13] sm:$0xff]
        %v1915 = vld [vmem:[#allocation2 + $0xc] sm:$0xff]
        %v1916 = vld [vmem:[#allocation2 + $0x14] sm:$0xff]
        %1919 = vrot.lane.b32.xlu0 %v1903, 32
        %v1920 = vpop.permute.xlu0 %1919
        %1921 = vrot.lane.b32.xlu0 %v1904, 32
        %v1922 = vpop.permute.xlu0 %1921
        %1927 = vrot.lane.b32.xlu0 %v1905, 64
        %v1928 = vpop.permute.xlu0 %1927
        %1929 = vrot.lane.b32.xlu0 %v1906, 64
        %v1930 = vpop.permute.xlu0 %1929
        %1935 = vrot.lane.b32.xlu0 %v1907, 96
        %v1936 = vpop.permute.xlu0 %1935
        %1937 = vrot.lane.b32.xlu0 %v1908, 96
        %v1938 = vpop.permute.xlu0 %1937
        %1943 = vrot.lane.b32.xlu0 %v1911, 32
        %v1944 = vpop.permute.xlu0 %1943
        %1945 = vrot.lane.b32.xlu0 %v1912, 32
        %v1946 = vpop.permute.xlu0 %1945
        %1951 = vrot.lane.b32.xlu0 %v1913, 64
        %v1952 = vpop.permute.xlu0 %1951
        %1953 = vrot.lane.b32.xlu0 %v1914, 64
        %v1954 = vpop.permute.xlu0 %1953
        %1959 = vrot.lane.b32.xlu0 %v1915, 96
        %v1960 = vpop.permute.xlu0 %1959
        %1961 = vrot.lane.b32.xlu0 %v1916, 96
        %v1962 = vpop.permute.xlu0 %1961
        %v1965 = vsel %vm627, %v1901, %v1920
        %v1966 = vsel %vm627, %v1902, %v1922
        %v1967 = vsel %vm811, %v1965, %v1928
        %v1968 = vsel %vm811, %v1966, %v1930
        %v1969 = vsel %vm814, %v1967, %v1936
        %v1970 = vsel %vm814, %v1968, %v1938
        %v1971 = vsel %vm627, %v1909, %v1944
        %v1972 = vsel %vm627, %v1910, %v1946
        %v1973 = vsel %vm811, %v1971, %v1952
        %v1974 = vsel %vm811, %v1972, %v1954
        %v1975 = vsel %vm814, %v1973, %v1960
        %v1976 = vsel %vm814, %v1974, %v1962
        %v1977 = vld [vmem:[#allocation14] sm:$0xff]
        %v1978 = vld [vmem:[#allocation14 + $0x8] sm:$0xff]
        %v1979 = vld [vmem:[#allocation14 + $0x10] sm:$0xff]
        %v1980 = vld [vmem:[#allocation14 + $0x18] sm:$0xff]
        %v1981 = vld [vmem:[#allocation14 + $0x20] sm:$0xff]
        %v1982 = vld [vmem:[#allocation14 + $0x28] sm:$0xff]
        %v1983 = vld [vmem:[#allocation14 + $0x30] sm:$0xff]
        %v1984 = vld [vmem:[#allocation14 + $0x38] sm:$0xff]
        %v1985 = vld [vmem:[#allocation14 + $0x40] sm:$0xff]
        %v1986 = vld [vmem:[#allocation14 + $0x48] sm:$0xff]
        %v1987 = vld [vmem:[#allocation14 + $0x50] sm:$0xff]
        %v1988 = vld [vmem:[#allocation14 + $0x58] sm:$0xff]
        %v1989 = vld [vmem:[#allocation14 + $0x60] sm:$0xff]
        %v1990 = vld [vmem:[#allocation14 + $0x68] sm:$0xff]
        %v1991 = vld [vmem:[#allocation14 + $0x70] sm:$0xff]
        %v1992 = vld [vmem:[#allocation14 + $0x78] sm:$0xff]
        %v1993 = vld [vmem:[#allocation14 + $0x80] sm:$0xff]
        %v1994 = vld [vmem:[#allocation14 + $0x88] sm:$0xff]
        %v1995 = vld [vmem:[#allocation14 + $0x90] sm:$0xff]
        %v1996 = vld [vmem:[#allocation14 + $0x98] sm:$0xff]
        %v1997 = vld [vmem:[#allocation14 + $0xa0] sm:$0xff]
        %v1998 = vld [vmem:[#allocation14 + $0xa8] sm:$0xff]
        %v1999 = vld [vmem:[#allocation14 + $0xb0] sm:$0xff]
        %v2000 = vld [vmem:[#allocation14 + $0xb8] sm:$0xff]
        %v2001 = vld [vmem:[#allocation14 + $0xc0] sm:$0xff]
        %v2002 = vld [vmem:[#allocation14 + $0xc8] sm:$0xff]
        %v2003 = vld [vmem:[#allocation14 + $0xd0] sm:$0xff]
        %v2004 = vld [vmem:[#allocation14 + $0xd8] sm:$0xff]
        %v2005 = vld [vmem:[#allocation14 + $0xe0] sm:$0xff]
        %v2006 = vld [vmem:[#allocation14 + $0xe8] sm:$0xff]
        %v2007 = vld [vmem:[#allocation14 + $0xf0] sm:$0xff]
        %v2008 = vld [vmem:[#allocation14 + $0xf8] sm:$0xff]
        %2009 = vmatprep.subr.mxu0 0.0
        %2010 = vmatpush1.msra.mxu0 %v1977
        %2011 = vmatprep.subr.mxu0 0.0
        %2012 = vmatpush1.msra.mxu0 %v1978
        %2013 = vmatprep.subr.mxu0 0.0
        %2014 = vmatpush1.msra.mxu0 %v1979
        %2015 = vmatprep.subr.mxu0 0.0
        %2016 = vmatpush1.msra.mxu0 %v1980
        %2017 = vmatprep.subr.mxu0 0.0
        %2018 = vmatpush1.msra.mxu0 %v1981
        %2019 = vmatprep.subr.mxu0 0.0
        %2020 = vmatpush1.msra.mxu0 %v1982
        %2021 = vmatprep.subr.mxu0 0.0
        %2022 = vmatpush1.msra.mxu0 %v1983
        %2023 = vmatprep.subr.mxu0 0.0
        %2024 = vmatpush1.msra.mxu0 %v1984
        %2025 = vmatprep.subr.mxu0 0.0
        %2026 = vmatpush1.msra.mxu0 %v1985
        %2027 = vmatprep.subr.mxu0 0.0
        %2028 = vmatpush1.msra.mxu0 %v1986
        %2029 = vmatprep.subr.mxu0 0.0
        %2030 = vmatpush1.msra.mxu0 %v1987
        %2031 = vmatprep.subr.mxu0 0.0
        %2032 = vmatpush1.msra.mxu0 %v1988
        %2033 = vmatprep.subr.mxu0 0.0
        %2034 = vmatpush1.msra.mxu0 %v1989
        %2035 = vmatprep.subr.mxu0 0.0
        %2036 = vmatpush1.msra.mxu0 %v1990
        %2037 = vmatprep.subr.mxu0 0.0
        %2038 = vmatpush1.msra.mxu0 %v1991
        %2039 = vmatprep.subr.mxu0 0.0
        %2040 = vmatpush1.msra.mxu0 %v1992
        %2041 = vmatprep.subr.mxu0 0.0
        %2042 = vmatpush1.msra.mxu0 %v1993
        %2043 = vmatprep.subr.mxu0 0.0
        %2044 = vmatpush1.msra.mxu0 %v1994
        %2045 = vmatprep.subr.mxu0 0.0
        %2046 = vmatpush1.msra.mxu0 %v1995
        %2047 = vmatprep.subr.mxu0 0.0
        %2048 = vmatpush1.msra.mxu0 %v1996
        %2049 = vmatprep.subr.mxu0 0.0
        %2050 = vmatpush1.msra.mxu0 %v1997
        %2051 = vmatprep.subr.mxu0 0.0
        %2052 = vmatpush1.msra.mxu0 %v1998
        %2053 = vmatprep.subr.mxu0 0.0
        %2054 = vmatpush1.msra.mxu0 %v1999
        %2055 = vmatprep.subr.mxu0 0.0
        %2056 = vmatpush1.msra.mxu0 %v2000
        %2057 = vmatprep.subr.mxu0 0.0
        %2058 = vmatpush1.msra.mxu0 %v2001
        %2059 = vmatprep.subr.mxu0 0.0
        %2060 = vmatpush1.msra.mxu0 %v2002
        %2061 = vmatprep.subr.mxu0 0.0
        %2062 = vmatpush1.msra.mxu0 %v2003
        %2063 = vmatprep.subr.mxu0 0.0
        %2064 = vmatpush1.msra.mxu0 %v2004
        %2065 = vmatprep.subr.mxu0 0.0
        %2066 = vmatpush1.msra.mxu0 %v2005
        %2067 = vmatprep.subr.mxu0 0.0
        %2068 = vmatpush1.msra.mxu0 %v2006
        %2069 = vmatprep.subr.mxu0 0.0
        %2070 = vmatpush1.msra.mxu0 %v2007
        %2071 = vmatprep.subr.mxu0 0.0
        %2072 = vmatpush1.msra.mxu0 %v2008
        %2073 = vmatprep.mubr.f32.mxu0 %v1975
        %2074 = vmatmul.mubr.f32.gmra.mrb[0].mxu0 %v1969
        %v2075 = vpop.f32.mrb[0].mxu0
        %v2076 = vadd.f32 0.0, %v2075
        %v2077 = vpop.f32.mrb[0].mxu0
        %2078 = vmatprep.mubr.f32.mxu0 %v1976
        %2079 = vmatmul.mubr.f32.gmra.mrb[0].mxu0 %v1970
        %v2080 = vpop.f32.mrb[0].mxu0
        %v2081 = vadd.f32 0.0, %v2080
        %v2082 = vpop.f32.mrb[0].mxu0
        %2083 = vdwg.mxu0
        %2084 = vmatprep.subr.mxu0 0.0
        %2085 = vmatpush1.msra.mxu0 %v1804
        %2086 = vmatprep.subr.mxu0 0.0
        %2087 = vmatpush1.msra.mxu0 %v1805
        %2088 = vmatprep.subr.mxu0 0.0
        %2089 = vmatpush1.msra.mxu0 %v1806
        %2090 = vmatprep.subr.mxu0 0.0
        %2091 = vmatpush1.msra.mxu0 %v1807
        %2092 = vmatprep.subr.mxu0 0.0
        %2093 = vmatpush1.msra.mxu0 %v1808
        %2094 = vmatprep.subr.mxu0 0.0
        %2095 = vmatpush1.msra.mxu0 %v1809
        %2096 = vmatprep.subr.mxu0 0.0
        %2097 = vmatpush1.msra.mxu0 %v1810
        %2098 = vmatprep.subr.mxu0 0.0
        %2099 = vmatpush1.msra.mxu0 %v1811
        %2100 = vmatprep.subr.mxu0 0.0
        %2101 = vmatpush1.msra.mxu0 %v1812
        %2102 = vmatprep.subr.mxu0 0.0
        %2103 = vmatpush1.msra.mxu0 %v1813
        %2104 = vmatprep.subr.mxu0 0.0
        %2105 = vmatpush1.msra.mxu0 %v1814
        %2106 = vmatprep.subr.mxu0 0.0
        %2107 = vmatpush1.msra.mxu0 %v1815
        %2108 = vmatprep.subr.mxu0 0.0
        %2109 = vmatpush1.msra.mxu0 %v1816
        %2110 = vmatprep.subr.mxu0 0.0
        %2111 = vmatpush1.msra.mxu0 %v1817
        %2112 = vmatprep.subr.mxu0 0.0
        %2113 = vmatpush1.msra.mxu0 %v1818
        %2114 = vmatprep.subr.mxu0 0.0
        %2115 = vmatpush1.msra.mxu0 %v1819
        %2116 = vmatprep.subr.mxu0 0.0
        %2117 = vmatpush1.msra.mxu0 0.0
        %2118 = vmatprep.subr.mxu0 0.0
        %2119 = vmatpush1.msra.mxu0 0.0
        %2120 = vmatprep.subr.mxu0 0.0
        %2121 = vmatpush1.msra.mxu0 0.0
        %2122 = vmatprep.subr.mxu0 0.0
        %2123 = vmatpush1.msra.mxu0 0.0
        %2124 = vmatprep.subr.mxu0 0.0
        %2125 = vmatpush1.msra.mxu0 0.0
        %2126 = vmatprep.subr.mxu0 0.0
        %2127 = vmatpush1.msra.mxu0 0.0
        %2128 = vmatprep.subr.mxu0 0.0
        %2129 = vmatpush1.msra.mxu0 0.0
        %2130 = vmatprep.subr.mxu0 0.0
        %2131 = vmatpush1.msra.mxu0 0.0
        %2132 = vmatprep.subr.mxu0 0.0
        %2133 = vmatpush1.msra.mxu0 0.0
        %2134 = vmatprep.subr.mxu0 0.0
        %2135 = vmatpush1.msra.mxu0 0.0
        %2136 = vmatprep.subr.mxu0 0.0
        %2137 = vmatpush1.msra.mxu0 0.0
        %2138 = vmatprep.subr.mxu0 0.0
        %2139 = vmatpush1.msra.mxu0 0.0
        %2140 = vmatprep.subr.mxu0 0.0
        %2141 = vmatpush1.msra.mxu0 0.0
        %2142 = vmatprep.subr.mxu0 0.0
        %2143 = vmatpush1.msra.mxu0 0.0
        %2144 = vmatprep.subr.mxu0 0.0
        %2145 = vmatpush1.msra.mxu0 0.0
        %2146 = vmatprep.subr.mxu0 0.0
        %2147 = vmatpush1.msra.mxu0 0.0
        %2148 = vmatprep.mubr.f32.mxu0 0.0
        %2149 = vmatmul.mubr.f32.gmra.mrb[0].mxu0 %v1786
        %v2150 = vpop.f32.mrb[0].mxu0
        %v2151 = vadd.f32 %v2076, %v2150
        %v2152 = vpop.f32.mrb[0].mxu0
        %2153 = vmatprep.mubr.f32.mxu0 0.0
        %2154 = vmatmul.mubr.f32.gmra.mrb[0].mxu0 %v1787
        %v2155 = vpop.f32.mrb[0].mxu0
        %v2156 = vadd.f32 %v2081, %v2155
        %v2157 = vpop.f32.mrb[0].mxu0
        %2158 = vdwg.mxu0
        %v2159 = vld [vmem:[#allocation2 + $0xd] sm:$0xff]
        %v2160 = vld [vmem:[#allocation2 + $0x15] sm:$0xff]
        %v2161 = vld [vmem:[#allocation2 + $0xe] sm:$0xff]
        %v2162 = vld [vmem:[#allocation2 + $0x16] sm:$0xff]
        %v2163 = vld [vmem:[#allocation2 + $0xf] sm:$0xff]
        %v2164 = vld [vmem:[#allocation2 + $0x17] sm:$0xff]
        %v2165 = vld [vmem:[#allocation2 + $0x10] sm:$0xff]
        %v2166 = vld [vmem:[#allocation2 + $0x18] sm:$0xff]
        %v2167 = vld [vmem:[#allocation2 + $0x11] sm:$0xff]
        %v2168 = vld [vmem:[#allocation2 + $0x19] sm:$0xff]
        %v2169 = vld [vmem:[#allocation2 + $0x12] sm:$0xff]
        %v2170 = vld [vmem:[#allocation2 + $0x1a] sm:$0xff]
        %v2171 = vld [vmem:[#allocation2 + $0x13] sm:$0xff]
        %v2172 = vld [vmem:[#allocation2 + $0x1b] sm:$0xff]
        %v2173 = vld [vmem:[#allocation2 + $0x14] sm:$0xff]
        %v2174 = vld [vmem:[#allocation2 + $0x1c] sm:$0xff]
        %2177 = vrot.lane.b32.xlu0 %v2161, 32
        %v2178 = vpop.permute.xlu0 %2177
        %2179 = vrot.lane.b32.xlu0 %v2162, 32
        %v2180 = vpop.permute.xlu0 %2179
        %2185 = vrot.lane.b32.xlu0 %v2163, 64
        %v2186 = vpop.permute.xlu0 %2185
        %2187 = vrot.lane.b32.xlu0 %v2164, 64
        %v2188 = vpop.permute.xlu0 %2187
        %2193 = vrot.lane.b32.xlu0 %v2165, 96
        %v2194 = vpop.permute.xlu0 %2193
        %2195 = vrot.lane.b32.xlu0 %v2166, 96
        %v2196 = vpop.permute.xlu0 %2195
        %2201 = vrot.lane.b32.xlu0 %v2169, 32
        %v2202 = vpop.permute.xlu0 %2201
        %2203 = vrot.lane.b32.xlu0 %v2170, 32
        %v2204 = vpop.permute.xlu0 %2203
        %2209 = vrot.lane.b32.xlu0 %v2171, 64
        %v2210 = vpop.permute.xlu0 %2209
        %2211 = vrot.lane.b32.xlu0 %v2172, 64
        %v2212 = vpop.permute.xlu0 %2211
        %2217 = vrot.lane.b32.xlu0 %v2173, 96
        %v2218 = vpop.permute.xlu0 %2217
        %2219 = vrot.lane.b32.xlu0 %v2174, 96
        %v2220 = vpop.permute.xlu0 %2219
        %v2223 = vsel %vm627, %v2159, %v2178
        %v2224 = vsel %vm627, %v2160, %v2180
        %v2225 = vsel %vm811, %v2223, %v2186
        %v2226 = vsel %vm811, %v2224, %v2188
        %v2227 = vsel %vm814, %v2225, %v2194
        %v2228 = vsel %vm814, %v2226, %v2196
        %v2229 = vsel %vm627, %v2167, %v2202
        %v2230 = vsel %vm627, %v2168, %v2204
        %v2231 = vsel %vm811, %v2229, %v2210
        %v2232 = vsel %vm811, %v2230, %v2212
        %v2233 = vsel %vm814, %v2231, %v2218
        %v2234 = vsel %vm814, %v2232, %v2220
        %s2235 = scalar_lea.vmem [#allocation14], 256
        %v2236 = vld [vmem:[%s2235] sm:$0xff]
        %v2237 = vld [vmem:[%s2235 + $0x8] sm:$0xff]
        %v2238 = vld [vmem:[%s2235 + $0x10] sm:$0xff]
        %v2239 = vld [vmem:[%s2235 + $0x18] sm:$0xff]
        %v2240 = vld [vmem:[%s2235 + $0x20] sm:$0xff]
        %v2241 = vld [vmem:[%s2235 + $0x28] sm:$0xff]
        %v2242 = vld [vmem:[%s2235 + $0x30] sm:$0xff]
        %v2243 = vld [vmem:[%s2235 + $0x38] sm:$0xff]
        %v2244 = vld [vmem:[%s2235 + $0x40] sm:$0xff]
        %v2245 = vld [vmem:[%s2235 + $0x48] sm:$0xff]
        %v2246 = vld [vmem:[%s2235 + $0x50] sm:$0xff]
        %v2247 = vld [vmem:[%s2235 + $0x58] sm:$0xff]
        %v2248 = vld [vmem:[%s2235 + $0x60] sm:$0xff]
        %v2249 = vld [vmem:[%s2235 + $0x68] sm:$0xff]
        %v2250 = vld [vmem:[%s2235 + $0x70] sm:$0xff]
        %v2251 = vld [vmem:[%s2235 + $0x78] sm:$0xff]
        %v2252 = vld [vmem:[%s2235 + $0x80] sm:$0xff]
        %v2253 = vld [vmem:[%s2235 + $0x88] sm:$0xff]
        %v2254 = vld [vmem:[%s2235 + $0x90] sm:$0xff]
        %v2255 = vld [vmem:[%s2235 + $0x98] sm:$0xff]
        %v2256 = vld [vmem:[%s2235 + $0xa0] sm:$0xff]
        %v2257 = vld [vmem:[%s2235 + $0xa8] sm:$0xff]
        %v2258 = vld [vmem:[%s2235 + $0xb0] sm:$0xff]
        %v2259 = vld [vmem:[%s2235 + $0xb8] sm:$0xff]
        %v2260 = vld [vmem:[%s2235 + $0xc0] sm:$0xff]
        %v2261 = vld [vmem:[%s2235 + $0xc8] sm:$0xff]
        %v2262 = vld [vmem:[%s2235 + $0xd0] sm:$0xff]
        %v2263 = vld [vmem:[%s2235 + $0xd8] sm:$0xff]
        %v2264 = vld [vmem:[%s2235 + $0xe0] sm:$0xff]
        %v2265 = vld [vmem:[%s2235 + $0xe8] sm:$0xff]
        %v2266 = vld [vmem:[%s2235 + $0xf0] sm:$0xff]
        %v2267 = vld [vmem:[%s2235 + $0xf8] sm:$0xff]
        %2268 = vmatprep.subr.mxu0 0.0
        %2269 = vmatpush1.msra.mxu0 %v2236
        %2270 = vmatprep.subr.mxu0 0.0
        %2271 = vmatpush1.msra.mxu0 %v2237
        %2272 = vmatprep.subr.mxu0 0.0
        %2273 = vmatpush1.msra.mxu0 %v2238
        %2274 = vmatprep.subr.mxu0 0.0
        %2275 = vmatpush1.msra.mxu0 %v2239
        %2276 = vmatprep.subr.mxu0 0.0
        %2277 = vmatpush1.msra.mxu0 %v2240
        %2278 = vmatprep.subr.mxu0 0.0
        %2279 = vmatpush1.msra.mxu0 %v2241
        %2280 = vmatprep.subr.mxu0 0.0
        %2281 = vmatpush1.msra.mxu0 %v2242
        %2282 = vmatprep.subr.mxu0 0.0
        %2283 = vmatpush1.msra.mxu0 %v2243
        %2284 = vmatprep.subr.mxu0 0.0
        %2285 = vmatpush1.msra.mxu0 %v2244
        %2286 = vmatprep.subr.mxu0 0.0
        %2287 = vmatpush1.msra.mxu0 %v2245
        %2288 = vmatprep.subr.mxu0 0.0
        %2289 = vmatpush1.msra.mxu0 %v2246
        %2290 = vmatprep.subr.mxu0 0.0
        %2291 = vmatpush1.msra.mxu0 %v2247
        %2292 = vmatprep.subr.mxu0 0.0
        %2293 = vmatpush1.msra.mxu0 %v2248
        %2294 = vmatprep.subr.mxu0 0.0
        %2295 = vmatpush1.msra.mxu0 %v2249
        %2296 = vmatprep.subr.mxu0 0.0
        %2297 = vmatpush1.msra.mxu0 %v2250
        %2298 = vmatprep.subr.mxu0 0.0
        %2299 = vmatpush1.msra.mxu0 %v2251
        %2300 = vmatprep.subr.mxu0 0.0
        %2301 = vmatpush1.msra.mxu0 %v2252
        %2302 = vmatprep.subr.mxu0 0.0
        %2303 = vmatpush1.msra.mxu0 %v2253
        %2304 = vmatprep.subr.mxu0 0.0
        %2305 = vmatpush1.msra.mxu0 %v2254
        %2306 = vmatprep.subr.mxu0 0.0
        %2307 = vmatpush1.msra.mxu0 %v2255
        %2308 = vmatprep.subr.mxu0 0.0
        %2309 = vmatpush1.msra.mxu0 %v2256
        %2310 = vmatprep.subr.mxu0 0.0
        %2311 = vmatpush1.msra.mxu0 %v2257
        %2312 = vmatprep.subr.mxu0 0.0
        %2313 = vmatpush1.msra.mxu0 %v2258
        %2314 = vmatprep.subr.mxu0 0.0
        %2315 = vmatpush1.msra.mxu0 %v2259
        %2316 = vmatprep.subr.mxu0 0.0
        %2317 = vmatpush1.msra.mxu0 %v2260
        %2318 = vmatprep.subr.mxu0 0.0
        %2319 = vmatpush1.msra.mxu0 %v2261
        %2320 = vmatprep.subr.mxu0 0.0
        %2321 = vmatpush1.msra.mxu0 %v2262
        %2322 = vmatprep.subr.mxu0 0.0
        %2323 = vmatpush1.msra.mxu0 %v2263
        %2324 = vmatprep.subr.mxu0 0.0
        %2325 = vmatpush1.msra.mxu0 %v2264
        %2326 = vmatprep.subr.mxu0 0.0
        %2327 = vmatpush1.msra.mxu0 %v2265
        %2328 = vmatprep.subr.mxu0 0.0
        %2329 = vmatpush1.msra.mxu0 %v2266
        %2330 = vmatprep.subr.mxu0 0.0
        %2331 = vmatpush1.msra.mxu0 %v2267
        %2332 = vmatprep.mubr.f32.mxu0 %v2233
        %2333 = vmatmul.mubr.f32.gmra.mrb[0].mxu0 %v2227
        %v2334 = vpop.f32.mrb[0].mxu0
        %v2335 = vadd.f32 0.0, %v2334
        %v2336 = vpop.f32.mrb[0].mxu0
        %2337 = vmatprep.mubr.f32.mxu0 %v2234
        %2338 = vmatmul.mubr.f32.gmra.mrb[0].mxu0 %v2228
        %v2339 = vpop.f32.mrb[0].mxu0
        %v2340 = vadd.f32 0.0, %v2339
        %v2341 = vpop.f32.mrb[0].mxu0
        %2342 = vdwg.mxu0
        %v2343 = vadd.f32 %v2151, %v2335
        %v2344 = vadd.f32 %v2156, %v2340
        %v2345 = vld [vmem:[#allocation2 + $0x15] sm:$0xff]
        %v2346 = vld [vmem:[#allocation2 + $0x1d] sm:$0xff]
        %v2347 = vld [vmem:[#allocation2 + $0x16] sm:$0xff]
        %v2348 = vld [vmem:[#allocation2 + $0x1e] sm:$0xff]
        %v2349 = vld [vmem:[#allocation2 + $0x17] sm:$0xff]
        %v2350 = vld [vmem:[#allocation2 + $0x1f] sm:$0xff]
        %v2351 = vld [vmem:[#allocation2 + $0x18] sm:$0xff]
        %v2352 = vld [vmem:[#allocation2 + $0x20] sm:$0xff]
        %v2353 = vld [vmem:[#allocation2 + $0x19] sm:$0xff]
        %v2354 = vld [vmem:[#allocation2 + $0x21] sm:$0xff]
        %v2355 = vld [vmem:[#allocation2 + $0x1a] sm:$0xff]
        %v2356 = vld [vmem:[#allocation2 + $0x22] sm:$0xff]
        %v2357 = vld [vmem:[#allocation2 + $0x1b] sm:$0xff]
        %v2358 = vld [vmem:[#allocation2 + $0x23] sm:$0xff]
        %v2359 = vld [vmem:[#allocation2 + $0x1c] sm:$0xff]
        %v2360 = vld [vmem:[#allocation2 + $0x24] sm:$0xff]
        %2363 = vrot.lane.b32.xlu0 %v2347, 32
        %v2364 = vpop.permute.xlu0 %2363
        %2365 = vrot.lane.b32.xlu0 %v2348, 32
        %v2366 = vpop.permute.xlu0 %2365
        %2371 = vrot.lane.b32.xlu0 %v2349, 64
        %v2372 = vpop.permute.xlu0 %2371
        %2373 = vrot.lane.b32.xlu0 %v2350, 64
        %v2374 = vpop.permute.xlu0 %2373
        %2379 = vrot.lane.b32.xlu0 %v2351, 96
        %v2380 = vpop.permute.xlu0 %2379
        %2381 = vrot.lane.b32.xlu0 %v2352, 96
        %v2382 = vpop.permute.xlu0 %2381
        %2387 = vrot.lane.b32.xlu0 %v2355, 32
        %v2388 = vpop.permute.xlu0 %2387
        %2389 = vrot.lane.b32.xlu0 %v2356, 32
        %v2390 = vpop.permute.xlu0 %2389
        %2395 = vrot.lane.b32.xlu0 %v2357, 64
        %v2396 = vpop.permute.xlu0 %2395
        %2397 = vrot.lane.b32.xlu0 %v2358, 64
        %v2398 = vpop.permute.xlu0 %2397
        %2403 = vrot.lane.b32.xlu0 %v2359, 96
        %v2404 = vpop.permute.xlu0 %2403
        %2405 = vrot.lane.b32.xlu0 %v2360, 96
        %v2406 = vpop.permute.xlu0 %2405
        %v2409 = vsel %vm627, %v2345, %v2364
        %v2410 = vsel %vm627, %v2346, %v2366
        %v2411 = vsel %vm811, %v2409, %v2372
        %v2412 = vsel %vm811, %v2410, %v2374
        %v2413 = vsel %vm814, %v2411, %v2380
        %v2414 = vsel %vm814, %v2412, %v2382
        %v2415 = vsel %vm627, %v2353, %v2388
        %v2416 = vsel %vm627, %v2354, %v2390
        %v2417 = vsel %vm811, %v2415, %v2396
        %v2418 = vsel %vm811, %v2416, %v2398
        %v2419 = vsel %vm814, %v2417, %v2404
        %v2420 = vsel %vm814, %v2418, %v2406
        %s2421 = scalar_lea.vmem [#allocation14], 512
        %v2422 = vld [vmem:[%s2421] sm:$0xff]
        %v2423 = vld [vmem:[%s2421 + $0x8] sm:$0xff]
        %v2424 = vld [vmem:[%s2421 + $0x10] sm:$0xff]
        %v2425 = vld [vmem:[%s2421 + $0x18] sm:$0xff]
        %v2426 = vld [vmem:[%s2421 + $0x20] sm:$0xff]
        %v2427 = vld [vmem:[%s2421 + $0x28] sm:$0xff]
        %v2428 = vld [vmem:[%s2421 + $0x30] sm:$0xff]
        %v2429 = vld [vmem:[%s2421 + $0x38] sm:$0xff]
        %v2430 = vld [vmem:[%s2421 + $0x40] sm:$0xff]
        %v2431 = vld [vmem:[%s2421 + $0x48] sm:$0xff]
        %v2432 = vld [vmem:[%s2421 + $0x50] sm:$0xff]
        %v2433 = vld [vmem:[%s2421 + $0x58] sm:$0xff]
        %v2434 = vld [vmem:[%s2421 + $0x60] sm:$0xff]
        %v2435 = vld [vmem:[%s2421 + $0x68] sm:$0xff]
        %v2436 = vld [vmem:[%s2421 + $0x70] sm:$0xff]
        %v2437 = vld [vmem:[%s2421 + $0x78] sm:$0xff]
        %v2438 = vld [vmem:[%s2421 + $0x80] sm:$0xff]
        %v2439 = vld [vmem:[%s2421 + $0x88] sm:$0xff]
        %v2440 = vld [vmem:[%s2421 + $0x90] sm:$0xff]
        %v2441 = vld [vmem:[%s2421 + $0x98] sm:$0xff]
        %v2442 = vld [vmem:[%s2421 + $0xa0] sm:$0xff]
        %v2443 = vld [vmem:[%s2421 + $0xa8] sm:$0xff]
        %v2444 = vld [vmem:[%s2421 + $0xb0] sm:$0xff]
        %v2445 = vld [vmem:[%s2421 + $0xb8] sm:$0xff]
        %v2446 = vld [vmem:[%s2421 + $0xc0] sm:$0xff]
        %v2447 = vld [vmem:[%s2421 + $0xc8] sm:$0xff]
        %v2448 = vld [vmem:[%s2421 + $0xd0] sm:$0xff]
        %v2449 = vld [vmem:[%s2421 + $0xd8] sm:$0xff]
        %v2450 = vld [vmem:[%s2421 + $0xe0] sm:$0xff]
        %v2451 = vld [vmem:[%s2421 + $0xe8] sm:$0xff]
        %v2452 = vld [vmem:[%s2421 + $0xf0] sm:$0xff]
        %v2453 = vld [vmem:[%s2421 + $0xf8] sm:$0xff]
        %2454 = vmatprep.subr.mxu0 0.0
        %2455 = vmatpush1.msra.mxu0 %v2422
        %2456 = vmatprep.subr.mxu0 0.0
        %2457 = vmatpush1.msra.mxu0 %v2423
        %2458 = vmatprep.subr.mxu0 0.0
        %2459 = vmatpush1.msra.mxu0 %v2424
        %2460 = vmatprep.subr.mxu0 0.0
        %2461 = vmatpush1.msra.mxu0 %v2425
        %2462 = vmatprep.subr.mxu0 0.0
        %2463 = vmatpush1.msra.mxu0 %v2426
        %2464 = vmatprep.subr.mxu0 0.0
        %2465 = vmatpush1.msra.mxu0 %v2427
        %2466 = vmatprep.subr.mxu0 0.0
        %2467 = vmatpush1.msra.mxu0 %v2428
        %2468 = vmatprep.subr.mxu0 0.0
        %2469 = vmatpush1.msra.mxu0 %v2429
        %2470 = vmatprep.subr.mxu0 0.0
        %2471 = vmatpush1.msra.mxu0 %v2430
        %2472 = vmatprep.subr.mxu0 0.0
        %2473 = vmatpush1.msra.mxu0 %v2431
        %2474 = vmatprep.subr.mxu0 0.0
        %2475 = vmatpush1.msra.mxu0 %v2432
        %2476 = vmatprep.subr.mxu0 0.0
        %2477 = vmatpush1.msra.mxu0 %v2433
        %2478 = vmatprep.subr.mxu0 0.0
        %2479 = vmatpush1.msra.mxu0 %v2434
        %2480 = vmatprep.subr.mxu0 0.0
        %2481 = vmatpush1.msra.mxu0 %v2435
        %2482 = vmatprep.subr.mxu0 0.0
        %2483 = vmatpush1.msra.mxu0 %v2436
        %2484 = vmatprep.subr.mxu0 0.0
        %2485 = vmatpush1.msra.mxu0 %v2437
        %2486 = vmatprep.subr.mxu0 0.0
        %2487 = vmatpush1.msra.mxu0 %v2438
        %2488 = vmatprep.subr.mxu0 0.0
        %2489 = vmatpush1.msra.mxu0 %v2439
        %2490 = vmatprep.subr.mxu0 0.0
        %2491 = vmatpush1.msra.mxu0 %v2440
        %2492 = vmatprep.subr.mxu0 0.0
        %2493 = vmatpush1.msra.mxu0 %v2441
        %2494 = vmatprep.subr.mxu0 0.0
        %2495 = vmatpush1.msra.mxu0 %v2442
        %2496 = vmatprep.subr.mxu0 0.0
        %2497 = vmatpush1.msra.mxu0 %v2443
        %2498 = vmatprep.subr.mxu0 0.0
        %2499 = vmatpush1.msra.mxu0 %v2444
        %2500 = vmatprep.subr.mxu0 0.0
        %2501 = vmatpush1.msra.mxu0 %v2445
        %2502 = vmatprep.subr.mxu0 0.0
        %2503 = vmatpush1.msra.mxu0 %v2446
        %2504 = vmatprep.subr.mxu0 0.0
        %2505 = vmatpush1.msra.mxu0 %v2447
        %2506 = vmatprep.subr.mxu0 0.0
        %2507 = vmatpush1.msra.mxu0 %v2448
        %2508 = vmatprep.subr.mxu0 0.0
        %2509 = vmatpush1.msra.mxu0 %v2449
        %2510 = vmatprep.subr.mxu0 0.0
        %2511 = vmatpush1.msra.mxu0 %v2450
        %2512 = vmatprep.subr.mxu0 0.0
        %2513 = vmatpush1.msra.mxu0 %v2451
        %2514 = vmatprep.subr.mxu0 0.0
        %2515 = vmatpush1.msra.mxu0 %v2452
        %2516 = vmatprep.subr.mxu0 0.0
        %2517 = vmatpush1.msra.mxu0 %v2453
        %2518 = vmatprep.mubr.f32.mxu0 %v2419
        %2519 = vmatmul.mubr.f32.gmra.mrb[0].mxu0 %v2413
        %v2520 = vpop.f32.mrb[0].mxu0
        %v2521 = vadd.f32 0.0, %v2520
        %v2522 = vpop.f32.mrb[0].mxu0
        %2523 = vmatprep.mubr.f32.mxu0 %v2420
        %2524 = vmatmul.mubr.f32.gmra.mrb[0].mxu0 %v2414
        %v2525 = vpop.f32.mrb[0].mxu0
        %v2526 = vadd.f32 0.0, %v2525
        %v2527 = vpop.f32.mrb[0].mxu0
        %2528 = vdwg.mxu0
        %v2529 = vadd.f32 %v2343, %v2521
        %v2530 = vadd.f32 %v2344, %v2526
        %v2531 = vld [vmem:[#allocation2 + $0x1d] sm:$0xff]
        %v2532 = vld [vmem:[#allocation2 + $0x25] sm:$0xff]
        %v2533 = vld [vmem:[#allocation2 + $0x1e] sm:$0xff]
        %v2534 = vld [vmem:[#allocation2 + $0x26] sm:$0xff]
        %v2535 = vld [vmem:[#allocation2 + $0x1f] sm:$0xff]
        %v2536 = vld [vmem:[#allocation2 + $0x27] sm:$0xff]
        %v2537 = vld [vmem:[#allocation2 + $0x20] sm:$0xff]
        %v2538 = vld [vmem:[#allocation2 + $0x28] sm:$0xff]
        %v2539 = vld [vmem:[#allocation2 + $0x21] sm:$0xff]
        %v2540 = vld [vmem:[#allocation2 + $0x29] sm:$0xff]
        %v2541 = vld [vmem:[#allocation2 + $0x22] sm:$0xff]
        %v2542 = vld [vmem:[#allocation2 + $0x2a] sm:$0xff]
        %v2543 = vld [vmem:[#allocation2 + $0x23] sm:$0xff]
        %v2544 = vld [vmem:[#allocation2 + $0x2b] sm:$0xff]
        %v2545 = vld [vmem:[#allocation2 + $0x24] sm:$0xff]
        %v2546 = vld [vmem:[#allocation2 + $0x2c] sm:$0xff]
        %2549 = vrot.lane.b32.xlu0 %v2533, 32
        %v2550 = vpop.permute.xlu0 %2549
        %2551 = vrot.lane.b32.xlu0 %v2534, 32
        %v2552 = vpop.permute.xlu0 %2551
        %2557 = vrot.lane.b32.xlu0 %v2535, 64
        %v2558 = vpop.permute.xlu0 %2557
        %2559 = vrot.lane.b32.xlu0 %v2536, 64
        %v2560 = vpop.permute.xlu0 %2559
        %2565 = vrot.lane.b32.xlu0 %v2537, 96
        %v2566 = vpop.permute.xlu0 %2565
        %2567 = vrot.lane.b32.xlu0 %v2538, 96
        %v2568 = vpop.permute.xlu0 %2567
        %2573 = vrot.lane.b32.xlu0 %v2541, 32
        %v2574 = vpop.permute.xlu0 %2573
        %2575 = vrot.lane.b32.xlu0 %v2542, 32
        %v2576 = vpop.permute.xlu0 %2575
        %2581 = vrot.lane.b32.xlu0 %v2543, 64
        %v2582 = vpop.permute.xlu0 %2581
        %2583 = vrot.lane.b32.xlu0 %v2544, 64
        %v2584 = vpop.permute.xlu0 %2583
        %2589 = vrot.lane.b32.xlu0 %v2545, 96
        %v2590 = vpop.permute.xlu0 %2589
        %2591 = vrot.lane.b32.xlu0 %v2546, 96
        %v2592 = vpop.permute.xlu0 %2591
        %v2595 = vsel %vm627, %v2531, %v2550
        %v2596 = vsel %vm627, %v2532, %v2552
        %v2597 = vsel %vm811, %v2595, %v2558
        %v2598 = vsel %vm811, %v2596, %v2560
        %v2599 = vsel %vm814, %v2597, %v2566
        %v2600 = vsel %vm814, %v2598, %v2568
        %v2601 = vsel %vm627, %v2539, %v2574
        %v2602 = vsel %vm627, %v2540, %v2576
        %v2603 = vsel %vm811, %v2601, %v2582
        %v2604 = vsel %vm811, %v2602, %v2584
        %v2605 = vsel %vm814, %v2603, %v2590
        %v2606 = vsel %vm814, %v2604, %v2592
        %s2607 = scalar_lea.vmem [#allocation14], 768
        %v2608 = vld [vmem:[%s2607] sm:$0xff]
        %v2609 = vld [vmem:[%s2607 + $0x8] sm:$0xff]
        %v2610 = vld [vmem:[%s2607 + $0x10] sm:$0xff]
        %v2611 = vld [vmem:[%s2607 + $0x18] sm:$0xff]
        %v2612 = vld [vmem:[%s2607 + $0x20] sm:$0xff]
        %v2613 = vld [vmem:[%s2607 + $0x28] sm:$0xff]
        %v2614 = vld [vmem:[%s2607 + $0x30] sm:$0xff]
        %v2615 = vld [vmem:[%s2607 + $0x38] sm:$0xff]
        %v2616 = vld [vmem:[%s2607 + $0x40] sm:$0xff]
        %v2617 = vld [vmem:[%s2607 + $0x48] sm:$0xff]
        %v2618 = vld [vmem:[%s2607 + $0x50] sm:$0xff]
        %v2619 = vld [vmem:[%s2607 + $0x58] sm:$0xff]
        %v2620 = vld [vmem:[%s2607 + $0x60] sm:$0xff]
        %v2621 = vld [vmem:[%s2607 + $0x68] sm:$0xff]
        %v2622 = vld [vmem:[%s2607 + $0x70] sm:$0xff]
        %v2623 = vld [vmem:[%s2607 + $0x78] sm:$0xff]
        %v2624 = vld [vmem:[%s2607 + $0x80] sm:$0xff]
        %v2625 = vld [vmem:[%s2607 + $0x88] sm:$0xff]
        %v2626 = vld [vmem:[%s2607 + $0x90] sm:$0xff]
        %v2627 = vld [vmem:[%s2607 + $0x98] sm:$0xff]
        %v2628 = vld [vmem:[%s2607 + $0xa0] sm:$0xff]
        %v2629 = vld [vmem:[%s2607 + $0xa8] sm:$0xff]
        %v2630 = vld [vmem:[%s2607 + $0xb0] sm:$0xff]
        %v2631 = vld [vmem:[%s2607 + $0xb8] sm:$0xff]
        %v2632 = vld [vmem:[%s2607 + $0xc0] sm:$0xff]
        %v2633 = vld [vmem:[%s2607 + $0xc8] sm:$0xff]
        %v2634 = vld [vmem:[%s2607 + $0xd0] sm:$0xff]
        %v2635 = vld [vmem:[%s2607 + $0xd8] sm:$0xff]
        %v2636 = vld [vmem:[%s2607 + $0xe0] sm:$0xff]
        %v2637 = vld [vmem:[%s2607 + $0xe8] sm:$0xff]
        %v2638 = vld [vmem:[%s2607 + $0xf0] sm:$0xff]
        %v2639 = vld [vmem:[%s2607 + $0xf8] sm:$0xff]
        %2640 = vmatprep.subr.mxu0 0.0
        %2641 = vmatpush1.msra.mxu0 %v2608
        %2642 = vmatprep.subr.mxu0 0.0
        %2643 = vmatpush1.msra.mxu0 %v2609
        %2644 = vmatprep.subr.mxu0 0.0
        %2645 = vmatpush1.msra.mxu0 %v2610
        %2646 = vmatprep.subr.mxu0 0.0
        %2647 = vmatpush1.msra.mxu0 %v2611
        %2648 = vmatprep.subr.mxu0 0.0
        %2649 = vmatpush1.msra.mxu0 %v2612
        %2650 = vmatprep.subr.mxu0 0.0
        %2651 = vmatpush1.msra.mxu0 %v2613
        %2652 = vmatprep.subr.mxu0 0.0
        %2653 = vmatpush1.msra.mxu0 %v2614
        %2654 = vmatprep.subr.mxu0 0.0
        %2655 = vmatpush1.msra.mxu0 %v2615
        %2656 = vmatprep.subr.mxu0 0.0
        %2657 = vmatpush1.msra.mxu0 %v2616
        %2658 = vmatprep.subr.mxu0 0.0
        %2659 = vmatpush1.msra.mxu0 %v2617
        %2660 = vmatprep.subr.mxu0 0.0
        %2661 = vmatpush1.msra.mxu0 %v2618
        %2662 = vmatprep.subr.mxu0 0.0
        %2663 = vmatpush1.msra.mxu0 %v2619
        %2664 = vmatprep.subr.mxu0 0.0
        %2665 = vmatpush1.msra.mxu0 %v2620
        %2666 = vmatprep.subr.mxu0 0.0
        %2667 = vmatpush1.msra.mxu0 %v2621
        %2668 = vmatprep.subr.mxu0 0.0
        %2669 = vmatpush1.msra.mxu0 %v2622
        %2670 = vmatprep.subr.mxu0 0.0
        %2671 = vmatpush1.msra.mxu0 %v2623
        %2672 = vmatprep.subr.mxu0 0.0
        %2673 = vmatpush1.msra.mxu0 %v2624
        %2674 = vmatprep.subr.mxu0 0.0
        %2675 = vmatpush1.msra.mxu0 %v2625
        %2676 = vmatprep.subr.mxu0 0.0
        %2677 = vmatpush1.msra.mxu0 %v2626
        %2678 = vmatprep.subr.mxu0 0.0
        %2679 = vmatpush1.msra.mxu0 %v2627
        %2680 = vmatprep.subr.mxu0 0.0
        %2681 = vmatpush1.msra.mxu0 %v2628
        %2682 = vmatprep.subr.mxu0 0.0
        %2683 = vmatpush1.msra.mxu0 %v2629
        %2684 = vmatprep.subr.mxu0 0.0
        %2685 = vmatpush1.msra.mxu0 %v2630
        %2686 = vmatprep.subr.mxu0 0.0
        %2687 = vmatpush1.msra.mxu0 %v2631
        %2688 = vmatprep.subr.mxu0 0.0
        %2689 = vmatpush1.msra.mxu0 %v2632
        %2690 = vmatprep.subr.mxu0 0.0
        %2691 = vmatpush1.msra.mxu0 %v2633
        %2692 = vmatprep.subr.mxu0 0.0
        %2693 = vmatpush1.msra.mxu0 %v2634
        %2694 = vmatprep.subr.mxu0 0.0
        %2695 = vmatpush1.msra.mxu0 %v2635
        %2696 = vmatprep.subr.mxu0 0.0
        %2697 = vmatpush1.msra.mxu0 %v2636
        %2698 = vmatprep.subr.mxu0 0.0
        %2699 = vmatpush1.msra.mxu0 %v2637
        %2700 = vmatprep.subr.mxu0 0.0
        %2701 = vmatpush1.msra.mxu0 %v2638
        %2702 = vmatprep.subr.mxu0 0.0
        %2703 = vmatpush1.msra.mxu0 %v2639
        %2704 = vmatprep.mubr.f32.mxu0 %v2605
        %2705 = vmatmul.mubr.f32.gmra.mrb[0].mxu0 %v2599
        %v2706 = vpop.f32.mrb[0].mxu0
        %v2707 = vadd.f32 0.0, %v2706
        %v2708 = vpop.f32.mrb[0].mxu0
        %2709 = vmatprep.mubr.f32.mxu0 %v2606
        %2710 = vmatmul.mubr.f32.gmra.mrb[0].mxu0 %v2600
        %v2711 = vpop.f32.mrb[0].mxu0
        %v2712 = vadd.f32 0.0, %v2711
        %v2713 = vpop.f32.mrb[0].mxu0
        %2714 = vdwg.mxu0
        %v2715 = vadd.f32 %v2529, %v2707
        %v2716 = vadd.f32 %v2530, %v2712
        %v2717 = vld [vmem:[#allocation2 + $0x25] sm:$0xff]
        %v2718 = vld [vmem:[#allocation2 + $0x2d] sm:$0xff]
        %v2719 = vld [vmem:[#allocation2 + $0x26] sm:$0xff]
        %v2720 = vld [vmem:[#allocation2 + $0x2e] sm:$0xff]
        %v2721 = vld [vmem:[#allocation2 + $0x27] sm:$0xff]
        %v2722 = vld [vmem:[#allocation2 + $0x2f] sm:$0xff]
        %v2723 = vld [vmem:[#allocation2 + $0x28] sm:$0xff]
        %v2724 = vld [vmem:[#allocation2 + $0x30] sm:$0xff]
        %v2725 = vld [vmem:[#allocation2 + $0x29] sm:$0xff]
        %v2726 = vld [vmem:[#allocation2 + $0x31] sm:$0xff]
        %v2727 = vld [vmem:[#allocation2 + $0x2a] sm:$0xff]
        %v2728 = vld [vmem:[#allocation2 + $0x32] sm:$0xff]
        %v2729 = vld [vmem:[#allocation2 + $0x2b] sm:$0xff]
        %v2730 = vld [vmem:[#allocation2 + $0x33] sm:$0xff]
        %v2731 = vld [vmem:[#allocation2 + $0x2c] sm:$0xff]
        %v2732 = vld [vmem:[#allocation2 + $0x34] sm:$0xff]
        %2735 = vrot.lane.b32.xlu0 %v2719, 32
        %v2736 = vpop.permute.xlu0 %2735
        %2737 = vrot.lane.b32.xlu0 %v2720, 32
        %v2738 = vpop.permute.xlu0 %2737
        %2743 = vrot.lane.b32.xlu0 %v2721, 64
        %v2744 = vpop.permute.xlu0 %2743
        %2745 = vrot.lane.b32.xlu0 %v2722, 64
        %v2746 = vpop.permute.xlu0 %2745
        %2751 = vrot.lane.b32.xlu0 %v2723, 96
        %v2752 = vpop.permute.xlu0 %2751
        %2753 = vrot.lane.b32.xlu0 %v2724, 96
        %v2754 = vpop.permute.xlu0 %2753
        %2759 = vrot.lane.b32.xlu0 %v2727, 32
        %v2760 = vpop.permute.xlu0 %2759
        %2761 = vrot.lane.b32.xlu0 %v2728, 32
        %v2762 = vpop.permute.xlu0 %2761
        %2767 = vrot.lane.b32.xlu0 %v2729, 64
        %v2768 = vpop.permute.xlu0 %2767
        %2769 = vrot.lane.b32.xlu0 %v2730, 64
        %v2770 = vpop.permute.xlu0 %2769
        %2775 = vrot.lane.b32.xlu0 %v2731, 96
        %v2776 = vpop.permute.xlu0 %2775
        %2777 = vrot.lane.b32.xlu0 %v2732, 96
        %v2778 = vpop.permute.xlu0 %2777
        %v2781 = vsel %vm627, %v2717, %v2736
        %v2782 = vsel %vm627, %v2718, %v2738
        %v2783 = vsel %vm811, %v2781, %v2744
        %v2784 = vsel %vm811, %v2782, %v2746
        %v2785 = vsel %vm814, %v2783, %v2752
        %v2786 = vsel %vm814, %v2784, %v2754
        %v2787 = vsel %vm627, %v2725, %v2760
        %v2788 = vsel %vm627, %v2726, %v2762
        %v2789 = vsel %vm811, %v2787, %v2768
        %v2790 = vsel %vm811, %v2788, %v2770
        %v2791 = vsel %vm814, %v2789, %v2776
        %v2792 = vsel %vm814, %v2790, %v2778
        %s2793 = scalar_lea.vmem [#allocation14], 1024
        %v2794 = vld [vmem:[%s2793] sm:$0xff]
        %v2795 = vld [vmem:[%s2793 + $0x8] sm:$0xff]
        %v2796 = vld [vmem:[%s2793 + $0x10] sm:$0xff]
        %v2797 = vld [vmem:[%s2793 + $0x18] sm:$0xff]
        %v2798 = vld [vmem:[%s2793 + $0x20] sm:$0xff]
        %v2799 = vld [vmem:[%s2793 + $0x28] sm:$0xff]
        %v2800 = vld [vmem:[%s2793 + $0x30] sm:$0xff]
        %v2801 = vld [vmem:[%s2793 + $0x38] sm:$0xff]
        %v2802 = vld [vmem:[%s2793 + $0x40] sm:$0xff]
        %v2803 = vld [vmem:[%s2793 + $0x48] sm:$0xff]
        %v2804 = vld [vmem:[%s2793 + $0x50] sm:$0xff]
        %v2805 = vld [vmem:[%s2793 + $0x58] sm:$0xff]
        %v2806 = vld [vmem:[%s2793 + $0x60] sm:$0xff]
        %v2807 = vld [vmem:[%s2793 + $0x68] sm:$0xff]
        %v2808 = vld [vmem:[%s2793 + $0x70] sm:$0xff]
        %v2809 = vld [vmem:[%s2793 + $0x78] sm:$0xff]
        %v2810 = vld [vmem:[%s2793 + $0x80] sm:$0xff]
        %v2811 = vld [vmem:[%s2793 + $0x88] sm:$0xff]
        %v2812 = vld [vmem:[%s2793 + $0x90] sm:$0xff]
        %v2813 = vld [vmem:[%s2793 + $0x98] sm:$0xff]
        %v2814 = vld [vmem:[%s2793 + $0xa0] sm:$0xff]
        %v2815 = vld [vmem:[%s2793 + $0xa8] sm:$0xff]
        %v2816 = vld [vmem:[%s2793 + $0xb0] sm:$0xff]
        %v2817 = vld [vmem:[%s2793 + $0xb8] sm:$0xff]
        %v2818 = vld [vmem:[%s2793 + $0xc0] sm:$0xff]
        %v2819 = vld [vmem:[%s2793 + $0xc8] sm:$0xff]
        %v2820 = vld [vmem:[%s2793 + $0xd0] sm:$0xff]
        %v2821 = vld [vmem:[%s2793 + $0xd8] sm:$0xff]
        %v2822 = vld [vmem:[%s2793 + $0xe0] sm:$0xff]
        %v2823 = vld [vmem:[%s2793 + $0xe8] sm:$0xff]
        %v2824 = vld [vmem:[%s2793 + $0xf0] sm:$0xff]
        %v2825 = vld [vmem:[%s2793 + $0xf8] sm:$0xff]
        %2826 = vmatprep.subr.mxu0 0.0
        %2827 = vmatpush1.msra.mxu0 %v2794
        %2828 = vmatprep.subr.mxu0 0.0
        %2829 = vmatpush1.msra.mxu0 %v2795
        %2830 = vmatprep.subr.mxu0 0.0
        %2831 = vmatpush1.msra.mxu0 %v2796
        %2832 = vmatprep.subr.mxu0 0.0
        %2833 = vmatpush1.msra.mxu0 %v2797
        %2834 = vmatprep.subr.mxu0 0.0
        %2835 = vmatpush1.msra.mxu0 %v2798
        %2836 = vmatprep.subr.mxu0 0.0
        %2837 = vmatpush1.msra.mxu0 %v2799
        %2838 = vmatprep.subr.mxu0 0.0
        %2839 = vmatpush1.msra.mxu0 %v2800
        %2840 = vmatprep.subr.mxu0 0.0
        %2841 = vmatpush1.msra.mxu0 %v2801
        %2842 = vmatprep.subr.mxu0 0.0
        %2843 = vmatpush1.msra.mxu0 %v2802
        %2844 = vmatprep.subr.mxu0 0.0
        %2845 = vmatpush1.msra.mxu0 %v2803
        %2846 = vmatprep.subr.mxu0 0.0
        %2847 = vmatpush1.msra.mxu0 %v2804
        %2848 = vmatprep.subr.mxu0 0.0
        %2849 = vmatpush1.msra.mxu0 %v2805
        %2850 = vmatprep.subr.mxu0 0.0
        %2851 = vmatpush1.msra.mxu0 %v2806
        %2852 = vmatprep.subr.mxu0 0.0
        %2853 = vmatpush1.msra.mxu0 %v2807
        %2854 = vmatprep.subr.mxu0 0.0
        %2855 = vmatpush1.msra.mxu0 %v2808
        %2856 = vmatprep.subr.mxu0 0.0
        %2857 = vmatpush1.msra.mxu0 %v2809
        %2858 = vmatprep.subr.mxu0 0.0
        %2859 = vmatpush1.msra.mxu0 %v2810
        %2860 = vmatprep.subr.mxu0 0.0
        %2861 = vmatpush1.msra.mxu0 %v2811
        %2862 = vmatprep.subr.mxu0 0.0
        %2863 = vmatpush1.msra.mxu0 %v2812
        %2864 = vmatprep.subr.mxu0 0.0
        %2865 = vmatpush1.msra.mxu0 %v2813
        %2866 = vmatprep.subr.mxu0 0.0
        %2867 = vmatpush1.msra.mxu0 %v2814
        %2868 = vmatprep.subr.mxu0 0.0
        %2869 = vmatpush1.msra.mxu0 %v2815
        %2870 = vmatprep.subr.mxu0 0.0
        %2871 = vmatpush1.msra.mxu0 %v2816
        %2872 = vmatprep.subr.mxu0 0.0
        %2873 = vmatpush1.msra.mxu0 %v2817
        %2874 = vmatprep.subr.mxu0 0.0
        %2875 = vmatpush1.msra.mxu0 %v2818
        %2876 = vmatprep.subr.mxu0 0.0
        %2877 = vmatpush1.msra.mxu0 %v2819
        %2878 = vmatprep.subr.mxu0 0.0
        %2879 = vmatpush1.msra.mxu0 %v2820
        %2880 = vmatprep.subr.mxu0 0.0
        %2881 = vmatpush1.msra.mxu0 %v2821
        %2882 = vmatprep.subr.mxu0 0.0
        %2883 = vmatpush1.msra.mxu0 %v2822
        %2884 = vmatprep.subr.mxu0 0.0
        %2885 = vmatpush1.msra.mxu0 %v2823
        %2886 = vmatprep.subr.mxu0 0.0
        %2887 = vmatpush1.msra.mxu0 %v2824
        %2888 = vmatprep.subr.mxu0 0.0
        %2889 = vmatpush1.msra.mxu0 %v2825
        %2890 = vmatprep.mubr.f32.mxu0 %v2791
        %2891 = vmatmul.mubr.f32.gmra.mrb[0].mxu0 %v2785
        %v2892 = vpop.f32.mrb[0].mxu0
        %v2893 = vadd.f32 0.0, %v2892
        %v2894 = vpop.f32.mrb[0].mxu0
        %2895 = vmatprep.mubr.f32.mxu0 %v2792
        %2896 = vmatmul.mubr.f32.gmra.mrb[0].mxu0 %v2786
        %v2897 = vpop.f32.mrb[0].mxu0
        %v2898 = vadd.f32 0.0, %v2897
        %v2899 = vpop.f32.mrb[0].mxu0
        %2900 = vdwg.mxu0
        %v2901 = vadd.f32 %v2715, %v2893
        %v2902 = vadd.f32 %v2716, %v2898
        %v2904 = vlaneseq
        %v2905 = vshrl.u32 %v2904, 7
        %v2906 = vsub.s32 0, %v2905
        %v2907 = vrot.slane %v1821, %v2906
        %v2909 = vmul.f32 %v2901, %v2907
        %v2910 = vmul.f32 %v2902, %v2907
        %v2912 = vlaneseq
        %v2913 = vshrl.u32 %v2912, 7
        %v2914 = vsub.s32 0, %v2913
        %v2915 = vrot.slane %v1823, %v2914
        %v2917 = vadd.f32 %v2909, %v2915
        %v2918 = vadd.f32 %v2910, %v2915
        %v2919 = vmax.f32 %v2917, 0.0
        %v2920 = vmax.f32 %v2918, 0.0
        %2921 = vst [vmem:[#allocation3 + $0x8] sm:$0xff] %v2919
        %2922 = vst [vmem:[#allocation3 + $0x10] sm:$0xff] %v2920
        %v2923 = vld [vmem:[#allocation3 + $0x8] sm:$0xff]
        %v2924 = vld [vmem:[#allocation3 + $0x10] sm:$0xff]
        %v2925 = vld [vmem:[#allocation3 + $0x7] sm:$0xff]
        %v2926 = vld [vmem:[#allocation3 + $0xf] sm:$0xff]
        %v2927 = vmax.f32 %v2925, %v2923
        %v2928 = vmax.f32 %v2926, %v2924
        %v2929 = vld [vmem:[#allocation3 + $0x9] sm:$0xff]
        %v2930 = vld [vmem:[#allocation3 + $0x11] sm:$0xff]
        %v2931 = vmax.f32 %v2927, %v2929
        %v2932 = vmax.f32 %v2928, %v2930
        %s2933 = scalar_lea.vmem %s4, 128
        %v2934 = vld [vmem:[%s2933] sm:$0xff]
        %v2935 = vld [vmem:[%s2933 + $0x8] sm:$0xff]
        %v2936 = vld [vmem:[%s2933 + $0x10] sm:$0xff]
        %v2937 = vld [vmem:[%s2933 + $0x18] sm:$0xff]
        %v2938 = vld [vmem:[%s2933 + $0x20] sm:$0xff]
        %v2939 = vld [vmem:[%s2933 + $0x28] sm:$0xff]
        %v2940 = vld [vmem:[%s2933 + $0x30] sm:$0xff]
        %v2941 = vld [vmem:[%s2933 + $0x38] sm:$0xff]
        %v2942 = vld [vmem:[%s2933 + $0x40] sm:$0xff]
        %v2943 = vld [vmem:[%s2933 + $0x48] sm:$0xff]
        %v2944 = vld [vmem:[%s2933 + $0x50] sm:$0xff]
        %v2945 = vld [vmem:[%s2933 + $0x58] sm:$0xff]
        %v2946 = vld [vmem:[%s2933 + $0x60] sm:$0xff]
        %v2947 = vld [vmem:[%s2933 + $0x68] sm:$0xff]
        %v2948 = vld [vmem:[%s2933 + $0x70] sm:$0xff]
        %v2949 = vld [vmem:[%s2933 + $0x78] sm:$0xff]
        %s2950 = scalar_lea.vmem [#allocation12], 128
        %v2951 = vld [vmem:[%s2950] sm:$0xff]
        %v2952 = vld [vmem:[%s2950 + $0x8] sm:$0xff]
        %v2953 = vld [vmem:[%s2950 + $0x10] sm:$0xff]
        %v2954 = vld [vmem:[%s2950 + $0x18] sm:$0xff]
        %v2955 = vld [vmem:[%s2950 + $0x20] sm:$0xff]
        %v2956 = vld [vmem:[%s2950 + $0x28] sm:$0xff]
        %v2957 = vld [vmem:[%s2950 + $0x30] sm:$0xff]
        %v2958 = vld [vmem:[%s2950 + $0x38] sm:$0xff]
        %v2959 = vld [vmem:[%s2950 + $0x40] sm:$0xff]
        %v2960 = vld [vmem:[%s2950 + $0x48] sm:$0xff]
        %v2961 = vld [vmem:[%s2950 + $0x50] sm:$0xff]
        %v2962 = vld [vmem:[%s2950 + $0x58] sm:$0xff]
        %v2963 = vld [vmem:[%s2950 + $0x60] sm:$0xff]
        %v2964 = vld [vmem:[%s2950 + $0x68] sm:$0xff]
        %v2965 = vld [vmem:[%s2950 + $0x70] sm:$0xff]
        %v2966 = vld [vmem:[%s2950 + $0x78] sm:$0xff]
        %s2967 = scalar_lea.vmem [#allocation15], 2
        %v2968 = vld [vmem:[%s2967] sm:$0x1]
        %s2969 = scalar_lea.vmem [#allocation17], 2
        %v2970 = vld [vmem:[%s2969] sm:$0x1]
        %2971 = vmatprep.subr.mxu0 0.0
        %2972 = vmatpush1.msra.mxu0 %v2934
        %2973 = vmatprep.subr.mxu0 0.0
        %2974 = vmatpush1.msra.mxu0 %v2935
        %2975 = vmatprep.subr.mxu0 0.0
        %2976 = vmatpush1.msra.mxu0 %v2936
        %2977 = vmatprep.subr.mxu0 0.0
        %2978 = vmatpush1.msra.mxu0 %v2937
        %2979 = vmatprep.subr.mxu0 0.0
        %2980 = vmatpush1.msra.mxu0 %v2938
        %2981 = vmatprep.subr.mxu0 0.0
        %2982 = vmatpush1.msra.mxu0 %v2939
        %2983 = vmatprep.subr.mxu0 0.0
        %2984 = vmatpush1.msra.mxu0 %v2940
        %2985 = vmatprep.subr.mxu0 0.0
        %2986 = vmatpush1.msra.mxu0 %v2941
        %2987 = vmatprep.subr.mxu0 0.0
        %2988 = vmatpush1.msra.mxu0 %v2942
        %2989 = vmatprep.subr.mxu0 0.0
        %2990 = vmatpush1.msra.mxu0 %v2943
        %2991 = vmatprep.subr.mxu0 0.0
        %2992 = vmatpush1.msra.mxu0 %v2944
        %2993 = vmatprep.subr.mxu0 0.0
        %2994 = vmatpush1.msra.mxu0 %v2945
        %2995 = vmatprep.subr.mxu0 0.0
        %2996 = vmatpush1.msra.mxu0 %v2946
        %2997 = vmatprep.subr.mxu0 0.0
        %2998 = vmatpush1.msra.mxu0 %v2947
        %2999 = vmatprep.subr.mxu0 0.0
        %3000 = vmatpush1.msra.mxu0 %v2948
        %3001 = vmatprep.subr.mxu0 0.0
        %3002 = vmatpush1.msra.mxu0 %v2949
        %3003 = vmatprep.subr.mxu0 0.0
        %3004 = vmatpush1.msra.mxu0 0.0
        %3005 = vmatprep.subr.mxu0 0.0
        %3006 = vmatpush1.msra.mxu0 0.0
        %3007 = vmatprep.subr.mxu0 0.0
        %3008 = vmatpush1.msra.mxu0 0.0
        %3009 = vmatprep.subr.mxu0 0.0
        %3010 = vmatpush1.msra.mxu0 0.0
        %3011 = vmatprep.subr.mxu0 0.0
        %3012 = vmatpush1.msra.mxu0 0.0
        %3013 = vmatprep.subr.mxu0 0.0
        %3014 = vmatpush1.msra.mxu0 0.0
        %3015 = vmatprep.subr.mxu0 0.0
        %3016 = vmatpush1.msra.mxu0 0.0
        %3017 = vmatprep.subr.mxu0 0.0
        %3018 = vmatpush1.msra.mxu0 0.0
        %3019 = vmatprep.subr.mxu0 0.0
        %3020 = vmatpush1.msra.mxu0 0.0
        %3021 = vmatprep.subr.mxu0 0.0
        %3022 = vmatpush1.msra.mxu0 0.0
        %3023 = vmatprep.subr.mxu0 0.0
        %3024 = vmatpush1.msra.mxu0 0.0
        %3025 = vmatprep.subr.mxu0 0.0
        %3026 = vmatpush1.msra.mxu0 0.0
        %3027 = vmatprep.subr.mxu0 0.0
        %3028 = vmatpush1.msra.mxu0 0.0
        %3029 = vmatprep.subr.mxu0 0.0
        %3030 = vmatpush1.msra.mxu0 0.0
        %3031 = vmatprep.subr.mxu0 0.0
        %3032 = vmatpush1.msra.mxu0 0.0
        %3033 = vmatprep.subr.mxu0 0.0
        %3034 = vmatpush1.msra.mxu0 0.0
        %3035 = vmatprep.mubr.f32.mxu0 0.0
        %3036 = vmatmul.mubr.f32.gmra.mrb[0].mxu0 %v2923
        %v3037 = vpop.f32.mrb[0].mxu0
        %v3038 = vadd.f32 0.0, %v3037
        %v3039 = vpop.f32.mrb[0].mxu0
        %3040 = vmatprep.mubr.f32.mxu0 0.0
        %3041 = vmatmul.mubr.f32.gmra.mrb[0].mxu0 %v2924
        %v3042 = vpop.f32.mrb[0].mxu0
        %v3043 = vadd.f32 0.0, %v3042
        %v3044 = vpop.f32.mrb[0].mxu0
        %3045 = vdwg.mxu0
        %3046 = vst.msk [vmem:[#allocation2 + $0x18] sm:$0xff] %vm627, %v3038
        %3047 = vst.msk [vmem:[#allocation2 + $0x20] sm:$0xff] %vm627, %v3043
        %v3048 = vld [vmem:[#allocation2 + $0x5] sm:$0xff]
        %v3049 = vld [vmem:[#allocation2 + $0xd] sm:$0xff]
        %v3050 = vld [vmem:[#allocation2 + $0x6] sm:$0xff]
        %v3051 = vld [vmem:[#allocation2 + $0xe] sm:$0xff]
        %v3052 = vld [vmem:[#allocation2 + $0x7] sm:$0xff]
        %v3053 = vld [vmem:[#allocation2 + $0xf] sm:$0xff]
        %v3054 = vld [vmem:[#allocation2 + $0x8] sm:$0xff]
        %v3055 = vld [vmem:[#allocation2 + $0x10] sm:$0xff]
        %v3056 = vld [vmem:[#allocation2 + $0x9] sm:$0xff]
        %v3057 = vld [vmem:[#allocation2 + $0x11] sm:$0xff]
        %v3058 = vld [vmem:[#allocation2 + $0xa] sm:$0xff]
        %v3059 = vld [vmem:[#allocation2 + $0x12] sm:$0xff]
        %v3060 = vld [vmem:[#allocation2 + $0xb] sm:$0xff]
        %v3061 = vld [vmem:[#allocation2 + $0x13] sm:$0xff]
        %v3062 = vld [vmem:[#allocation2 + $0xc] sm:$0xff]
        %v3063 = vld [vmem:[#allocation2 + $0x14] sm:$0xff]
        %3066 = vrot.lane.b32.xlu0 %v3050, 32
        %v3067 = vpop.permute.xlu0 %3066
        %3068 = vrot.lane.b32.xlu0 %v3051, 32
        %v3069 = vpop.permute.xlu0 %3068
        %3074 = vrot.lane.b32.xlu0 %v3052, 64
        %v3075 = vpop.permute.xlu0 %3074
        %3076 = vrot.lane.b32.xlu0 %v3053, 64
        %v3077 = vpop.permute.xlu0 %3076
        %3082 = vrot.lane.b32.xlu0 %v3054, 96
        %v3083 = vpop.permute.xlu0 %3082
        %3084 = vrot.lane.b32.xlu0 %v3055, 96
        %v3085 = vpop.permute.xlu0 %3084
        %3090 = vrot.lane.b32.xlu0 %v3058, 32
        %v3091 = vpop.permute.xlu0 %3090
        %3092 = vrot.lane.b32.xlu0 %v3059, 32
        %v3093 = vpop.permute.xlu0 %3092
        %3098 = vrot.lane.b32.xlu0 %v3060, 64
        %v3099 = vpop.permute.xlu0 %3098
        %3100 = vrot.lane.b32.xlu0 %v3061, 64
        %v3101 = vpop.permute.xlu0 %3100
        %3106 = vrot.lane.b32.xlu0 %v3062, 96
        %v3107 = vpop.permute.xlu0 %3106
        %3108 = vrot.lane.b32.xlu0 %v3063, 96
        %v3109 = vpop.permute.xlu0 %3108
        %v3112 = vsel %vm627, %v3048, %v3067
        %v3113 = vsel %vm627, %v3049, %v3069
        %v3114 = vsel %vm811, %v3112, %v3075
        %v3115 = vsel %vm811, %v3113, %v3077
        %v3116 = vsel %vm814, %v3114, %v3083
        %v3117 = vsel %vm814, %v3115, %v3085
        %v3118 = vsel %vm627, %v3056, %v3091
        %v3119 = vsel %vm627, %v3057, %v3093
        %v3120 = vsel %vm811, %v3118, %v3099
        %v3121 = vsel %vm811, %v3119, %v3101
        %v3122 = vsel %vm814, %v3120, %v3107
        %v3123 = vsel %vm814, %v3121, %v3109
        %s3124 = scalar_lea.vmem [#allocation14], 1280
        %v3125 = vld [vmem:[%s3124] sm:$0xff]
        %v3126 = vld [vmem:[%s3124 + $0x8] sm:$0xff]
        %v3127 = vld [vmem:[%s3124 + $0x10] sm:$0xff]
        %v3128 = vld [vmem:[%s3124 + $0x18] sm:$0xff]
        %v3129 = vld [vmem:[%s3124 + $0x20] sm:$0xff]
        %v3130 = vld [vmem:[%s3124 + $0x28] sm:$0xff]
        %v3131 = vld [vmem:[%s3124 + $0x30] sm:$0xff]
        %v3132 = vld [vmem:[%s3124 + $0x38] sm:$0xff]
        %v3133 = vld [vmem:[%s3124 + $0x40] sm:$0xff]
        %v3134 = vld [vmem:[%s3124 + $0x48] sm:$0xff]
        %v3135 = vld [vmem:[%s3124 + $0x50] sm:$0xff]
        %v3136 = vld [vmem:[%s3124 + $0x58] sm:$0xff]
        %v3137 = vld [vmem:[%s3124 + $0x60] sm:$0xff]
        %v3138 = vld [vmem:[%s3124 + $0x68] sm:$0xff]
        %v3139 = vld [vmem:[%s3124 + $0x70] sm:$0xff]
        %v3140 = vld [vmem:[%s3124 + $0x78] sm:$0xff]
        %v3141 = vld [vmem:[%s3124 + $0x80] sm:$0xff]
        %v3142 = vld [vmem:[%s3124 + $0x88] sm:$0xff]
        %v3143 = vld [vmem:[%s3124 + $0x90] sm:$0xff]
        %v3144 = vld [vmem:[%s3124 + $0x98] sm:$0xff]
        %v3145 = vld [vmem:[%s3124 + $0xa0] sm:$0xff]
        %v3146 = vld [vmem:[%s3124 + $0xa8] sm:$0xff]
        %v3147 = vld [vmem:[%s3124 + $0xb0] sm:$0xff]
        %v3148 = vld [vmem:[%s3124 + $0xb8] sm:$0xff]
        %v3149 = vld [vmem:[%s3124 + $0xc0] sm:$0xff]
        %v3150 = vld [vmem:[%s3124 + $0xc8] sm:$0xff]
        %v3151 = vld [vmem:[%s3124 + $0xd0] sm:$0xff]
        %v3152 = vld [vmem:[%s3124 + $0xd8] sm:$0xff]
        %v3153 = vld [vmem:[%s3124 + $0xe0] sm:$0xff]
        %v3154 = vld [vmem:[%s3124 + $0xe8] sm:$0xff]
        %v3155 = vld [vmem:[%s3124 + $0xf0] sm:$0xff]
        %v3156 = vld [vmem:[%s3124 + $0xf8] sm:$0xff]
        %3157 = vmatprep.subr.mxu0 0.0
        %3158 = vmatpush1.msra.mxu0 %v3125
        %3159 = vmatprep.subr.mxu0 0.0
        %3160 = vmatpush1.msra.mxu0 %v3126
        %3161 = vmatprep.subr.mxu0 0.0
        %3162 = vmatpush1.msra.mxu0 %v3127
        %3163 = vmatprep.subr.mxu0 0.0
        %3164 = vmatpush1.msra.mxu0 %v3128
        %3165 = vmatprep.subr.mxu0 0.0
        %3166 = vmatpush1.msra.mxu0 %v3129
        %3167 = vmatprep.subr.mxu0 0.0
        %3168 = vmatpush1.msra.mxu0 %v3130
        %3169 = vmatprep.subr.mxu0 0.0
        %3170 = vmatpush1.msra.mxu0 %v3131
        %3171 = vmatprep.subr.mxu0 0.0
        %3172 = vmatpush1.msra.mxu0 %v3132
        %3173 = vmatprep.subr.mxu0 0.0
        %3174 = vmatpush1.msra.mxu0 %v3133
        %3175 = vmatprep.subr.mxu0 0.0
        %3176 = vmatpush1.msra.mxu0 %v3134
        %3177 = vmatprep.subr.mxu0 0.0
        %3178 = vmatpush1.msra.mxu0 %v3135
        %3179 = vmatprep.subr.mxu0 0.0
        %3180 = vmatpush1.msra.mxu0 %v3136
        %3181 = vmatprep.subr.mxu0 0.0
        %3182 = vmatpush1.msra.mxu0 %v3137
        %3183 = vmatprep.subr.mxu0 0.0
        %3184 = vmatpush1.msra.mxu0 %v3138
        %3185 = vmatprep.subr.mxu0 0.0
        %3186 = vmatpush1.msra.mxu0 %v3139
        %3187 = vmatprep.subr.mxu0 0.0
        %3188 = vmatpush1.msra.mxu0 %v3140
        %3189 = vmatprep.subr.mxu0 0.0
        %3190 = vmatpush1.msra.mxu0 %v3141
        %3191 = vmatprep.subr.mxu0 0.0
        %3192 = vmatpush1.msra.mxu0 %v3142
        %3193 = vmatprep.subr.mxu0 0.0
        %3194 = vmatpush1.msra.mxu0 %v3143
        %3195 = vmatprep.subr.mxu0 0.0
        %3196 = vmatpush1.msra.mxu0 %v3144
        %3197 = vmatprep.subr.mxu0 0.0
        %3198 = vmatpush1.msra.mxu0 %v3145
        %3199 = vmatprep.subr.mxu0 0.0
        %3200 = vmatpush1.msra.mxu0 %v3146
        %3201 = vmatprep.subr.mxu0 0.0
        %3202 = vmatpush1.msra.mxu0 %v3147
        %3203 = vmatprep.subr.mxu0 0.0
        %3204 = vmatpush1.msra.mxu0 %v3148
        %3205 = vmatprep.subr.mxu0 0.0
        %3206 = vmatpush1.msra.mxu0 %v3149
        %3207 = vmatprep.subr.mxu0 0.0
        %3208 = vmatpush1.msra.mxu0 %v3150
        %3209 = vmatprep.subr.mxu0 0.0
        %3210 = vmatpush1.msra.mxu0 %v3151
        %3211 = vmatprep.subr.mxu0 0.0
        %3212 = vmatpush1.msra.mxu0 %v3152
        %3213 = vmatprep.subr.mxu0 0.0
        %3214 = vmatpush1.msra.mxu0 %v3153
        %3215 = vmatprep.subr.mxu0 0.0
        %3216 = vmatpush1.msra.mxu0 %v3154
        %3217 = vmatprep.subr.mxu0 0.0
        %3218 = vmatpush1.msra.mxu0 %v3155
        %3219 = vmatprep.subr.mxu0 0.0
        %3220 = vmatpush1.msra.mxu0 %v3156
        %3221 = vmatprep.mubr.f32.mxu0 %v3122
        %3222 = vmatmul.mubr.f32.gmra.mrb[0].mxu0 %v3116
        %v3223 = vpop.f32.mrb[0].mxu0
        %v3224 = vadd.f32 0.0, %v3223
        %v3225 = vpop.f32.mrb[0].mxu0
        %3226 = vmatprep.mubr.f32.mxu0 %v3123
        %3227 = vmatmul.mubr.f32.gmra.mrb[0].mxu0 %v3117
        %v3228 = vpop.f32.mrb[0].mxu0
        %v3229 = vadd.f32 0.0, %v3228
        %v3230 = vpop.f32.mrb[0].mxu0
        %3231 = vdwg.mxu0
        %3232 = vmatprep.subr.mxu0 0.0
        %3233 = vmatpush1.msra.mxu0 %v2951
        %3234 = vmatprep.subr.mxu0 0.0
        %3235 = vmatpush1.msra.mxu0 %v2952
        %3236 = vmatprep.subr.mxu0 0.0
        %3237 = vmatpush1.msra.mxu0 %v2953
        %3238 = vmatprep.subr.mxu0 0.0
        %3239 = vmatpush1.msra.mxu0 %v2954
        %3240 = vmatprep.subr.mxu0 0.0
        %3241 = vmatpush1.msra.mxu0 %v2955
        %3242 = vmatprep.subr.mxu0 0.0
        %3243 = vmatpush1.msra.mxu0 %v2956
        %3244 = vmatprep.subr.mxu0 0.0
        %3245 = vmatpush1.msra.mxu0 %v2957
        %3246 = vmatprep.subr.mxu0 0.0
        %3247 = vmatpush1.msra.mxu0 %v2958
        %3248 = vmatprep.subr.mxu0 0.0
        %3249 = vmatpush1.msra.mxu0 %v2959
        %3250 = vmatprep.subr.mxu0 0.0
        %3251 = vmatpush1.msra.mxu0 %v2960
        %3252 = vmatprep.subr.mxu0 0.0
        %3253 = vmatpush1.msra.mxu0 %v2961
        %3254 = vmatprep.subr.mxu0 0.0
        %3255 = vmatpush1.msra.mxu0 %v2962
        %3256 = vmatprep.subr.mxu0 0.0
        %3257 = vmatpush1.msra.mxu0 %v2963
        %3258 = vmatprep.subr.mxu0 0.0
        %3259 = vmatpush1.msra.mxu0 %v2964
        %3260 = vmatprep.subr.mxu0 0.0
        %3261 = vmatpush1.msra.mxu0 %v2965
        %3262 = vmatprep.subr.mxu0 0.0
        %3263 = vmatpush1.msra.mxu0 %v2966
        %3264 = vmatprep.subr.mxu0 0.0
        %3265 = vmatpush1.msra.mxu0 0.0
        %3266 = vmatprep.subr.mxu0 0.0
        %3267 = vmatpush1.msra.mxu0 0.0
        %3268 = vmatprep.subr.mxu0 0.0
        %3269 = vmatpush1.msra.mxu0 0.0
        %3270 = vmatprep.subr.mxu0 0.0
        %3271 = vmatpush1.msra.mxu0 0.0
        %3272 = vmatprep.subr.mxu0 0.0
        %3273 = vmatpush1.msra.mxu0 0.0
        %3274 = vmatprep.subr.mxu0 0.0
        %3275 = vmatpush1.msra.mxu0 0.0
        %3276 = vmatprep.subr.mxu0 0.0
        %3277 = vmatpush1.msra.mxu0 0.0
        %3278 = vmatprep.subr.mxu0 0.0
        %3279 = vmatpush1.msra.mxu0 0.0
        %3280 = vmatprep.subr.mxu0 0.0
        %3281 = vmatpush1.msra.mxu0 0.0
        %3282 = vmatprep.subr.mxu0 0.0
        %3283 = vmatpush1.msra.mxu0 0.0
        %3284 = vmatprep.subr.mxu0 0.0
        %3285 = vmatpush1.msra.mxu0 0.0
        %3286 = vmatprep.subr.mxu0 0.0
        %3287 = vmatpush1.msra.mxu0 0.0
        %3288 = vmatprep.subr.mxu0 0.0
        %3289 = vmatpush1.msra.mxu0 0.0
        %3290 = vmatprep.subr.mxu0 0.0
        %3291 = vmatpush1.msra.mxu0 0.0
        %3292 = vmatprep.subr.mxu0 0.0
        %3293 = vmatpush1.msra.mxu0 0.0
        %3294 = vmatprep.subr.mxu0 0.0
        %3295 = vmatpush1.msra.mxu0 0.0
        %3296 = vmatprep.mubr.f32.mxu0 0.0
        %3297 = vmatmul.mubr.f32.gmra.mrb[0].mxu0 %v2931
        %v3298 = vpop.f32.mrb[0].mxu0
        %v3299 = vadd.f32 %v3224, %v3298
        %v3300 = vpop.f32.mrb[0].mxu0
        %3301 = vmatprep.mubr.f32.mxu0 0.0
        %3302 = vmatmul.mubr.f32.gmra.mrb[0].mxu0 %v2932
        %v3303 = vpop.f32.mrb[0].mxu0
        %v3304 = vadd.f32 %v3229, %v3303
        %v3305 = vpop.f32.mrb[0].mxu0
        %3306 = vdwg.mxu0
        %v3307 = vld [vmem:[#allocation2 + $0xd] sm:$0xff]
        %v3308 = vld [vmem:[#allocation2 + $0x15] sm:$0xff]
        %v3309 = vld [vmem:[#allocation2 + $0xe] sm:$0xff]
        %v3310 = vld [vmem:[#allocation2 + $0x16] sm:$0xff]
        %v3311 = vld [vmem:[#allocation2 + $0xf] sm:$0xff]
        %v3312 = vld [vmem:[#allocation2 + $0x17] sm:$0xff]
        %v3313 = vld [vmem:[#allocation2 + $0x10] sm:$0xff]
        %v3314 = vld [vmem:[#allocation2 + $0x18] sm:$0xff]
        %v3315 = vld [vmem:[#allocation2 + $0x11] sm:$0xff]
        %v3316 = vld [vmem:[#allocation2 + $0x19] sm:$0xff]
        %v3317 = vld [vmem:[#allocation2 + $0x12] sm:$0xff]
        %v3318 = vld [vmem:[#allocation2 + $0x1a] sm:$0xff]
        %v3319 = vld [vmem:[#allocation2 + $0x13] sm:$0xff]
        %v3320 = vld [vmem:[#allocation2 + $0x1b] sm:$0xff]
        %v3321 = vld [vmem:[#allocation2 + $0x14] sm:$0xff]
        %v3322 = vld [vmem:[#allocation2 + $0x1c] sm:$0xff]
        %3325 = vrot.lane.b32.xlu0 %v3309, 32
        %v3326 = vpop.permute.xlu0 %3325
        %3327 = vrot.lane.b32.xlu0 %v3310, 32
        %v3328 = vpop.permute.xlu0 %3327
        %3333 = vrot.lane.b32.xlu0 %v3311, 64
        %v3334 = vpop.permute.xlu0 %3333
        %3335 = vrot.lane.b32.xlu0 %v3312, 64
        %v3336 = vpop.permute.xlu0 %3335
        %3341 = vrot.lane.b32.xlu0 %v3313, 96
        %v3342 = vpop.permute.xlu0 %3341
        %3343 = vrot.lane.b32.xlu0 %v3314, 96
        %v3344 = vpop.permute.xlu0 %3343
        %3349 = vrot.lane.b32.xlu0 %v3317, 32
        %v3350 = vpop.permute.xlu0 %3349
        %3351 = vrot.lane.b32.xlu0 %v3318, 32
        %v3352 = vpop.permute.xlu0 %3351
        %3357 = vrot.lane.b32.xlu0 %v3319, 64
        %v3358 = vpop.permute.xlu0 %3357
        %3359 = vrot.lane.b32.xlu0 %v3320, 64
        %v3360 = vpop.permute.xlu0 %3359
        %3365 = vrot.lane.b32.xlu0 %v3321, 96
        %v3366 = vpop.permute.xlu0 %3365
        %3367 = vrot.lane.b32.xlu0 %v3322, 96
        %v3368 = vpop.permute.xlu0 %3367
        %v3371 = vsel %vm627, %v3307, %v3326
        %v3372 = vsel %vm627, %v3308, %v3328
        %v3373 = vsel %vm811, %v3371, %v3334
        %v3374 = vsel %vm811, %v3372, %v3336
        %v3375 = vsel %vm814, %v3373, %v3342
        %v3376 = vsel %vm814, %v3374, %v3344
        %v3377 = vsel %vm627, %v3315, %v3350
        %v3378 = vsel %vm627, %v3316, %v3352
        %v3379 = vsel %vm811, %v3377, %v3358
        %v3380 = vsel %vm811, %v3378, %v3360
        %v3381 = vsel %vm814, %v3379, %v3366
        %v3382 = vsel %vm814, %v3380, %v3368
        %s3383 = scalar_lea.vmem [#allocation14], 1536
        %v3384 = vld [vmem:[%s3383] sm:$0xff]
        %v3385 = vld [vmem:[%s3383 + $0x8] sm:$0xff]
        %v3386 = vld [vmem:[%s3383 + $0x10] sm:$0xff]
        %v3387 = vld [vmem:[%s3383 + $0x18] sm:$0xff]
        %v3388 = vld [vmem:[%s3383 + $0x20] sm:$0xff]
        %v3389 = vld [vmem:[%s3383 + $0x28] sm:$0xff]
        %v3390 = vld [vmem:[%s3383 + $0x30] sm:$0xff]
        %v3391 = vld [vmem:[%s3383 + $0x38] sm:$0xff]
        %v3392 = vld [vmem:[%s3383 + $0x40] sm:$0xff]
        %v3393 = vld [vmem:[%s3383 + $0x48] sm:$0xff]
        %v3394 = vld [vmem:[%s3383 + $0x50] sm:$0xff]
        %v3395 = vld [vmem:[%s3383 + $0x58] sm:$0xff]
        %v3396 = vld [vmem:[%s3383 + $0x60] sm:$0xff]
        %v3397 = vld [vmem:[%s3383 + $0x68] sm:$0xff]
        %v3398 = vld [vmem:[%s3383 + $0x70] sm:$0xff]
        %v3399 = vld [vmem:[%s3383 + $0x78] sm:$0xff]
        %v3400 = vld [vmem:[%s3383 + $0x80] sm:$0xff]
        %v3401 = vld [vmem:[%s3383 + $0x88] sm:$0xff]
        %v3402 = vld [vmem:[%s3383 + $0x90] sm:$0xff]
        %v3403 = vld [vmem:[%s3383 + $0x98] sm:$0xff]
        %v3404 = vld [vmem:[%s3383 + $0xa0] sm:$0xff]
        %v3405 = vld [vmem:[%s3383 + $0xa8] sm:$0xff]
        %v3406 = vld [vmem:[%s3383 + $0xb0] sm:$0xff]
        %v3407 = vld [vmem:[%s3383 + $0xb8] sm:$0xff]
        %v3408 = vld [vmem:[%s3383 + $0xc0] sm:$0xff]
        %v3409 = vld [vmem:[%s3383 + $0xc8] sm:$0xff]
        %v3410 = vld [vmem:[%s3383 + $0xd0] sm:$0xff]
        %v3411 = vld [vmem:[%s3383 + $0xd8] sm:$0xff]
        %v3412 = vld [vmem:[%s3383 + $0xe0] sm:$0xff]
        %v3413 = vld [vmem:[%s3383 + $0xe8] sm:$0xff]
        %v3414 = vld [vmem:[%s3383 + $0xf0] sm:$0xff]
        %v3415 = vld [vmem:[%s3383 + $0xf8] sm:$0xff]
        %3416 = vmatprep.subr.mxu0 0.0
        %3417 = vmatpush1.msra.mxu0 %v3384
        %3418 = vmatprep.subr.mxu0 0.0
        %3419 = vmatpush1.msra.mxu0 %v3385
        %3420 = vmatprep.subr.mxu0 0.0
        %3421 = vmatpush1.msra.mxu0 %v3386
        %3422 = vmatprep.subr.mxu0 0.0
        %3423 = vmatpush1.msra.mxu0 %v3387
        %3424 = vmatprep.subr.mxu0 0.0
        %3425 = vmatpush1.msra.mxu0 %v3388
        %3426 = vmatprep.subr.mxu0 0.0
        %3427 = vmatpush1.msra.mxu0 %v3389
        %3428 = vmatprep.subr.mxu0 0.0
        %3429 = vmatpush1.msra.mxu0 %v3390
        %3430 = vmatprep.subr.mxu0 0.0
        %3431 = vmatpush1.msra.mxu0 %v3391
        %3432 = vmatprep.subr.mxu0 0.0
        %3433 = vmatpush1.msra.mxu0 %v3392
        %3434 = vmatprep.subr.mxu0 0.0
        %3435 = vmatpush1.msra.mxu0 %v3393
        %3436 = vmatprep.subr.mxu0 0.0
        %3437 = vmatpush1.msra.mxu0 %v3394
        %3438 = vmatprep.subr.mxu0 0.0
        %3439 = vmatpush1.msra.mxu0 %v3395
        %3440 = vmatprep.subr.mxu0 0.0
        %3441 = vmatpush1.msra.mxu0 %v3396
        %3442 = vmatprep.subr.mxu0 0.0
        %3443 = vmatpush1.msra.mxu0 %v3397
        %3444 = vmatprep.subr.mxu0 0.0
        %3445 = vmatpush1.msra.mxu0 %v3398
        %3446 = vmatprep.subr.mxu0 0.0
        %3447 = vmatpush1.msra.mxu0 %v3399
        %3448 = vmatprep.subr.mxu0 0.0
        %3449 = vmatpush1.msra.mxu0 %v3400
        %3450 = vmatprep.subr.mxu0 0.0
        %3451 = vmatpush1.msra.mxu0 %v3401
        %3452 = vmatprep.subr.mxu0 0.0
        %3453 = vmatpush1.msra.mxu0 %v3402
        %3454 = vmatprep.subr.mxu0 0.0
        %3455 = vmatpush1.msra.mxu0 %v3403
        %3456 = vmatprep.subr.mxu0 0.0
        %3457 = vmatpush1.msra.mxu0 %v3404
        %3458 = vmatprep.subr.mxu0 0.0
        %3459 = vmatpush1.msra.mxu0 %v3405
        %3460 = vmatprep.subr.mxu0 0.0
        %3461 = vmatpush1.msra.mxu0 %v3406
        %3462 = vmatprep.subr.mxu0 0.0
        %3463 = vmatpush1.msra.mxu0 %v3407
        %3464 = vmatprep.subr.mxu0 0.0
        %3465 = vmatpush1.msra.mxu0 %v3408
        %3466 = vmatprep.subr.mxu0 0.0
        %3467 = vmatpush1.msra.mxu0 %v3409
        %3468 = vmatprep.subr.mxu0 0.0
        %3469 = vmatpush1.msra.mxu0 %v3410
        %3470 = vmatprep.subr.mxu0 0.0
        %3471 = vmatpush1.msra.mxu0 %v3411
        %3472 = vmatprep.subr.mxu0 0.0
        %3473 = vmatpush1.msra.mxu0 %v3412
        %3474 = vmatprep.subr.mxu0 0.0
        %3475 = vmatpush1.msra.mxu0 %v3413
        %3476 = vmatprep.subr.mxu0 0.0
        %3477 = vmatpush1.msra.mxu0 %v3414
        %3478 = vmatprep.subr.mxu0 0.0
        %3479 = vmatpush1.msra.mxu0 %v3415
        %3480 = vmatprep.mubr.f32.mxu0 %v3381
        %3481 = vmatmul.mubr.f32.gmra.mrb[0].mxu0 %v3375
        %v3482 = vpop.f32.mrb[0].mxu0
        %v3483 = vadd.f32 0.0, %v3482
        %v3484 = vpop.f32.mrb[0].mxu0
        %3485 = vmatprep.mubr.f32.mxu0 %v3382
        %3486 = vmatmul.mubr.f32.gmra.mrb[0].mxu0 %v3376
        %v3487 = vpop.f32.mrb[0].mxu0
        %v3488 = vadd.f32 0.0, %v3487
        %v3489 = vpop.f32.mrb[0].mxu0
        %3490 = vdwg.mxu0
        %v3491 = vadd.f32 %v3299, %v3483
        %v3492 = vadd.f32 %v3304, %v3488
        %v3493 = vld [vmem:[#allocation2 + $0x15] sm:$0xff]
        %v3494 = vld [vmem:[#allocation2 + $0x1d] sm:$0xff]
        %v3495 = vld [vmem:[#allocation2 + $0x16] sm:$0xff]
        %v3496 = vld [vmem:[#allocation2 + $0x1e] sm:$0xff]
        %v3497 = vld [vmem:[#allocation2 + $0x17] sm:$0xff]
        %v3498 = vld [vmem:[#allocation2 + $0x1f] sm:$0xff]
        %v3499 = vld [vmem:[#allocation2 + $0x18] sm:$0xff]
        %v3500 = vld [vmem:[#allocation2 + $0x20] sm:$0xff]
        %v3501 = vld [vmem:[#allocation2 + $0x19] sm:$0xff]
        %v3502 = vld [vmem:[#allocation2 + $0x21] sm:$0xff]
        %v3503 = vld [vmem:[#allocation2 + $0x1a] sm:$0xff]
        %v3504 = vld [vmem:[#allocation2 + $0x22] sm:$0xff]
        %v3505 = vld [vmem:[#allocation2 + $0x1b] sm:$0xff]
        %v3506 = vld [vmem:[#allocation2 + $0x23] sm:$0xff]
        %v3507 = vld [vmem:[#allocation2 + $0x1c] sm:$0xff]
        %v3508 = vld [vmem:[#allocation2 + $0x24] sm:$0xff]
        %3511 = vrot.lane.b32.xlu0 %v3495, 32
        %v3512 = vpop.permute.xlu0 %3511
        %3513 = vrot.lane.b32.xlu0 %v3496, 32
        %v3514 = vpop.permute.xlu0 %3513
        %3519 = vrot.lane.b32.xlu0 %v3497, 64
        %v3520 = vpop.permute.xlu0 %3519
        %3521 = vrot.lane.b32.xlu0 %v3498, 64
        %v3522 = vpop.permute.xlu0 %3521
        %3527 = vrot.lane.b32.xlu0 %v3499, 96
        %v3528 = vpop.permute.xlu0 %3527
        %3529 = vrot.lane.b32.xlu0 %v3500, 96
        %v3530 = vpop.permute.xlu0 %3529
        %3535 = vrot.lane.b32.xlu0 %v3503, 32
        %v3536 = vpop.permute.xlu0 %3535
        %3537 = vrot.lane.b32.xlu0 %v3504, 32
        %v3538 = vpop.permute.xlu0 %3537
        %3543 = vrot.lane.b32.xlu0 %v3505, 64
        %v3544 = vpop.permute.xlu0 %3543
        %3545 = vrot.lane.b32.xlu0 %v3506, 64
        %v3546 = vpop.permute.xlu0 %3545
        %3551 = vrot.lane.b32.xlu0 %v3507, 96
        %v3552 = vpop.permute.xlu0 %3551
        %3553 = vrot.lane.b32.xlu0 %v3508, 96
        %v3554 = vpop.permute.xlu0 %3553
        %v3557 = vsel %vm627, %v3493, %v3512
        %v3558 = vsel %vm627, %v3494, %v3514
        %v3559 = vsel %vm811, %v3557, %v3520
        %v3560 = vsel %vm811, %v3558, %v3522
        %v3561 = vsel %vm814, %v3559, %v3528
        %v3562 = vsel %vm814, %v3560, %v3530
        %v3563 = vsel %vm627, %v3501, %v3536
        %v3564 = vsel %vm627, %v3502, %v3538
        %v3565 = vsel %vm811, %v3563, %v3544
        %v3566 = vsel %vm811, %v3564, %v3546
        %v3567 = vsel %vm814, %v3565, %v3552
        %v3568 = vsel %vm814, %v3566, %v3554
        %s3569 = scalar_lea.vmem [#allocation14], 1792
        %v3570 = vld [vmem:[%s3569] sm:$0xff]
        %v3571 = vld [vmem:[%s3569 + $0x8] sm:$0xff]
        %v3572 = vld [vmem:[%s3569 + $0x10] sm:$0xff]
        %v3573 = vld [vmem:[%s3569 + $0x18] sm:$0xff]
        %v3574 = vld [vmem:[%s3569 + $0x20] sm:$0xff]
        %v3575 = vld [vmem:[%s3569 + $0x28] sm:$0xff]
        %v3576 = vld [vmem:[%s3569 + $0x30] sm:$0xff]
        %v3577 = vld [vmem:[%s3569 + $0x38] sm:$0xff]
        %v3578 = vld [vmem:[%s3569 + $0x40] sm:$0xff]
        %v3579 = vld [vmem:[%s3569 + $0x48] sm:$0xff]
        %v3580 = vld [vmem:[%s3569 + $0x50] sm:$0xff]
        %v3581 = vld [vmem:[%s3569 + $0x58] sm:$0xff]
        %v3582 = vld [vmem:[%s3569 + $0x60] sm:$0xff]
        %v3583 = vld [vmem:[%s3569 + $0x68] sm:$0xff]
        %v3584 = vld [vmem:[%s3569 + $0x70] sm:$0xff]
        %v3585 = vld [vmem:[%s3569 + $0x78] sm:$0xff]
        %v3586 = vld [vmem:[%s3569 + $0x80] sm:$0xff]
        %v3587 = vld [vmem:[%s3569 + $0x88] sm:$0xff]
        %v3588 = vld [vmem:[%s3569 + $0x90] sm:$0xff]
        %v3589 = vld [vmem:[%s3569 + $0x98] sm:$0xff]
        %v3590 = vld [vmem:[%s3569 + $0xa0] sm:$0xff]
        %v3591 = vld [vmem:[%s3569 + $0xa8] sm:$0xff]
        %v3592 = vld [vmem:[%s3569 + $0xb0] sm:$0xff]
        %v3593 = vld [vmem:[%s3569 + $0xb8] sm:$0xff]
        %v3594 = vld [vmem:[%s3569 + $0xc0] sm:$0xff]
        %v3595 = vld [vmem:[%s3569 + $0xc8] sm:$0xff]
        %v3596 = vld [vmem:[%s3569 + $0xd0] sm:$0xff]
        %v3597 = vld [vmem:[%s3569 + $0xd8] sm:$0xff]
        %v3598 = vld [vmem:[%s3569 + $0xe0] sm:$0xff]
        %v3599 = vld [vmem:[%s3569 + $0xe8] sm:$0xff]
        %v3600 = vld [vmem:[%s3569 + $0xf0] sm:$0xff]
        %v3601 = vld [vmem:[%s3569 + $0xf8] sm:$0xff]
        %3602 = vmatprep.subr.mxu0 0.0
        %3603 = vmatpush1.msra.mxu0 %v3570
        %3604 = vmatprep.subr.mxu0 0.0
        %3605 = vmatpush1.msra.mxu0 %v3571
        %3606 = vmatprep.subr.mxu0 0.0
        %3607 = vmatpush1.msra.mxu0 %v3572
        %3608 = vmatprep.subr.mxu0 0.0
        %3609 = vmatpush1.msra.mxu0 %v3573
        %3610 = vmatprep.subr.mxu0 0.0
        %3611 = vmatpush1.msra.mxu0 %v3574
        %3612 = vmatprep.subr.mxu0 0.0
        %3613 = vmatpush1.msra.mxu0 %v3575
        %3614 = vmatprep.subr.mxu0 0.0
        %3615 = vmatpush1.msra.mxu0 %v3576
        %3616 = vmatprep.subr.mxu0 0.0
        %3617 = vmatpush1.msra.mxu0 %v3577
        %3618 = vmatprep.subr.mxu0 0.0
        %3619 = vmatpush1.msra.mxu0 %v3578
        %3620 = vmatprep.subr.mxu0 0.0
        %3621 = vmatpush1.msra.mxu0 %v3579
        %3622 = vmatprep.subr.mxu0 0.0
        %3623 = vmatpush1.msra.mxu0 %v3580
        %3624 = vmatprep.subr.mxu0 0.0
        %3625 = vmatpush1.msra.mxu0 %v3581
        %3626 = vmatprep.subr.mxu0 0.0
        %3627 = vmatpush1.msra.mxu0 %v3582
        %3628 = vmatprep.subr.mxu0 0.0
        %3629 = vmatpush1.msra.mxu0 %v3583
        %3630 = vmatprep.subr.mxu0 0.0
        %3631 = vmatpush1.msra.mxu0 %v3584
        %3632 = vmatprep.subr.mxu0 0.0
        %3633 = vmatpush1.msra.mxu0 %v3585
        %3634 = vmatprep.subr.mxu0 0.0
        %3635 = vmatpush1.msra.mxu0 %v3586
        %3636 = vmatprep.subr.mxu0 0.0
        %3637 = vmatpush1.msra.mxu0 %v3587
        %3638 = vmatprep.subr.mxu0 0.0
        %3639 = vmatpush1.msra.mxu0 %v3588
        %3640 = vmatprep.subr.mxu0 0.0
        %3641 = vmatpush1.msra.mxu0 %v3589
        %3642 = vmatprep.subr.mxu0 0.0
        %3643 = vmatpush1.msra.mxu0 %v3590
        %3644 = vmatprep.subr.mxu0 0.0
        %3645 = vmatpush1.msra.mxu0 %v3591
        %3646 = vmatprep.subr.mxu0 0.0
        %3647 = vmatpush1.msra.mxu0 %v3592
        %3648 = vmatprep.subr.mxu0 0.0
        %3649 = vmatpush1.msra.mxu0 %v3593
        %3650 = vmatprep.subr.mxu0 0.0
        %3651 = vmatpush1.msra.mxu0 %v3594
        %3652 = vmatprep.subr.mxu0 0.0
        %3653 = vmatpush1.msra.mxu0 %v3595
        %3654 = vmatprep.subr.mxu0 0.0
        %3655 = vmatpush1.msra.mxu0 %v3596
        %3656 = vmatprep.subr.mxu0 0.0
        %3657 = vmatpush1.msra.mxu0 %v3597
        %3658 = vmatprep.subr.mxu0 0.0
        %3659 = vmatpush1.msra.mxu0 %v3598
        %3660 = vmatprep.subr.mxu0 0.0
        %3661 = vmatpush1.msra.mxu0 %v3599
        %3662 = vmatprep.subr.mxu0 0.0
        %3663 = vmatpush1.msra.mxu0 %v3600
        %3664 = vmatprep.subr.mxu0 0.0
        %3665 = vmatpush1.msra.mxu0 %v3601
        %3666 = vmatprep.mubr.f32.mxu0 %v3567
        %3667 = vmatmul.mubr.f32.gmra.mrb[0].mxu0 %v3561
        %v3668 = vpop.f32.mrb[0].mxu0
        %v3669 = vadd.f32 0.0, %v3668
        %v3670 = vpop.f32.mrb[0].mxu0
        %3671 = vmatprep.mubr.f32.mxu0 %v3568
        %3672 = vmatmul.mubr.f32.gmra.mrb[0].mxu0 %v3562
        %v3673 = vpop.f32.mrb[0].mxu0
        %v3674 = vadd.f32 0.0, %v3673
        %v3675 = vpop.f32.mrb[0].mxu0
        %3676 = vdwg.mxu0
        %v3677 = vadd.f32 %v3491, %v3669
        %v3678 = vadd.f32 %v3492, %v3674
        %v3679 = vld [vmem:[#allocation2 + $0x1d] sm:$0xff]
        %v3680 = vld [vmem:[#allocation2 + $0x25] sm:$0xff]
        %v3681 = vld [vmem:[#allocation2 + $0x1e] sm:$0xff]
        %v3682 = vld [vmem:[#allocation2 + $0x26] sm:$0xff]
        %v3683 = vld [vmem:[#allocation2 + $0x1f] sm:$0xff]
        %v3684 = vld [vmem:[#allocation2 + $0x27] sm:$0xff]
        %v3685 = vld [vmem:[#allocation2 + $0x20] sm:$0xff]
        %v3686 = vld [vmem:[#allocation2 + $0x28] sm:$0xff]
        %v3687 = vld [vmem:[#allocation2 + $0x21] sm:$0xff]
        %v3688 = vld [vmem:[#allocation2 + $0x29] sm:$0xff]
        %v3689 = vld [vmem:[#allocation2 + $0x22] sm:$0xff]
        %v3690 = vld [vmem:[#allocation2 + $0x2a] sm:$0xff]
        %v3691 = vld [vmem:[#allocation2 + $0x23] sm:$0xff]
        %v3692 = vld [vmem:[#allocation2 + $0x2b] sm:$0xff]
        %v3693 = vld [vmem:[#allocation2 + $0x24] sm:$0xff]
        %v3694 = vld [vmem:[#allocation2 + $0x2c] sm:$0xff]
        %3697 = vrot.lane.b32.xlu0 %v3681, 32
        %v3698 = vpop.permute.xlu0 %3697
        %3699 = vrot.lane.b32.xlu0 %v3682, 32
        %v3700 = vpop.permute.xlu0 %3699
        %3705 = vrot.lane.b32.xlu0 %v3683, 64
        %v3706 = vpop.permute.xlu0 %3705
        %3707 = vrot.lane.b32.xlu0 %v3684, 64
        %v3708 = vpop.permute.xlu0 %3707
        %3713 = vrot.lane.b32.xlu0 %v3685, 96
        %v3714 = vpop.permute.xlu0 %3713
        %3715 = vrot.lane.b32.xlu0 %v3686, 96
        %v3716 = vpop.permute.xlu0 %3715
        %3721 = vrot.lane.b32.xlu0 %v3689, 32
        %v3722 = vpop.permute.xlu0 %3721
        %3723 = vrot.lane.b32.xlu0 %v3690, 32
        %v3724 = vpop.permute.xlu0 %3723
        %3729 = vrot.lane.b32.xlu0 %v3691, 64
        %v3730 = vpop.permute.xlu0 %3729
        %3731 = vrot.lane.b32.xlu0 %v3692, 64
        %v3732 = vpop.permute.xlu0 %3731
        %3737 = vrot.lane.b32.xlu0 %v3693, 96
        %v3738 = vpop.permute.xlu0 %3737
        %3739 = vrot.lane.b32.xlu0 %v3694, 96
        %v3740 = vpop.permute.xlu0 %3739
        %v3743 = vsel %vm627, %v3679, %v3698
        %v3744 = vsel %vm627, %v3680, %v3700
        %v3745 = vsel %vm811, %v3743, %v3706
        %v3746 = vsel %vm811, %v3744, %v3708
        %v3747 = vsel %vm814, %v3745, %v3714
        %v3748 = vsel %vm814, %v3746, %v3716
        %v3749 = vsel %vm627, %v3687, %v3722
        %v3750 = vsel %vm627, %v3688, %v3724
        %v3751 = vsel %vm811, %v3749, %v3730
        %v3752 = vsel %vm811, %v3750, %v3732
        %v3753 = vsel %vm814, %v3751, %v3738
        %v3754 = vsel %vm814, %v3752, %v3740
        %s3755 = scalar_lea.vmem [#allocation14], 2048
        %v3756 = vld [vmem:[%s3755] sm:$0xff]
        %v3757 = vld [vmem:[%s3755 + $0x8] sm:$0xff]
        %v3758 = vld [vmem:[%s3755 + $0x10] sm:$0xff]
        %v3759 = vld [vmem:[%s3755 + $0x18] sm:$0xff]
        %v3760 = vld [vmem:[%s3755 + $0x20] sm:$0xff]
        %v3761 = vld [vmem:[%s3755 + $0x28] sm:$0xff]
        %v3762 = vld [vmem:[%s3755 + $0x30] sm:$0xff]
        %v3763 = vld [vmem:[%s3755 + $0x38] sm:$0xff]
        %v3764 = vld [vmem:[%s3755 + $0x40] sm:$0xff]
        %v3765 = vld [vmem:[%s3755 + $0x48] sm:$0xff]
        %v3766 = vld [vmem:[%s3755 + $0x50] sm:$0xff]
        %v3767 = vld [vmem:[%s3755 + $0x58] sm:$0xff]
        %v3768 = vld [vmem:[%s3755 + $0x60] sm:$0xff]
        %v3769 = vld [vmem:[%s3755 + $0x68] sm:$0xff]
        %v3770 = vld [vmem:[%s3755 + $0x70] sm:$0xff]
        %v3771 = vld [vmem:[%s3755 + $0x78] sm:$0xff]
        %v3772 = vld [vmem:[%s3755 + $0x80] sm:$0xff]
        %v3773 = vld [vmem:[%s3755 + $0x88] sm:$0xff]
        %v3774 = vld [vmem:[%s3755 + $0x90] sm:$0xff]
        %v3775 = vld [vmem:[%s3755 + $0x98] sm:$0xff]
        %v3776 = vld [vmem:[%s3755 + $0xa0] sm:$0xff]
        %v3777 = vld [vmem:[%s3755 + $0xa8] sm:$0xff]
        %v3778 = vld [vmem:[%s3755 + $0xb0] sm:$0xff]
        %v3779 = vld [vmem:[%s3755 + $0xb8] sm:$0xff]
        %v3780 = vld [vmem:[%s3755 + $0xc0] sm:$0xff]
        %v3781 = vld [vmem:[%s3755 + $0xc8] sm:$0xff]
        %v3782 = vld [vmem:[%s3755 + $0xd0] sm:$0xff]
        %v3783 = vld [vmem:[%s3755 + $0xd8] sm:$0xff]
        %v3784 = vld [vmem:[%s3755 + $0xe0] sm:$0xff]
        %v3785 = vld [vmem:[%s3755 + $0xe8] sm:$0xff]
        %v3786 = vld [vmem:[%s3755 + $0xf0] sm:$0xff]
        %v3787 = vld [vmem:[%s3755 + $0xf8] sm:$0xff]
        %3788 = vmatprep.subr.mxu0 0.0
        %3789 = vmatpush1.msra.mxu0 %v3756
        %3790 = vmatprep.subr.mxu0 0.0
        %3791 = vmatpush1.msra.mxu0 %v3757
        %3792 = vmatprep.subr.mxu0 0.0
        %3793 = vmatpush1.msra.mxu0 %v3758
        %3794 = vmatprep.subr.mxu0 0.0
        %3795 = vmatpush1.msra.mxu0 %v3759
        %3796 = vmatprep.subr.mxu0 0.0
        %3797 = vmatpush1.msra.mxu0 %v3760
        %3798 = vmatprep.subr.mxu0 0.0
        %3799 = vmatpush1.msra.mxu0 %v3761
        %3800 = vmatprep.subr.mxu0 0.0
        %3801 = vmatpush1.msra.mxu0 %v3762
        %3802 = vmatprep.subr.mxu0 0.0
        %3803 = vmatpush1.msra.mxu0 %v3763
        %3804 = vmatprep.subr.mxu0 0.0
        %3805 = vmatpush1.msra.mxu0 %v3764
        %3806 = vmatprep.subr.mxu0 0.0
        %3807 = vmatpush1.msra.mxu0 %v3765
        %3808 = vmatprep.subr.mxu0 0.0
        %3809 = vmatpush1.msra.mxu0 %v3766
        %3810 = vmatprep.subr.mxu0 0.0
        %3811 = vmatpush1.msra.mxu0 %v3767
        %3812 = vmatprep.subr.mxu0 0.0
        %3813 = vmatpush1.msra.mxu0 %v3768
        %3814 = vmatprep.subr.mxu0 0.0
        %3815 = vmatpush1.msra.mxu0 %v3769
        %3816 = vmatprep.subr.mxu0 0.0
        %3817 = vmatpush1.msra.mxu0 %v3770
        %3818 = vmatprep.subr.mxu0 0.0
        %3819 = vmatpush1.msra.mxu0 %v3771
        %3820 = vmatprep.subr.mxu0 0.0
        %3821 = vmatpush1.msra.mxu0 %v3772
        %3822 = vmatprep.subr.mxu0 0.0
        %3823 = vmatpush1.msra.mxu0 %v3773
        %3824 = vmatprep.subr.mxu0 0.0
        %3825 = vmatpush1.msra.mxu0 %v3774
        %3826 = vmatprep.subr.mxu0 0.0
        %3827 = vmatpush1.msra.mxu0 %v3775
        %3828 = vmatprep.subr.mxu0 0.0
        %3829 = vmatpush1.msra.mxu0 %v3776
        %3830 = vmatprep.subr.mxu0 0.0
        %3831 = vmatpush1.msra.mxu0 %v3777
        %3832 = vmatprep.subr.mxu0 0.0
        %3833 = vmatpush1.msra.mxu0 %v3778
        %3834 = vmatprep.subr.mxu0 0.0
        %3835 = vmatpush1.msra.mxu0 %v3779
        %3836 = vmatprep.subr.mxu0 0.0
        %3837 = vmatpush1.msra.mxu0 %v3780
        %3838 = vmatprep.subr.mxu0 0.0
        %3839 = vmatpush1.msra.mxu0 %v3781
        %3840 = vmatprep.subr.mxu0 0.0
        %3841 = vmatpush1.msra.mxu0 %v3782
        %3842 = vmatprep.subr.mxu0 0.0
        %3843 = vmatpush1.msra.mxu0 %v3783
        %3844 = vmatprep.subr.mxu0 0.0
        %3845 = vmatpush1.msra.mxu0 %v3784
        %3846 = vmatprep.subr.mxu0 0.0
        %3847 = vmatpush1.msra.mxu0 %v3785
        %3848 = vmatprep.subr.mxu0 0.0
        %3849 = vmatpush1.msra.mxu0 %v3786
        %3850 = vmatprep.subr.mxu0 0.0
        %3851 = vmatpush1.msra.mxu0 %v3787
        %3852 = vmatprep.mubr.f32.mxu0 %v3753
        %3853 = vmatmul.mubr.f32.gmra.mrb[0].mxu0 %v3747
        %v3854 = vpop.f32.mrb[0].mxu0
        %v3855 = vadd.f32 0.0, %v3854
        %v3856 = vpop.f32.mrb[0].mxu0
        %3857 = vmatprep.mubr.f32.mxu0 %v3754
        %3858 = vmatmul.mubr.f32.gmra.mrb[0].mxu0 %v3748
        %v3859 = vpop.f32.mrb[0].mxu0
        %v3860 = vadd.f32 0.0, %v3859
        %v3861 = vpop.f32.mrb[0].mxu0
        %3862 = vdwg.mxu0
        %v3863 = vadd.f32 %v3677, %v3855
        %v3864 = vadd.f32 %v3678, %v3860
        %v3865 = vld [vmem:[#allocation2 + $0x25] sm:$0xff]
        %v3866 = vld [vmem:[#allocation2 + $0x2d] sm:$0xff]
        %v3867 = vld [vmem:[#allocation2 + $0x26] sm:$0xff]
        %v3868 = vld [vmem:[#allocation2 + $0x2e] sm:$0xff]
        %v3869 = vld [vmem:[#allocation2 + $0x27] sm:$0xff]
        %v3870 = vld [vmem:[#allocation2 + $0x2f] sm:$0xff]
        %v3871 = vld [vmem:[#allocation2 + $0x28] sm:$0xff]
        %v3872 = vld [vmem:[#allocation2 + $0x30] sm:$0xff]
        %v3873 = vld [vmem:[#allocation2 + $0x29] sm:$0xff]
        %v3874 = vld [vmem:[#allocation2 + $0x31] sm:$0xff]
        %v3875 = vld [vmem:[#allocation2 + $0x2a] sm:$0xff]
        %v3876 = vld [vmem:[#allocation2 + $0x32] sm:$0xff]
        %v3877 = vld [vmem:[#allocation2 + $0x2b] sm:$0xff]
        %v3878 = vld [vmem:[#allocation2 + $0x33] sm:$0xff]
        %v3879 = vld [vmem:[#allocation2 + $0x2c] sm:$0xff]
        %v3880 = vld [vmem:[#allocation2 + $0x34] sm:$0xff]
        %3883 = vrot.lane.b32.xlu0 %v3867, 32
        %v3884 = vpop.permute.xlu0 %3883
        %3885 = vrot.lane.b32.xlu0 %v3868, 32
        %v3886 = vpop.permute.xlu0 %3885
        %3891 = vrot.lane.b32.xlu0 %v3869, 64
        %v3892 = vpop.permute.xlu0 %3891
        %3893 = vrot.lane.b32.xlu0 %v3870, 64
        %v3894 = vpop.permute.xlu0 %3893
        %3899 = vrot.lane.b32.xlu0 %v3871, 96
        %v3900 = vpop.permute.xlu0 %3899
        %3901 = vrot.lane.b32.xlu0 %v3872, 96
        %v3902 = vpop.permute.xlu0 %3901
        %3907 = vrot.lane.b32.xlu0 %v3875, 32
        %v3908 = vpop.permute.xlu0 %3907
        %3909 = vrot.lane.b32.xlu0 %v3876, 32
        %v3910 = vpop.permute.xlu0 %3909
        %3915 = vrot.lane.b32.xlu0 %v3877, 64
        %v3916 = vpop.permute.xlu0 %3915
        %3917 = vrot.lane.b32.xlu0 %v3878, 64
        %v3918 = vpop.permute.xlu0 %3917
        %3923 = vrot.lane.b32.xlu0 %v3879, 96
        %v3924 = vpop.permute.xlu0 %3923
        %3925 = vrot.lane.b32.xlu0 %v3880, 96
        %v3926 = vpop.permute.xlu0 %3925
        %v3929 = vsel %vm627, %v3865, %v3884
        %v3930 = vsel %vm627, %v3866, %v3886
        %v3931 = vsel %vm811, %v3929, %v3892
        %v3932 = vsel %vm811, %v3930, %v3894
        %v3933 = vsel %vm814, %v3931, %v3900
        %v3934 = vsel %vm814, %v3932, %v3902
        %v3935 = vsel %vm627, %v3873, %v3908
        %v3936 = vsel %vm627, %v3874, %v3910
        %v3937 = vsel %vm811, %v3935, %v3916
        %v3938 = vsel %vm811, %v3936, %v3918
        %v3939 = vsel %vm814, %v3937, %v3924
        %v3940 = vsel %vm814, %v3938, %v3926
        %s3941 = scalar_lea.vmem [#allocation14], 2304
        %v3942 = vld [vmem:[%s3941] sm:$0xff]
        %v3943 = vld [vmem:[%s3941 + $0x8] sm:$0xff]
        %v3944 = vld [vmem:[%s3941 + $0x10] sm:$0xff]
        %v3945 = vld [vmem:[%s3941 + $0x18] sm:$0xff]
        %v3946 = vld [vmem:[%s3941 + $0x20] sm:$0xff]
        %v3947 = vld [vmem:[%s3941 + $0x28] sm:$0xff]
        %v3948 = vld [vmem:[%s3941 + $0x30] sm:$0xff]
        %v3949 = vld [vmem:[%s3941 + $0x38] sm:$0xff]
        %v3950 = vld [vmem:[%s3941 + $0x40] sm:$0xff]
        %v3951 = vld [vmem:[%s3941 + $0x48] sm:$0xff]
        %v3952 = vld [vmem:[%s3941 + $0x50] sm:$0xff]
        %v3953 = vld [vmem:[%s3941 + $0x58] sm:$0xff]
        %v3954 = vld [vmem:[%s3941 + $0x60] sm:$0xff]
        %v3955 = vld [vmem:[%s3941 + $0x68] sm:$0xff]
        %v3956 = vld [vmem:[%s3941 + $0x70] sm:$0xff]
        %v3957 = vld [vmem:[%s3941 + $0x78] sm:$0xff]
        %v3958 = vld [vmem:[%s3941 + $0x80] sm:$0xff]
        %v3959 = vld [vmem:[%s3941 + $0x88] sm:$0xff]
        %v3960 = vld [vmem:[%s3941 + $0x90] sm:$0xff]
        %v3961 = vld [vmem:[%s3941 + $0x98] sm:$0xff]
        %v3962 = vld [vmem:[%s3941 + $0xa0] sm:$0xff]
        %v3963 = vld [vmem:[%s3941 + $0xa8] sm:$0xff]
        %v3964 = vld [vmem:[%s3941 + $0xb0] sm:$0xff]
        %v3965 = vld [vmem:[%s3941 + $0xb8] sm:$0xff]
        %v3966 = vld [vmem:[%s3941 + $0xc0] sm:$0xff]
        %v3967 = vld [vmem:[%s3941 + $0xc8] sm:$0xff]
        %v3968 = vld [vmem:[%s3941 + $0xd0] sm:$0xff]
        %v3969 = vld [vmem:[%s3941 + $0xd8] sm:$0xff]
        %v3970 = vld [vmem:[%s3941 + $0xe0] sm:$0xff]
        %v3971 = vld [vmem:[%s3941 + $0xe8] sm:$0xff]
        %v3972 = vld [vmem:[%s3941 + $0xf0] sm:$0xff]
        %v3973 = vld [vmem:[%s3941 + $0xf8] sm:$0xff]
        %3974 = vmatprep.subr.mxu0 0.0
        %3975 = vmatpush1.msra.mxu0 %v3942
        %3976 = vmatprep.subr.mxu0 0.0
        %3977 = vmatpush1.msra.mxu0 %v3943
        %3978 = vmatprep.subr.mxu0 0.0
        %3979 = vmatpush1.msra.mxu0 %v3944
        %3980 = vmatprep.subr.mxu0 0.0
        %3981 = vmatpush1.msra.mxu0 %v3945
        %3982 = vmatprep.subr.mxu0 0.0
        %3983 = vmatpush1.msra.mxu0 %v3946
        %3984 = vmatprep.subr.mxu0 0.0
        %3985 = vmatpush1.msra.mxu0 %v3947
        %3986 = vmatprep.subr.mxu0 0.0
        %3987 = vmatpush1.msra.mxu0 %v3948
        %3988 = vmatprep.subr.mxu0 0.0
        %3989 = vmatpush1.msra.mxu0 %v3949
        %3990 = vmatprep.subr.mxu0 0.0
        %3991 = vmatpush1.msra.mxu0 %v3950
        %3992 = vmatprep.subr.mxu0 0.0
        %3993 = vmatpush1.msra.mxu0 %v3951
        %3994 = vmatprep.subr.mxu0 0.0
        %3995 = vmatpush1.msra.mxu0 %v3952
        %3996 = vmatprep.subr.mxu0 0.0
        %3997 = vmatpush1.msra.mxu0 %v3953
        %3998 = vmatprep.subr.mxu0 0.0
        %3999 = vmatpush1.msra.mxu0 %v3954
        %4000 = vmatprep.subr.mxu0 0.0
        %4001 = vmatpush1.msra.mxu0 %v3955
        %4002 = vmatprep.subr.mxu0 0.0
        %4003 = vmatpush1.msra.mxu0 %v3956
        %4004 = vmatprep.subr.mxu0 0.0
        %4005 = vmatpush1.msra.mxu0 %v3957
        %4006 = vmatprep.subr.mxu0 0.0
        %4007 = vmatpush1.msra.mxu0 %v3958
        %4008 = vmatprep.subr.mxu0 0.0
        %4009 = vmatpush1.msra.mxu0 %v3959
        %4010 = vmatprep.subr.mxu0 0.0
        %4011 = vmatpush1.msra.mxu0 %v3960
        %4012 = vmatprep.subr.mxu0 0.0
        %4013 = vmatpush1.msra.mxu0 %v3961
        %4014 = vmatprep.subr.mxu0 0.0
        %4015 = vmatpush1.msra.mxu0 %v3962
        %4016 = vmatprep.subr.mxu0 0.0
        %4017 = vmatpush1.msra.mxu0 %v3963
        %4018 = vmatprep.subr.mxu0 0.0
        %4019 = vmatpush1.msra.mxu0 %v3964
        %4020 = vmatprep.subr.mxu0 0.0
        %4021 = vmatpush1.msra.mxu0 %v3965
        %4022 = vmatprep.subr.mxu0 0.0
        %4023 = vmatpush1.msra.mxu0 %v3966
        %4024 = vmatprep.subr.mxu0 0.0
        %4025 = vmatpush1.msra.mxu0 %v3967
        %4026 = vmatprep.subr.mxu0 0.0
        %4027 = vmatpush1.msra.mxu0 %v3968
        %4028 = vmatprep.subr.mxu0 0.0
        %4029 = vmatpush1.msra.mxu0 %v3969
        %4030 = vmatprep.subr.mxu0 0.0
        %4031 = vmatpush1.msra.mxu0 %v3970
        %4032 = vmatprep.subr.mxu0 0.0
        %4033 = vmatpush1.msra.mxu0 %v3971
        %4034 = vmatprep.subr.mxu0 0.0
        %4035 = vmatpush1.msra.mxu0 %v3972
        %4036 = vmatprep.subr.mxu0 0.0
        %4037 = vmatpush1.msra.mxu0 %v3973
        %4038 = vmatprep.mubr.f32.mxu0 %v3939
        %4039 = vmatmul.mubr.f32.gmra.mrb[0].mxu0 %v3933
        %v4040 = vpop.f32.mrb[0].mxu0
        %v4041 = vadd.f32 0.0, %v4040
        %v4042 = vpop.f32.mrb[0].mxu0
        %4043 = vmatprep.mubr.f32.mxu0 %v3940
        %4044 = vmatmul.mubr.f32.gmra.mrb[0].mxu0 %v3934
        %v4045 = vpop.f32.mrb[0].mxu0
        %v4046 = vadd.f32 0.0, %v4045
        %v4047 = vpop.f32.mrb[0].mxu0
        %4048 = vdwg.mxu0
        %v4049 = vadd.f32 %v3863, %v4041
        %v4050 = vadd.f32 %v3864, %v4046
        %v4052 = vlaneseq
        %v4053 = vshrl.u32 %v4052, 7
        %v4054 = vsub.s32 0, %v4053
        %v4055 = vrot.slane %v2968, %v4054
        %v4057 = vmul.f32 %v4049, %v4055
        %v4058 = vmul.f32 %v4050, %v4055
        %v4060 = vlaneseq
        %v4061 = vshrl.u32 %v4060, 7
        %v4062 = vsub.s32 0, %v4061
        %v4063 = vrot.slane %v2970, %v4062
        %v4065 = vadd.f32 %v4057, %v4063
        %v4066 = vadd.f32 %v4058, %v4063
        %v4067 = vmax.f32 %v4065, 0.0
        %v4068 = vmax.f32 %v4066, 0.0
        %v4069 = vld [vmem:[#allocation18] sm:$0xf]
        %v4071 = vsel %vm664, %v4069, 0
        %4073 = vmatprep.subr.mxu0 0.0
        %4074 = vmatpush1.msra.mxu0 %v4071
        %4075 = vmatprep.subr.mxu0 0.0
        %4076 = vmatpush1.msra.mxu0 0.0
        %4077 = vmatprep.subr.mxu0 0.0
        %4078 = vmatpush1.msra.mxu0 0.0
        %4079 = vmatprep.subr.mxu0 0.0
        %4080 = vmatpush1.msra.mxu0 0.0
        %4081 = vmatprep.subr.mxu0 0.0
        %4082 = vmatpush1.msra.mxu0 0.0
        %4083 = vmatprep.subr.mxu0 0.0
        %4084 = vmatpush1.msra.mxu0 0.0
        %4085 = vmatprep.subr.mxu0 0.0
        %4086 = vmatpush1.msra.mxu0 0.0
        %4087 = vmatprep.subr.mxu0 0.0
        %4088 = vmatpush1.msra.mxu0 0.0
        %4089 = vmatprep.subr.mxu0 0.0
        %4090 = vmatpush1.msra.mxu0 0.0
        %4091 = vmatprep.subr.mxu0 0.0
        %4092 = vmatpush1.msra.mxu0 0.0
        %4093 = vmatprep.subr.mxu0 0.0
        %4094 = vmatpush1.msra.mxu0 0.0
        %4095 = vmatprep.subr.mxu0 0.0
        %4096 = vmatpush1.msra.mxu0 0.0
        %4097 = vmatprep.subr.mxu0 0.0
        %4098 = vmatpush1.msra.mxu0 0.0
        %4099 = vmatprep.subr.mxu0 0.0
        %4100 = vmatpush1.msra.mxu0 0.0
        %4101 = vmatprep.subr.mxu0 0.0
        %4102 = vmatpush1.msra.mxu0 0.0
        %4103 = vmatprep.subr.mxu0 0.0
        %4104 = vmatpush1.msra.mxu0 0.0
        %4105 = vmatprep.subr.mxu0 0.0
        %4106 = vmatpush1.msra.mxu0 0.0
        %4107 = vmatprep.subr.mxu0 0.0
        %4108 = vmatpush1.msra.mxu0 0.0
        %4109 = vmatprep.subr.mxu0 0.0
        %4110 = vmatpush1.msra.mxu0 0.0
        %4111 = vmatprep.subr.mxu0 0.0
        %4112 = vmatpush1.msra.mxu0 0.0
        %4113 = vmatprep.subr.mxu0 0.0
        %4114 = vmatpush1.msra.mxu0 0.0
        %4115 = vmatprep.subr.mxu0 0.0
        %4116 = vmatpush1.msra.mxu0 0.0
        %4117 = vmatprep.subr.mxu0 0.0
        %4118 = vmatpush1.msra.mxu0 0.0
        %4119 = vmatprep.subr.mxu0 0.0
        %4120 = vmatpush1.msra.mxu0 0.0
        %4121 = vmatprep.subr.mxu0 0.0
        %4122 = vmatpush1.msra.mxu0 0.0
        %4123 = vmatprep.subr.mxu0 0.0
        %4124 = vmatpush1.msra.mxu0 0.0
        %4125 = vmatprep.subr.mxu0 0.0
        %4126 = vmatpush1.msra.mxu0 0.0
        %4127 = vmatprep.subr.mxu0 0.0
        %4128 = vmatpush1.msra.mxu0 0.0
        %4129 = vmatprep.subr.mxu0 0.0
        %4130 = vmatpush1.msra.mxu0 0.0
        %4131 = vmatprep.subr.mxu0 0.0
        %4132 = vmatpush1.msra.mxu0 0.0
        %4133 = vmatprep.subr.mxu0 0.0
        %4134 = vmatpush1.msra.mxu0 0.0
        %4135 = vmatprep.subr.mxu0 0.0
        %4136 = vmatpush1.msra.mxu0 0.0
        %4137 = vmatprep.mubr.f32.mxu0 0.0
        %4138 = vmatmul.mubr.f32.gmra.mrb[0].mxu0 %v659
        %v4139 = vpop.f32.mrb[0].mxu0
        %v4140 = vadd.f32 0.0, %v4139
        %v4141 = vpop.f32.mrb[0].mxu0
        %4142 = vmatprep.mubr.f32.mxu0 0.0
        %4143 = vmatmul.mubr.f32.gmra.mrb[0].mxu0 %v662
        %v4144 = vpop.f32.mrb[0].mxu0
        %v4145 = vadd.f32 0.0, %v4144
        %v4146 = vpop.f32.mrb[0].mxu0
        %4147 = vdwg.mxu0
        %v4148 = vld [vmem:[#allocation20] sm:$0x1]
        %v4150 = vlaneseq
        %v4151 = vshrl.u32 %v4150, 7
        %v4152 = vsub.s32 0, %v4151
        %v4153 = vrot.slane %v4148, %v4152
        %v4155 = vmul.f32 %v4140, %v4153
        %v4156 = vmul.f32 %v4145, %v4153
        %v4157 = vadd.f32 %v4067, %v4155
        %v4158 = vadd.f32 %v4068, %v4156
        %v4159 = vld [vmem:[#allocation21] sm:$0x1]
        %v4161 = vlaneseq
        %v4162 = vshrl.u32 %v4161, 7
        %v4163 = vsub.s32 0, %v4162
        %v4164 = vrot.slane %v4159, %v4163
        %v4166 = vadd.f32 %v4157, %v4164
        %v4167 = vadd.f32 %v4158, %v4164
        %v4168 = vmax.f32 %v4166, 0.0
        %v4169 = vmax.f32 %v4167, 0.0
        %4170 = vst [vmem:[#allocation4] sm:$0xff] %v4168
        %4171 = vst [vmem:[#allocation4 + $0x8] sm:$0xff] %v4169
        %4172 = vst [vmem:[#allocation3 + $0x8] sm:$0xff] %v4168
        %4173 = vst [vmem:[#allocation3 + $0x10] sm:$0xff] %v4169
        %v4174 = vld [vmem:[#allocation3 + $0x8] sm:$0xff]
        %v4175 = vld [vmem:[#allocation3 + $0x10] sm:$0xff]
        %v4176 = vld [vmem:[#allocation3 + $0x7] sm:$0xff]
        %v4177 = vld [vmem:[#allocation3 + $0xf] sm:$0xff]
        %v4178 = vmax.f32 %v4176, %v4174
        %v4179 = vmax.f32 %v4177, %v4175
        %v4180 = vld [vmem:[#allocation3 + $0x9] sm:$0xff]
        %v4181 = vld [vmem:[#allocation3 + $0x11] sm:$0xff]
        %v4182 = vmax.f32 %v4178, %v4180
        %v4183 = vmax.f32 %v4179, %v4181
        %s4184 = scalar_lea.vmem %s4, 256
        %v4185 = vld [vmem:[%s4184] sm:$0xff]
        %v4186 = vld [vmem:[%s4184 + $0x8] sm:$0xff]
        %v4187 = vld [vmem:[%s4184 + $0x10] sm:$0xff]
        %v4188 = vld [vmem:[%s4184 + $0x18] sm:$0xff]
        %v4189 = vld [vmem:[%s4184 + $0x20] sm:$0xff]
        %v4190 = vld [vmem:[%s4184 + $0x28] sm:$0xff]
        %v4191 = vld [vmem:[%s4184 + $0x30] sm:$0xff]
        %v4192 = vld [vmem:[%s4184 + $0x38] sm:$0xff]
        %v4193 = vld [vmem:[%s4184 + $0x40] sm:$0xff]
        %v4194 = vld [vmem:[%s4184 + $0x48] sm:$0xff]
        %v4195 = vld [vmem:[%s4184 + $0x50] sm:$0xff]
        %v4196 = vld [vmem:[%s4184 + $0x58] sm:$0xff]
        %v4197 = vld [vmem:[%s4184 + $0x60] sm:$0xff]
        %v4198 = vld [vmem:[%s4184 + $0x68] sm:$0xff]
        %v4199 = vld [vmem:[%s4184 + $0x70] sm:$0xff]
        %v4200 = vld [vmem:[%s4184 + $0x78] sm:$0xff]
        %s4201 = scalar_lea.vmem [#allocation12], 256
        %v4202 = vld [vmem:[%s4201] sm:$0xff]
        %v4203 = vld [vmem:[%s4201 + $0x8] sm:$0xff]
        %v4204 = vld [vmem:[%s4201 + $0x10] sm:$0xff]
        %v4205 = vld [vmem:[%s4201 + $0x18] sm:$0xff]
        %v4206 = vld [vmem:[%s4201 + $0x20] sm:$0xff]
        %v4207 = vld [vmem:[%s4201 + $0x28] sm:$0xff]
        %v4208 = vld [vmem:[%s4201 + $0x30] sm:$0xff]
        %v4209 = vld [vmem:[%s4201 + $0x38] sm:$0xff]
        %v4210 = vld [vmem:[%s4201 + $0x40] sm:$0xff]
        %v4211 = vld [vmem:[%s4201 + $0x48] sm:$0xff]
        %v4212 = vld [vmem:[%s4201 + $0x50] sm:$0xff]
        %v4213 = vld [vmem:[%s4201 + $0x58] sm:$0xff]
        %v4214 = vld [vmem:[%s4201 + $0x60] sm:$0xff]
        %v4215 = vld [vmem:[%s4201 + $0x68] sm:$0xff]
        %v4216 = vld [vmem:[%s4201 + $0x70] sm:$0xff]
        %v4217 = vld [vmem:[%s4201 + $0x78] sm:$0xff]
        %s4218 = scalar_lea.vmem [#allocation15], 3
        %v4219 = vld [vmem:[%s4218] sm:$0x1]
        %s4220 = scalar_lea.vmem [#allocation17], 3
        %v4221 = vld [vmem:[%s4220] sm:$0x1]
        %4222 = vmatprep.subr.mxu0 0.0
        %4223 = vmatpush1.msra.mxu0 %v4185
        %4224 = vmatprep.subr.mxu0 0.0
        %4225 = vmatpush1.msra.mxu0 %v4186
        %4226 = vmatprep.subr.mxu0 0.0
        %4227 = vmatpush1.msra.mxu0 %v4187
        %4228 = vmatprep.subr.mxu0 0.0
        %4229 = vmatpush1.msra.mxu0 %v4188
        %4230 = vmatprep.subr.mxu0 0.0
        %4231 = vmatpush1.msra.mxu0 %v4189
        %4232 = vmatprep.subr.mxu0 0.0
        %4233 = vmatpush1.msra.mxu0 %v4190
        %4234 = vmatprep.subr.mxu0 0.0
        %4235 = vmatpush1.msra.mxu0 %v4191
        %4236 = vmatprep.subr.mxu0 0.0
        %4237 = vmatpush1.msra.mxu0 %v4192
        %4238 = vmatprep.subr.mxu0 0.0
        %4239 = vmatpush1.msra.mxu0 %v4193
        %4240 = vmatprep.subr.mxu0 0.0
        %4241 = vmatpush1.msra.mxu0 %v4194
        %4242 = vmatprep.subr.mxu0 0.0
        %4243 = vmatpush1.msra.mxu0 %v4195
        %4244 = vmatprep.subr.mxu0 0.0
        %4245 = vmatpush1.msra.mxu0 %v4196
        %4246 = vmatprep.subr.mxu0 0.0
        %4247 = vmatpush1.msra.mxu0 %v4197
        %4248 = vmatprep.subr.mxu0 0.0
        %4249 = vmatpush1.msra.mxu0 %v4198
        %4250 = vmatprep.subr.mxu0 0.0
        %4251 = vmatpush1.msra.mxu0 %v4199
        %4252 = vmatprep.subr.mxu0 0.0
        %4253 = vmatpush1.msra.mxu0 %v4200
        %4254 = vmatprep.subr.mxu0 0.0
        %4255 = vmatpush1.msra.mxu0 0.0
        %4256 = vmatprep.subr.mxu0 0.0
        %4257 = vmatpush1.msra.mxu0 0.0
        %4258 = vmatprep.subr.mxu0 0.0
        %4259 = vmatpush1.msra.mxu0 0.0
        %4260 = vmatprep.subr.mxu0 0.0
        %4261 = vmatpush1.msra.mxu0 0.0
        %4262 = vmatprep.subr.mxu0 0.0
        %4263 = vmatpush1.msra.mxu0 0.0
        %4264 = vmatprep.subr.mxu0 0.0
        %4265 = vmatpush1.msra.mxu0 0.0
        %4266 = vmatprep.subr.mxu0 0.0
        %4267 = vmatpush1.msra.mxu0 0.0
        %4268 = vmatprep.subr.mxu0 0.0
        %4269 = vmatpush1.msra.mxu0 0.0
        %4270 = vmatprep.subr.mxu0 0.0
        %4271 = vmatpush1.msra.mxu0 0.0
        %4272 = vmatprep.subr.mxu0 0.0
        %4273 = vmatpush1.msra.mxu0 0.0
        %4274 = vmatprep.subr.mxu0 0.0
        %4275 = vmatpush1.msra.mxu0 0.0
        %4276 = vmatprep.subr.mxu0 0.0
        %4277 = vmatpush1.msra.mxu0 0.0
        %4278 = vmatprep.subr.mxu0 0.0
        %4279 = vmatpush1.msra.mxu0 0.0
        %4280 = vmatprep.subr.mxu0 0.0
        %4281 = vmatpush1.msra.mxu0 0.0
        %4282 = vmatprep.subr.mxu0 0.0
        %4283 = vmatpush1.msra.mxu0 0.0
        %4284 = vmatprep.subr.mxu0 0.0
        %4285 = vmatpush1.msra.mxu0 0.0
        %4286 = vmatprep.mubr.f32.mxu0 0.0
        %4287 = vmatmul.mubr.f32.gmra.mrb[0].mxu0 %v4174
        %v4288 = vpop.f32.mrb[0].mxu0
        %v4289 = vadd.f32 0.0, %v4288
        %v4290 = vpop.f32.mrb[0].mxu0
        %4291 = vmatprep.mubr.f32.mxu0 0.0
        %4292 = vmatmul.mubr.f32.gmra.mrb[0].mxu0 %v4175
        %v4293 = vpop.f32.mrb[0].mxu0
        %v4294 = vadd.f32 0.0, %v4293
        %v4295 = vpop.f32.mrb[0].mxu0
        %4296 = vdwg.mxu0
        %4297 = vst.msk [vmem:[#allocation2 + $0x18] sm:$0xff] %vm627, %v4289
        %4298 = vst.msk [vmem:[#allocation2 + $0x20] sm:$0xff] %vm627, %v4294
        %v4299 = vld [vmem:[#allocation2 + $0x5] sm:$0xff]
        %v4300 = vld [vmem:[#allocation2 + $0xd] sm:$0xff]
        %v4301 = vld [vmem:[#allocation2 + $0x6] sm:$0xff]
        %v4302 = vld [vmem:[#allocation2 + $0xe] sm:$0xff]
        %v4303 = vld [vmem:[#allocation2 + $0x7] sm:$0xff]
        %v4304 = vld [vmem:[#allocation2 + $0xf] sm:$0xff]
        %v4305 = vld [vmem:[#allocation2 + $0x8] sm:$0xff]
        %v4306 = vld [vmem:[#allocation2 + $0x10] sm:$0xff]
        %v4307 = vld [vmem:[#allocation2 + $0x9] sm:$0xff]
        %v4308 = vld [vmem:[#allocation2 + $0x11] sm:$0xff]
        %v4309 = vld [vmem:[#allocation2 + $0xa] sm:$0xff]
        %v4310 = vld [vmem:[#allocation2 + $0x12] sm:$0xff]
        %v4311 = vld [vmem:[#allocation2 + $0xb] sm:$0xff]
        %v4312 = vld [vmem:[#allocation2 + $0x13] sm:$0xff]
        %v4313 = vld [vmem:[#allocation2 + $0xc] sm:$0xff]
        %v4314 = vld [vmem:[#allocation2 + $0x14] sm:$0xff]
        %4317 = vrot.lane.b32.xlu0 %v4301, 32
        %v4318 = vpop.permute.xlu0 %4317
        %4319 = vrot.lane.b32.xlu0 %v4302, 32
        %v4320 = vpop.permute.xlu0 %4319
        %4325 = vrot.lane.b32.xlu0 %v4303, 64
        %v4326 = vpop.permute.xlu0 %4325
        %4327 = vrot.lane.b32.xlu0 %v4304, 64
        %v4328 = vpop.permute.xlu0 %4327
        %4333 = vrot.lane.b32.xlu0 %v4305, 96
        %v4334 = vpop.permute.xlu0 %4333
        %4335 = vrot.lane.b32.xlu0 %v4306, 96
        %v4336 = vpop.permute.xlu0 %4335
        %4341 = vrot.lane.b32.xlu0 %v4309, 32
        %v4342 = vpop.permute.xlu0 %4341
        %4343 = vrot.lane.b32.xlu0 %v4310, 32
        %v4344 = vpop.permute.xlu0 %4343
        %4349 = vrot.lane.b32.xlu0 %v4311, 64
        %v4350 = vpop.permute.xlu0 %4349
        %4351 = vrot.lane.b32.xlu0 %v4312, 64
        %v4352 = vpop.permute.xlu0 %4351
        %4357 = vrot.lane.b32.xlu0 %v4313, 96
        %v4358 = vpop.permute.xlu0 %4357
        %4359 = vrot.lane.b32.xlu0 %v4314, 96
        %v4360 = vpop.permute.xlu0 %4359
        %v4363 = vsel %vm627, %v4299, %v4318
        %v4364 = vsel %vm627, %v4300, %v4320
        %v4365 = vsel %vm811, %v4363, %v4326
        %v4366 = vsel %vm811, %v4364, %v4328
        %v4367 = vsel %vm814, %v4365, %v4334
        %v4368 = vsel %vm814, %v4366, %v4336
        %v4369 = vsel %vm627, %v4307, %v4342
        %v4370 = vsel %vm627, %v4308, %v4344
        %v4371 = vsel %vm811, %v4369, %v4350
        %v4372 = vsel %vm811, %v4370, %v4352
        %v4373 = vsel %vm814, %v4371, %v4358
        %v4374 = vsel %vm814, %v4372, %v4360
        %s4375 = scalar_lea.vmem [#allocation14], 2560
        %v4376 = vld [vmem:[%s4375] sm:$0xff]
        %v4377 = vld [vmem:[%s4375 + $0x8] sm:$0xff]
        %v4378 = vld [vmem:[%s4375 + $0x10] sm:$0xff]
        %v4379 = vld [vmem:[%s4375 + $0x18] sm:$0xff]
        %v4380 = vld [vmem:[%s4375 + $0x20] sm:$0xff]
        %v4381 = vld [vmem:[%s4375 + $0x28] sm:$0xff]
        %v4382 = vld [vmem:[%s4375 + $0x30] sm:$0xff]
        %v4383 = vld [vmem:[%s4375 + $0x38] sm:$0xff]
        %v4384 = vld [vmem:[%s4375 + $0x40] sm:$0xff]
        %v4385 = vld [vmem:[%s4375 + $0x48] sm:$0xff]
        %v4386 = vld [vmem:[%s4375 + $0x50] sm:$0xff]
        %v4387 = vld [vmem:[%s4375 + $0x58] sm:$0xff]
        %v4388 = vld [vmem:[%s4375 + $0x60] sm:$0xff]
        %v4389 = vld [vmem:[%s4375 + $0x68] sm:$0xff]
        %v4390 = vld [vmem:[%s4375 + $0x70] sm:$0xff]
        %v4391 = vld [vmem:[%s4375 + $0x78] sm:$0xff]
        %v4392 = vld [vmem:[%s4375 + $0x80] sm:$0xff]
        %v4393 = vld [vmem:[%s4375 + $0x88] sm:$0xff]
        %v4394 = vld [vmem:[%s4375 + $0x90] sm:$0xff]
        %v4395 = vld [vmem:[%s4375 + $0x98] sm:$0xff]
        %v4396 = vld [vmem:[%s4375 + $0xa0] sm:$0xff]
        %v4397 = vld [vmem:[%s4375 + $0xa8] sm:$0xff]
        %v4398 = vld [vmem:[%s4375 + $0xb0] sm:$0xff]
        %v4399 = vld [vmem:[%s4375 + $0xb8] sm:$0xff]
        %v4400 = vld [vmem:[%s4375 + $0xc0] sm:$0xff]
        %v4401 = vld [vmem:[%s4375 + $0xc8] sm:$0xff]
        %v4402 = vld [vmem:[%s4375 + $0xd0] sm:$0xff]
        %v4403 = vld [vmem:[%s4375 + $0xd8] sm:$0xff]
        %v4404 = vld [vmem:[%s4375 + $0xe0] sm:$0xff]
        %v4405 = vld [vmem:[%s4375 + $0xe8] sm:$0xff]
        %v4406 = vld [vmem:[%s4375 + $0xf0] sm:$0xff]
        %v4407 = vld [vmem:[%s4375 + $0xf8] sm:$0xff]
        %4408 = vmatprep.subr.mxu0 0.0
        %4409 = vmatpush1.msra.mxu0 %v4376
        %4410 = vmatprep.subr.mxu0 0.0
        %4411 = vmatpush1.msra.mxu0 %v4377
        %4412 = vmatprep.subr.mxu0 0.0
        %4413 = vmatpush1.msra.mxu0 %v4378
        %4414 = vmatprep.subr.mxu0 0.0
        %4415 = vmatpush1.msra.mxu0 %v4379
        %4416 = vmatprep.subr.mxu0 0.0
        %4417 = vmatpush1.msra.mxu0 %v4380
        %4418 = vmatprep.subr.mxu0 0.0
        %4419 = vmatpush1.msra.mxu0 %v4381
        %4420 = vmatprep.subr.mxu0 0.0
        %4421 = vmatpush1.msra.mxu0 %v4382
        %4422 = vmatprep.subr.mxu0 0.0
        %4423 = vmatpush1.msra.mxu0 %v4383
        %4424 = vmatprep.subr.mxu0 0.0
        %4425 = vmatpush1.msra.mxu0 %v4384
        %4426 = vmatprep.subr.mxu0 0.0
        %4427 = vmatpush1.msra.mxu0 %v4385
        %4428 = vmatprep.subr.mxu0 0.0
        %4429 = vmatpush1.msra.mxu0 %v4386
        %4430 = vmatprep.subr.mxu0 0.0
        %4431 = vmatpush1.msra.mxu0 %v4387
        %4432 = vmatprep.subr.mxu0 0.0
        %4433 = vmatpush1.msra.mxu0 %v4388
        %4434 = vmatprep.subr.mxu0 0.0
        %4435 = vmatpush1.msra.mxu0 %v4389
        %4436 = vmatprep.subr.mxu0 0.0
        %4437 = vmatpush1.msra.mxu0 %v4390
        %4438 = vmatprep.subr.mxu0 0.0
        %4439 = vmatpush1.msra.mxu0 %v4391
        %4440 = vmatprep.subr.mxu0 0.0
        %4441 = vmatpush1.msra.mxu0 %v4392
        %4442 = vmatprep.subr.mxu0 0.0
        %4443 = vmatpush1.msra.mxu0 %v4393
        %4444 = vmatprep.subr.mxu0 0.0
        %4445 = vmatpush1.msra.mxu0 %v4394
        %4446 = vmatprep.subr.mxu0 0.0
        %4447 = vmatpush1.msra.mxu0 %v4395
        %4448 = vmatprep.subr.mxu0 0.0
        %4449 = vmatpush1.msra.mxu0 %v4396
        %4450 = vmatprep.subr.mxu0 0.0
        %4451 = vmatpush1.msra.mxu0 %v4397
        %4452 = vmatprep.subr.mxu0 0.0
        %4453 = vmatpush1.msra.mxu0 %v4398
        %4454 = vmatprep.subr.mxu0 0.0
        %4455 = vmatpush1.msra.mxu0 %v4399
        %4456 = vmatprep.subr.mxu0 0.0
        %4457 = vmatpush1.msra.mxu0 %v4400
        %4458 = vmatprep.subr.mxu0 0.0
        %4459 = vmatpush1.msra.mxu0 %v4401
        %4460 = vmatprep.subr.mxu0 0.0
        %4461 = vmatpush1.msra.mxu0 %v4402
        %4462 = vmatprep.subr.mxu0 0.0
        %4463 = vmatpush1.msra.mxu0 %v4403
        %4464 = vmatprep.subr.mxu0 0.0
        %4465 = vmatpush1.msra.mxu0 %v4404
        %4466 = vmatprep.subr.mxu0 0.0
        %4467 = vmatpush1.msra.mxu0 %v4405
        %4468 = vmatprep.subr.mxu0 0.0
        %4469 = vmatpush1.msra.mxu0 %v4406
        %4470 = vmatprep.subr.mxu0 0.0
        %4471 = vmatpush1.msra.mxu0 %v4407
        %4472 = vmatprep.mubr.f32.mxu0 %v4373
        %4473 = vmatmul.mubr.f32.gmra.mrb[0].mxu0 %v4367
        %v4474 = vpop.f32.mrb[0].mxu0
        %v4475 = vadd.f32 0.0, %v4474
        %v4476 = vpop.f32.mrb[0].mxu0
        %4477 = vmatprep.mubr.f32.mxu0 %v4374
        %4478 = vmatmul.mubr.f32.gmra.mrb[0].mxu0 %v4368
        %v4479 = vpop.f32.mrb[0].mxu0
        %v4480 = vadd.f32 0.0, %v4479
        %v4481 = vpop.f32.mrb[0].mxu0
        %4482 = vdwg.mxu0
        %4483 = vmatprep.subr.mxu0 0.0
        %4484 = vmatpush1.msra.mxu0 %v4202
        %4485 = vmatprep.subr.mxu0 0.0
        %4486 = vmatpush1.msra.mxu0 %v4203
        %4487 = vmatprep.subr.mxu0 0.0
        %4488 = vmatpush1.msra.mxu0 %v4204
        %4489 = vmatprep.subr.mxu0 0.0
        %4490 = vmatpush1.msra.mxu0 %v4205
        %4491 = vmatprep.subr.mxu0 0.0
        %4492 = vmatpush1.msra.mxu0 %v4206
        %4493 = vmatprep.subr.mxu0 0.0
        %4494 = vmatpush1.msra.mxu0 %v4207
        %4495 = vmatprep.subr.mxu0 0.0
        %4496 = vmatpush1.msra.mxu0 %v4208
        %4497 = vmatprep.subr.mxu0 0.0
        %4498 = vmatpush1.msra.mxu0 %v4209
        %4499 = vmatprep.subr.mxu0 0.0
        %4500 = vmatpush1.msra.mxu0 %v4210
        %4501 = vmatprep.subr.mxu0 0.0
        %4502 = vmatpush1.msra.mxu0 %v4211
        %4503 = vmatprep.subr.mxu0 0.0
        %4504 = vmatpush1.msra.mxu0 %v4212
        %4505 = vmatprep.subr.mxu0 0.0
        %4506 = vmatpush1.msra.mxu0 %v4213
        %4507 = vmatprep.subr.mxu0 0.0
        %4508 = vmatpush1.msra.mxu0 %v4214
        %4509 = vmatprep.subr.mxu0 0.0
        %4510 = vmatpush1.msra.mxu0 %v4215
        %4511 = vmatprep.subr.mxu0 0.0
        %4512 = vmatpush1.msra.mxu0 %v4216
        %4513 = vmatprep.subr.mxu0 0.0
        %4514 = vmatpush1.msra.mxu0 %v4217
        %4515 = vmatprep.subr.mxu0 0.0
        %4516 = vmatpush1.msra.mxu0 0.0
        %4517 = vmatprep.subr.mxu0 0.0
        %4518 = vmatpush1.msra.mxu0 0.0
        %4519 = vmatprep.subr.mxu0 0.0
        %4520 = vmatpush1.msra.mxu0 0.0
        %4521 = vmatprep.subr.mxu0 0.0
        %4522 = vmatpush1.msra.mxu0 0.0
        %4523 = vmatprep.subr.mxu0 0.0
        %4524 = vmatpush1.msra.mxu0 0.0
        %4525 = vmatprep.subr.mxu0 0.0
        %4526 = vmatpush1.msra.mxu0 0.0
        %4527 = vmatprep.subr.mxu0 0.0
        %4528 = vmatpush1.msra.mxu0 0.0
        %4529 = vmatprep.subr.mxu0 0.0
        %4530 = vmatpush1.msra.mxu0 0.0
        %4531 = vmatprep.subr.mxu0 0.0
        %4532 = vmatpush1.msra.mxu0 0.0
        %4533 = vmatprep.subr.mxu0 0.0
        %4534 = vmatpush1.msra.mxu0 0.0
        %4535 = vmatprep.subr.mxu0 0.0
        %4536 = vmatpush1.msra.mxu0 0.0
        %4537 = vmatprep.subr.mxu0 0.0
        %4538 = vmatpush1.msra.mxu0 0.0
        %4539 = vmatprep.subr.mxu0 0.0
        %4540 = vmatpush1.msra.mxu0 0.0
        %4541 = vmatprep.subr.mxu0 0.0
        %4542 = vmatpush1.msra.mxu0 0.0
        %4543 = vmatprep.subr.mxu0 0.0
        %4544 = vmatpush1.msra.mxu0 0.0
        %4545 = vmatprep.subr.mxu0 0.0
        %4546 = vmatpush1.msra.mxu0 0.0
        %4547 = vmatprep.mubr.f32.mxu0 0.0
        %4548 = vmatmul.mubr.f32.gmra.mrb[0].mxu0 %v4182
        %v4549 = vpop.f32.mrb[0].mxu0
        %v4550 = vadd.f32 %v4475, %v4549
        %v4551 = vpop.f32.mrb[0].mxu0
        %4552 = vmatprep.mubr.f32.mxu0 0.0
        %4553 = vmatmul.mubr.f32.gmra.mrb[0].mxu0 %v4183
        %v4554 = vpop.f32.mrb[0].mxu0
        %v4555 = vadd.f32 %v4480, %v4554
        %v4556 = vpop.f32.mrb[0].mxu0
        %4557 = vdwg.mxu0
        %v4558 = vld [vmem:[#allocation2 + $0xd] sm:$0xff]
        %v4559 = vld [vmem:[#allocation2 + $0x15] sm:$0xff]
        %v4560 = vld [vmem:[#allocation2 + $0xe] sm:$0xff]
        %v4561 = vld [vmem:[#allocation2 + $0x16] sm:$0xff]
        %v4562 = vld [vmem:[#allocation2 + $0xf] sm:$0xff]
        %v4563 = vld [vmem:[#allocation2 + $0x17] sm:$0xff]
        %v4564 = vld [vmem:[#allocation2 + $0x10] sm:$0xff]
        %v4565 = vld [vmem:[#allocation2 + $0x18] sm:$0xff]
        %v4566 = vld [vmem:[#allocation2 + $0x11] sm:$0xff]
        %v4567 = vld [vmem:[#allocation2 + $0x19] sm:$0xff]
        %v4568 = vld [vmem:[#allocation2 + $0x12] sm:$0xff]
        %v4569 = vld [vmem:[#allocation2 + $0x1a] sm:$0xff]
        %v4570 = vld [vmem:[#allocation2 + $0x13] sm:$0xff]
        %v4571 = vld [vmem:[#allocation2 + $0x1b] sm:$0xff]
        %v4572 = vld [vmem:[#allocation2 + $0x14] sm:$0xff]
        %v4573 = vld [vmem:[#allocation2 + $0x1c] sm:$0xff]
        %4576 = vrot.lane.b32.xlu0 %v4560, 32
        %v4577 = vpop.permute.xlu0 %4576
        %4578 = vrot.lane.b32.xlu0 %v4561, 32
        %v4579 = vpop.permute.xlu0 %4578
        %4584 = vrot.lane.b32.xlu0 %v4562, 64
        %v4585 = vpop.permute.xlu0 %4584
        %4586 = vrot.lane.b32.xlu0 %v4563, 64
        %v4587 = vpop.permute.xlu0 %4586
        %4592 = vrot.lane.b32.xlu0 %v4564, 96
        %v4593 = vpop.permute.xlu0 %4592
        %4594 = vrot.lane.b32.xlu0 %v4565, 96
        %v4595 = vpop.permute.xlu0 %4594
        %4600 = vrot.lane.b32.xlu0 %v4568, 32
        %v4601 = vpop.permute.xlu0 %4600
        %4602 = vrot.lane.b32.xlu0 %v4569, 32
        %v4603 = vpop.permute.xlu0 %4602
        %4608 = vrot.lane.b32.xlu0 %v4570, 64
        %v4609 = vpop.permute.xlu0 %4608
        %4610 = vrot.lane.b32.xlu0 %v4571, 64
        %v4611 = vpop.permute.xlu0 %4610
        %4616 = vrot.lane.b32.xlu0 %v4572, 96
        %v4617 = vpop.permute.xlu0 %4616
        %4618 = vrot.lane.b32.xlu0 %v4573, 96
        %v4619 = vpop.permute.xlu0 %4618
        %v4622 = vsel %vm627, %v4558, %v4577
        %v4623 = vsel %vm627, %v4559, %v4579
        %v4624 = vsel %vm811, %v4622, %v4585
        %v4625 = vsel %vm811, %v4623, %v4587
        %v4626 = vsel %vm814, %v4624, %v4593
        %v4627 = vsel %vm814, %v4625, %v4595
        %v4628 = vsel %vm627, %v4566, %v4601
        %v4629 = vsel %vm627, %v4567, %v4603
        %v4630 = vsel %vm811, %v4628, %v4609
        %v4631 = vsel %vm811, %v4629, %v4611
        %v4632 = vsel %vm814, %v4630, %v4617
        %v4633 = vsel %vm814, %v4631, %v4619
        %s4634 = scalar_lea.vmem [#allocation14], 2816
        %v4635 = vld [vmem:[%s4634] sm:$0xff]
        %v4636 = vld [vmem:[%s4634 + $0x8] sm:$0xff]
        %v4637 = vld [vmem:[%s4634 + $0x10] sm:$0xff]
        %v4638 = vld [vmem:[%s4634 + $0x18] sm:$0xff]
        %v4639 = vld [vmem:[%s4634 + $0x20] sm:$0xff]
        %v4640 = vld [vmem:[%s4634 + $0x28] sm:$0xff]
        %v4641 = vld [vmem:[%s4634 + $0x30] sm:$0xff]
        %v4642 = vld [vmem:[%s4634 + $0x38] sm:$0xff]
        %v4643 = vld [vmem:[%s4634 + $0x40] sm:$0xff]
        %v4644 = vld [vmem:[%s4634 + $0x48] sm:$0xff]
        %v4645 = vld [vmem:[%s4634 + $0x50] sm:$0xff]
        %v4646 = vld [vmem:[%s4634 + $0x58] sm:$0xff]
        %v4647 = vld [vmem:[%s4634 + $0x60] sm:$0xff]
        %v4648 = vld [vmem:[%s4634 + $0x68] sm:$0xff]
        %v4649 = vld [vmem:[%s4634 + $0x70] sm:$0xff]
        %v4650 = vld [vmem:[%s4634 + $0x78] sm:$0xff]
        %v4651 = vld [vmem:[%s4634 + $0x80] sm:$0xff]
        %v4652 = vld [vmem:[%s4634 + $0x88] sm:$0xff]
        %v4653 = vld [vmem:[%s4634 + $0x90] sm:$0xff]
        %v4654 = vld [vmem:[%s4634 + $0x98] sm:$0xff]
        %v4655 = vld [vmem:[%s4634 + $0xa0] sm:$0xff]
        %v4656 = vld [vmem:[%s4634 + $0xa8] sm:$0xff]
        %v4657 = vld [vmem:[%s4634 + $0xb0] sm:$0xff]
        %v4658 = vld [vmem:[%s4634 + $0xb8] sm:$0xff]
        %v4659 = vld [vmem:[%s4634 + $0xc0] sm:$0xff]
        %v4660 = vld [vmem:[%s4634 + $0xc8] sm:$0xff]
        %v4661 = vld [vmem:[%s4634 + $0xd0] sm:$0xff]
        %v4662 = vld [vmem:[%s4634 + $0xd8] sm:$0xff]
        %v4663 = vld [vmem:[%s4634 + $0xe0] sm:$0xff]
        %v4664 = vld [vmem:[%s4634 + $0xe8] sm:$0xff]
        %v4665 = vld [vmem:[%s4634 + $0xf0] sm:$0xff]
        %v4666 = vld [vmem:[%s4634 + $0xf8] sm:$0xff]
        %4667 = vmatprep.subr.mxu0 0.0
        %4668 = vmatpush1.msra.mxu0 %v4635
        %4669 = vmatprep.subr.mxu0 0.0
        %4670 = vmatpush1.msra.mxu0 %v4636
        %4671 = vmatprep.subr.mxu0 0.0
        %4672 = vmatpush1.msra.mxu0 %v4637
        %4673 = vmatprep.subr.mxu0 0.0
        %4674 = vmatpush1.msra.mxu0 %v4638
        %4675 = vmatprep.subr.mxu0 0.0
        %4676 = vmatpush1.msra.mxu0 %v4639
        %4677 = vmatprep.subr.mxu0 0.0
        %4678 = vmatpush1.msra.mxu0 %v4640
        %4679 = vmatprep.subr.mxu0 0.0
        %4680 = vmatpush1.msra.mxu0 %v4641
        %4681 = vmatprep.subr.mxu0 0.0
        %4682 = vmatpush1.msra.mxu0 %v4642
        %4683 = vmatprep.subr.mxu0 0.0
        %4684 = vmatpush1.msra.mxu0 %v4643
        %4685 = vmatprep.subr.mxu0 0.0
        %4686 = vmatpush1.msra.mxu0 %v4644
        %4687 = vmatprep.subr.mxu0 0.0
        %4688 = vmatpush1.msra.mxu0 %v4645
        %4689 = vmatprep.subr.mxu0 0.0
        %4690 = vmatpush1.msra.mxu0 %v4646
        %4691 = vmatprep.subr.mxu0 0.0
        %4692 = vmatpush1.msra.mxu0 %v4647
        %4693 = vmatprep.subr.mxu0 0.0
        %4694 = vmatpush1.msra.mxu0 %v4648
        %4695 = vmatprep.subr.mxu0 0.0
        %4696 = vmatpush1.msra.mxu0 %v4649
        %4697 = vmatprep.subr.mxu0 0.0
        %4698 = vmatpush1.msra.mxu0 %v4650
        %4699 = vmatprep.subr.mxu0 0.0
        %4700 = vmatpush1.msra.mxu0 %v4651
        %4701 = vmatprep.subr.mxu0 0.0
        %4702 = vmatpush1.msra.mxu0 %v4652
        %4703 = vmatprep.subr.mxu0 0.0
        %4704 = vmatpush1.msra.mxu0 %v4653
        %4705 = vmatprep.subr.mxu0 0.0
        %4706 = vmatpush1.msra.mxu0 %v4654
        %4707 = vmatprep.subr.mxu0 0.0
        %4708 = vmatpush1.msra.mxu0 %v4655
        %4709 = vmatprep.subr.mxu0 0.0
        %4710 = vmatpush1.msra.mxu0 %v4656
        %4711 = vmatprep.subr.mxu0 0.0
        %4712 = vmatpush1.msra.mxu0 %v4657
        %4713 = vmatprep.subr.mxu0 0.0
        %4714 = vmatpush1.msra.mxu0 %v4658
        %4715 = vmatprep.subr.mxu0 0.0
        %4716 = vmatpush1.msra.mxu0 %v4659
        %4717 = vmatprep.subr.mxu0 0.0
        %4718 = vmatpush1.msra.mxu0 %v4660
        %4719 = vmatprep.subr.mxu0 0.0
        %4720 = vmatpush1.msra.mxu0 %v4661
        %4721 = vmatprep.subr.mxu0 0.0
        %4722 = vmatpush1.msra.mxu0 %v4662
        %4723 = vmatprep.subr.mxu0 0.0
        %4724 = vmatpush1.msra.mxu0 %v4663
        %4725 = vmatprep.subr.mxu0 0.0
        %4726 = vmatpush1.msra.mxu0 %v4664
        %4727 = vmatprep.subr.mxu0 0.0
        %4728 = vmatpush1.msra.mxu0 %v4665
        %4729 = vmatprep.subr.mxu0 0.0
        %4730 = vmatpush1.msra.mxu0 %v4666
        %4731 = vmatprep.mubr.f32.mxu0 %v4632
        %4732 = vmatmul.mubr.f32.gmra.mrb[0].mxu0 %v4626
        %v4733 = vpop.f32.mrb[0].mxu0
        %v4734 = vadd.f32 0.0, %v4733
        %v4735 = vpop.f32.mrb[0].mxu0
        %4736 = vmatprep.mubr.f32.mxu0 %v4633
        %4737 = vmatmul.mubr.f32.gmra.mrb[0].mxu0 %v4627
        %v4738 = vpop.f32.mrb[0].mxu0
        %v4739 = vadd.f32 0.0, %v4738
        %v4740 = vpop.f32.mrb[0].mxu0
        %4741 = vdwg.mxu0
        %v4742 = vadd.f32 %v4550, %v4734
        %v4743 = vadd.f32 %v4555, %v4739
        %v4744 = vld [vmem:[#allocation2 + $0x15] sm:$0xff]
        %v4745 = vld [vmem:[#allocation2 + $0x1d] sm:$0xff]
        %v4746 = vld [vmem:[#allocation2 + $0x16] sm:$0xff]
        %v4747 = vld [vmem:[#allocation2 + $0x1e] sm:$0xff]
        %v4748 = vld [vmem:[#allocation2 + $0x17] sm:$0xff]
        %v4749 = vld [vmem:[#allocation2 + $0x1f] sm:$0xff]
        %v4750 = vld [vmem:[#allocation2 + $0x18] sm:$0xff]
        %v4751 = vld [vmem:[#allocation2 + $0x20] sm:$0xff]
        %v4752 = vld [vmem:[#allocation2 + $0x19] sm:$0xff]
        %v4753 = vld [vmem:[#allocation2 + $0x21] sm:$0xff]
        %v4754 = vld [vmem:[#allocation2 + $0x1a] sm:$0xff]
        %v4755 = vld [vmem:[#allocation2 + $0x22] sm:$0xff]
        %v4756 = vld [vmem:[#allocation2 + $0x1b] sm:$0xff]
        %v4757 = vld [vmem:[#allocation2 + $0x23] sm:$0xff]
        %v4758 = vld [vmem:[#allocation2 + $0x1c] sm:$0xff]
        %v4759 = vld [vmem:[#allocation2 + $0x24] sm:$0xff]
        %4762 = vrot.lane.b32.xlu0 %v4746, 32
        %v4763 = vpop.permute.xlu0 %4762
        %4764 = vrot.lane.b32.xlu0 %v4747, 32
        %v4765 = vpop.permute.xlu0 %4764
        %4770 = vrot.lane.b32.xlu0 %v4748, 64
        %v4771 = vpop.permute.xlu0 %4770
        %4772 = vrot.lane.b32.xlu0 %v4749, 64
        %v4773 = vpop.permute.xlu0 %4772
        %4778 = vrot.lane.b32.xlu0 %v4750, 96
        %v4779 = vpop.permute.xlu0 %4778
        %4780 = vrot.lane.b32.xlu0 %v4751, 96
        %v4781 = vpop.permute.xlu0 %4780
        %4786 = vrot.lane.b32.xlu0 %v4754, 32
        %v4787 = vpop.permute.xlu0 %4786
        %4788 = vrot.lane.b32.xlu0 %v4755, 32
        %v4789 = vpop.permute.xlu0 %4788
        %4794 = vrot.lane.b32.xlu0 %v4756, 64
        %v4795 = vpop.permute.xlu0 %4794
        %4796 = vrot.lane.b32.xlu0 %v4757, 64
        %v4797 = vpop.permute.xlu0 %4796
        %4802 = vrot.lane.b32.xlu0 %v4758, 96
        %v4803 = vpop.permute.xlu0 %4802
        %4804 = vrot.lane.b32.xlu0 %v4759, 96
        %v4805 = vpop.permute.xlu0 %4804
        %v4808 = vsel %vm627, %v4744, %v4763
        %v4809 = vsel %vm627, %v4745, %v4765
        %v4810 = vsel %vm811, %v4808, %v4771
        %v4811 = vsel %vm811, %v4809, %v4773
        %v4812 = vsel %vm814, %v4810, %v4779
        %v4813 = vsel %vm814, %v4811, %v4781
        %v4814 = vsel %vm627, %v4752, %v4787
        %v4815 = vsel %vm627, %v4753, %v4789
        %v4816 = vsel %vm811, %v4814, %v4795
        %v4817 = vsel %vm811, %v4815, %v4797
        %v4818 = vsel %vm814, %v4816, %v4803
        %v4819 = vsel %vm814, %v4817, %v4805
        %s4820 = scalar_lea.vmem [#allocation14], 3072
        %v4821 = vld [vmem:[%s4820] sm:$0xff]
        %v4822 = vld [vmem:[%s4820 + $0x8] sm:$0xff]
        %v4823 = vld [vmem:[%s4820 + $0x10] sm:$0xff]
        %v4824 = vld [vmem:[%s4820 + $0x18] sm:$0xff]
        %v4825 = vld [vmem:[%s4820 + $0x20] sm:$0xff]
        %v4826 = vld [vmem:[%s4820 + $0x28] sm:$0xff]
        %v4827 = vld [vmem:[%s4820 + $0x30] sm:$0xff]
        %v4828 = vld [vmem:[%s4820 + $0x38] sm:$0xff]
        %v4829 = vld [vmem:[%s4820 + $0x40] sm:$0xff]
        %v4830 = vld [vmem:[%s4820 + $0x48] sm:$0xff]
        %v4831 = vld [vmem:[%s4820 + $0x50] sm:$0xff]
        %v4832 = vld [vmem:[%s4820 + $0x58] sm:$0xff]
        %v4833 = vld [vmem:[%s4820 + $0x60] sm:$0xff]
        %v4834 = vld [vmem:[%s4820 + $0x68] sm:$0xff]
        %v4835 = vld [vmem:[%s4820 + $0x70] sm:$0xff]
        %v4836 = vld [vmem:[%s4820 + $0x78] sm:$0xff]
        %v4837 = vld [vmem:[%s4820 + $0x80] sm:$0xff]
        %v4838 = vld [vmem:[%s4820 + $0x88] sm:$0xff]
        %v4839 = vld [vmem:[%s4820 + $0x90] sm:$0xff]
        %v4840 = vld [vmem:[%s4820 + $0x98] sm:$0xff]
        %v4841 = vld [vmem:[%s4820 + $0xa0] sm:$0xff]
        %v4842 = vld [vmem:[%s4820 + $0xa8] sm:$0xff]
        %v4843 = vld [vmem:[%s4820 + $0xb0] sm:$0xff]
        %v4844 = vld [vmem:[%s4820 + $0xb8] sm:$0xff]
        %v4845 = vld [vmem:[%s4820 + $0xc0] sm:$0xff]
        %v4846 = vld [vmem:[%s4820 + $0xc8] sm:$0xff]
        %v4847 = vld [vmem:[%s4820 + $0xd0] sm:$0xff]
        %v4848 = vld [vmem:[%s4820 + $0xd8] sm:$0xff]
        %v4849 = vld [vmem:[%s4820 + $0xe0] sm:$0xff]
        %v4850 = vld [vmem:[%s4820 + $0xe8] sm:$0xff]
        %v4851 = vld [vmem:[%s4820 + $0xf0] sm:$0xff]
        %v4852 = vld [vmem:[%s4820 + $0xf8] sm:$0xff]
        %4853 = vmatprep.subr.mxu0 0.0
        %4854 = vmatpush1.msra.mxu0 %v4821
        %4855 = vmatprep.subr.mxu0 0.0
        %4856 = vmatpush1.msra.mxu0 %v4822
        %4857 = vmatprep.subr.mxu0 0.0
        %4858 = vmatpush1.msra.mxu0 %v4823
        %4859 = vmatprep.subr.mxu0 0.0
        %4860 = vmatpush1.msra.mxu0 %v4824
        %4861 = vmatprep.subr.mxu0 0.0
        %4862 = vmatpush1.msra.mxu0 %v4825
        %4863 = vmatprep.subr.mxu0 0.0
        %4864 = vmatpush1.msra.mxu0 %v4826
        %4865 = vmatprep.subr.mxu0 0.0
        %4866 = vmatpush1.msra.mxu0 %v4827
        %4867 = vmatprep.subr.mxu0 0.0
        %4868 = vmatpush1.msra.mxu0 %v4828
        %4869 = vmatprep.subr.mxu0 0.0
        %4870 = vmatpush1.msra.mxu0 %v4829
        %4871 = vmatprep.subr.mxu0 0.0
        %4872 = vmatpush1.msra.mxu0 %v4830
        %4873 = vmatprep.subr.mxu0 0.0
        %4874 = vmatpush1.msra.mxu0 %v4831
        %4875 = vmatprep.subr.mxu0 0.0
        %4876 = vmatpush1.msra.mxu0 %v4832
        %4877 = vmatprep.subr.mxu0 0.0
        %4878 = vmatpush1.msra.mxu0 %v4833
        %4879 = vmatprep.subr.mxu0 0.0
        %4880 = vmatpush1.msra.mxu0 %v4834
        %4881 = vmatprep.subr.mxu0 0.0
        %4882 = vmatpush1.msra.mxu0 %v4835
        %4883 = vmatprep.subr.mxu0 0.0
        %4884 = vmatpush1.msra.mxu0 %v4836
        %4885 = vmatprep.subr.mxu0 0.0
        %4886 = vmatpush1.msra.mxu0 %v4837
        %4887 = vmatprep.subr.mxu0 0.0
        %4888 = vmatpush1.msra.mxu0 %v4838
        %4889 = vmatprep.subr.mxu0 0.0
        %4890 = vmatpush1.msra.mxu0 %v4839
        %4891 = vmatprep.subr.mxu0 0.0
        %4892 = vmatpush1.msra.mxu0 %v4840
        %4893 = vmatprep.subr.mxu0 0.0
        %4894 = vmatpush1.msra.mxu0 %v4841
        %4895 = vmatprep.subr.mxu0 0.0
        %4896 = vmatpush1.msra.mxu0 %v4842
        %4897 = vmatprep.subr.mxu0 0.0
        %4898 = vmatpush1.msra.mxu0 %v4843
        %4899 = vmatprep.subr.mxu0 0.0
        %4900 = vmatpush1.msra.mxu0 %v4844
        %4901 = vmatprep.subr.mxu0 0.0
        %4902 = vmatpush1.msra.mxu0 %v4845
        %4903 = vmatprep.subr.mxu0 0.0
        %4904 = vmatpush1.msra.mxu0 %v4846
        %4905 = vmatprep.subr.mxu0 0.0
        %4906 = vmatpush1.msra.mxu0 %v4847
        %4907 = vmatprep.subr.mxu0 0.0
        %4908 = vmatpush1.msra.mxu0 %v4848
        %4909 = vmatprep.subr.mxu0 0.0
        %4910 = vmatpush1.msra.mxu0 %v4849
        %4911 = vmatprep.subr.mxu0 0.0
        %4912 = vmatpush1.msra.mxu0 %v4850
        %4913 = vmatprep.subr.mxu0 0.0
        %4914 = vmatpush1.msra.mxu0 %v4851
        %4915 = vmatprep.subr.mxu0 0.0
        %4916 = vmatpush1.msra.mxu0 %v4852
        %4917 = vmatprep.mubr.f32.mxu0 %v4818
        %4918 = vmatmul.mubr.f32.gmra.mrb[0].mxu0 %v4812
        %v4919 = vpop.f32.mrb[0].mxu0
        %v4920 = vadd.f32 0.0, %v4919
        %v4921 = vpop.f32.mrb[0].mxu0
        %4922 = vmatprep.mubr.f32.mxu0 %v4819
        %4923 = vmatmul.mubr.f32.gmra.mrb[0].mxu0 %v4813
        %v4924 = vpop.f32.mrb[0].mxu0
        %v4925 = vadd.f32 0.0, %v4924
        %v4926 = vpop.f32.mrb[0].mxu0
        %4927 = vdwg.mxu0
        %v4928 = vadd.f32 %v4742, %v4920
        %v4929 = vadd.f32 %v4743, %v4925
        %v4930 = vld [vmem:[#allocation2 + $0x1d] sm:$0xff]
        %v4931 = vld [vmem:[#allocation2 + $0x25] sm:$0xff]
        %v4932 = vld [vmem:[#allocation2 + $0x1e] sm:$0xff]
        %v4933 = vld [vmem:[#allocation2 + $0x26] sm:$0xff]
        %v4934 = vld [vmem:[#allocation2 + $0x1f] sm:$0xff]
        %v4935 = vld [vmem:[#allocation2 + $0x27] sm:$0xff]
        %v4936 = vld [vmem:[#allocation2 + $0x20] sm:$0xff]
        %v4937 = vld [vmem:[#allocation2 + $0x28] sm:$0xff]
        %v4938 = vld [vmem:[#allocation2 + $0x21] sm:$0xff]
        %v4939 = vld [vmem:[#allocation2 + $0x29] sm:$0xff]
        %v4940 = vld [vmem:[#allocation2 + $0x22] sm:$0xff]
        %v4941 = vld [vmem:[#allocation2 + $0x2a] sm:$0xff]
        %v4942 = vld [vmem:[#allocation2 + $0x23] sm:$0xff]
        %v4943 = vld [vmem:[#allocation2 + $0x2b] sm:$0xff]
        %v4944 = vld [vmem:[#allocation2 + $0x24] sm:$0xff]
        %v4945 = vld [vmem:[#allocation2 + $0x2c] sm:$0xff]
        %4948 = vrot.lane.b32.xlu0 %v4932, 32
        %v4949 = vpop.permute.xlu0 %4948
        %4950 = vrot.lane.b32.xlu0 %v4933, 32
        %v4951 = vpop.permute.xlu0 %4950
        %4956 = vrot.lane.b32.xlu0 %v4934, 64
        %v4957 = vpop.permute.xlu0 %4956
        %4958 = vrot.lane.b32.xlu0 %v4935, 64
        %v4959 = vpop.permute.xlu0 %4958
        %4964 = vrot.lane.b32.xlu0 %v4936, 96
        %v4965 = vpop.permute.xlu0 %4964
        %4966 = vrot.lane.b32.xlu0 %v4937, 96
        %v4967 = vpop.permute.xlu0 %4966
        %4972 = vrot.lane.b32.xlu0 %v4940, 32
        %v4973 = vpop.permute.xlu0 %4972
        %4974 = vrot.lane.b32.xlu0 %v4941, 32
        %v4975 = vpop.permute.xlu0 %4974
        %4980 = vrot.lane.b32.xlu0 %v4942, 64
        %v4981 = vpop.permute.xlu0 %4980
        %4982 = vrot.lane.b32.xlu0 %v4943, 64
        %v4983 = vpop.permute.xlu0 %4982
        %4988 = vrot.lane.b32.xlu0 %v4944, 96
        %v4989 = vpop.permute.xlu0 %4988
        %4990 = vrot.lane.b32.xlu0 %v4945, 96
        %v4991 = vpop.permute.xlu0 %4990
        %v4994 = vsel %vm627, %v4930, %v4949
        %v4995 = vsel %vm627, %v4931, %v4951
        %v4996 = vsel %vm811, %v4994, %v4957
        %v4997 = vsel %vm811, %v4995, %v4959
        %v4998 = vsel %vm814, %v4996, %v4965
        %v4999 = vsel %vm814, %v4997, %v4967
        %v5000 = vsel %vm627, %v4938, %v4973
        %v5001 = vsel %vm627, %v4939, %v4975
        %v5002 = vsel %vm811, %v5000, %v4981
        %v5003 = vsel %vm811, %v5001, %v4983
        %v5004 = vsel %vm814, %v5002, %v4989
        %v5005 = vsel %vm814, %v5003, %v4991
        %s5006 = scalar_lea.vmem [#allocation14], 3328
        %v5007 = vld [vmem:[%s5006] sm:$0xff]
        %v5008 = vld [vmem:[%s5006 + $0x8] sm:$0xff]
        %v5009 = vld [vmem:[%s5006 + $0x10] sm:$0xff]
        %v5010 = vld [vmem:[%s5006 + $0x18] sm:$0xff]
        %v5011 = vld [vmem:[%s5006 + $0x20] sm:$0xff]
        %v5012 = vld [vmem:[%s5006 + $0x28] sm:$0xff]
        %v5013 = vld [vmem:[%s5006 + $0x30] sm:$0xff]
        %v5014 = vld [vmem:[%s5006 + $0x38] sm:$0xff]
        %v5015 = vld [vmem:[%s5006 + $0x40] sm:$0xff]
        %v5016 = vld [vmem:[%s5006 + $0x48] sm:$0xff]
        %v5017 = vld [vmem:[%s5006 + $0x50] sm:$0xff]
        %v5018 = vld [vmem:[%s5006 + $0x58] sm:$0xff]
        %v5019 = vld [vmem:[%s5006 + $0x60] sm:$0xff]
        %v5020 = vld [vmem:[%s5006 + $0x68] sm:$0xff]
        %v5021 = vld [vmem:[%s5006 + $0x70] sm:$0xff]
        %v5022 = vld [vmem:[%s5006 + $0x78] sm:$0xff]
        %v5023 = vld [vmem:[%s5006 + $0x80] sm:$0xff]
        %v5024 = vld [vmem:[%s5006 + $0x88] sm:$0xff]
        %v5025 = vld [vmem:[%s5006 + $0x90] sm:$0xff]
        %v5026 = vld [vmem:[%s5006 + $0x98] sm:$0xff]
        %v5027 = vld [vmem:[%s5006 + $0xa0] sm:$0xff]
        %v5028 = vld [vmem:[%s5006 + $0xa8] sm:$0xff]
        %v5029 = vld [vmem:[%s5006 + $0xb0] sm:$0xff]
        %v5030 = vld [vmem:[%s5006 + $0xb8] sm:$0xff]
        %v5031 = vld [vmem:[%s5006 + $0xc0] sm:$0xff]
        %v5032 = vld [vmem:[%s5006 + $0xc8] sm:$0xff]
        %v5033 = vld [vmem:[%s5006 + $0xd0] sm:$0xff]
        %v5034 = vld [vmem:[%s5006 + $0xd8] sm:$0xff]
        %v5035 = vld [vmem:[%s5006 + $0xe0] sm:$0xff]
        %v5036 = vld [vmem:[%s5006 + $0xe8] sm:$0xff]
        %v5037 = vld [vmem:[%s5006 + $0xf0] sm:$0xff]
        %v5038 = vld [vmem:[%s5006 + $0xf8] sm:$0xff]
        %5039 = vmatprep.subr.mxu0 0.0
        %5040 = vmatpush1.msra.mxu0 %v5007
        %5041 = vmatprep.subr.mxu0 0.0
        %5042 = vmatpush1.msra.mxu0 %v5008
        %5043 = vmatprep.subr.mxu0 0.0
        %5044 = vmatpush1.msra.mxu0 %v5009
        %5045 = vmatprep.subr.mxu0 0.0
        %5046 = vmatpush1.msra.mxu0 %v5010
        %5047 = vmatprep.subr.mxu0 0.0
        %5048 = vmatpush1.msra.mxu0 %v5011
        %5049 = vmatprep.subr.mxu0 0.0
        %5050 = vmatpush1.msra.mxu0 %v5012
        %5051 = vmatprep.subr.mxu0 0.0
        %5052 = vmatpush1.msra.mxu0 %v5013
        %5053 = vmatprep.subr.mxu0 0.0
        %5054 = vmatpush1.msra.mxu0 %v5014
        %5055 = vmatprep.subr.mxu0 0.0
        %5056 = vmatpush1.msra.mxu0 %v5015
        %5057 = vmatprep.subr.mxu0 0.0
        %5058 = vmatpush1.msra.mxu0 %v5016
        %5059 = vmatprep.subr.mxu0 0.0
        %5060 = vmatpush1.msra.mxu0 %v5017
        %5061 = vmatprep.subr.mxu0 0.0
        %5062 = vmatpush1.msra.mxu0 %v5018
        %5063 = vmatprep.subr.mxu0 0.0
        %5064 = vmatpush1.msra.mxu0 %v5019
        %5065 = vmatprep.subr.mxu0 0.0
        %5066 = vmatpush1.msra.mxu0 %v5020
        %5067 = vmatprep.subr.mxu0 0.0
        %5068 = vmatpush1.msra.mxu0 %v5021
        %5069 = vmatprep.subr.mxu0 0.0
        %5070 = vmatpush1.msra.mxu0 %v5022
        %5071 = vmatprep.subr.mxu0 0.0
        %5072 = vmatpush1.msra.mxu0 %v5023
        %5073 = vmatprep.subr.mxu0 0.0
        %5074 = vmatpush1.msra.mxu0 %v5024
        %5075 = vmatprep.subr.mxu0 0.0
        %5076 = vmatpush1.msra.mxu0 %v5025
        %5077 = vmatprep.subr.mxu0 0.0
        %5078 = vmatpush1.msra.mxu0 %v5026
        %5079 = vmatprep.subr.mxu0 0.0
        %5080 = vmatpush1.msra.mxu0 %v5027
        %5081 = vmatprep.subr.mxu0 0.0
        %5082 = vmatpush1.msra.mxu0 %v5028
        %5083 = vmatprep.subr.mxu0 0.0
        %5084 = vmatpush1.msra.mxu0 %v5029
        %5085 = vmatprep.subr.mxu0 0.0
        %5086 = vmatpush1.msra.mxu0 %v5030
        %5087 = vmatprep.subr.mxu0 0.0
        %5088 = vmatpush1.msra.mxu0 %v5031
        %5089 = vmatprep.subr.mxu0 0.0
        %5090 = vmatpush1.msra.mxu0 %v5032
        %5091 = vmatprep.subr.mxu0 0.0
        %5092 = vmatpush1.msra.mxu0 %v5033
        %5093 = vmatprep.subr.mxu0 0.0
        %5094 = vmatpush1.msra.mxu0 %v5034
        %5095 = vmatprep.subr.mxu0 0.0
        %5096 = vmatpush1.msra.mxu0 %v5035
        %5097 = vmatprep.subr.mxu0 0.0
        %5098 = vmatpush1.msra.mxu0 %v5036
        %5099 = vmatprep.subr.mxu0 0.0
        %5100 = vmatpush1.msra.mxu0 %v5037
        %5101 = vmatprep.subr.mxu0 0.0
        %5102 = vmatpush1.msra.mxu0 %v5038
        %5103 = vmatprep.mubr.f32.mxu0 %v5004
        %5104 = vmatmul.mubr.f32.gmra.mrb[0].mxu0 %v4998
        %v5105 = vpop.f32.mrb[0].mxu0
        %v5106 = vadd.f32 0.0, %v5105
        %v5107 = vpop.f32.mrb[0].mxu0
        %5108 = vmatprep.mubr.f32.mxu0 %v5005
        %5109 = vmatmul.mubr.f32.gmra.mrb[0].mxu0 %v4999
        %v5110 = vpop.f32.mrb[0].mxu0
        %v5111 = vadd.f32 0.0, %v5110
        %v5112 = vpop.f32.mrb[0].mxu0
        %5113 = vdwg.mxu0
        %v5114 = vadd.f32 %v4928, %v5106
        %v5115 = vadd.f32 %v4929, %v5111
        %v5116 = vld [vmem:[#allocation2 + $0x25] sm:$0xff]
        %v5117 = vld [vmem:[#allocation2 + $0x2d] sm:$0xff]
        %v5118 = vld [vmem:[#allocation2 + $0x26] sm:$0xff]
        %v5119 = vld [vmem:[#allocation2 + $0x2e] sm:$0xff]
        %v5120 = vld [vmem:[#allocation2 + $0x27] sm:$0xff]
        %v5121 = vld [vmem:[#allocation2 + $0x2f] sm:$0xff]
        %v5122 = vld [vmem:[#allocation2 + $0x28] sm:$0xff]
        %v5123 = vld [vmem:[#allocation2 + $0x30] sm:$0xff]
        %v5124 = vld [vmem:[#allocation2 + $0x29] sm:$0xff]
        %v5125 = vld [vmem:[#allocation2 + $0x31] sm:$0xff]
        %v5126 = vld [vmem:[#allocation2 + $0x2a] sm:$0xff]
        %v5127 = vld [vmem:[#allocation2 + $0x32] sm:$0xff]
        %v5128 = vld [vmem:[#allocation2 + $0x2b] sm:$0xff]
        %v5129 = vld [vmem:[#allocation2 + $0x33] sm:$0xff]
        %v5130 = vld [vmem:[#allocation2 + $0x2c] sm:$0xff]
        %v5131 = vld [vmem:[#allocation2 + $0x34] sm:$0xff]
        %5134 = vrot.lane.b32.xlu0 %v5118, 32
        %v5135 = vpop.permute.xlu0 %5134
        %5136 = vrot.lane.b32.xlu0 %v5119, 32
        %v5137 = vpop.permute.xlu0 %5136
        %5142 = vrot.lane.b32.xlu0 %v5120, 64
        %v5143 = vpop.permute.xlu0 %5142
        %5144 = vrot.lane.b32.xlu0 %v5121, 64
        %v5145 = vpop.permute.xlu0 %5144
        %5150 = vrot.lane.b32.xlu0 %v5122, 96
        %v5151 = vpop.permute.xlu0 %5150
        %5152 = vrot.lane.b32.xlu0 %v5123, 96
        %v5153 = vpop.permute.xlu0 %5152
        %5158 = vrot.lane.b32.xlu0 %v5126, 32
        %v5159 = vpop.permute.xlu0 %5158
        %5160 = vrot.lane.b32.xlu0 %v5127, 32
        %v5161 = vpop.permute.xlu0 %5160
        %5166 = vrot.lane.b32.xlu0 %v5128, 64
        %v5167 = vpop.permute.xlu0 %5166
        %5168 = vrot.lane.b32.xlu0 %v5129, 64
        %v5169 = vpop.permute.xlu0 %5168
        %5174 = vrot.lane.b32.xlu0 %v5130, 96
        %v5175 = vpop.permute.xlu0 %5174
        %5176 = vrot.lane.b32.xlu0 %v5131, 96
        %v5177 = vpop.permute.xlu0 %5176
        %v5180 = vsel %vm627, %v5116, %v5135
        %v5181 = vsel %vm627, %v5117, %v5137
        %v5182 = vsel %vm811, %v5180, %v5143
        %v5183 = vsel %vm811, %v5181, %v5145
        %v5184 = vsel %vm814, %v5182, %v5151
        %v5185 = vsel %vm814, %v5183, %v5153
        %v5186 = vsel %vm627, %v5124, %v5159
        %v5187 = vsel %vm627, %v5125, %v5161
        %v5188 = vsel %vm811, %v5186, %v5167
        %v5189 = vsel %vm811, %v5187, %v5169
        %v5190 = vsel %vm814, %v5188, %v5175
        %v5191 = vsel %vm814, %v5189, %v5177
        %s5192 = scalar_lea.vmem [#allocation14], 3584
        %v5193 = vld [vmem:[%s5192] sm:$0xff]
        %v5194 = vld [vmem:[%s5192 + $0x8] sm:$0xff]
        %v5195 = vld [vmem:[%s5192 + $0x10] sm:$0xff]
        %v5196 = vld [vmem:[%s5192 + $0x18] sm:$0xff]
        %v5197 = vld [vmem:[%s5192 + $0x20] sm:$0xff]
        %v5198 = vld [vmem:[%s5192 + $0x28] sm:$0xff]
        %v5199 = vld [vmem:[%s5192 + $0x30] sm:$0xff]
        %v5200 = vld [vmem:[%s5192 + $0x38] sm:$0xff]
        %v5201 = vld [vmem:[%s5192 + $0x40] sm:$0xff]
        %v5202 = vld [vmem:[%s5192 + $0x48] sm:$0xff]
        %v5203 = vld [vmem:[%s5192 + $0x50] sm:$0xff]
        %v5204 = vld [vmem:[%s5192 + $0x58] sm:$0xff]
        %v5205 = vld [vmem:[%s5192 + $0x60] sm:$0xff]
        %v5206 = vld [vmem:[%s5192 + $0x68] sm:$0xff]
        %v5207 = vld [vmem:[%s5192 + $0x70] sm:$0xff]
        %v5208 = vld [vmem:[%s5192 + $0x78] sm:$0xff]
        %v5209 = vld [vmem:[%s5192 + $0x80] sm:$0xff]
        %v5210 = vld [vmem:[%s5192 + $0x88] sm:$0xff]
        %v5211 = vld [vmem:[%s5192 + $0x90] sm:$0xff]
        %v5212 = vld [vmem:[%s5192 + $0x98] sm:$0xff]
        %v5213 = vld [vmem:[%s5192 + $0xa0] sm:$0xff]
        %v5214 = vld [vmem:[%s5192 + $0xa8] sm:$0xff]
        %v5215 = vld [vmem:[%s5192 + $0xb0] sm:$0xff]
        %v5216 = vld [vmem:[%s5192 + $0xb8] sm:$0xff]
        %v5217 = vld [vmem:[%s5192 + $0xc0] sm:$0xff]
        %v5218 = vld [vmem:[%s5192 + $0xc8] sm:$0xff]
        %v5219 = vld [vmem:[%s5192 + $0xd0] sm:$0xff]
        %v5220 = vld [vmem:[%s5192 + $0xd8] sm:$0xff]
        %v5221 = vld [vmem:[%s5192 + $0xe0] sm:$0xff]
        %v5222 = vld [vmem:[%s5192 + $0xe8] sm:$0xff]
        %v5223 = vld [vmem:[%s5192 + $0xf0] sm:$0xff]
        %v5224 = vld [vmem:[%s5192 + $0xf8] sm:$0xff]
        %5225 = vmatprep.subr.mxu0 0.0
        %5226 = vmatpush1.msra.mxu0 %v5193
        %5227 = vmatprep.subr.mxu0 0.0
        %5228 = vmatpush1.msra.mxu0 %v5194
        %5229 = vmatprep.subr.mxu0 0.0
        %5230 = vmatpush1.msra.mxu0 %v5195
        %5231 = vmatprep.subr.mxu0 0.0
        %5232 = vmatpush1.msra.mxu0 %v5196
        %5233 = vmatprep.subr.mxu0 0.0
        %5234 = vmatpush1.msra.mxu0 %v5197
        %5235 = vmatprep.subr.mxu0 0.0
        %5236 = vmatpush1.msra.mxu0 %v5198
        %5237 = vmatprep.subr.mxu0 0.0
        %5238 = vmatpush1.msra.mxu0 %v5199
        %5239 = vmatprep.subr.mxu0 0.0
        %5240 = vmatpush1.msra.mxu0 %v5200
        %5241 = vmatprep.subr.mxu0 0.0
        %5242 = vmatpush1.msra.mxu0 %v5201
        %5243 = vmatprep.subr.mxu0 0.0
        %5244 = vmatpush1.msra.mxu0 %v5202
        %5245 = vmatprep.subr.mxu0 0.0
        %5246 = vmatpush1.msra.mxu0 %v5203
        %5247 = vmatprep.subr.mxu0 0.0
        %5248 = vmatpush1.msra.mxu0 %v5204
        %5249 = vmatprep.subr.mxu0 0.0
        %5250 = vmatpush1.msra.mxu0 %v5205
        %5251 = vmatprep.subr.mxu0 0.0
        %5252 = vmatpush1.msra.mxu0 %v5206
        %5253 = vmatprep.subr.mxu0 0.0
        %5254 = vmatpush1.msra.mxu0 %v5207
        %5255 = vmatprep.subr.mxu0 0.0
        %5256 = vmatpush1.msra.mxu0 %v5208
        %5257 = vmatprep.subr.mxu0 0.0
        %5258 = vmatpush1.msra.mxu0 %v5209
        %5259 = vmatprep.subr.mxu0 0.0
        %5260 = vmatpush1.msra.mxu0 %v5210
        %5261 = vmatprep.subr.mxu0 0.0
        %5262 = vmatpush1.msra.mxu0 %v5211
        %5263 = vmatprep.subr.mxu0 0.0
        %5264 = vmatpush1.msra.mxu0 %v5212
        %5265 = vmatprep.subr.mxu0 0.0
        %5266 = vmatpush1.msra.mxu0 %v5213
        %5267 = vmatprep.subr.mxu0 0.0
        %5268 = vmatpush1.msra.mxu0 %v5214
        %5269 = vmatprep.subr.mxu0 0.0
        %5270 = vmatpush1.msra.mxu0 %v5215
        %5271 = vmatprep.subr.mxu0 0.0
        %5272 = vmatpush1.msra.mxu0 %v5216
        %5273 = vmatprep.subr.mxu0 0.0
        %5274 = vmatpush1.msra.mxu0 %v5217
        %5275 = vmatprep.subr.mxu0 0.0
        %5276 = vmatpush1.msra.mxu0 %v5218
        %5277 = vmatprep.subr.mxu0 0.0
        %5278 = vmatpush1.msra.mxu0 %v5219
        %5279 = vmatprep.subr.mxu0 0.0
        %5280 = vmatpush1.msra.mxu0 %v5220
        %5281 = vmatprep.subr.mxu0 0.0
        %5282 = vmatpush1.msra.mxu0 %v5221
        %5283 = vmatprep.subr.mxu0 0.0
        %5284 = vmatpush1.msra.mxu0 %v5222
        %5285 = vmatprep.subr.mxu0 0.0
        %5286 = vmatpush1.msra.mxu0 %v5223
        %5287 = vmatprep.subr.mxu0 0.0
        %5288 = vmatpush1.msra.mxu0 %v5224
        %5289 = vmatprep.mubr.f32.mxu0 %v5190
        %5290 = vmatmul.mubr.f32.gmra.mrb[0].mxu0 %v5184
        %v5291 = vpop.f32.mrb[0].mxu0
        %v5292 = vadd.f32 0.0, %v5291
        %v5293 = vpop.f32.mrb[0].mxu0
        %5294 = vmatprep.mubr.f32.mxu0 %v5191
        %5295 = vmatmul.mubr.f32.gmra.mrb[0].mxu0 %v5185
        %v5296 = vpop.f32.mrb[0].mxu0
        %v5297 = vadd.f32 0.0, %v5296
        %v5298 = vpop.f32.mrb[0].mxu0
        %5299 = vdwg.mxu0
        %v5300 = vadd.f32 %v5114, %v5292
        %v5301 = vadd.f32 %v5115, %v5297
        %v5303 = vlaneseq
        %v5304 = vshrl.u32 %v5303, 7
        %v5305 = vsub.s32 0, %v5304
        %v5306 = vrot.slane %v4219, %v5305
        %v5308 = vmul.f32 %v5300, %v5306
        %v5309 = vmul.f32 %v5301, %v5306
        %v5311 = vlaneseq
        %v5312 = vshrl.u32 %v5311, 7
        %v5313 = vsub.s32 0, %v5312
        %v5314 = vrot.slane %v4221, %v5313
        %v5316 = vadd.f32 %v5308, %v5314
        %v5317 = vadd.f32 %v5309, %v5314
        %v5318 = vmax.f32 %v5316, 0.0
        %v5319 = vmax.f32 %v5317, 0.0
        %5320 = vst [vmem:[#allocation3 + $0x8] sm:$0xff] %v5318
        %5321 = vst [vmem:[#allocation3 + $0x10] sm:$0xff] %v5319
        %v5322 = vld [vmem:[#allocation3 + $0x8] sm:$0xff]
        %v5323 = vld [vmem:[#allocation3 + $0x10] sm:$0xff]
        %v5324 = vld [vmem:[#allocation3 + $0x7] sm:$0xff]
        %v5325 = vld [vmem:[#allocation3 + $0xf] sm:$0xff]
        %v5326 = vmax.f32 %v5324, %v5322
        %v5327 = vmax.f32 %v5325, %v5323
        %v5328 = vld [vmem:[#allocation3 + $0x9] sm:$0xff]
        %v5329 = vld [vmem:[#allocation3 + $0x11] sm:$0xff]
        %v5330 = vmax.f32 %v5326, %v5328
        %v5331 = vmax.f32 %v5327, %v5329
        %s5332 = scalar_lea.vmem %s4, 384
        %v5333 = vld [vmem:[%s5332] sm:$0xff]
        %v5334 = vld [vmem:[%s5332 + $0x8] sm:$0xff]
        %v5335 = vld [vmem:[%s5332 + $0x10] sm:$0xff]
        %v5336 = vld [vmem:[%s5332 + $0x18] sm:$0xff]
        %v5337 = vld [vmem:[%s5332 + $0x20] sm:$0xff]
        %v5338 = vld [vmem:[%s5332 + $0x28] sm:$0xff]
        %v5339 = vld [vmem:[%s5332 + $0x30] sm:$0xff]
        %v5340 = vld [vmem:[%s5332 + $0x38] sm:$0xff]
        %v5341 = vld [vmem:[%s5332 + $0x40] sm:$0xff]
        %v5342 = vld [vmem:[%s5332 + $0x48] sm:$0xff]
        %v5343 = vld [vmem:[%s5332 + $0x50] sm:$0xff]
        %v5344 = vld [vmem:[%s5332 + $0x58] sm:$0xff]
        %v5345 = vld [vmem:[%s5332 + $0x60] sm:$0xff]
        %v5346 = vld [vmem:[%s5332 + $0x68] sm:$0xff]
        %v5347 = vld [vmem:[%s5332 + $0x70] sm:$0xff]
        %v5348 = vld [vmem:[%s5332 + $0x78] sm:$0xff]
        %s5349 = scalar_lea.vmem [#allocation12], 384
        %v5350 = vld [vmem:[%s5349] sm:$0xff]
        %v5351 = vld [vmem:[%s5349 + $0x8] sm:$0xff]
        %v5352 = vld [vmem:[%s5349 + $0x10] sm:$0xff]
        %v5353 = vld [vmem:[%s5349 + $0x18] sm:$0xff]
        %v5354 = vld [vmem:[%s5349 + $0x20] sm:$0xff]
        %v5355 = vld [vmem:[%s5349 + $0x28] sm:$0xff]
        %v5356 = vld [vmem:[%s5349 + $0x30] sm:$0xff]
        %v5357 = vld [vmem:[%s5349 + $0x38] sm:$0xff]
        %v5358 = vld [vmem:[%s5349 + $0x40] sm:$0xff]
        %v5359 = vld [vmem:[%s5349 + $0x48] sm:$0xff]
        %v5360 = vld [vmem:[%s5349 + $0x50] sm:$0xff]
        %v5361 = vld [vmem:[%s5349 + $0x58] sm:$0xff]
        %v5362 = vld [vmem:[%s5349 + $0x60] sm:$0xff]
        %v5363 = vld [vmem:[%s5349 + $0x68] sm:$0xff]
        %v5364 = vld [vmem:[%s5349 + $0x70] sm:$0xff]
        %v5365 = vld [vmem:[%s5349 + $0x78] sm:$0xff]
        %s5366 = scalar_lea.vmem [#allocation15], 4
        %v5367 = vld [vmem:[%s5366] sm:$0x1]
        %s5368 = scalar_lea.vmem [#allocation17], 4
        %v5369 = vld [vmem:[%s5368] sm:$0x1]
        %5370 = vmatprep.subr.mxu0 0.0
        %5371 = vmatpush1.msra.mxu0 %v5333
        %5372 = vmatprep.subr.mxu0 0.0
        %5373 = vmatpush1.msra.mxu0 %v5334
        %5374 = vmatprep.subr.mxu0 0.0
        %5375 = vmatpush1.msra.mxu0 %v5335
        %5376 = vmatprep.subr.mxu0 0.0
        %5377 = vmatpush1.msra.mxu0 %v5336
        %5378 = vmatprep.subr.mxu0 0.0
        %5379 = vmatpush1.msra.mxu0 %v5337
        %5380 = vmatprep.subr.mxu0 0.0
        %5381 = vmatpush1.msra.mxu0 %v5338
        %5382 = vmatprep.subr.mxu0 0.0
        %5383 = vmatpush1.msra.mxu0 %v5339
        %5384 = vmatprep.subr.mxu0 0.0
        %5385 = vmatpush1.msra.mxu0 %v5340
        %5386 = vmatprep.subr.mxu0 0.0
        %5387 = vmatpush1.msra.mxu0 %v5341
        %5388 = vmatprep.subr.mxu0 0.0
        %5389 = vmatpush1.msra.mxu0 %v5342
        %5390 = vmatprep.subr.mxu0 0.0
        %5391 = vmatpush1.msra.mxu0 %v5343
        %5392 = vmatprep.subr.mxu0 0.0
        %5393 = vmatpush1.msra.mxu0 %v5344
        %5394 = vmatprep.subr.mxu0 0.0
        %5395 = vmatpush1.msra.mxu0 %v5345
        %5396 = vmatprep.subr.mxu0 0.0
        %5397 = vmatpush1.msra.mxu0 %v5346
        %5398 = vmatprep.subr.mxu0 0.0
        %5399 = vmatpush1.msra.mxu0 %v5347
        %5400 = vmatprep.subr.mxu0 0.0
        %5401 = vmatpush1.msra.mxu0 %v5348
        %5402 = vmatprep.subr.mxu0 0.0
        %5403 = vmatpush1.msra.mxu0 0.0
        %5404 = vmatprep.subr.mxu0 0.0
        %5405 = vmatpush1.msra.mxu0 0.0
        %5406 = vmatprep.subr.mxu0 0.0
        %5407 = vmatpush1.msra.mxu0 0.0
        %5408 = vmatprep.subr.mxu0 0.0
        %5409 = vmatpush1.msra.mxu0 0.0
        %5410 = vmatprep.subr.mxu0 0.0
        %5411 = vmatpush1.msra.mxu0 0.0
        %5412 = vmatprep.subr.mxu0 0.0
        %5413 = vmatpush1.msra.mxu0 0.0
        %5414 = vmatprep.subr.mxu0 0.0
        %5415 = vmatpush1.msra.mxu0 0.0
        %5416 = vmatprep.subr.mxu0 0.0
        %5417 = vmatpush1.msra.mxu0 0.0
        %5418 = vmatprep.subr.mxu0 0.0
        %5419 = vmatpush1.msra.mxu0 0.0
        %5420 = vmatprep.subr.mxu0 0.0
        %5421 = vmatpush1.msra.mxu0 0.0
        %5422 = vmatprep.subr.mxu0 0.0
        %5423 = vmatpush1.msra.mxu0 0.0
        %5424 = vmatprep.subr.mxu0 0.0
        %5425 = vmatpush1.msra.mxu0 0.0
        %5426 = vmatprep.subr.mxu0 0.0
        %5427 = vmatpush1.msra.mxu0 0.0
        %5428 = vmatprep.subr.mxu0 0.0
        %5429 = vmatpush1.msra.mxu0 0.0
        %5430 = vmatprep.subr.mxu0 0.0
        %5431 = vmatpush1.msra.mxu0 0.0
        %5432 = vmatprep.subr.mxu0 0.0
        %5433 = vmatpush1.msra.mxu0 0.0
        %5434 = vmatprep.mubr.f32.mxu0 0.0
        %5435 = vmatmul.mubr.f32.gmra.mrb[0].mxu0 %v5322
        %v5436 = vpop.f32.mrb[0].mxu0
        %v5437 = vadd.f32 0.0, %v5436
        %v5438 = vpop.f32.mrb[0].mxu0
        %5439 = vmatprep.mubr.f32.mxu0 0.0
        %5440 = vmatmul.mubr.f32.gmra.mrb[0].mxu0 %v5323
        %v5441 = vpop.f32.mrb[0].mxu0
        %v5442 = vadd.f32 0.0, %v5441
        %v5443 = vpop.f32.mrb[0].mxu0
        %5444 = vdwg.mxu0
        %5445 = vst.msk [vmem:[#allocation2 + $0x18] sm:$0xff] %vm627, %v5437
        %5446 = vst.msk [vmem:[#allocation2 + $0x20] sm:$0xff] %vm627, %v5442
        %v5447 = vld [vmem:[#allocation2 + $0x5] sm:$0xff]
        %v5448 = vld [vmem:[#allocation2 + $0xd] sm:$0xff]
        %v5449 = vld [vmem:[#allocation2 + $0x6] sm:$0xff]
        %v5450 = vld [vmem:[#allocation2 + $0xe] sm:$0xff]
        %v5451 = vld [vmem:[#allocation2 + $0x7] sm:$0xff]
        %v5452 = vld [vmem:[#allocation2 + $0xf] sm:$0xff]
        %v5453 = vld [vmem:[#allocation2 + $0x8] sm:$0xff]
        %v5454 = vld [vmem:[#allocation2 + $0x10] sm:$0xff]
        %v5455 = vld [vmem:[#allocation2 + $0x9] sm:$0xff]
        %v5456 = vld [vmem:[#allocation2 + $0x11] sm:$0xff]
        %v5457 = vld [vmem:[#allocation2 + $0xa] sm:$0xff]
        %v5458 = vld [vmem:[#allocation2 + $0x12] sm:$0xff]
        %v5459 = vld [vmem:[#allocation2 + $0xb] sm:$0xff]
        %v5460 = vld [vmem:[#allocation2 + $0x13] sm:$0xff]
        %v5461 = vld [vmem:[#allocation2 + $0xc] sm:$0xff]
        %v5462 = vld [vmem:[#allocation2 + $0x14] sm:$0xff]
        %5465 = vrot.lane.b32.xlu0 %v5449, 32
        %v5466 = vpop.permute.xlu0 %5465
        %5467 = vrot.lane.b32.xlu0 %v5450, 32
        %v5468 = vpop.permute.xlu0 %5467
        %5473 = vrot.lane.b32.xlu0 %v5451, 64
        %v5474 = vpop.permute.xlu0 %5473
        %5475 = vrot.lane.b32.xlu0 %v5452, 64
        %v5476 = vpop.permute.xlu0 %5475
        %5481 = vrot.lane.b32.xlu0 %v5453, 96
        %v5482 = vpop.permute.xlu0 %5481
        %5483 = vrot.lane.b32.xlu0 %v5454, 96
        %v5484 = vpop.permute.xlu0 %5483
        %5489 = vrot.lane.b32.xlu0 %v5457, 32
        %v5490 = vpop.permute.xlu0 %5489
        %5491 = vrot.lane.b32.xlu0 %v5458, 32
        %v5492 = vpop.permute.xlu0 %5491
        %5497 = vrot.lane.b32.xlu0 %v5459, 64
        %v5498 = vpop.permute.xlu0 %5497
        %5499 = vrot.lane.b32.xlu0 %v5460, 64
        %v5500 = vpop.permute.xlu0 %5499
        %5505 = vrot.lane.b32.xlu0 %v5461, 96
        %v5506 = vpop.permute.xlu0 %5505
        %5507 = vrot.lane.b32.xlu0 %v5462, 96
        %v5508 = vpop.permute.xlu0 %5507
        %v5511 = vsel %vm627, %v5447, %v5466
        %v5512 = vsel %vm627, %v5448, %v5468
        %v5513 = vsel %vm811, %v5511, %v5474
        %v5514 = vsel %vm811, %v5512, %v5476
        %v5515 = vsel %vm814, %v5513, %v5482
        %v5516 = vsel %vm814, %v5514, %v5484
        %v5517 = vsel %vm627, %v5455, %v5490
        %v5518 = vsel %vm627, %v5456, %v5492
        %v5519 = vsel %vm811, %v5517, %v5498
        %v5520 = vsel %vm811, %v5518, %v5500
        %v5521 = vsel %vm814, %v5519, %v5506
        %v5522 = vsel %vm814, %v5520, %v5508
        %s5523 = scalar_lea.vmem [#allocation14], 3840
        %v5524 = vld [vmem:[%s5523] sm:$0xff]
        %v5525 = vld [vmem:[%s5523 + $0x8] sm:$0xff]
        %v5526 = vld [vmem:[%s5523 + $0x10] sm:$0xff]
        %v5527 = vld [vmem:[%s5523 + $0x18] sm:$0xff]
        %v5528 = vld [vmem:[%s5523 + $0x20] sm:$0xff]
        %v5529 = vld [vmem:[%s5523 + $0x28] sm:$0xff]
        %v5530 = vld [vmem:[%s5523 + $0x30] sm:$0xff]
        %v5531 = vld [vmem:[%s5523 + $0x38] sm:$0xff]
        %v5532 = vld [vmem:[%s5523 + $0x40] sm:$0xff]
        %v5533 = vld [vmem:[%s5523 + $0x48] sm:$0xff]
        %v5534 = vld [vmem:[%s5523 + $0x50] sm:$0xff]
        %v5535 = vld [vmem:[%s5523 + $0x58] sm:$0xff]
        %v5536 = vld [vmem:[%s5523 + $0x60] sm:$0xff]
        %v5537 = vld [vmem:[%s5523 + $0x68] sm:$0xff]
        %v5538 = vld [vmem:[%s5523 + $0x70] sm:$0xff]
        %v5539 = vld [vmem:[%s5523 + $0x78] sm:$0xff]
        %v5540 = vld [vmem:[%s5523 + $0x80] sm:$0xff]
        %v5541 = vld [vmem:[%s5523 + $0x88] sm:$0xff]
        %v5542 = vld [vmem:[%s5523 + $0x90] sm:$0xff]
        %v5543 = vld [vmem:[%s5523 + $0x98] sm:$0xff]
        %v5544 = vld [vmem:[%s5523 + $0xa0] sm:$0xff]
        %v5545 = vld [vmem:[%s5523 + $0xa8] sm:$0xff]
        %v5546 = vld [vmem:[%s5523 + $0xb0] sm:$0xff]
        %v5547 = vld [vmem:[%s5523 + $0xb8] sm:$0xff]
        %v5548 = vld [vmem:[%s5523 + $0xc0] sm:$0xff]
        %v5549 = vld [vmem:[%s5523 + $0xc8] sm:$0xff]
        %v5550 = vld [vmem:[%s5523 + $0xd0] sm:$0xff]
        %v5551 = vld [vmem:[%s5523 + $0xd8] sm:$0xff]
        %v5552 = vld [vmem:[%s5523 + $0xe0] sm:$0xff]
        %v5553 = vld [vmem:[%s5523 + $0xe8] sm:$0xff]
        %v5554 = vld [vmem:[%s5523 + $0xf0] sm:$0xff]
        %v5555 = vld [vmem:[%s5523 + $0xf8] sm:$0xff]
        %5556 = vmatprep.subr.mxu0 0.0
        %5557 = vmatpush1.msra.mxu0 %v5524
        %5558 = vmatprep.subr.mxu0 0.0
        %5559 = vmatpush1.msra.mxu0 %v5525
        %5560 = vmatprep.subr.mxu0 0.0
        %5561 = vmatpush1.msra.mxu0 %v5526
        %5562 = vmatprep.subr.mxu0 0.0
        %5563 = vmatpush1.msra.mxu0 %v5527
        %5564 = vmatprep.subr.mxu0 0.0
        %5565 = vmatpush1.msra.mxu0 %v5528
        %5566 = vmatprep.subr.mxu0 0.0
        %5567 = vmatpush1.msra.mxu0 %v5529
        %5568 = vmatprep.subr.mxu0 0.0
        %5569 = vmatpush1.msra.mxu0 %v5530
        %5570 = vmatprep.subr.mxu0 0.0
        %5571 = vmatpush1.msra.mxu0 %v5531
        %5572 = vmatprep.subr.mxu0 0.0
        %5573 = vmatpush1.msra.mxu0 %v5532
        %5574 = vmatprep.subr.mxu0 0.0
        %5575 = vmatpush1.msra.mxu0 %v5533
        %5576 = vmatprep.subr.mxu0 0.0
        %5577 = vmatpush1.msra.mxu0 %v5534
        %5578 = vmatprep.subr.mxu0 0.0
        %5579 = vmatpush1.msra.mxu0 %v5535
        %5580 = vmatprep.subr.mxu0 0.0
        %5581 = vmatpush1.msra.mxu0 %v5536
        %5582 = vmatprep.subr.mxu0 0.0
        %5583 = vmatpush1.msra.mxu0 %v5537
        %5584 = vmatprep.subr.mxu0 0.0
        %5585 = vmatpush1.msra.mxu0 %v5538
        %5586 = vmatprep.subr.mxu0 0.0
        %5587 = vmatpush1.msra.mxu0 %v5539
        %5588 = vmatprep.subr.mxu0 0.0
        %5589 = vmatpush1.msra.mxu0 %v5540
        %5590 = vmatprep.subr.mxu0 0.0
        %5591 = vmatpush1.msra.mxu0 %v5541
        %5592 = vmatprep.subr.mxu0 0.0
        %5593 = vmatpush1.msra.mxu0 %v5542
        %5594 = vmatprep.subr.mxu0 0.0
        %5595 = vmatpush1.msra.mxu0 %v5543
        %5596 = vmatprep.subr.mxu0 0.0
        %5597 = vmatpush1.msra.mxu0 %v5544
        %5598 = vmatprep.subr.mxu0 0.0
        %5599 = vmatpush1.msra.mxu0 %v5545
        %5600 = vmatprep.subr.mxu0 0.0
        %5601 = vmatpush1.msra.mxu0 %v5546
        %5602 = vmatprep.subr.mxu0 0.0
        %5603 = vmatpush1.msra.mxu0 %v5547
        %5604 = vmatprep.subr.mxu0 0.0
        %5605 = vmatpush1.msra.mxu0 %v5548
        %5606 = vmatprep.subr.mxu0 0.0
        %5607 = vmatpush1.msra.mxu0 %v5549
        %5608 = vmatprep.subr.mxu0 0.0
        %5609 = vmatpush1.msra.mxu0 %v5550
        %5610 = vmatprep.subr.mxu0 0.0
        %5611 = vmatpush1.msra.mxu0 %v5551
        %5612 = vmatprep.subr.mxu0 0.0
        %5613 = vmatpush1.msra.mxu0 %v5552
        %5614 = vmatprep.subr.mxu0 0.0
        %5615 = vmatpush1.msra.mxu0 %v5553
        %5616 = vmatprep.subr.mxu0 0.0
        %5617 = vmatpush1.msra.mxu0 %v5554
        %5618 = vmatprep.subr.mxu0 0.0
        %5619 = vmatpush1.msra.mxu0 %v5555
        %5620 = vmatprep.mubr.f32.mxu0 %v5521
        %5621 = vmatmul.mubr.f32.gmra.mrb[0].mxu0 %v5515
        %v5622 = vpop.f32.mrb[0].mxu0
        %v5623 = vadd.f32 0.0, %v5622
        %v5624 = vpop.f32.mrb[0].mxu0
        %5625 = vmatprep.mubr.f32.mxu0 %v5522
        %5626 = vmatmul.mubr.f32.gmra.mrb[0].mxu0 %v5516
        %v5627 = vpop.f32.mrb[0].mxu0
        %v5628 = vadd.f32 0.0, %v5627
        %v5629 = vpop.f32.mrb[0].mxu0
        %5630 = vdwg.mxu0
        %5631 = vmatprep.subr.mxu0 0.0
        %5632 = vmatpush1.msra.mxu0 %v5350
        %5633 = vmatprep.subr.mxu0 0.0
        %5634 = vmatpush1.msra.mxu0 %v5351
        %5635 = vmatprep.subr.mxu0 0.0
        %5636 = vmatpush1.msra.mxu0 %v5352
        %5637 = vmatprep.subr.mxu0 0.0
        %5638 = vmatpush1.msra.mxu0 %v5353
        %5639 = vmatprep.subr.mxu0 0.0
        %5640 = vmatpush1.msra.mxu0 %v5354
        %5641 = vmatprep.subr.mxu0 0.0
        %5642 = vmatpush1.msra.mxu0 %v5355
        %5643 = vmatprep.subr.mxu0 0.0
        %5644 = vmatpush1.msra.mxu0 %v5356
        %5645 = vmatprep.subr.mxu0 0.0
        %5646 = vmatpush1.msra.mxu0 %v5357
        %5647 = vmatprep.subr.mxu0 0.0
        %5648 = vmatpush1.msra.mxu0 %v5358
        %5649 = vmatprep.subr.mxu0 0.0
        %5650 = vmatpush1.msra.mxu0 %v5359
        %5651 = vmatprep.subr.mxu0 0.0
        %5652 = vmatpush1.msra.mxu0 %v5360
        %5653 = vmatprep.subr.mxu0 0.0
        %5654 = vmatpush1.msra.mxu0 %v5361
        %5655 = vmatprep.subr.mxu0 0.0
        %5656 = vmatpush1.msra.mxu0 %v5362
        %5657 = vmatprep.subr.mxu0 0.0
        %5658 = vmatpush1.msra.mxu0 %v5363
        %5659 = vmatprep.subr.mxu0 0.0
        %5660 = vmatpush1.msra.mxu0 %v5364
        %5661 = vmatprep.subr.mxu0 0.0
        %5662 = vmatpush1.msra.mxu0 %v5365
        %5663 = vmatprep.subr.mxu0 0.0
        %5664 = vmatpush1.msra.mxu0 0.0
        %5665 = vmatprep.subr.mxu0 0.0
        %5666 = vmatpush1.msra.mxu0 0.0
        %5667 = vmatprep.subr.mxu0 0.0
        %5668 = vmatpush1.msra.mxu0 0.0
        %5669 = vmatprep.subr.mxu0 0.0
        %5670 = vmatpush1.msra.mxu0 0.0
        %5671 = vmatprep.subr.mxu0 0.0
        %5672 = vmatpush1.msra.mxu0 0.0
        %5673 = vmatprep.subr.mxu0 0.0
        %5674 = vmatpush1.msra.mxu0 0.0
        %5675 = vmatprep.subr.mxu0 0.0
        %5676 = vmatpush1.msra.mxu0 0.0
        %5677 = vmatprep.subr.mxu0 0.0
        %5678 = vmatpush1.msra.mxu0 0.0
        %5679 = vmatprep.subr.mxu0 0.0
        %5680 = vmatpush1.msra.mxu0 0.0
        %5681 = vmatprep.subr.mxu0 0.0
        %5682 = vmatpush1.msra.mxu0 0.0
        %5683 = vmatprep.subr.mxu0 0.0
        %5684 = vmatpush1.msra.mxu0 0.0
        %5685 = vmatprep.subr.mxu0 0.0
        %5686 = vmatpush1.msra.mxu0 0.0
        %5687 = vmatprep.subr.mxu0 0.0
        %5688 = vmatpush1.msra.mxu0 0.0
        %5689 = vmatprep.subr.mxu0 0.0
        %5690 = vmatpush1.msra.mxu0 0.0
        %5691 = vmatprep.subr.mxu0 0.0
        %5692 = vmatpush1.msra.mxu0 0.0
        %5693 = vmatprep.subr.mxu0 0.0
        %5694 = vmatpush1.msra.mxu0 0.0
        %5695 = vmatprep.mubr.f32.mxu0 0.0
        %5696 = vmatmul.mubr.f32.gmra.mrb[0].mxu0 %v5330
        %v5697 = vpop.f32.mrb[0].mxu0
        %v5698 = vadd.f32 %v5623, %v5697
        %v5699 = vpop.f32.mrb[0].mxu0
        %5700 = vmatprep.mubr.f32.mxu0 0.0
        %5701 = vmatmul.mubr.f32.gmra.mrb[0].mxu0 %v5331
        %v5702 = vpop.f32.mrb[0].mxu0
        %v5703 = vadd.f32 %v5628, %v5702
        %v5704 = vpop.f32.mrb[0].mxu0
        %5705 = vdwg.mxu0
        %v5706 = vld [vmem:[#allocation2 + $0xd] sm:$0xff]
        %v5707 = vld [vmem:[#allocation2 + $0x15] sm:$0xff]
        %v5708 = vld [vmem:[#allocation2 + $0xe] sm:$0xff]
        %v5709 = vld [vmem:[#allocation2 + $0x16] sm:$0xff]
        %v5710 = vld [vmem:[#allocation2 + $0xf] sm:$0xff]
        %v5711 = vld [vmem:[#allocation2 + $0x17] sm:$0xff]
        %v5712 = vld [vmem:[#allocation2 + $0x10] sm:$0xff]
        %v5713 = vld [vmem:[#allocation2 + $0x18] sm:$0xff]
        %v5714 = vld [vmem:[#allocation2 + $0x11] sm:$0xff]
        %v5715 = vld [vmem:[#allocation2 + $0x19] sm:$0xff]
        %v5716 = vld [vmem:[#allocation2 + $0x12] sm:$0xff]
        %v5717 = vld [vmem:[#allocation2 + $0x1a] sm:$0xff]
        %v5718 = vld [vmem:[#allocation2 + $0x13] sm:$0xff]
        %v5719 = vld [vmem:[#allocation2 + $0x1b] sm:$0xff]
        %v5720 = vld [vmem:[#allocation2 + $0x14] sm:$0xff]
        %v5721 = vld [vmem:[#allocation2 + $0x1c] sm:$0xff]
        %5724 = vrot.lane.b32.xlu0 %v5708, 32
        %v5725 = vpop.permute.xlu0 %5724
        %5726 = vrot.lane.b32.xlu0 %v5709, 32
        %v5727 = vpop.permute.xlu0 %5726
        %5732 = vrot.lane.b32.xlu0 %v5710, 64
        %v5733 = vpop.permute.xlu0 %5732
        %5734 = vrot.lane.b32.xlu0 %v5711, 64
        %v5735 = vpop.permute.xlu0 %5734
        %5740 = vrot.lane.b32.xlu0 %v5712, 96
        %v5741 = vpop.permute.xlu0 %5740
        %5742 = vrot.lane.b32.xlu0 %v5713, 96
        %v5743 = vpop.permute.xlu0 %5742
        %5748 = vrot.lane.b32.xlu0 %v5716, 32
        %v5749 = vpop.permute.xlu0 %5748
        %5750 = vrot.lane.b32.xlu0 %v5717, 32
        %v5751 = vpop.permute.xlu0 %5750
        %5756 = vrot.lane.b32.xlu0 %v5718, 64
        %v5757 = vpop.permute.xlu0 %5756
        %5758 = vrot.lane.b32.xlu0 %v5719, 64
        %v5759 = vpop.permute.xlu0 %5758
        %5764 = vrot.lane.b32.xlu0 %v5720, 96
        %v5765 = vpop.permute.xlu0 %5764
        %5766 = vrot.lane.b32.xlu0 %v5721, 96
        %v5767 = vpop.permute.xlu0 %5766
        %v5770 = vsel %vm627, %v5706, %v5725
        %v5771 = vsel %vm627, %v5707, %v5727
        %v5772 = vsel %vm811, %v5770, %v5733
        %v5773 = vsel %vm811, %v5771, %v5735
        %v5774 = vsel %vm814, %v5772, %v5741
        %v5775 = vsel %vm814, %v5773, %v5743
        %v5776 = vsel %vm627, %v5714, %v5749
        %v5777 = vsel %vm627, %v5715, %v5751
        %v5778 = vsel %vm811, %v5776, %v5757
        %v5779 = vsel %vm811, %v5777, %v5759
        %v5780 = vsel %vm814, %v5778, %v5765
        %v5781 = vsel %vm814, %v5779, %v5767
        %s5782 = scalar_lea.vmem [#allocation14], 4096
        %v5783 = vld [vmem:[%s5782] sm:$0xff]
        %v5784 = vld [vmem:[%s5782 + $0x8] sm:$0xff]
        %v5785 = vld [vmem:[%s5782 + $0x10] sm:$0xff]
        %v5786 = vld [vmem:[%s5782 + $0x18] sm:$0xff]
        %v5787 = vld [vmem:[%s5782 + $0x20] sm:$0xff]
        %v5788 = vld [vmem:[%s5782 + $0x28] sm:$0xff]
        %v5789 = vld [vmem:[%s5782 + $0x30] sm:$0xff]
        %v5790 = vld [vmem:[%s5782 + $0x38] sm:$0xff]
        %v5791 = vld [vmem:[%s5782 + $0x40] sm:$0xff]
        %v5792 = vld [vmem:[%s5782 + $0x48] sm:$0xff]
        %v5793 = vld [vmem:[%s5782 + $0x50] sm:$0xff]
        %v5794 = vld [vmem:[%s5782 + $0x58] sm:$0xff]
        %v5795 = vld [vmem:[%s5782 + $0x60] sm:$0xff]
        %v5796 = vld [vmem:[%s5782 + $0x68] sm:$0xff]
        %v5797 = vld [vmem:[%s5782 + $0x70] sm:$0xff]
        %v5798 = vld [vmem:[%s5782 + $0x78] sm:$0xff]
        %v5799 = vld [vmem:[%s5782 + $0x80] sm:$0xff]
        %v5800 = vld [vmem:[%s5782 + $0x88] sm:$0xff]
        %v5801 = vld [vmem:[%s5782 + $0x90] sm:$0xff]
        %v5802 = vld [vmem:[%s5782 + $0x98] sm:$0xff]
        %v5803 = vld [vmem:[%s5782 + $0xa0] sm:$0xff]
        %v5804 = vld [vmem:[%s5782 + $0xa8] sm:$0xff]
        %v5805 = vld [vmem:[%s5782 + $0xb0] sm:$0xff]
        %v5806 = vld [vmem:[%s5782 + $0xb8] sm:$0xff]
        %v5807 = vld [vmem:[%s5782 + $0xc0] sm:$0xff]
        %v5808 = vld [vmem:[%s5782 + $0xc8] sm:$0xff]
        %v5809 = vld [vmem:[%s5782 + $0xd0] sm:$0xff]
        %v5810 = vld [vmem:[%s5782 + $0xd8] sm:$0xff]
        %v5811 = vld [vmem:[%s5782 + $0xe0] sm:$0xff]
        %v5812 = vld [vmem:[%s5782 + $0xe8] sm:$0xff]
        %v5813 = vld [vmem:[%s5782 + $0xf0] sm:$0xff]
        %v5814 = vld [vmem:[%s5782 + $0xf8] sm:$0xff]
        %5815 = vmatprep.subr.mxu0 0.0
        %5816 = vmatpush1.msra.mxu0 %v5783
        %5817 = vmatprep.subr.mxu0 0.0
        %5818 = vmatpush1.msra.mxu0 %v5784
        %5819 = vmatprep.subr.mxu0 0.0
        %5820 = vmatpush1.msra.mxu0 %v5785
        %5821 = vmatprep.subr.mxu0 0.0
        %5822 = vmatpush1.msra.mxu0 %v5786
        %5823 = vmatprep.subr.mxu0 0.0
        %5824 = vmatpush1.msra.mxu0 %v5787
        %5825 = vmatprep.subr.mxu0 0.0
        %5826 = vmatpush1.msra.mxu0 %v5788
        %5827 = vmatprep.subr.mxu0 0.0
        %5828 = vmatpush1.msra.mxu0 %v5789
        %5829 = vmatprep.subr.mxu0 0.0
        %5830 = vmatpush1.msra.mxu0 %v5790
        %5831 = vmatprep.subr.mxu0 0.0
        %5832 = vmatpush1.msra.mxu0 %v5791
        %5833 = vmatprep.subr.mxu0 0.0
        %5834 = vmatpush1.msra.mxu0 %v5792
        %5835 = vmatprep.subr.mxu0 0.0
        %5836 = vmatpush1.msra.mxu0 %v5793
        %5837 = vmatprep.subr.mxu0 0.0
        %5838 = vmatpush1.msra.mxu0 %v5794
        %5839 = vmatprep.subr.mxu0 0.0
        %5840 = vmatpush1.msra.mxu0 %v5795
        %5841 = vmatprep.subr.mxu0 0.0
        %5842 = vmatpush1.msra.mxu0 %v5796
        %5843 = vmatprep.subr.mxu0 0.0
        %5844 = vmatpush1.msra.mxu0 %v5797
        %5845 = vmatprep.subr.mxu0 0.0
        %5846 = vmatpush1.msra.mxu0 %v5798
        %5847 = vmatprep.subr.mxu0 0.0
        %5848 = vmatpush1.msra.mxu0 %v5799
        %5849 = vmatprep.subr.mxu0 0.0
        %5850 = vmatpush1.msra.mxu0 %v5800
        %5851 = vmatprep.subr.mxu0 0.0
        %5852 = vmatpush1.msra.mxu0 %v5801
        %5853 = vmatprep.subr.mxu0 0.0
        %5854 = vmatpush1.msra.mxu0 %v5802
        %5855 = vmatprep.subr.mxu0 0.0
        %5856 = vmatpush1.msra.mxu0 %v5803
        %5857 = vmatprep.subr.mxu0 0.0
        %5858 = vmatpush1.msra.mxu0 %v5804
        %5859 = vmatprep.subr.mxu0 0.0
        %5860 = vmatpush1.msra.mxu0 %v5805
        %5861 = vmatprep.subr.mxu0 0.0
        %5862 = vmatpush1.msra.mxu0 %v5806
        %5863 = vmatprep.subr.mxu0 0.0
        %5864 = vmatpush1.msra.mxu0 %v5807
        %5865 = vmatprep.subr.mxu0 0.0
        %5866 = vmatpush1.msra.mxu0 %v5808
        %5867 = vmatprep.subr.mxu0 0.0
        %5868 = vmatpush1.msra.mxu0 %v5809
        %5869 = vmatprep.subr.mxu0 0.0
        %5870 = vmatpush1.msra.mxu0 %v5810
        %5871 = vmatprep.subr.mxu0 0.0
        %5872 = vmatpush1.msra.mxu0 %v5811
        %5873 = vmatprep.subr.mxu0 0.0
        %5874 = vmatpush1.msra.mxu0 %v5812
        %5875 = vmatprep.subr.mxu0 0.0
        %5876 = vmatpush1.msra.mxu0 %v5813
        %5877 = vmatprep.subr.mxu0 0.0
        %5878 = vmatpush1.msra.mxu0 %v5814
        %5879 = vmatprep.mubr.f32.mxu0 %v5780
        %5880 = vmatmul.mubr.f32.gmra.mrb[0].mxu0 %v5774
        %v5881 = vpop.f32.mrb[0].mxu0
        %v5882 = vadd.f32 0.0, %v5881
        %v5883 = vpop.f32.mrb[0].mxu0
        %5884 = vmatprep.mubr.f32.mxu0 %v5781
        %5885 = vmatmul.mubr.f32.gmra.mrb[0].mxu0 %v5775
        %v5886 = vpop.f32.mrb[0].mxu0
        %v5887 = vadd.f32 0.0, %v5886
        %v5888 = vpop.f32.mrb[0].mxu0
        %5889 = vdwg.mxu0
        %v5890 = vadd.f32 %v5698, %v5882
        %v5891 = vadd.f32 %v5703, %v5887
        %v5892 = vld [vmem:[#allocation2 + $0x15] sm:$0xff]
        %v5893 = vld [vmem:[#allocation2 + $0x1d] sm:$0xff]
        %v5894 = vld [vmem:[#allocation2 + $0x16] sm:$0xff]
        %v5895 = vld [vmem:[#allocation2 + $0x1e] sm:$0xff]
        %v5896 = vld [vmem:[#allocation2 + $0x17] sm:$0xff]
        %v5897 = vld [vmem:[#allocation2 + $0x1f] sm:$0xff]
        %v5898 = vld [vmem:[#allocation2 + $0x18] sm:$0xff]
        %v5899 = vld [vmem:[#allocation2 + $0x20] sm:$0xff]
        %v5900 = vld [vmem:[#allocation2 + $0x19] sm:$0xff]
        %v5901 = vld [vmem:[#allocation2 + $0x21] sm:$0xff]
        %v5902 = vld [vmem:[#allocation2 + $0x1a] sm:$0xff]
        %v5903 = vld [vmem:[#allocation2 + $0x22] sm:$0xff]
        %v5904 = vld [vmem:[#allocation2 + $0x1b] sm:$0xff]
        %v5905 = vld [vmem:[#allocation2 + $0x23] sm:$0xff]
        %v5906 = vld [vmem:[#allocation2 + $0x1c] sm:$0xff]
        %v5907 = vld [vmem:[#allocation2 + $0x24] sm:$0xff]
        %5910 = vrot.lane.b32.xlu0 %v5894, 32
        %v5911 = vpop.permute.xlu0 %5910
        %5912 = vrot.lane.b32.xlu0 %v5895, 32
        %v5913 = vpop.permute.xlu0 %5912
        %5918 = vrot.lane.b32.xlu0 %v5896, 64
        %v5919 = vpop.permute.xlu0 %5918
        %5920 = vrot.lane.b32.xlu0 %v5897, 64
        %v5921 = vpop.permute.xlu0 %5920
        %5926 = vrot.lane.b32.xlu0 %v5898, 96
        %v5927 = vpop.permute.xlu0 %5926
        %5928 = vrot.lane.b32.xlu0 %v5899, 96
        %v5929 = vpop.permute.xlu0 %5928
        %5934 = vrot.lane.b32.xlu0 %v5902, 32
        %v5935 = vpop.permute.xlu0 %5934
        %5936 = vrot.lane.b32.xlu0 %v5903, 32
        %v5937 = vpop.permute.xlu0 %5936
        %5942 = vrot.lane.b32.xlu0 %v5904, 64
        %v5943 = vpop.permute.xlu0 %5942
        %5944 = vrot.lane.b32.xlu0 %v5905, 64
        %v5945 = vpop.permute.xlu0 %5944
        %5950 = vrot.lane.b32.xlu0 %v5906, 96
        %v5951 = vpop.permute.xlu0 %5950
        %5952 = vrot.lane.b32.xlu0 %v5907, 96
        %v5953 = vpop.permute.xlu0 %5952
        %v5956 = vsel %vm627, %v5892, %v5911
        %v5957 = vsel %vm627, %v5893, %v5913
        %v5958 = vsel %vm811, %v5956, %v5919
        %v5959 = vsel %vm811, %v5957, %v5921
        %v5960 = vsel %vm814, %v5958, %v5927
        %v5961 = vsel %vm814, %v5959, %v5929
        %v5962 = vsel %vm627, %v5900, %v5935
        %v5963 = vsel %vm627, %v5901, %v5937
        %v5964 = vsel %vm811, %v5962, %v5943
        %v5965 = vsel %vm811, %v5963, %v5945
        %v5966 = vsel %vm814, %v5964, %v5951
        %v5967 = vsel %vm814, %v5965, %v5953
        %s5968 = scalar_lea.vmem [#allocation14], 4352
        %v5969 = vld [vmem:[%s5968] sm:$0xff]
        %v5970 = vld [vmem:[%s5968 + $0x8] sm:$0xff]
        %v5971 = vld [vmem:[%s5968 + $0x10] sm:$0xff]
        %v5972 = vld [vmem:[%s5968 + $0x18] sm:$0xff]
        %v5973 = vld [vmem:[%s5968 + $0x20] sm:$0xff]
        %v5974 = vld [vmem:[%s5968 + $0x28] sm:$0xff]
        %v5975 = vld [vmem:[%s5968 + $0x30] sm:$0xff]
        %v5976 = vld [vmem:[%s5968 + $0x38] sm:$0xff]
        %v5977 = vld [vmem:[%s5968 + $0x40] sm:$0xff]
        %v5978 = vld [vmem:[%s5968 + $0x48] sm:$0xff]
        %v5979 = vld [vmem:[%s5968 + $0x50] sm:$0xff]
        %v5980 = vld [vmem:[%s5968 + $0x58] sm:$0xff]
        %v5981 = vld [vmem:[%s5968 + $0x60] sm:$0xff]
        %v5982 = vld [vmem:[%s5968 + $0x68] sm:$0xff]
        %v5983 = vld [vmem:[%s5968 + $0x70] sm:$0xff]
        %v5984 = vld [vmem:[%s5968 + $0x78] sm:$0xff]
        %v5985 = vld [vmem:[%s5968 + $0x80] sm:$0xff]
        %v5986 = vld [vmem:[%s5968 + $0x88] sm:$0xff]
        %v5987 = vld [vmem:[%s5968 + $0x90] sm:$0xff]
        %v5988 = vld [vmem:[%s5968 + $0x98] sm:$0xff]
        %v5989 = vld [vmem:[%s5968 + $0xa0] sm:$0xff]
        %v5990 = vld [vmem:[%s5968 + $0xa8] sm:$0xff]
        %v5991 = vld [vmem:[%s5968 + $0xb0] sm:$0xff]
        %v5992 = vld [vmem:[%s5968 + $0xb8] sm:$0xff]
        %v5993 = vld [vmem:[%s5968 + $0xc0] sm:$0xff]
        %v5994 = vld [vmem:[%s5968 + $0xc8] sm:$0xff]
        %v5995 = vld [vmem:[%s5968 + $0xd0] sm:$0xff]
        %v5996 = vld [vmem:[%s5968 + $0xd8] sm:$0xff]
        %v5997 = vld [vmem:[%s5968 + $0xe0] sm:$0xff]
        %v5998 = vld [vmem:[%s5968 + $0xe8] sm:$0xff]
        %v5999 = vld [vmem:[%s5968 + $0xf0] sm:$0xff]
        %v6000 = vld [vmem:[%s5968 + $0xf8] sm:$0xff]
        %6001 = vmatprep.subr.mxu0 0.0
        %6002 = vmatpush1.msra.mxu0 %v5969
        %6003 = vmatprep.subr.mxu0 0.0
        %6004 = vmatpush1.msra.mxu0 %v5970
        %6005 = vmatprep.subr.mxu0 0.0
        %6006 = vmatpush1.msra.mxu0 %v5971
        %6007 = vmatprep.subr.mxu0 0.0
        %6008 = vmatpush1.msra.mxu0 %v5972
        %6009 = vmatprep.subr.mxu0 0.0
        %6010 = vmatpush1.msra.mxu0 %v5973
        %6011 = vmatprep.subr.mxu0 0.0
        %6012 = vmatpush1.msra.mxu0 %v5974
        %6013 = vmatprep.subr.mxu0 0.0
        %6014 = vmatpush1.msra.mxu0 %v5975
        %6015 = vmatprep.subr.mxu0 0.0
        %6016 = vmatpush1.msra.mxu0 %v5976
        %6017 = vmatprep.subr.mxu0 0.0
        %6018 = vmatpush1.msra.mxu0 %v5977
        %6019 = vmatprep.subr.mxu0 0.0
        %6020 = vmatpush1.msra.mxu0 %v5978
        %6021 = vmatprep.subr.mxu0 0.0
        %6022 = vmatpush1.msra.mxu0 %v5979
        %6023 = vmatprep.subr.mxu0 0.0
        %6024 = vmatpush1.msra.mxu0 %v5980
        %6025 = vmatprep.subr.mxu0 0.0
        %6026 = vmatpush1.msra.mxu0 %v5981
        %6027 = vmatprep.subr.mxu0 0.0
        %6028 = vmatpush1.msra.mxu0 %v5982
        %6029 = vmatprep.subr.mxu0 0.0
        %6030 = vmatpush1.msra.mxu0 %v5983
        %6031 = vmatprep.subr.mxu0 0.0
        %6032 = vmatpush1.msra.mxu0 %v5984
        %6033 = vmatprep.subr.mxu0 0.0
        %6034 = vmatpush1.msra.mxu0 %v5985
        %6035 = vmatprep.subr.mxu0 0.0
        %6036 = vmatpush1.msra.mxu0 %v5986
        %6037 = vmatprep.subr.mxu0 0.0
        %6038 = vmatpush1.msra.mxu0 %v5987
        %6039 = vmatprep.subr.mxu0 0.0
        %6040 = vmatpush1.msra.mxu0 %v5988
        %6041 = vmatprep.subr.mxu0 0.0
        %6042 = vmatpush1.msra.mxu0 %v5989
        %6043 = vmatprep.subr.mxu0 0.0
        %6044 = vmatpush1.msra.mxu0 %v5990
        %6045 = vmatprep.subr.mxu0 0.0
        %6046 = vmatpush1.msra.mxu0 %v5991
        %6047 = vmatprep.subr.mxu0 0.0
        %6048 = vmatpush1.msra.mxu0 %v5992
        %6049 = vmatprep.subr.mxu0 0.0
        %6050 = vmatpush1.msra.mxu0 %v5993
        %6051 = vmatprep.subr.mxu0 0.0
        %6052 = vmatpush1.msra.mxu0 %v5994
        %6053 = vmatprep.subr.mxu0 0.0
        %6054 = vmatpush1.msra.mxu0 %v5995
        %6055 = vmatprep.subr.mxu0 0.0
        %6056 = vmatpush1.msra.mxu0 %v5996
        %6057 = vmatprep.subr.mxu0 0.0
        %6058 = vmatpush1.msra.mxu0 %v5997
        %6059 = vmatprep.subr.mxu0 0.0
        %6060 = vmatpush1.msra.mxu0 %v5998
        %6061 = vmatprep.subr.mxu0 0.0
        %6062 = vmatpush1.msra.mxu0 %v5999
        %6063 = vmatprep.subr.mxu0 0.0
        %6064 = vmatpush1.msra.mxu0 %v6000
        %6065 = vmatprep.mubr.f32.mxu0 %v5966
        %6066 = vmatmul.mubr.f32.gmra.mrb[0].mxu0 %v5960
        %v6067 = vpop.f32.mrb[0].mxu0
        %v6068 = vadd.f32 0.0, %v6067
        %v6069 = vpop.f32.mrb[0].mxu0
        %6070 = vmatprep.mubr.f32.mxu0 %v5967
        %6071 = vmatmul.mubr.f32.gmra.mrb[0].mxu0 %v5961
        %v6072 = vpop.f32.mrb[0].mxu0
        %v6073 = vadd.f32 0.0, %v6072
        %v6074 = vpop.f32.mrb[0].mxu0
        %6075 = vdwg.mxu0
        %v6076 = vadd.f32 %v5890, %v6068
        %v6077 = vadd.f32 %v5891, %v6073
        %v6078 = vld [vmem:[#allocation2 + $0x1d] sm:$0xff]
        %v6079 = vld [vmem:[#allocation2 + $0x25] sm:$0xff]
        %v6080 = vld [vmem:[#allocation2 + $0x1e] sm:$0xff]
        %v6081 = vld [vmem:[#allocation2 + $0x26] sm:$0xff]
        %v6082 = vld [vmem:[#allocation2 + $0x1f] sm:$0xff]
        %v6083 = vld [vmem:[#allocation2 + $0x27] sm:$0xff]
        %v6084 = vld [vmem:[#allocation2 + $0x20] sm:$0xff]
        %v6085 = vld [vmem:[#allocation2 + $0x28] sm:$0xff]
        %v6086 = vld [vmem:[#allocation2 + $0x21] sm:$0xff]
        %v6087 = vld [vmem:[#allocation2 + $0x29] sm:$0xff]
        %v6088 = vld [vmem:[#allocation2 + $0x22] sm:$0xff]
        %v6089 = vld [vmem:[#allocation2 + $0x2a] sm:$0xff]
        %v6090 = vld [vmem:[#allocation2 + $0x23] sm:$0xff]
        %v6091 = vld [vmem:[#allocation2 + $0x2b] sm:$0xff]
        %v6092 = vld [vmem:[#allocation2 + $0x24] sm:$0xff]
        %v6093 = vld [vmem:[#allocation2 + $0x2c] sm:$0xff]
        %6096 = vrot.lane.b32.xlu0 %v6080, 32
        %v6097 = vpop.permute.xlu0 %6096
        %6098 = vrot.lane.b32.xlu0 %v6081, 32
        %v6099 = vpop.permute.xlu0 %6098
        %6104 = vrot.lane.b32.xlu0 %v6082, 64
        %v6105 = vpop.permute.xlu0 %6104
        %6106 = vrot.lane.b32.xlu0 %v6083, 64
        %v6107 = vpop.permute.xlu0 %6106
        %6112 = vrot.lane.b32.xlu0 %v6084, 96
        %v6113 = vpop.permute.xlu0 %6112
        %6114 = vrot.lane.b32.xlu0 %v6085, 96
        %v6115 = vpop.permute.xlu0 %6114
        %6120 = vrot.lane.b32.xlu0 %v6088, 32
        %v6121 = vpop.permute.xlu0 %6120
        %6122 = vrot.lane.b32.xlu0 %v6089, 32
        %v6123 = vpop.permute.xlu0 %6122
        %6128 = vrot.lane.b32.xlu0 %v6090, 64
        %v6129 = vpop.permute.xlu0 %6128
        %6130 = vrot.lane.b32.xlu0 %v6091, 64
        %v6131 = vpop.permute.xlu0 %6130
        %6136 = vrot.lane.b32.xlu0 %v6092, 96
        %v6137 = vpop.permute.xlu0 %6136
        %6138 = vrot.lane.b32.xlu0 %v6093, 96
        %v6139 = vpop.permute.xlu0 %6138
        %v6142 = vsel %vm627, %v6078, %v6097
        %v6143 = vsel %vm627, %v6079, %v6099
        %v6144 = vsel %vm811, %v6142, %v6105
        %v6145 = vsel %vm811, %v6143, %v6107
        %v6146 = vsel %vm814, %v6144, %v6113
        %v6147 = vsel %vm814, %v6145, %v6115
        %v6148 = vsel %vm627, %v6086, %v6121
        %v6149 = vsel %vm627, %v6087, %v6123
        %v6150 = vsel %vm811, %v6148, %v6129
        %v6151 = vsel %vm811, %v6149, %v6131
        %v6152 = vsel %vm814, %v6150, %v6137
        %v6153 = vsel %vm814, %v6151, %v6139
        %s6154 = scalar_lea.vmem [#allocation14], 4608
        %v6155 = vld [vmem:[%s6154] sm:$0xff]
        %v6156 = vld [vmem:[%s6154 + $0x8] sm:$0xff]
        %v6157 = vld [vmem:[%s6154 + $0x10] sm:$0xff]
        %v6158 = vld [vmem:[%s6154 + $0x18] sm:$0xff]
        %v6159 = vld [vmem:[%s6154 + $0x20] sm:$0xff]
        %v6160 = vld [vmem:[%s6154 + $0x28] sm:$0xff]
        %v6161 = vld [vmem:[%s6154 + $0x30] sm:$0xff]
        %v6162 = vld [vmem:[%s6154 + $0x38] sm:$0xff]
        %v6163 = vld [vmem:[%s6154 + $0x40] sm:$0xff]
        %v6164 = vld [vmem:[%s6154 + $0x48] sm:$0xff]
        %v6165 = vld [vmem:[%s6154 + $0x50] sm:$0xff]
        %v6166 = vld [vmem:[%s6154 + $0x58] sm:$0xff]
        %v6167 = vld [vmem:[%s6154 + $0x60] sm:$0xff]
        %v6168 = vld [vmem:[%s6154 + $0x68] sm:$0xff]
        %v6169 = vld [vmem:[%s6154 + $0x70] sm:$0xff]
        %v6170 = vld [vmem:[%s6154 + $0x78] sm:$0xff]
        %v6171 = vld [vmem:[%s6154 + $0x80] sm:$0xff]
        %v6172 = vld [vmem:[%s6154 + $0x88] sm:$0xff]
        %v6173 = vld [vmem:[%s6154 + $0x90] sm:$0xff]
        %v6174 = vld [vmem:[%s6154 + $0x98] sm:$0xff]
        %v6175 = vld [vmem:[%s6154 + $0xa0] sm:$0xff]
        %v6176 = vld [vmem:[%s6154 + $0xa8] sm:$0xff]
        %v6177 = vld [vmem:[%s6154 + $0xb0] sm:$0xff]
        %v6178 = vld [vmem:[%s6154 + $0xb8] sm:$0xff]
        %v6179 = vld [vmem:[%s6154 + $0xc0] sm:$0xff]
        %v6180 = vld [vmem:[%s6154 + $0xc8] sm:$0xff]
        %v6181 = vld [vmem:[%s6154 + $0xd0] sm:$0xff]
        %v6182 = vld [vmem:[%s6154 + $0xd8] sm:$0xff]
        %v6183 = vld [vmem:[%s6154 + $0xe0] sm:$0xff]
        %v6184 = vld [vmem:[%s6154 + $0xe8] sm:$0xff]
        %v6185 = vld [vmem:[%s6154 + $0xf0] sm:$0xff]
        %v6186 = vld [vmem:[%s6154 + $0xf8] sm:$0xff]
        %6187 = vmatprep.subr.mxu0 0.0
        %6188 = vmatpush1.msra.mxu0 %v6155
        %6189 = vmatprep.subr.mxu0 0.0
        %6190 = vmatpush1.msra.mxu0 %v6156
        %6191 = vmatprep.subr.mxu0 0.0
        %6192 = vmatpush1.msra.mxu0 %v6157
        %6193 = vmatprep.subr.mxu0 0.0
        %6194 = vmatpush1.msra.mxu0 %v6158
        %6195 = vmatprep.subr.mxu0 0.0
        %6196 = vmatpush1.msra.mxu0 %v6159
        %6197 = vmatprep.subr.mxu0 0.0
        %6198 = vmatpush1.msra.mxu0 %v6160
        %6199 = vmatprep.subr.mxu0 0.0
        %6200 = vmatpush1.msra.mxu0 %v6161
        %6201 = vmatprep.subr.mxu0 0.0
        %6202 = vmatpush1.msra.mxu0 %v6162
        %6203 = vmatprep.subr.mxu0 0.0
        %6204 = vmatpush1.msra.mxu0 %v6163
        %6205 = vmatprep.subr.mxu0 0.0
        %6206 = vmatpush1.msra.mxu0 %v6164
        %6207 = vmatprep.subr.mxu0 0.0
        %6208 = vmatpush1.msra.mxu0 %v6165
        %6209 = vmatprep.subr.mxu0 0.0
        %6210 = vmatpush1.msra.mxu0 %v6166
        %6211 = vmatprep.subr.mxu0 0.0
        %6212 = vmatpush1.msra.mxu0 %v6167
        %6213 = vmatprep.subr.mxu0 0.0
        %6214 = vmatpush1.msra.mxu0 %v6168
        %6215 = vmatprep.subr.mxu0 0.0
        %6216 = vmatpush1.msra.mxu0 %v6169
        %6217 = vmatprep.subr.mxu0 0.0
        %6218 = vmatpush1.msra.mxu0 %v6170
        %6219 = vmatprep.subr.mxu0 0.0
        %6220 = vmatpush1.msra.mxu0 %v6171
        %6221 = vmatprep.subr.mxu0 0.0
        %6222 = vmatpush1.msra.mxu0 %v6172
        %6223 = vmatprep.subr.mxu0 0.0
        %6224 = vmatpush1.msra.mxu0 %v6173
        %6225 = vmatprep.subr.mxu0 0.0
        %6226 = vmatpush1.msra.mxu0 %v6174
        %6227 = vmatprep.subr.mxu0 0.0
        %6228 = vmatpush1.msra.mxu0 %v6175
        %6229 = vmatprep.subr.mxu0 0.0
        %6230 = vmatpush1.msra.mxu0 %v6176
        %6231 = vmatprep.subr.mxu0 0.0
        %6232 = vmatpush1.msra.mxu0 %v6177
        %6233 = vmatprep.subr.mxu0 0.0
        %6234 = vmatpush1.msra.mxu0 %v6178
        %6235 = vmatprep.subr.mxu0 0.0
        %6236 = vmatpush1.msra.mxu0 %v6179
        %6237 = vmatprep.subr.mxu0 0.0
        %6238 = vmatpush1.msra.mxu0 %v6180
        %6239 = vmatprep.subr.mxu0 0.0
        %6240 = vmatpush1.msra.mxu0 %v6181
        %6241 = vmatprep.subr.mxu0 0.0
        %6242 = vmatpush1.msra.mxu0 %v6182
        %6243 = vmatprep.subr.mxu0 0.0
        %6244 = vmatpush1.msra.mxu0 %v6183
        %6245 = vmatprep.subr.mxu0 0.0
        %6246 = vmatpush1.msra.mxu0 %v6184
        %6247 = vmatprep.subr.mxu0 0.0
        %6248 = vmatpush1.msra.mxu0 %v6185
        %6249 = vmatprep.subr.mxu0 0.0
        %6250 = vmatpush1.msra.mxu0 %v6186
        %6251 = vmatprep.mubr.f32.mxu0 %v6152
        %6252 = vmatmul.mubr.f32.gmra.mrb[0].mxu0 %v6146
        %v6253 = vpop.f32.mrb[0].mxu0
        %v6254 = vadd.f32 0.0, %v6253
        %v6255 = vpop.f32.mrb[0].mxu0
        %6256 = vmatprep.mubr.f32.mxu0 %v6153
        %6257 = vmatmul.mubr.f32.gmra.mrb[0].mxu0 %v6147
        %v6258 = vpop.f32.mrb[0].mxu0
        %v6259 = vadd.f32 0.0, %v6258
        %v6260 = vpop.f32.mrb[0].mxu0
        %6261 = vdwg.mxu0
        %v6262 = vadd.f32 %v6076, %v6254
        %v6263 = vadd.f32 %v6077, %v6259
        %v6264 = vld [vmem:[#allocation2 + $0x25] sm:$0xff]
        %v6265 = vld [vmem:[#allocation2 + $0x2d] sm:$0xff]
        %v6266 = vld [vmem:[#allocation2 + $0x26] sm:$0xff]
        %v6267 = vld [vmem:[#allocation2 + $0x2e] sm:$0xff]
        %v6268 = vld [vmem:[#allocation2 + $0x27] sm:$0xff]
        %v6269 = vld [vmem:[#allocation2 + $0x2f] sm:$0xff]
        %v6270 = vld [vmem:[#allocation2 + $0x28] sm:$0xff]
        %v6271 = vld [vmem:[#allocation2 + $0x30] sm:$0xff]
        %v6272 = vld [vmem:[#allocation2 + $0x29] sm:$0xff]
        %v6273 = vld [vmem:[#allocation2 + $0x31] sm:$0xff]
        %v6274 = vld [vmem:[#allocation2 + $0x2a] sm:$0xff]
        %v6275 = vld [vmem:[#allocation2 + $0x32] sm:$0xff]
        %v6276 = vld [vmem:[#allocation2 + $0x2b] sm:$0xff]
        %v6277 = vld [vmem:[#allocation2 + $0x33] sm:$0xff]
        %v6278 = vld [vmem:[#allocation2 + $0x2c] sm:$0xff]
        %v6279 = vld [vmem:[#allocation2 + $0x34] sm:$0xff]
        %6282 = vrot.lane.b32.xlu0 %v6266, 32
        %v6283 = vpop.permute.xlu0 %6282
        %6284 = vrot.lane.b32.xlu0 %v6267, 32
        %v6285 = vpop.permute.xlu0 %6284
        %6290 = vrot.lane.b32.xlu0 %v6268, 64
        %v6291 = vpop.permute.xlu0 %6290
        %6292 = vrot.lane.b32.xlu0 %v6269, 64
        %v6293 = vpop.permute.xlu0 %6292
        %6298 = vrot.lane.b32.xlu0 %v6270, 96
        %v6299 = vpop.permute.xlu0 %6298
        %6300 = vrot.lane.b32.xlu0 %v6271, 96
        %v6301 = vpop.permute.xlu0 %6300
        %6306 = vrot.lane.b32.xlu0 %v6274, 32
        %v6307 = vpop.permute.xlu0 %6306
        %6308 = vrot.lane.b32.xlu0 %v6275, 32
        %v6309 = vpop.permute.xlu0 %6308
        %6314 = vrot.lane.b32.xlu0 %v6276, 64
        %v6315 = vpop.permute.xlu0 %6314
        %6316 = vrot.lane.b32.xlu0 %v6277, 64
        %v6317 = vpop.permute.xlu0 %6316
        %6322 = vrot.lane.b32.xlu0 %v6278, 96
        %v6323 = vpop.permute.xlu0 %6322
        %6324 = vrot.lane.b32.xlu0 %v6279, 96
        %v6325 = vpop.permute.xlu0 %6324
        %v6328 = vsel %vm627, %v6264, %v6283
        %v6329 = vsel %vm627, %v6265, %v6285
        %v6330 = vsel %vm811, %v6328, %v6291
        %v6331 = vsel %vm811, %v6329, %v6293
        %v6332 = vsel %vm814, %v6330, %v6299
        %v6333 = vsel %vm814, %v6331, %v6301
        %v6334 = vsel %vm627, %v6272, %v6307
        %v6335 = vsel %vm627, %v6273, %v6309
        %v6336 = vsel %vm811, %v6334, %v6315
        %v6337 = vsel %vm811, %v6335, %v6317
        %v6338 = vsel %vm814, %v6336, %v6323
        %v6339 = vsel %vm814, %v6337, %v6325
        %s6340 = scalar_lea.vmem [#allocation14], 4864
        %v6341 = vld [vmem:[%s6340] sm:$0xff]
        %v6342 = vld [vmem:[%s6340 + $0x8] sm:$0xff]
        %v6343 = vld [vmem:[%s6340 + $0x10] sm:$0xff]
        %v6344 = vld [vmem:[%s6340 + $0x18] sm:$0xff]
        %v6345 = vld [vmem:[%s6340 + $0x20] sm:$0xff]
        %v6346 = vld [vmem:[%s6340 + $0x28] sm:$0xff]
        %v6347 = vld [vmem:[%s6340 + $0x30] sm:$0xff]
        %v6348 = vld [vmem:[%s6340 + $0x38] sm:$0xff]
        %v6349 = vld [vmem:[%s6340 + $0x40] sm:$0xff]
        %v6350 = vld [vmem:[%s6340 + $0x48] sm:$0xff]
        %v6351 = vld [vmem:[%s6340 + $0x50] sm:$0xff]
        %v6352 = vld [vmem:[%s6340 + $0x58] sm:$0xff]
        %v6353 = vld [vmem:[%s6340 + $0x60] sm:$0xff]
        %v6354 = vld [vmem:[%s6340 + $0x68] sm:$0xff]
        %v6355 = vld [vmem:[%s6340 + $0x70] sm:$0xff]
        %v6356 = vld [vmem:[%s6340 + $0x78] sm:$0xff]
        %v6357 = vld [vmem:[%s6340 + $0x80] sm:$0xff]
        %v6358 = vld [vmem:[%s6340 + $0x88] sm:$0xff]
        %v6359 = vld [vmem:[%s6340 + $0x90] sm:$0xff]
        %v6360 = vld [vmem:[%s6340 + $0x98] sm:$0xff]
        %v6361 = vld [vmem:[%s6340 + $0xa0] sm:$0xff]
        %v6362 = vld [vmem:[%s6340 + $0xa8] sm:$0xff]
        %v6363 = vld [vmem:[%s6340 + $0xb0] sm:$0xff]
        %v6364 = vld [vmem:[%s6340 + $0xb8] sm:$0xff]
        %v6365 = vld [vmem:[%s6340 + $0xc0] sm:$0xff]
        %v6366 = vld [vmem:[%s6340 + $0xc8] sm:$0xff]
        %v6367 = vld [vmem:[%s6340 + $0xd0] sm:$0xff]
        %v6368 = vld [vmem:[%s6340 + $0xd8] sm:$0xff]
        %v6369 = vld [vmem:[%s6340 + $0xe0] sm:$0xff]
        %v6370 = vld [vmem:[%s6340 + $0xe8] sm:$0xff]
        %v6371 = vld [vmem:[%s6340 + $0xf0] sm:$0xff]
        %v6372 = vld [vmem:[%s6340 + $0xf8] sm:$0xff]
        %6373 = vmatprep.subr.mxu0 0.0
        %6374 = vmatpush1.msra.mxu0 %v6341
        %6375 = vmatprep.subr.mxu0 0.0
        %6376 = vmatpush1.msra.mxu0 %v6342
        %6377 = vmatprep.subr.mxu0 0.0
        %6378 = vmatpush1.msra.mxu0 %v6343
        %6379 = vmatprep.subr.mxu0 0.0
        %6380 = vmatpush1.msra.mxu0 %v6344
        %6381 = vmatprep.subr.mxu0 0.0
        %6382 = vmatpush1.msra.mxu0 %v6345
        %6383 = vmatprep.subr.mxu0 0.0
        %6384 = vmatpush1.msra.mxu0 %v6346
        %6385 = vmatprep.subr.mxu0 0.0
        %6386 = vmatpush1.msra.mxu0 %v6347
        %6387 = vmatprep.subr.mxu0 0.0
        %6388 = vmatpush1.msra.mxu0 %v6348
        %6389 = vmatprep.subr.mxu0 0.0
        %6390 = vmatpush1.msra.mxu0 %v6349
        %6391 = vmatprep.subr.mxu0 0.0
        %6392 = vmatpush1.msra.mxu0 %v6350
        %6393 = vmatprep.subr.mxu0 0.0
        %6394 = vmatpush1.msra.mxu0 %v6351
        %6395 = vmatprep.subr.mxu0 0.0
        %6396 = vmatpush1.msra.mxu0 %v6352
        %6397 = vmatprep.subr.mxu0 0.0
        %6398 = vmatpush1.msra.mxu0 %v6353
        %6399 = vmatprep.subr.mxu0 0.0
        %6400 = vmatpush1.msra.mxu0 %v6354
        %6401 = vmatprep.subr.mxu0 0.0
        %6402 = vmatpush1.msra.mxu0 %v6355
        %6403 = vmatprep.subr.mxu0 0.0
        %6404 = vmatpush1.msra.mxu0 %v6356
        %6405 = vmatprep.subr.mxu0 0.0
        %6406 = vmatpush1.msra.mxu0 %v6357
        %6407 = vmatprep.subr.mxu0 0.0
        %6408 = vmatpush1.msra.mxu0 %v6358
        %6409 = vmatprep.subr.mxu0 0.0
        %6410 = vmatpush1.msra.mxu0 %v6359
        %6411 = vmatprep.subr.mxu0 0.0
        %6412 = vmatpush1.msra.mxu0 %v6360
        %6413 = vmatprep.subr.mxu0 0.0
        %6414 = vmatpush1.msra.mxu0 %v6361
        %6415 = vmatprep.subr.mxu0 0.0
        %6416 = vmatpush1.msra.mxu0 %v6362
        %6417 = vmatprep.subr.mxu0 0.0
        %6418 = vmatpush1.msra.mxu0 %v6363
        %6419 = vmatprep.subr.mxu0 0.0
        %6420 = vmatpush1.msra.mxu0 %v6364
        %6421 = vmatprep.subr.mxu0 0.0
        %6422 = vmatpush1.msra.mxu0 %v6365
        %6423 = vmatprep.subr.mxu0 0.0
        %6424 = vmatpush1.msra.mxu0 %v6366
        %6425 = vmatprep.subr.mxu0 0.0
        %6426 = vmatpush1.msra.mxu0 %v6367
        %6427 = vmatprep.subr.mxu0 0.0
        %6428 = vmatpush1.msra.mxu0 %v6368
        %6429 = vmatprep.subr.mxu0 0.0
        %6430 = vmatpush1.msra.mxu0 %v6369
        %6431 = vmatprep.subr.mxu0 0.0
        %6432 = vmatpush1.msra.mxu0 %v6370
        %6433 = vmatprep.subr.mxu0 0.0
        %6434 = vmatpush1.msra.mxu0 %v6371
        %6435 = vmatprep.subr.mxu0 0.0
        %6436 = vmatpush1.msra.mxu0 %v6372
        %6437 = vmatprep.mubr.f32.mxu0 %v6338
        %6438 = vmatmul.mubr.f32.gmra.mrb[0].mxu0 %v6332
        %v6439 = vpop.f32.mrb[0].mxu0
        %v6440 = vadd.f32 0.0, %v6439
        %v6441 = vpop.f32.mrb[0].mxu0
        %6442 = vmatprep.mubr.f32.mxu0 %v6339
        %6443 = vmatmul.mubr.f32.gmra.mrb[0].mxu0 %v6333
        %v6444 = vpop.f32.mrb[0].mxu0
        %v6445 = vadd.f32 0.0, %v6444
        %v6446 = vpop.f32.mrb[0].mxu0
        %6447 = vdwg.mxu0
        %v6448 = vadd.f32 %v6262, %v6440
        %v6449 = vadd.f32 %v6263, %v6445
        %v6451 = vlaneseq
        %v6452 = vshrl.u32 %v6451, 7
        %v6453 = vsub.s32 0, %v6452
        %v6454 = vrot.slane %v5367, %v6453
        %v6456 = vmul.f32 %v6448, %v6454
        %v6457 = vmul.f32 %v6449, %v6454
        %v6459 = vlaneseq
        %v6460 = vshrl.u32 %v6459, 7
        %v6461 = vsub.s32 0, %v6460
        %v6462 = vrot.slane %v5369, %v6461
        %v6464 = vadd.f32 %v6456, %v6462
        %v6465 = vadd.f32 %v6457, %v6462
        %v6466 = vmax.f32 %v6464, 0.0
        %v6467 = vmax.f32 %v6465, 0.0
        %6468 = vst [vmem:[#allocation3 + $0x8] sm:$0xff] %v6466
        %6469 = vst [vmem:[#allocation3 + $0x10] sm:$0xff] %v6467
        %v6470 = vld [vmem:[#allocation3 + $0x8] sm:$0xff]
        %v6471 = vld [vmem:[#allocation3 + $0x10] sm:$0xff]
        %v6472 = vld [vmem:[#allocation3 + $0x7] sm:$0xff]
        %v6473 = vld [vmem:[#allocation3 + $0xf] sm:$0xff]
        %v6474 = vmax.f32 %v6472, %v6470
        %v6475 = vmax.f32 %v6473, %v6471
        %v6476 = vld [vmem:[#allocation3 + $0x9] sm:$0xff]
        %v6477 = vld [vmem:[#allocation3 + $0x11] sm:$0xff]
        %v6478 = vmax.f32 %v6474, %v6476
        %v6479 = vmax.f32 %v6475, %v6477
        %s6480 = scalar_lea.vmem %s4, 512
        %v6481 = vld [vmem:[%s6480] sm:$0xff]
        %v6482 = vld [vmem:[%s6480 + $0x8] sm:$0xff]
        %v6483 = vld [vmem:[%s6480 + $0x10] sm:$0xff]
        %v6484 = vld [vmem:[%s6480 + $0x18] sm:$0xff]
        %v6485 = vld [vmem:[%s6480 + $0x20] sm:$0xff]
        %v6486 = vld [vmem:[%s6480 + $0x28] sm:$0xff]
        %v6487 = vld [vmem:[%s6480 + $0x30] sm:$0xff]
        %v6488 = vld [vmem:[%s6480 + $0x38] sm:$0xff]
        %v6489 = vld [vmem:[%s6480 + $0x40] sm:$0xff]
        %v6490 = vld [vmem:[%s6480 + $0x48] sm:$0xff]
        %v6491 = vld [vmem:[%s6480 + $0x50] sm:$0xff]
        %v6492 = vld [vmem:[%s6480 + $0x58] sm:$0xff]
        %v6493 = vld [vmem:[%s6480 + $0x60] sm:$0xff]
        %v6494 = vld [vmem:[%s6480 + $0x68] sm:$0xff]
        %v6495 = vld [vmem:[%s6480 + $0x70] sm:$0xff]
        %v6496 = vld [vmem:[%s6480 + $0x78] sm:$0xff]
        %s6497 = scalar_lea.vmem [#allocation12], 512
        %v6498 = vld [vmem:[%s6497] sm:$0xff]
        %v6499 = vld [vmem:[%s6497 + $0x8] sm:$0xff]
        %v6500 = vld [vmem:[%s6497 + $0x10] sm:$0xff]
        %v6501 = vld [vmem:[%s6497 + $0x18] sm:$0xff]
        %v6502 = vld [vmem:[%s6497 + $0x20] sm:$0xff]
        %v6503 = vld [vmem:[%s6497 + $0x28] sm:$0xff]
        %v6504 = vld [vmem:[%s6497 + $0x30] sm:$0xff]
        %v6505 = vld [vmem:[%s6497 + $0x38] sm:$0xff]
        %v6506 = vld [vmem:[%s6497 + $0x40] sm:$0xff]
        %v6507 = vld [vmem:[%s6497 + $0x48] sm:$0xff]
        %v6508 = vld [vmem:[%s6497 + $0x50] sm:$0xff]
        %v6509 = vld [vmem:[%s6497 + $0x58] sm:$0xff]
        %v6510 = vld [vmem:[%s6497 + $0x60] sm:$0xff]
        %v6511 = vld [vmem:[%s6497 + $0x68] sm:$0xff]
        %v6512 = vld [vmem:[%s6497 + $0x70] sm:$0xff]
        %v6513 = vld [vmem:[%s6497 + $0x78] sm:$0xff]
        %s6514 = scalar_lea.vmem [#allocation15], 5
        %v6515 = vld [vmem:[%s6514] sm:$0x1]
        %s6516 = scalar_lea.vmem [#allocation17], 5
        %v6517 = vld [vmem:[%s6516] sm:$0x1]
        %6518 = vmatprep.subr.mxu0 0.0
        %6519 = vmatpush1.msra.mxu0 %v6481
        %6520 = vmatprep.subr.mxu0 0.0
        %6521 = vmatpush1.msra.mxu0 %v6482
        %6522 = vmatprep.subr.mxu0 0.0
        %6523 = vmatpush1.msra.mxu0 %v6483
        %6524 = vmatprep.subr.mxu0 0.0
        %6525 = vmatpush1.msra.mxu0 %v6484
        %6526 = vmatprep.subr.mxu0 0.0
        %6527 = vmatpush1.msra.mxu0 %v6485
        %6528 = vmatprep.subr.mxu0 0.0
        %6529 = vmatpush1.msra.mxu0 %v6486
        %6530 = vmatprep.subr.mxu0 0.0
        %6531 = vmatpush1.msra.mxu0 %v6487
        %6532 = vmatprep.subr.mxu0 0.0
        %6533 = vmatpush1.msra.mxu0 %v6488
        %6534 = vmatprep.subr.mxu0 0.0
        %6535 = vmatpush1.msra.mxu0 %v6489
        %6536 = vmatprep.subr.mxu0 0.0
        %6537 = vmatpush1.msra.mxu0 %v6490
        %6538 = vmatprep.subr.mxu0 0.0
        %6539 = vmatpush1.msra.mxu0 %v6491
        %6540 = vmatprep.subr.mxu0 0.0
        %6541 = vmatpush1.msra.mxu0 %v6492
        %6542 = vmatprep.subr.mxu0 0.0
        %6543 = vmatpush1.msra.mxu0 %v6493
        %6544 = vmatprep.subr.mxu0 0.0
        %6545 = vmatpush1.msra.mxu0 %v6494
        %6546 = vmatprep.subr.mxu0 0.0
        %6547 = vmatpush1.msra.mxu0 %v6495
        %6548 = vmatprep.subr.mxu0 0.0
        %6549 = vmatpush1.msra.mxu0 %v6496
        %6550 = vmatprep.subr.mxu0 0.0
        %6551 = vmatpush1.msra.mxu0 0.0
        %6552 = vmatprep.subr.mxu0 0.0
        %6553 = vmatpush1.msra.mxu0 0.0
        %6554 = vmatprep.subr.mxu0 0.0
        %6555 = vmatpush1.msra.mxu0 0.0
        %6556 = vmatprep.subr.mxu0 0.0
        %6557 = vmatpush1.msra.mxu0 0.0
        %6558 = vmatprep.subr.mxu0 0.0
        %6559 = vmatpush1.msra.mxu0 0.0
        %6560 = vmatprep.subr.mxu0 0.0
        %6561 = vmatpush1.msra.mxu0 0.0
        %6562 = vmatprep.subr.mxu0 0.0
        %6563 = vmatpush1.msra.mxu0 0.0
        %6564 = vmatprep.subr.mxu0 0.0
        %6565 = vmatpush1.msra.mxu0 0.0
        %6566 = vmatprep.subr.mxu0 0.0
        %6567 = vmatpush1.msra.mxu0 0.0
        %6568 = vmatprep.subr.mxu0 0.0
        %6569 = vmatpush1.msra.mxu0 0.0
        %6570 = vmatprep.subr.mxu0 0.0
        %6571 = vmatpush1.msra.mxu0 0.0
        %6572 = vmatprep.subr.mxu0 0.0
        %6573 = vmatpush1.msra.mxu0 0.0
        %6574 = vmatprep.subr.mxu0 0.0
        %6575 = vmatpush1.msra.mxu0 0.0
        %6576 = vmatprep.subr.mxu0 0.0
        %6577 = vmatpush1.msra.mxu0 0.0
        %6578 = vmatprep.subr.mxu0 0.0
        %6579 = vmatpush1.msra.mxu0 0.0
        %6580 = vmatprep.subr.mxu0 0.0
        %6581 = vmatpush1.msra.mxu0 0.0
        %6582 = vmatprep.mubr.f32.mxu0 0.0
        %6583 = vmatmul.mubr.f32.gmra.mrb[0].mxu0 %v6470
        %v6584 = vpop.f32.mrb[0].mxu0
        %v6585 = vadd.f32 0.0, %v6584
        %v6586 = vpop.f32.mrb[0].mxu0
        %6587 = vmatprep.mubr.f32.mxu0 0.0
        %6588 = vmatmul.mubr.f32.gmra.mrb[0].mxu0 %v6471
        %v6589 = vpop.f32.mrb[0].mxu0
        %v6590 = vadd.f32 0.0, %v6589
        %v6591 = vpop.f32.mrb[0].mxu0
        %6592 = vdwg.mxu0
        %6593 = vst.msk [vmem:[#allocation2 + $0x18] sm:$0xff] %vm627, %v6585
        %6594 = vst.msk [vmem:[#allocation2 + $0x20] sm:$0xff] %vm627, %v6590
        %v6595 = vld [vmem:[#allocation2 + $0x5] sm:$0xff]
        %v6596 = vld [vmem:[#allocation2 + $0xd] sm:$0xff]
        %v6597 = vld [vmem:[#allocation2 + $0x6] sm:$0xff]
        %v6598 = vld [vmem:[#allocation2 + $0xe] sm:$0xff]
        %v6599 = vld [vmem:[#allocation2 + $0x7] sm:$0xff]
        %v6600 = vld [vmem:[#allocation2 + $0xf] sm:$0xff]
        %v6601 = vld [vmem:[#allocation2 + $0x8] sm:$0xff]
        %v6602 = vld [vmem:[#allocation2 + $0x10] sm:$0xff]
        %v6603 = vld [vmem:[#allocation2 + $0x9] sm:$0xff]
        %v6604 = vld [vmem:[#allocation2 + $0x11] sm:$0xff]
        %v6605 = vld [vmem:[#allocation2 + $0xa] sm:$0xff]
        %v6606 = vld [vmem:[#allocation2 + $0x12] sm:$0xff]
        %v6607 = vld [vmem:[#allocation2 + $0xb] sm:$0xff]
        %v6608 = vld [vmem:[#allocation2 + $0x13] sm:$0xff]
        %v6609 = vld [vmem:[#allocation2 + $0xc] sm:$0xff]
        %v6610 = vld [vmem:[#allocation2 + $0x14] sm:$0xff]
        %6613 = vrot.lane.b32.xlu0 %v6597, 32
        %v6614 = vpop.permute.xlu0 %6613
        %6615 = vrot.lane.b32.xlu0 %v6598, 32
        %v6616 = vpop.permute.xlu0 %6615
        %6621 = vrot.lane.b32.xlu0 %v6599, 64
        %v6622 = vpop.permute.xlu0 %6621
        %6623 = vrot.lane.b32.xlu0 %v6600, 64
        %v6624 = vpop.permute.xlu0 %6623
        %6629 = vrot.lane.b32.xlu0 %v6601, 96
        %v6630 = vpop.permute.xlu0 %6629
        %6631 = vrot.lane.b32.xlu0 %v6602, 96
        %v6632 = vpop.permute.xlu0 %6631
        %6637 = vrot.lane.b32.xlu0 %v6605, 32
        %v6638 = vpop.permute.xlu0 %6637
        %6639 = vrot.lane.b32.xlu0 %v6606, 32
        %v6640 = vpop.permute.xlu0 %6639
        %6645 = vrot.lane.b32.xlu0 %v6607, 64
        %v6646 = vpop.permute.xlu0 %6645
        %6647 = vrot.lane.b32.xlu0 %v6608, 64
        %v6648 = vpop.permute.xlu0 %6647
        %6653 = vrot.lane.b32.xlu0 %v6609, 96
        %v6654 = vpop.permute.xlu0 %6653
        %6655 = vrot.lane.b32.xlu0 %v6610, 96
        %v6656 = vpop.permute.xlu0 %6655
        %v6659 = vsel %vm627, %v6595, %v6614
        %v6660 = vsel %vm627, %v6596, %v6616
        %v6661 = vsel %vm811, %v6659, %v6622
        %v6662 = vsel %vm811, %v6660, %v6624
        %v6663 = vsel %vm814, %v6661, %v6630
        %v6664 = vsel %vm814, %v6662, %v6632
        %v6665 = vsel %vm627, %v6603, %v6638
        %v6666 = vsel %vm627, %v6604, %v6640
        %v6667 = vsel %vm811, %v6665, %v6646
        %v6668 = vsel %vm811, %v6666, %v6648
        %v6669 = vsel %vm814, %v6667, %v6654
        %v6670 = vsel %vm814, %v6668, %v6656
        %s6671 = scalar_lea.vmem [#allocation14], 5120
        %v6672 = vld [vmem:[%s6671] sm:$0xff]
        %v6673 = vld [vmem:[%s6671 + $0x8] sm:$0xff]
        %v6674 = vld [vmem:[%s6671 + $0x10] sm:$0xff]
        %v6675 = vld [vmem:[%s6671 + $0x18] sm:$0xff]
        %v6676 = vld [vmem:[%s6671 + $0x20] sm:$0xff]
        %v6677 = vld [vmem:[%s6671 + $0x28] sm:$0xff]
        %v6678 = vld [vmem:[%s6671 + $0x30] sm:$0xff]
        %v6679 = vld [vmem:[%s6671 + $0x38] sm:$0xff]
        %v6680 = vld [vmem:[%s6671 + $0x40] sm:$0xff]
        %v6681 = vld [vmem:[%s6671 + $0x48] sm:$0xff]
        %v6682 = vld [vmem:[%s6671 + $0x50] sm:$0xff]
        %v6683 = vld [vmem:[%s6671 + $0x58] sm:$0xff]
        %v6684 = vld [vmem:[%s6671 + $0x60] sm:$0xff]
        %v6685 = vld [vmem:[%s6671 + $0x68] sm:$0xff]
        %v6686 = vld [vmem:[%s6671 + $0x70] sm:$0xff]
        %v6687 = vld [vmem:[%s6671 + $0x78] sm:$0xff]
        %v6688 = vld [vmem:[%s6671 + $0x80] sm:$0xff]
        %v6689 = vld [vmem:[%s6671 + $0x88] sm:$0xff]
        %v6690 = vld [vmem:[%s6671 + $0x90] sm:$0xff]
        %v6691 = vld [vmem:[%s6671 + $0x98] sm:$0xff]
        %v6692 = vld [vmem:[%s6671 + $0xa0] sm:$0xff]
        %v6693 = vld [vmem:[%s6671 + $0xa8] sm:$0xff]
        %v6694 = vld [vmem:[%s6671 + $0xb0] sm:$0xff]
        %v6695 = vld [vmem:[%s6671 + $0xb8] sm:$0xff]
        %v6696 = vld [vmem:[%s6671 + $0xc0] sm:$0xff]
        %v6697 = vld [vmem:[%s6671 + $0xc8] sm:$0xff]
        %v6698 = vld [vmem:[%s6671 + $0xd0] sm:$0xff]
        %v6699 = vld [vmem:[%s6671 + $0xd8] sm:$0xff]
        %v6700 = vld [vmem:[%s6671 + $0xe0] sm:$0xff]
        %v6701 = vld [vmem:[%s6671 + $0xe8] sm:$0xff]
        %v6702 = vld [vmem:[%s6671 + $0xf0] sm:$0xff]
        %v6703 = vld [vmem:[%s6671 + $0xf8] sm:$0xff]
        %6704 = vmatprep.subr.mxu0 0.0
        %6705 = vmatpush1.msra.mxu0 %v6672
        %6706 = vmatprep.subr.mxu0 0.0
        %6707 = vmatpush1.msra.mxu0 %v6673
        %6708 = vmatprep.subr.mxu0 0.0
        %6709 = vmatpush1.msra.mxu0 %v6674
        %6710 = vmatprep.subr.mxu0 0.0
        %6711 = vmatpush1.msra.mxu0 %v6675
        %6712 = vmatprep.subr.mxu0 0.0
        %6713 = vmatpush1.msra.mxu0 %v6676
        %6714 = vmatprep.subr.mxu0 0.0
        %6715 = vmatpush1.msra.mxu0 %v6677
        %6716 = vmatprep.subr.mxu0 0.0
        %6717 = vmatpush1.msra.mxu0 %v6678
        %6718 = vmatprep.subr.mxu0 0.0
        %6719 = vmatpush1.msra.mxu0 %v6679
        %6720 = vmatprep.subr.mxu0 0.0
        %6721 = vmatpush1.msra.mxu0 %v6680
        %6722 = vmatprep.subr.mxu0 0.0
        %6723 = vmatpush1.msra.mxu0 %v6681
        %6724 = vmatprep.subr.mxu0 0.0
        %6725 = vmatpush1.msra.mxu0 %v6682
        %6726 = vmatprep.subr.mxu0 0.0
        %6727 = vmatpush1.msra.mxu0 %v6683
        %6728 = vmatprep.subr.mxu0 0.0
        %6729 = vmatpush1.msra.mxu0 %v6684
        %6730 = vmatprep.subr.mxu0 0.0
        %6731 = vmatpush1.msra.mxu0 %v6685
        %6732 = vmatprep.subr.mxu0 0.0
        %6733 = vmatpush1.msra.mxu0 %v6686
        %6734 = vmatprep.subr.mxu0 0.0
        %6735 = vmatpush1.msra.mxu0 %v6687
        %6736 = vmatprep.subr.mxu0 0.0
        %6737 = vmatpush1.msra.mxu0 %v6688
        %6738 = vmatprep.subr.mxu0 0.0
        %6739 = vmatpush1.msra.mxu0 %v6689
        %6740 = vmatprep.subr.mxu0 0.0
        %6741 = vmatpush1.msra.mxu0 %v6690
        %6742 = vmatprep.subr.mxu0 0.0
        %6743 = vmatpush1.msra.mxu0 %v6691
        %6744 = vmatprep.subr.mxu0 0.0
        %6745 = vmatpush1.msra.mxu0 %v6692
        %6746 = vmatprep.subr.mxu0 0.0
        %6747 = vmatpush1.msra.mxu0 %v6693
        %6748 = vmatprep.subr.mxu0 0.0
        %6749 = vmatpush1.msra.mxu0 %v6694
        %6750 = vmatprep.subr.mxu0 0.0
        %6751 = vmatpush1.msra.mxu0 %v6695
        %6752 = vmatprep.subr.mxu0 0.0
        %6753 = vmatpush1.msra.mxu0 %v6696
        %6754 = vmatprep.subr.mxu0 0.0
        %6755 = vmatpush1.msra.mxu0 %v6697
        %6756 = vmatprep.subr.mxu0 0.0
        %6757 = vmatpush1.msra.mxu0 %v6698
        %6758 = vmatprep.subr.mxu0 0.0
        %6759 = vmatpush1.msra.mxu0 %v6699
        %6760 = vmatprep.subr.mxu0 0.0
        %6761 = vmatpush1.msra.mxu0 %v6700
        %6762 = vmatprep.subr.mxu0 0.0
        %6763 = vmatpush1.msra.mxu0 %v6701
        %6764 = vmatprep.subr.mxu0 0.0
        %6765 = vmatpush1.msra.mxu0 %v6702
        %6766 = vmatprep.subr.mxu0 0.0
        %6767 = vmatpush1.msra.mxu0 %v6703
        %6768 = vmatprep.mubr.f32.mxu0 %v6669
        %6769 = vmatmul.mubr.f32.gmra.mrb[0].mxu0 %v6663
        %v6770 = vpop.f32.mrb[0].mxu0
        %v6771 = vadd.f32 0.0, %v6770
        %v6772 = vpop.f32.mrb[0].mxu0
        %6773 = vmatprep.mubr.f32.mxu0 %v6670
        %6774 = vmatmul.mubr.f32.gmra.mrb[0].mxu0 %v6664
        %v6775 = vpop.f32.mrb[0].mxu0
        %v6776 = vadd.f32 0.0, %v6775
        %v6777 = vpop.f32.mrb[0].mxu0
        %6778 = vdwg.mxu0
        %6779 = vmatprep.subr.mxu0 0.0
        %6780 = vmatpush1.msra.mxu0 %v6498
        %6781 = vmatprep.subr.mxu0 0.0
        %6782 = vmatpush1.msra.mxu0 %v6499
        %6783 = vmatprep.subr.mxu0 0.0
        %6784 = vmatpush1.msra.mxu0 %v6500
        %6785 = vmatprep.subr.mxu0 0.0
        %6786 = vmatpush1.msra.mxu0 %v6501
        %6787 = vmatprep.subr.mxu0 0.0
        %6788 = vmatpush1.msra.mxu0 %v6502
        %6789 = vmatprep.subr.mxu0 0.0
        %6790 = vmatpush1.msra.mxu0 %v6503
        %6791 = vmatprep.subr.mxu0 0.0
        %6792 = vmatpush1.msra.mxu0 %v6504
        %6793 = vmatprep.subr.mxu0 0.0
        %6794 = vmatpush1.msra.mxu0 %v6505
        %6795 = vmatprep.subr.mxu0 0.0
        %6796 = vmatpush1.msra.mxu0 %v6506
        %6797 = vmatprep.subr.mxu0 0.0
        %6798 = vmatpush1.msra.mxu0 %v6507
        %6799 = vmatprep.subr.mxu0 0.0
        %6800 = vmatpush1.msra.mxu0 %v6508
        %6801 = vmatprep.subr.mxu0 0.0
        %6802 = vmatpush1.msra.mxu0 %v6509
        %6803 = vmatprep.subr.mxu0 0.0
        %6804 = vmatpush1.msra.mxu0 %v6510
        %6805 = vmatprep.subr.mxu0 0.0
        %6806 = vmatpush1.msra.mxu0 %v6511
        %6807 = vmatprep.subr.mxu0 0.0
        %6808 = vmatpush1.msra.mxu0 %v6512
        %6809 = vmatprep.subr.mxu0 0.0
        %6810 = vmatpush1.msra.mxu0 %v6513
        %6811 = vmatprep.subr.mxu0 0.0
        %6812 = vmatpush1.msra.mxu0 0.0
        %6813 = vmatprep.subr.mxu0 0.0
        %6814 = vmatpush1.msra.mxu0 0.0
        %6815 = vmatprep.subr.mxu0 0.0
        %6816 = vmatpush1.msra.mxu0 0.0
        %6817 = vmatprep.subr.mxu0 0.0
        %6818 = vmatpush1.msra.mxu0 0.0
        %6819 = vmatprep.subr.mxu0 0.0
        %6820 = vmatpush1.msra.mxu0 0.0
        %6821 = vmatprep.subr.mxu0 0.0
        %6822 = vmatpush1.msra.mxu0 0.0
        %6823 = vmatprep.subr.mxu0 0.0
        %6824 = vmatpush1.msra.mxu0 0.0
        %6825 = vmatprep.subr.mxu0 0.0
        %6826 = vmatpush1.msra.mxu0 0.0
        %6827 = vmatprep.subr.mxu0 0.0
        %6828 = vmatpush1.msra.mxu0 0.0
        %6829 = vmatprep.subr.mxu0 0.0
        %6830 = vmatpush1.msra.mxu0 0.0
        %6831 = vmatprep.subr.mxu0 0.0
        %6832 = vmatpush1.msra.mxu0 0.0
        %6833 = vmatprep.subr.mxu0 0.0
        %6834 = vmatpush1.msra.mxu0 0.0
        %6835 = vmatprep.subr.mxu0 0.0
        %6836 = vmatpush1.msra.mxu0 0.0
        %6837 = vmatprep.subr.mxu0 0.0
        %6838 = vmatpush1.msra.mxu0 0.0
        %6839 = vmatprep.subr.mxu0 0.0
        %6840 = vmatpush1.msra.mxu0 0.0
        %6841 = vmatprep.subr.mxu0 0.0
        %6842 = vmatpush1.msra.mxu0 0.0
        %6843 = vmatprep.mubr.f32.mxu0 0.0
        %6844 = vmatmul.mubr.f32.gmra.mrb[0].mxu0 %v6478
        %v6845 = vpop.f32.mrb[0].mxu0
        %v6846 = vadd.f32 %v6771, %v6845
        %v6847 = vpop.f32.mrb[0].mxu0
        %6848 = vmatprep.mubr.f32.mxu0 0.0
        %6849 = vmatmul.mubr.f32.gmra.mrb[0].mxu0 %v6479
        %v6850 = vpop.f32.mrb[0].mxu0
        %v6851 = vadd.f32 %v6776, %v6850
        %v6852 = vpop.f32.mrb[0].mxu0
        %6853 = vdwg.mxu0
        %v6854 = vld [vmem:[#allocation2 + $0xd] sm:$0xff]
        %v6855 = vld [vmem:[#allocation2 + $0x15] sm:$0xff]
        %v6856 = vld [vmem:[#allocation2 + $0xe] sm:$0xff]
        %v6857 = vld [vmem:[#allocation2 + $0x16] sm:$0xff]
        %v6858 = vld [vmem:[#allocation2 + $0xf] sm:$0xff]
        %v6859 = vld [vmem:[#allocation2 + $0x17] sm:$0xff]
        %v6860 = vld [vmem:[#allocation2 + $0x10] sm:$0xff]
        %v6861 = vld [vmem:[#allocation2 + $0x18] sm:$0xff]
        %v6862 = vld [vmem:[#allocation2 + $0x11] sm:$0xff]
        %v6863 = vld [vmem:[#allocation2 + $0x19] sm:$0xff]
        %v6864 = vld [vmem:[#allocation2 + $0x12] sm:$0xff]
        %v6865 = vld [vmem:[#allocation2 + $0x1a] sm:$0xff]
        %v6866 = vld [vmem:[#allocation2 + $0x13] sm:$0xff]
        %v6867 = vld [vmem:[#allocation2 + $0x1b] sm:$0xff]
        %v6868 = vld [vmem:[#allocation2 + $0x14] sm:$0xff]
        %v6869 = vld [vmem:[#allocation2 + $0x1c] sm:$0xff]
        %6872 = vrot.lane.b32.xlu0 %v6856, 32
        %v6873 = vpop.permute.xlu0 %6872
        %6874 = vrot.lane.b32.xlu0 %v6857, 32
        %v6875 = vpop.permute.xlu0 %6874
        %6880 = vrot.lane.b32.xlu0 %v6858, 64
        %v6881 = vpop.permute.xlu0 %6880
        %6882 = vrot.lane.b32.xlu0 %v6859, 64
        %v6883 = vpop.permute.xlu0 %6882
        %6888 = vrot.lane.b32.xlu0 %v6860, 96
        %v6889 = vpop.permute.xlu0 %6888
        %6890 = vrot.lane.b32.xlu0 %v6861, 96
        %v6891 = vpop.permute.xlu0 %6890
        %6896 = vrot.lane.b32.xlu0 %v6864, 32
        %v6897 = vpop.permute.xlu0 %6896
        %6898 = vrot.lane.b32.xlu0 %v6865, 32
        %v6899 = vpop.permute.xlu0 %6898
        %6904 = vrot.lane.b32.xlu0 %v6866, 64
        %v6905 = vpop.permute.xlu0 %6904
        %6906 = vrot.lane.b32.xlu0 %v6867, 64
        %v6907 = vpop.permute.xlu0 %6906
        %6912 = vrot.lane.b32.xlu0 %v6868, 96
        %v6913 = vpop.permute.xlu0 %6912
        %6914 = vrot.lane.b32.xlu0 %v6869, 96
        %v6915 = vpop.permute.xlu0 %6914
        %v6918 = vsel %vm627, %v6854, %v6873
        %v6919 = vsel %vm627, %v6855, %v6875
        %v6920 = vsel %vm811, %v6918, %v6881
        %v6921 = vsel %vm811, %v6919, %v6883
        %v6922 = vsel %vm814, %v6920, %v6889
        %v6923 = vsel %vm814, %v6921, %v6891
        %v6924 = vsel %vm627, %v6862, %v6897
        %v6925 = vsel %vm627, %v6863, %v6899
        %v6926 = vsel %vm811, %v6924, %v6905
        %v6927 = vsel %vm811, %v6925, %v6907
        %v6928 = vsel %vm814, %v6926, %v6913
        %v6929 = vsel %vm814, %v6927, %v6915
        %s6930 = scalar_lea.vmem [#allocation14], 5376
        %v6931 = vld [vmem:[%s6930] sm:$0xff]
        %v6932 = vld [vmem:[%s6930 + $0x8] sm:$0xff]
        %v6933 = vld [vmem:[%s6930 + $0x10] sm:$0xff]
        %v6934 = vld [vmem:[%s6930 + $0x18] sm:$0xff]
        %v6935 = vld [vmem:[%s6930 + $0x20] sm:$0xff]
        %v6936 = vld [vmem:[%s6930 + $0x28] sm:$0xff]
        %v6937 = vld [vmem:[%s6930 + $0x30] sm:$0xff]
        %v6938 = vld [vmem:[%s6930 + $0x38] sm:$0xff]
        %v6939 = vld [vmem:[%s6930 + $0x40] sm:$0xff]
        %v6940 = vld [vmem:[%s6930 + $0x48] sm:$0xff]
        %v6941 = vld [vmem:[%s6930 + $0x50] sm:$0xff]
        %v6942 = vld [vmem:[%s6930 + $0x58] sm:$0xff]
        %v6943 = vld [vmem:[%s6930 + $0x60] sm:$0xff]
        %v6944 = vld [vmem:[%s6930 + $0x68] sm:$0xff]
        %v6945 = vld [vmem:[%s6930 + $0x70] sm:$0xff]
        %v6946 = vld [vmem:[%s6930 + $0x78] sm:$0xff]
        %v6947 = vld [vmem:[%s6930 + $0x80] sm:$0xff]
        %v6948 = vld [vmem:[%s6930 + $0x88] sm:$0xff]
        %v6949 = vld [vmem:[%s6930 + $0x90] sm:$0xff]
        %v6950 = vld [vmem:[%s6930 + $0x98] sm:$0xff]
        %v6951 = vld [vmem:[%s6930 + $0xa0] sm:$0xff]
        %v6952 = vld [vmem:[%s6930 + $0xa8] sm:$0xff]
        %v6953 = vld [vmem:[%s6930 + $0xb0] sm:$0xff]
        %v6954 = vld [vmem:[%s6930 + $0xb8] sm:$0xff]
        %v6955 = vld [vmem:[%s6930 + $0xc0] sm:$0xff]
        %v6956 = vld [vmem:[%s6930 + $0xc8] sm:$0xff]
        %v6957 = vld [vmem:[%s6930 + $0xd0] sm:$0xff]
        %v6958 = vld [vmem:[%s6930 + $0xd8] sm:$0xff]
        %v6959 = vld [vmem:[%s6930 + $0xe0] sm:$0xff]
        %v6960 = vld [vmem:[%s6930 + $0xe8] sm:$0xff]
        %v6961 = vld [vmem:[%s6930 + $0xf0] sm:$0xff]
        %v6962 = vld [vmem:[%s6930 + $0xf8] sm:$0xff]
        %6963 = vmatprep.subr.mxu0 0.0
        %6964 = vmatpush1.msra.mxu0 %v6931
        %6965 = vmatprep.subr.mxu0 0.0
        %6966 = vmatpush1.msra.mxu0 %v6932
        %6967 = vmatprep.subr.mxu0 0.0
        %6968 = vmatpush1.msra.mxu0 %v6933
        %6969 = vmatprep.subr.mxu0 0.0
        %6970 = vmatpush1.msra.mxu0 %v6934
        %6971 = vmatprep.subr.mxu0 0.0
        %6972 = vmatpush1.msra.mxu0 %v6935
        %6973 = vmatprep.subr.mxu0 0.0
        %6974 = vmatpush1.msra.mxu0 %v6936
        %6975 = vmatprep.subr.mxu0 0.0
        %6976 = vmatpush1.msra.mxu0 %v6937
        %6977 = vmatprep.subr.mxu0 0.0
        %6978 = vmatpush1.msra.mxu0 %v6938
        %6979 = vmatprep.subr.mxu0 0.0
        %6980 = vmatpush1.msra.mxu0 %v6939
        %6981 = vmatprep.subr.mxu0 0.0
        %6982 = vmatpush1.msra.mxu0 %v6940
        %6983 = vmatprep.subr.mxu0 0.0
        %6984 = vmatpush1.msra.mxu0 %v6941
        %6985 = vmatprep.subr.mxu0 0.0
        %6986 = vmatpush1.msra.mxu0 %v6942
        %6987 = vmatprep.subr.mxu0 0.0
        %6988 = vmatpush1.msra.mxu0 %v6943
        %6989 = vmatprep.subr.mxu0 0.0
        %6990 = vmatpush1.msra.mxu0 %v6944
        %6991 = vmatprep.subr.mxu0 0.0
        %6992 = vmatpush1.msra.mxu0 %v6945
        %6993 = vmatprep.subr.mxu0 0.0
        %6994 = vmatpush1.msra.mxu0 %v6946
        %6995 = vmatprep.subr.mxu0 0.0
        %6996 = vmatpush1.msra.mxu0 %v6947
        %6997 = vmatprep.subr.mxu0 0.0
        %6998 = vmatpush1.msra.mxu0 %v6948
        %6999 = vmatprep.subr.mxu0 0.0
        %7000 = vmatpush1.msra.mxu0 %v6949
        %7001 = vmatprep.subr.mxu0 0.0
        %7002 = vmatpush1.msra.mxu0 %v6950
        %7003 = vmatprep.subr.mxu0 0.0
        %7004 = vmatpush1.msra.mxu0 %v6951
        %7005 = vmatprep.subr.mxu0 0.0
        %7006 = vmatpush1.msra.mxu0 %v6952
        %7007 = vmatprep.subr.mxu0 0.0
        %7008 = vmatpush1.msra.mxu0 %v6953
        %7009 = vmatprep.subr.mxu0 0.0
        %7010 = vmatpush1.msra.mxu0 %v6954
        %7011 = vmatprep.subr.mxu0 0.0
        %7012 = vmatpush1.msra.mxu0 %v6955
        %7013 = vmatprep.subr.mxu0 0.0
        %7014 = vmatpush1.msra.mxu0 %v6956
        %7015 = vmatprep.subr.mxu0 0.0
        %7016 = vmatpush1.msra.mxu0 %v6957
        %7017 = vmatprep.subr.mxu0 0.0
        %7018 = vmatpush1.msra.mxu0 %v6958
        %7019 = vmatprep.subr.mxu0 0.0
        %7020 = vmatpush1.msra.mxu0 %v6959
        %7021 = vmatprep.subr.mxu0 0.0
        %7022 = vmatpush1.msra.mxu0 %v6960
        %7023 = vmatprep.subr.mxu0 0.0
        %7024 = vmatpush1.msra.mxu0 %v6961
        %7025 = vmatprep.subr.mxu0 0.0
        %7026 = vmatpush1.msra.mxu0 %v6962
        %7027 = vmatprep.mubr.f32.mxu0 %v6928
        %7028 = vmatmul.mubr.f32.gmra.mrb[0].mxu0 %v6922
        %v7029 = vpop.f32.mrb[0].mxu0
        %v7030 = vadd.f32 0.0, %v7029
        %v7031 = vpop.f32.mrb[0].mxu0
        %7032 = vmatprep.mubr.f32.mxu0 %v6929
        %7033 = vmatmul.mubr.f32.gmra.mrb[0].mxu0 %v6923
        %v7034 = vpop.f32.mrb[0].mxu0
        %v7035 = vadd.f32 0.0, %v7034
        %v7036 = vpop.f32.mrb[0].mxu0
        %7037 = vdwg.mxu0
        %v7038 = vadd.f32 %v6846, %v7030
        %v7039 = vadd.f32 %v6851, %v7035
        %v7040 = vld [vmem:[#allocation2 + $0x15] sm:$0xff]
        %v7041 = vld [vmem:[#allocation2 + $0x1d] sm:$0xff]
        %v7042 = vld [vmem:[#allocation2 + $0x16] sm:$0xff]
        %v7043 = vld [vmem:[#allocation2 + $0x1e] sm:$0xff]
        %v7044 = vld [vmem:[#allocation2 + $0x17] sm:$0xff]
        %v7045 = vld [vmem:[#allocation2 + $0x1f] sm:$0xff]
        %v7046 = vld [vmem:[#allocation2 + $0x18] sm:$0xff]
        %v7047 = vld [vmem:[#allocation2 + $0x20] sm:$0xff]
        %v7048 = vld [vmem:[#allocation2 + $0x19] sm:$0xff]
        %v7049 = vld [vmem:[#allocation2 + $0x21] sm:$0xff]
        %v7050 = vld [vmem:[#allocation2 + $0x1a] sm:$0xff]
        %v7051 = vld [vmem:[#allocation2 + $0x22] sm:$0xff]
        %v7052 = vld [vmem:[#allocation2 + $0x1b] sm:$0xff]
        %v7053 = vld [vmem:[#allocation2 + $0x23] sm:$0xff]
        %v7054 = vld [vmem:[#allocation2 + $0x1c] sm:$0xff]
        %v7055 = vld [vmem:[#allocation2 + $0x24] sm:$0xff]
        %7058 = vrot.lane.b32.xlu0 %v7042, 32
        %v7059 = vpop.permute.xlu0 %7058
        %7060 = vrot.lane.b32.xlu0 %v7043, 32
        %v7061 = vpop.permute.xlu0 %7060
        %7066 = vrot.lane.b32.xlu0 %v7044, 64
        %v7067 = vpop.permute.xlu0 %7066
        %7068 = vrot.lane.b32.xlu0 %v7045, 64
        %v7069 = vpop.permute.xlu0 %7068
        %7074 = vrot.lane.b32.xlu0 %v7046, 96
        %v7075 = vpop.permute.xlu0 %7074
        %7076 = vrot.lane.b32.xlu0 %v7047, 96
        %v7077 = vpop.permute.xlu0 %7076
        %7082 = vrot.lane.b32.xlu0 %v7050, 32
        %v7083 = vpop.permute.xlu0 %7082
        %7084 = vrot.lane.b32.xlu0 %v7051, 32
        %v7085 = vpop.permute.xlu0 %7084
        %7090 = vrot.lane.b32.xlu0 %v7052, 64
        %v7091 = vpop.permute.xlu0 %7090
        %7092 = vrot.lane.b32.xlu0 %v7053, 64
        %v7093 = vpop.permute.xlu0 %7092
        %7098 = vrot.lane.b32.xlu0 %v7054, 96
        %v7099 = vpop.permute.xlu0 %7098
        %7100 = vrot.lane.b32.xlu0 %v7055, 96
        %v7101 = vpop.permute.xlu0 %7100
        %v7104 = vsel %vm627, %v7040, %v7059
        %v7105 = vsel %vm627, %v7041, %v7061
        %v7106 = vsel %vm811, %v7104, %v7067
        %v7107 = vsel %vm811, %v7105, %v7069
        %v7108 = vsel %vm814, %v7106, %v7075
        %v7109 = vsel %vm814, %v7107, %v7077
        %v7110 = vsel %vm627, %v7048, %v7083
        %v7111 = vsel %vm627, %v7049, %v7085
        %v7112 = vsel %vm811, %v7110, %v7091
        %v7113 = vsel %vm811, %v7111, %v7093
        %v7114 = vsel %vm814, %v7112, %v7099
        %v7115 = vsel %vm814, %v7113, %v7101
        %s7116 = scalar_lea.vmem [#allocation14], 5632
        %v7117 = vld [vmem:[%s7116] sm:$0xff]
        %v7118 = vld [vmem:[%s7116 + $0x8] sm:$0xff]
        %v7119 = vld [vmem:[%s7116 + $0x10] sm:$0xff]
        %v7120 = vld [vmem:[%s7116 + $0x18] sm:$0xff]
        %v7121 = vld [vmem:[%s7116 + $0x20] sm:$0xff]
        %v7122 = vld [vmem:[%s7116 + $0x28] sm:$0xff]
        %v7123 = vld [vmem:[%s7116 + $0x30] sm:$0xff]
        %v7124 = vld [vmem:[%s7116 + $0x38] sm:$0xff]
        %v7125 = vld [vmem:[%s7116 + $0x40] sm:$0xff]
        %v7126 = vld [vmem:[%s7116 + $0x48] sm:$0xff]
        %v7127 = vld [vmem:[%s7116 + $0x50] sm:$0xff]
        %v7128 = vld [vmem:[%s7116 + $0x58] sm:$0xff]
        %v7129 = vld [vmem:[%s7116 + $0x60] sm:$0xff]
        %v7130 = vld [vmem:[%s7116 + $0x68] sm:$0xff]
        %v7131 = vld [vmem:[%s7116 + $0x70] sm:$0xff]
        %v7132 = vld [vmem:[%s7116 + $0x78] sm:$0xff]
        %v7133 = vld [vmem:[%s7116 + $0x80] sm:$0xff]
        %v7134 = vld [vmem:[%s7116 + $0x88] sm:$0xff]
        %v7135 = vld [vmem:[%s7116 + $0x90] sm:$0xff]
        %v7136 = vld [vmem:[%s7116 + $0x98] sm:$0xff]
        %v7137 = vld [vmem:[%s7116 + $0xa0] sm:$0xff]
        %v7138 = vld [vmem:[%s7116 + $0xa8] sm:$0xff]
        %v7139 = vld [vmem:[%s7116 + $0xb0] sm:$0xff]
        %v7140 = vld [vmem:[%s7116 + $0xb8] sm:$0xff]
        %v7141 = vld [vmem:[%s7116 + $0xc0] sm:$0xff]
        %v7142 = vld [vmem:[%s7116 + $0xc8] sm:$0xff]
        %v7143 = vld [vmem:[%s7116 + $0xd0] sm:$0xff]
        %v7144 = vld [vmem:[%s7116 + $0xd8] sm:$0xff]
        %v7145 = vld [vmem:[%s7116 + $0xe0] sm:$0xff]
        %v7146 = vld [vmem:[%s7116 + $0xe8] sm:$0xff]
        %v7147 = vld [vmem:[%s7116 + $0xf0] sm:$0xff]
        %v7148 = vld [vmem:[%s7116 + $0xf8] sm:$0xff]
        %7149 = vmatprep.subr.mxu0 0.0
        %7150 = vmatpush1.msra.mxu0 %v7117
        %7151 = vmatprep.subr.mxu0 0.0
        %7152 = vmatpush1.msra.mxu0 %v7118
        %7153 = vmatprep.subr.mxu0 0.0
        %7154 = vmatpush1.msra.mxu0 %v7119
        %7155 = vmatprep.subr.mxu0 0.0
        %7156 = vmatpush1.msra.mxu0 %v7120
        %7157 = vmatprep.subr.mxu0 0.0
        %7158 = vmatpush1.msra.mxu0 %v7121
        %7159 = vmatprep.subr.mxu0 0.0
        %7160 = vmatpush1.msra.mxu0 %v7122
        %7161 = vmatprep.subr.mxu0 0.0
        %7162 = vmatpush1.msra.mxu0 %v7123
        %7163 = vmatprep.subr.mxu0 0.0
        %7164 = vmatpush1.msra.mxu0 %v7124
        %7165 = vmatprep.subr.mxu0 0.0
        %7166 = vmatpush1.msra.mxu0 %v7125
        %7167 = vmatprep.subr.mxu0 0.0
        %7168 = vmatpush1.msra.mxu0 %v7126
        %7169 = vmatprep.subr.mxu0 0.0
        %7170 = vmatpush1.msra.mxu0 %v7127
        %7171 = vmatprep.subr.mxu0 0.0
        %7172 = vmatpush1.msra.mxu0 %v7128
        %7173 = vmatprep.subr.mxu0 0.0
        %7174 = vmatpush1.msra.mxu0 %v7129
        %7175 = vmatprep.subr.mxu0 0.0
        %7176 = vmatpush1.msra.mxu0 %v7130
        %7177 = vmatprep.subr.mxu0 0.0
        %7178 = vmatpush1.msra.mxu0 %v7131
        %7179 = vmatprep.subr.mxu0 0.0
        %7180 = vmatpush1.msra.mxu0 %v7132
        %7181 = vmatprep.subr.mxu0 0.0
        %7182 = vmatpush1.msra.mxu0 %v7133
        %7183 = vmatprep.subr.mxu0 0.0
        %7184 = vmatpush1.msra.mxu0 %v7134
        %7185 = vmatprep.subr.mxu0 0.0
        %7186 = vmatpush1.msra.mxu0 %v7135
        %7187 = vmatprep.subr.mxu0 0.0
        %7188 = vmatpush1.msra.mxu0 %v7136
        %7189 = vmatprep.subr.mxu0 0.0
        %7190 = vmatpush1.msra.mxu0 %v7137
        %7191 = vmatprep.subr.mxu0 0.0
        %7192 = vmatpush1.msra.mxu0 %v7138
        %7193 = vmatprep.subr.mxu0 0.0
        %7194 = vmatpush1.msra.mxu0 %v7139
        %7195 = vmatprep.subr.mxu0 0.0
        %7196 = vmatpush1.msra.mxu0 %v7140
        %7197 = vmatprep.subr.mxu0 0.0
        %7198 = vmatpush1.msra.mxu0 %v7141
        %7199 = vmatprep.subr.mxu0 0.0
        %7200 = vmatpush1.msra.mxu0 %v7142
        %7201 = vmatprep.subr.mxu0 0.0
        %7202 = vmatpush1.msra.mxu0 %v7143
        %7203 = vmatprep.subr.mxu0 0.0
        %7204 = vmatpush1.msra.mxu0 %v7144
        %7205 = vmatprep.subr.mxu0 0.0
        %7206 = vmatpush1.msra.mxu0 %v7145
        %7207 = vmatprep.subr.mxu0 0.0
        %7208 = vmatpush1.msra.mxu0 %v7146
        %7209 = vmatprep.subr.mxu0 0.0
        %7210 = vmatpush1.msra.mxu0 %v7147
        %7211 = vmatprep.subr.mxu0 0.0
        %7212 = vmatpush1.msra.mxu0 %v7148
        %7213 = vmatprep.mubr.f32.mxu0 %v7114
        %7214 = vmatmul.mubr.f32.gmra.mrb[0].mxu0 %v7108
        %v7215 = vpop.f32.mrb[0].mxu0
        %v7216 = vadd.f32 0.0, %v7215
        %v7217 = vpop.f32.mrb[0].mxu0
        %7218 = vmatprep.mubr.f32.mxu0 %v7115
        %7219 = vmatmul.mubr.f32.gmra.mrb[0].mxu0 %v7109
        %v7220 = vpop.f32.mrb[0].mxu0
        %v7221 = vadd.f32 0.0, %v7220
        %v7222 = vpop.f32.mrb[0].mxu0
        %7223 = vdwg.mxu0
        %v7224 = vadd.f32 %v7038, %v7216
        %v7225 = vadd.f32 %v7039, %v7221
        %v7226 = vld [vmem:[#allocation2 + $0x1d] sm:$0xff]
        %v7227 = vld [vmem:[#allocation2 + $0x25] sm:$0xff]
        %v7228 = vld [vmem:[#allocation2 + $0x1e] sm:$0xff]
        %v7229 = vld [vmem:[#allocation2 + $0x26] sm:$0xff]
        %v7230 = vld [vmem:[#allocation2 + $0x1f] sm:$0xff]
        %v7231 = vld [vmem:[#allocation2 + $0x27] sm:$0xff]
        %v7232 = vld [vmem:[#allocation2 + $0x20] sm:$0xff]
        %v7233 = vld [vmem:[#allocation2 + $0x28] sm:$0xff]
        %v7234 = vld [vmem:[#allocation2 + $0x21] sm:$0xff]
        %v7235 = vld [vmem:[#allocation2 + $0x29] sm:$0xff]
        %v7236 = vld [vmem:[#allocation2 + $0x22] sm:$0xff]
        %v7237 = vld [vmem:[#allocation2 + $0x2a] sm:$0xff]
        %v7238 = vld [vmem:[#allocation2 + $0x23] sm:$0xff]
        %v7239 = vld [vmem:[#allocation2 + $0x2b] sm:$0xff]
        %v7240 = vld [vmem:[#allocation2 + $0x24] sm:$0xff]
        %v7241 = vld [vmem:[#allocation2 + $0x2c] sm:$0xff]
        %7244 = vrot.lane.b32.xlu0 %v7228, 32
        %v7245 = vpop.permute.xlu0 %7244
        %7246 = vrot.lane.b32.xlu0 %v7229, 32
        %v7247 = vpop.permute.xlu0 %7246
        %7252 = vrot.lane.b32.xlu0 %v7230, 64
        %v7253 = vpop.permute.xlu0 %7252
        %7254 = vrot.lane.b32.xlu0 %v7231, 64
        %v7255 = vpop.permute.xlu0 %7254
        %7260 = vrot.lane.b32.xlu0 %v7232, 96
        %v7261 = vpop.permute.xlu0 %7260
        %7262 = vrot.lane.b32.xlu0 %v7233, 96
        %v7263 = vpop.permute.xlu0 %7262
        %7268 = vrot.lane.b32.xlu0 %v7236, 32
        %v7269 = vpop.permute.xlu0 %7268
        %7270 = vrot.lane.b32.xlu0 %v7237, 32
        %v7271 = vpop.permute.xlu0 %7270
        %7276 = vrot.lane.b32.xlu0 %v7238, 64
        %v7277 = vpop.permute.xlu0 %7276
        %7278 = vrot.lane.b32.xlu0 %v7239, 64
        %v7279 = vpop.permute.xlu0 %7278
        %7284 = vrot.lane.b32.xlu0 %v7240, 96
        %v7285 = vpop.permute.xlu0 %7284
        %7286 = vrot.lane.b32.xlu0 %v7241, 96
        %v7287 = vpop.permute.xlu0 %7286
        %v7290 = vsel %vm627, %v7226, %v7245
        %v7291 = vsel %vm627, %v7227, %v7247
        %v7292 = vsel %vm811, %v7290, %v7253
        %v7293 = vsel %vm811, %v7291, %v7255
        %v7294 = vsel %vm814, %v7292, %v7261
        %v7295 = vsel %vm814, %v7293, %v7263
        %v7296 = vsel %vm627, %v7234, %v7269
        %v7297 = vsel %vm627, %v7235, %v7271
        %v7298 = vsel %vm811, %v7296, %v7277
        %v7299 = vsel %vm811, %v7297, %v7279
        %v7300 = vsel %vm814, %v7298, %v7285
        %v7301 = vsel %vm814, %v7299, %v7287
        %s7302 = scalar_lea.vmem [#allocation14], 5888
        %v7303 = vld [vmem:[%s7302] sm:$0xff]
        %v7304 = vld [vmem:[%s7302 + $0x8] sm:$0xff]
        %v7305 = vld [vmem:[%s7302 + $0x10] sm:$0xff]
        %v7306 = vld [vmem:[%s7302 + $0x18] sm:$0xff]
        %v7307 = vld [vmem:[%s7302 + $0x20] sm:$0xff]
        %v7308 = vld [vmem:[%s7302 + $0x28] sm:$0xff]
        %v7309 = vld [vmem:[%s7302 + $0x30] sm:$0xff]
        %v7310 = vld [vmem:[%s7302 + $0x38] sm:$0xff]
        %v7311 = vld [vmem:[%s7302 + $0x40] sm:$0xff]
        %v7312 = vld [vmem:[%s7302 + $0x48] sm:$0xff]
        %v7313 = vld [vmem:[%s7302 + $0x50] sm:$0xff]
        %v7314 = vld [vmem:[%s7302 + $0x58] sm:$0xff]
        %v7315 = vld [vmem:[%s7302 + $0x60] sm:$0xff]
        %v7316 = vld [vmem:[%s7302 + $0x68] sm:$0xff]
        %v7317 = vld [vmem:[%s7302 + $0x70] sm:$0xff]
        %v7318 = vld [vmem:[%s7302 + $0x78] sm:$0xff]
        %v7319 = vld [vmem:[%s7302 + $0x80] sm:$0xff]
        %v7320 = vld [vmem:[%s7302 + $0x88] sm:$0xff]
        %v7321 = vld [vmem:[%s7302 + $0x90] sm:$0xff]
        %v7322 = vld [vmem:[%s7302 + $0x98] sm:$0xff]
        %v7323 = vld [vmem:[%s7302 + $0xa0] sm:$0xff]
        %v7324 = vld [vmem:[%s7302 + $0xa8] sm:$0xff]
        %v7325 = vld [vmem:[%s7302 + $0xb0] sm:$0xff]
        %v7326 = vld [vmem:[%s7302 + $0xb8] sm:$0xff]
        %v7327 = vld [vmem:[%s7302 + $0xc0] sm:$0xff]
        %v7328 = vld [vmem:[%s7302 + $0xc8] sm:$0xff]
        %v7329 = vld [vmem:[%s7302 + $0xd0] sm:$0xff]
        %v7330 = vld [vmem:[%s7302 + $0xd8] sm:$0xff]
        %v7331 = vld [vmem:[%s7302 + $0xe0] sm:$0xff]
        %v7332 = vld [vmem:[%s7302 + $0xe8] sm:$0xff]
        %v7333 = vld [vmem:[%s7302 + $0xf0] sm:$0xff]
        %v7334 = vld [vmem:[%s7302 + $0xf8] sm:$0xff]
        %7335 = vmatprep.subr.mxu0 0.0
        %7336 = vmatpush1.msra.mxu0 %v7303
        %7337 = vmatprep.subr.mxu0 0.0
        %7338 = vmatpush1.msra.mxu0 %v7304
        %7339 = vmatprep.subr.mxu0 0.0
        %7340 = vmatpush1.msra.mxu0 %v7305
        %7341 = vmatprep.subr.mxu0 0.0
        %7342 = vmatpush1.msra.mxu0 %v7306
        %7343 = vmatprep.subr.mxu0 0.0
        %7344 = vmatpush1.msra.mxu0 %v7307
        %7345 = vmatprep.subr.mxu0 0.0
        %7346 = vmatpush1.msra.mxu0 %v7308
        %7347 = vmatprep.subr.mxu0 0.0
        %7348 = vmatpush1.msra.mxu0 %v7309
        %7349 = vmatprep.subr.mxu0 0.0
        %7350 = vmatpush1.msra.mxu0 %v7310
        %7351 = vmatprep.subr.mxu0 0.0
        %7352 = vmatpush1.msra.mxu0 %v7311
        %7353 = vmatprep.subr.mxu0 0.0
        %7354 = vmatpush1.msra.mxu0 %v7312
        %7355 = vmatprep.subr.mxu0 0.0
        %7356 = vmatpush1.msra.mxu0 %v7313
        %7357 = vmatprep.subr.mxu0 0.0
        %7358 = vmatpush1.msra.mxu0 %v7314
        %7359 = vmatprep.subr.mxu0 0.0
        %7360 = vmatpush1.msra.mxu0 %v7315
        %7361 = vmatprep.subr.mxu0 0.0
        %7362 = vmatpush1.msra.mxu0 %v7316
        %7363 = vmatprep.subr.mxu0 0.0
        %7364 = vmatpush1.msra.mxu0 %v7317
        %7365 = vmatprep.subr.mxu0 0.0
        %7366 = vmatpush1.msra.mxu0 %v7318
        %7367 = vmatprep.subr.mxu0 0.0
        %7368 = vmatpush1.msra.mxu0 %v7319
        %7369 = vmatprep.subr.mxu0 0.0
        %7370 = vmatpush1.msra.mxu0 %v7320
        %7371 = vmatprep.subr.mxu0 0.0
        %7372 = vmatpush1.msra.mxu0 %v7321
        %7373 = vmatprep.subr.mxu0 0.0
        %7374 = vmatpush1.msra.mxu0 %v7322
        %7375 = vmatprep.subr.mxu0 0.0
        %7376 = vmatpush1.msra.mxu0 %v7323
        %7377 = vmatprep.subr.mxu0 0.0
        %7378 = vmatpush1.msra.mxu0 %v7324
        %7379 = vmatprep.subr.mxu0 0.0
        %7380 = vmatpush1.msra.mxu0 %v7325
        %7381 = vmatprep.subr.mxu0 0.0
        %7382 = vmatpush1.msra.mxu0 %v7326
        %7383 = vmatprep.subr.mxu0 0.0
        %7384 = vmatpush1.msra.mxu0 %v7327
        %7385 = vmatprep.subr.mxu0 0.0
        %7386 = vmatpush1.msra.mxu0 %v7328
        %7387 = vmatprep.subr.mxu0 0.0
        %7388 = vmatpush1.msra.mxu0 %v7329
        %7389 = vmatprep.subr.mxu0 0.0
        %7390 = vmatpush1.msra.mxu0 %v7330
        %7391 = vmatprep.subr.mxu0 0.0
        %7392 = vmatpush1.msra.mxu0 %v7331
        %7393 = vmatprep.subr.mxu0 0.0
        %7394 = vmatpush1.msra.mxu0 %v7332
        %7395 = vmatprep.subr.mxu0 0.0
        %7396 = vmatpush1.msra.mxu0 %v7333
        %7397 = vmatprep.subr.mxu0 0.0
        %7398 = vmatpush1.msra.mxu0 %v7334
        %7399 = vmatprep.mubr.f32.mxu0 %v7300
        %7400 = vmatmul.mubr.f32.gmra.mrb[0].mxu0 %v7294
        %v7401 = vpop.f32.mrb[0].mxu0
        %v7402 = vadd.f32 0.0, %v7401
        %v7403 = vpop.f32.mrb[0].mxu0
        %7404 = vmatprep.mubr.f32.mxu0 %v7301
        %7405 = vmatmul.mubr.f32.gmra.mrb[0].mxu0 %v7295
        %v7406 = vpop.f32.mrb[0].mxu0
        %v7407 = vadd.f32 0.0, %v7406
        %v7408 = vpop.f32.mrb[0].mxu0
        %7409 = vdwg.mxu0
        %v7410 = vadd.f32 %v7224, %v7402
        %v7411 = vadd.f32 %v7225, %v7407
        %v7412 = vld [vmem:[#allocation2 + $0x25] sm:$0xff]
        %v7413 = vld [vmem:[#allocation2 + $0x2d] sm:$0xff]
        %v7414 = vld [vmem:[#allocation2 + $0x26] sm:$0xff]
        %v7415 = vld [vmem:[#allocation2 + $0x2e] sm:$0xff]
        %v7416 = vld [vmem:[#allocation2 + $0x27] sm:$0xff]
        %v7417 = vld [vmem:[#allocation2 + $0x2f] sm:$0xff]
        %v7418 = vld [vmem:[#allocation2 + $0x28] sm:$0xff]
        %v7419 = vld [vmem:[#allocation2 + $0x30] sm:$0xff]
        %v7420 = vld [vmem:[#allocation2 + $0x29] sm:$0xff]
        %v7421 = vld [vmem:[#allocation2 + $0x31] sm:$0xff]
        %v7422 = vld [vmem:[#allocation2 + $0x2a] sm:$0xff]
        %v7423 = vld [vmem:[#allocation2 + $0x32] sm:$0xff]
        %v7424 = vld [vmem:[#allocation2 + $0x2b] sm:$0xff]
        %v7425 = vld [vmem:[#allocation2 + $0x33] sm:$0xff]
        %v7426 = vld [vmem:[#allocation2 + $0x2c] sm:$0xff]
        %v7427 = vld [vmem:[#allocation2 + $0x34] sm:$0xff]
        %7430 = vrot.lane.b32.xlu0 %v7414, 32
        %v7431 = vpop.permute.xlu0 %7430
        %7432 = vrot.lane.b32.xlu0 %v7415, 32
        %v7433 = vpop.permute.xlu0 %7432
        %7438 = vrot.lane.b32.xlu0 %v7416, 64
        %v7439 = vpop.permute.xlu0 %7438
        %7440 = vrot.lane.b32.xlu0 %v7417, 64
        %v7441 = vpop.permute.xlu0 %7440
        %7446 = vrot.lane.b32.xlu0 %v7418, 96
        %v7447 = vpop.permute.xlu0 %7446
        %7448 = vrot.lane.b32.xlu0 %v7419, 96
        %v7449 = vpop.permute.xlu0 %7448
        %7454 = vrot.lane.b32.xlu0 %v7422, 32
        %v7455 = vpop.permute.xlu0 %7454
        %7456 = vrot.lane.b32.xlu0 %v7423, 32
        %v7457 = vpop.permute.xlu0 %7456
        %7462 = vrot.lane.b32.xlu0 %v7424, 64
        %v7463 = vpop.permute.xlu0 %7462
        %7464 = vrot.lane.b32.xlu0 %v7425, 64
        %v7465 = vpop.permute.xlu0 %7464
        %7470 = vrot.lane.b32.xlu0 %v7426, 96
        %v7471 = vpop.permute.xlu0 %7470
        %7472 = vrot.lane.b32.xlu0 %v7427, 96
        %v7473 = vpop.permute.xlu0 %7472
        %v7476 = vsel %vm627, %v7412, %v7431
        %v7477 = vsel %vm627, %v7413, %v7433
        %v7478 = vsel %vm811, %v7476, %v7439
        %v7479 = vsel %vm811, %v7477, %v7441
        %v7480 = vsel %vm814, %v7478, %v7447
        %v7481 = vsel %vm814, %v7479, %v7449
        %v7482 = vsel %vm627, %v7420, %v7455
        %v7483 = vsel %vm627, %v7421, %v7457
        %v7484 = vsel %vm811, %v7482, %v7463
        %v7485 = vsel %vm811, %v7483, %v7465
        %v7486 = vsel %vm814, %v7484, %v7471
        %v7487 = vsel %vm814, %v7485, %v7473
        %s7488 = scalar_lea.vmem [#allocation14], 6144
        %v7489 = vld [vmem:[%s7488] sm:$0xff]
        %v7490 = vld [vmem:[%s7488 + $0x8] sm:$0xff]
        %v7491 = vld [vmem:[%s7488 + $0x10] sm:$0xff]
        %v7492 = vld [vmem:[%s7488 + $0x18] sm:$0xff]
        %v7493 = vld [vmem:[%s7488 + $0x20] sm:$0xff]
        %v7494 = vld [vmem:[%s7488 + $0x28] sm:$0xff]
        %v7495 = vld [vmem:[%s7488 + $0x30] sm:$0xff]
        %v7496 = vld [vmem:[%s7488 + $0x38] sm:$0xff]
        %v7497 = vld [vmem:[%s7488 + $0x40] sm:$0xff]
        %v7498 = vld [vmem:[%s7488 + $0x48] sm:$0xff]
        %v7499 = vld [vmem:[%s7488 + $0x50] sm:$0xff]
        %v7500 = vld [vmem:[%s7488 + $0x58] sm:$0xff]
        %v7501 = vld [vmem:[%s7488 + $0x60] sm:$0xff]
        %v7502 = vld [vmem:[%s7488 + $0x68] sm:$0xff]
        %v7503 = vld [vmem:[%s7488 + $0x70] sm:$0xff]
        %v7504 = vld [vmem:[%s7488 + $0x78] sm:$0xff]
        %v7505 = vld [vmem:[%s7488 + $0x80] sm:$0xff]
        %v7506 = vld [vmem:[%s7488 + $0x88] sm:$0xff]
        %v7507 = vld [vmem:[%s7488 + $0x90] sm:$0xff]
        %v7508 = vld [vmem:[%s7488 + $0x98] sm:$0xff]
        %v7509 = vld [vmem:[%s7488 + $0xa0] sm:$0xff]
        %v7510 = vld [vmem:[%s7488 + $0xa8] sm:$0xff]
        %v7511 = vld [vmem:[%s7488 + $0xb0] sm:$0xff]
        %v7512 = vld [vmem:[%s7488 + $0xb8] sm:$0xff]
        %v7513 = vld [vmem:[%s7488 + $0xc0] sm:$0xff]
        %v7514 = vld [vmem:[%s7488 + $0xc8] sm:$0xff]
        %v7515 = vld [vmem:[%s7488 + $0xd0] sm:$0xff]
        %v7516 = vld [vmem:[%s7488 + $0xd8] sm:$0xff]
        %v7517 = vld [vmem:[%s7488 + $0xe0] sm:$0xff]
        %v7518 = vld [vmem:[%s7488 + $0xe8] sm:$0xff]
        %v7519 = vld [vmem:[%s7488 + $0xf0] sm:$0xff]
        %v7520 = vld [vmem:[%s7488 + $0xf8] sm:$0xff]
        %7521 = vmatprep.subr.mxu0 0.0
        %7522 = vmatpush1.msra.mxu0 %v7489
        %7523 = vmatprep.subr.mxu0 0.0
        %7524 = vmatpush1.msra.mxu0 %v7490
        %7525 = vmatprep.subr.mxu0 0.0
        %7526 = vmatpush1.msra.mxu0 %v7491
        %7527 = vmatprep.subr.mxu0 0.0
        %7528 = vmatpush1.msra.mxu0 %v7492
        %7529 = vmatprep.subr.mxu0 0.0
        %7530 = vmatpush1.msra.mxu0 %v7493
        %7531 = vmatprep.subr.mxu0 0.0
        %7532 = vmatpush1.msra.mxu0 %v7494
        %7533 = vmatprep.subr.mxu0 0.0
        %7534 = vmatpush1.msra.mxu0 %v7495
        %7535 = vmatprep.subr.mxu0 0.0
        %7536 = vmatpush1.msra.mxu0 %v7496
        %7537 = vmatprep.subr.mxu0 0.0
        %7538 = vmatpush1.msra.mxu0 %v7497
        %7539 = vmatprep.subr.mxu0 0.0
        %7540 = vmatpush1.msra.mxu0 %v7498
        %7541 = vmatprep.subr.mxu0 0.0
        %7542 = vmatpush1.msra.mxu0 %v7499
        %7543 = vmatprep.subr.mxu0 0.0
        %7544 = vmatpush1.msra.mxu0 %v7500
        %7545 = vmatprep.subr.mxu0 0.0
        %7546 = vmatpush1.msra.mxu0 %v7501
        %7547 = vmatprep.subr.mxu0 0.0
        %7548 = vmatpush1.msra.mxu0 %v7502
        %7549 = vmatprep.subr.mxu0 0.0
        %7550 = vmatpush1.msra.mxu0 %v7503
        %7551 = vmatprep.subr.mxu0 0.0
        %7552 = vmatpush1.msra.mxu0 %v7504
        %7553 = vmatprep.subr.mxu0 0.0
        %7554 = vmatpush1.msra.mxu0 %v7505
        %7555 = vmatprep.subr.mxu0 0.0
        %7556 = vmatpush1.msra.mxu0 %v7506
        %7557 = vmatprep.subr.mxu0 0.0
        %7558 = vmatpush1.msra.mxu0 %v7507
        %7559 = vmatprep.subr.mxu0 0.0
        %7560 = vmatpush1.msra.mxu0 %v7508
        %7561 = vmatprep.subr.mxu0 0.0
        %7562 = vmatpush1.msra.mxu0 %v7509
        %7563 = vmatprep.subr.mxu0 0.0
        %7564 = vmatpush1.msra.mxu0 %v7510
        %7565 = vmatprep.subr.mxu0 0.0
        %7566 = vmatpush1.msra.mxu0 %v7511
        %7567 = vmatprep.subr.mxu0 0.0
        %7568 = vmatpush1.msra.mxu0 %v7512
        %7569 = vmatprep.subr.mxu0 0.0
        %7570 = vmatpush1.msra.mxu0 %v7513
        %7571 = vmatprep.subr.mxu0 0.0
        %7572 = vmatpush1.msra.mxu0 %v7514
        %7573 = vmatprep.subr.mxu0 0.0
        %7574 = vmatpush1.msra.mxu0 %v7515
        %7575 = vmatprep.subr.mxu0 0.0
        %7576 = vmatpush1.msra.mxu0 %v7516
        %7577 = vmatprep.subr.mxu0 0.0
        %7578 = vmatpush1.msra.mxu0 %v7517
        %7579 = vmatprep.subr.mxu0 0.0
        %7580 = vmatpush1.msra.mxu0 %v7518
        %7581 = vmatprep.subr.mxu0 0.0
        %7582 = vmatpush1.msra.mxu0 %v7519
        %7583 = vmatprep.subr.mxu0 0.0
        %7584 = vmatpush1.msra.mxu0 %v7520
        %7585 = vmatprep.mubr.f32.mxu0 %v7486
        %7586 = vmatmul.mubr.f32.gmra.mrb[0].mxu0 %v7480
        %v7587 = vpop.f32.mrb[0].mxu0
        %v7588 = vadd.f32 0.0, %v7587
        %v7589 = vpop.f32.mrb[0].mxu0
        %7590 = vmatprep.mubr.f32.mxu0 %v7487
        %7591 = vmatmul.mubr.f32.gmra.mrb[0].mxu0 %v7481
        %v7592 = vpop.f32.mrb[0].mxu0
        %v7593 = vadd.f32 0.0, %v7592
        %v7594 = vpop.f32.mrb[0].mxu0
        %7595 = vdwg.mxu0
        %v7596 = vadd.f32 %v7410, %v7588
        %v7597 = vadd.f32 %v7411, %v7593
        %v7599 = vlaneseq
        %v7600 = vshrl.u32 %v7599, 7
        %v7601 = vsub.s32 0, %v7600
        %v7602 = vrot.slane %v6515, %v7601
        %v7604 = vmul.f32 %v7596, %v7602
        %v7605 = vmul.f32 %v7597, %v7602
        %v7607 = vlaneseq
        %v7608 = vshrl.u32 %v7607, 7
        %v7609 = vsub.s32 0, %v7608
        %v7610 = vrot.slane %v6517, %v7609
        %v7612 = vadd.f32 %v7604, %v7610
        %v7613 = vadd.f32 %v7605, %v7610
        %v7614 = vmax.f32 %v7612, 0.0
        %v7615 = vmax.f32 %v7613, 0.0
        %v7616 = vld [vmem:[#allocation4] sm:$0xff]
        %v7617 = vld [vmem:[#allocation4 + $0x8] sm:$0xff]
        %v7618 = vld [vmem:[#allocation23] sm:$0x1]
        %v7620 = vlaneseq
        %v7621 = vshrl.u32 %v7620, 7
        %v7622 = vsub.s32 0, %v7621
        %v7623 = vrot.slane %v7618, %v7622
        %v7625 = vmul.f32 %v7616, %v7623
        %v7626 = vmul.f32 %v7617, %v7623
        %v7627 = vadd.f32 %v7614, %v7625
        %v7628 = vadd.f32 %v7615, %v7626
        %v7629 = vld [vmem:[#allocation24] sm:$0x1]
        %v7631 = vlaneseq
        %v7632 = vshrl.u32 %v7631, 7
        %v7633 = vsub.s32 0, %v7632
        %v7634 = vrot.slane %v7629, %v7633
        %v7636 = vadd.f32 %v7627, %v7634
        %v7637 = vadd.f32 %v7628, %v7634
        %v7638 = vmax.f32 %v7636, 0.0
        %v7639 = vmax.f32 %v7637, 0.0
        %7640 = vst [vmem:[%s621] sm:$0xff] %v7638
        %7641 = vst [vmem:[%s621 + $0x8] sm:$0xff] %v7639
        %s7642 = sand.u32 %s342, 1
        %s7643 = scalar_lea.sflag [#allocation8], %s7642
        %s7644 = sand.u32 %s342, 1
        %s7645 = smul.addr %s7644, 16
        %s7646 = scalar_lea.vmem [#allocation26], %s7645
        // Predicated region
        $region125: #{tpu_custom_call.1} parent=75 // pred_check
          %p7647 = pneg %p352
        $region126: #{tpu_custom_call.1} parent=75 // pred_check_branch
          %7649 = sbr.rel (%p7647) target = $region128
        $region127: #{tpu_custom_call.1} parent=75 // pred_region
          %s7651 = ssub.s32 256, 256
          %7652 = vsyncadd %s7643, %s7651
          %s7653 = smul.addr %s35, 2
          %s7654 = smul.addr %s7653, 128
          %s7655 = scalar_lea.hbm %s14, %s7654
          %s7656 = sshll.u32 %s7646, 4
          %s7657 = int_to_ptr.vmem [resolvable:$true] %s7656
          %7662 = dma.vmem_to_hbm [thread:$0]  %s7657, 256, %s7655, %s7643, 128, 128, 8
        $region128: #{tpu_custom_call.1} parent=75 // pred_fallthru
          _
      $region76: #{tpu_custom_call.1} parent=5 // pred_fallthru
        _
      %p7663 = scmp.le.s32.totalorder 2, %s30
      // Predicated region
      $region129: #{tpu_custom_call.1} parent=5 // pred_check
        %p7664 = pneg %p7663
      $region130: #{tpu_custom_call.1} parent=5 // pred_check_branch
        %7666 = sbr.rel (%p7664) target = $region132
      $region131: #{tpu_custom_call.1} parent=5 // pred_region
        %s7667 = ssub.s32 %s30, 2
        // Predicated region
        $region133: #{tpu_custom_call.1} parent=131 // pred_check
          %p7668 = pneg %p358
        $region134: #{tpu_custom_call.1} parent=131 // pred_check_branch
          %7670 = sbr.rel (%p7668) target = $region136
        $region135: #{tpu_custom_call.1} parent=131 // pred_region
          %s7671 = sand.u32 %s343, 1
          %s7672 = scalar_lea.sflag [#allocation8], %s7671
          %s7673 = sand.u32 %s343, 1
          %s7674 = smul.addr %s7673, 16
          %s7675 = scalar_lea.vmem [#allocation26], %s7674
          %7676 = dma.done %s7672, 256
        $region136: #{tpu_custom_call.1} parent=131 // pred_fallthru
          _
      $region132: #{tpu_custom_call.1} parent=5 // pred_fallthru
        _
    $region6: #{tpu_custom_call.1} parent=1 // loop_footer
      %s34 = sadd.s32 1, %s30
    $region7: #{tpu_custom_call.1} parent=1 // loop_footer_branch
      %29 = sbr.rel target = $region3
    $region8: #{tpu_custom_call.1} parent=1 // loop_exit
      _
    %7677 = vsyncpa [#allocation7], 1
    %s7678 = scalar_lea.sflag [#allocation7], 1
    %7679 = vsyncpa %s7678, 1
    %7680 = vsyncpa [#allocation10], 1
    %7681 = vsyncpa [#allocation13], 1
    %7682 = vsyncpa [#allocation16], 1
    %7683 = vsyncpa [#allocation19], 1
    %7684 = vsyncpa [#allocation22], 1
    %7685 = vsyncpa [#allocation25], 1
    %7686 = vsyncpa [#allocation8], 1
    %s7687 = scalar_lea.sflag [#allocation8], 1
    %7688 = vsyncpa %s7687, 1

</llo_original>
